<compile_context>
chip_gen: v7x
topology: tpu7x:2x2x1
jax: 0.10.0
libtpu: 0.0.40
codegen_flags: <defaults>
</compile_context>

<pallas_src>
import functools
import math

import jax
import jax.numpy as jnp
from jax.experimental import pallas as pl
from jax.experimental.pallas import tpu as pltpu

N_CH = 8        # N  (entropy bottleneck channels)
M_CH = 12       # M  (expansion channels); M*3//2 = 18, M*2 = 24
MAX_ROW_TILE = 1024


def _round_up(x, m):
    return ((x + m - 1) // m) * m


def _row_tiles(rows):
    rp = max(128, _round_up(rows, 128))
    tn = min(MAX_ROW_TILE, rp)
    rp = _round_up(rp, tn)
    return rp, tn


# --------------------------------------------------------------------------
# Fused conv kernel: bf16 matmul + bias + (leaky_relu | GDN | IGDN) epilogue
# --------------------------------------------------------------------------
def _conv_kernel(a_ref, w_ref, b_ref, *rest, act, gdn):
    # a_ref: (Kp, TN) bf16 im2col columns; w_ref: (Cout, Kp) bf16; b: (Cout,1) f32
    x = jnp.dot(w_ref[...], a_ref[...], preferred_element_type=jnp.float32)
    x = x + b_ref[...]
    if act == "leaky_relu":
        x = jnp.where(x >= 0, x, 0.01 * x)
    elif act == "relu":
        x = jnp.maximum(x, 0.0)
    if gdn == "none":
        o_ref = rest[0]
        o_ref[...] = x
    else:
        g_ref, beta_ref, o_ref = rest
        norm = jnp.dot(g_ref[...], x * x,
                       preferred_element_type=jnp.float32) + beta_ref[...]
        if gdn == "fwd":
            o_ref[...] = x * jax.lax.rsqrt(norm)      # GDN
        else:
            o_ref[...] = x * jnp.sqrt(norm)           # IGDN


def matmul_fused(a, wm, b, act="none", gdn=None, gdn_p=None):
    """a: (K, rows) f32, wm: (Cout, K) f32, b: (Cout,). Returns (Cout, rows) f32."""
    cout, K = wm.shape
    rows = a.shape[1]
    Kp = _round_up(K, 16)
    rows_p, tn = _row_tiles(rows)
    a_p = jnp.pad(a, ((0, Kp - K), (0, rows_p - rows))).astype(jnp.bfloat16)
    w_p = jnp.pad(wm, ((0, 0), (0, Kp - K))).astype(jnp.bfloat16)

    inputs = [a_p, w_p, b.reshape(cout, 1).astype(jnp.float32)]
    in_specs = [
        pl.BlockSpec((Kp, tn), lambda i: (0, i)),
        pl.BlockSpec((cout, Kp), lambda i: (0, 0)),
        pl.BlockSpec((cout, 1), lambda i: (0, 0)),
    ]
    mode = "none"
    if gdn is not None:
        mode = gdn
        inputs += [gdn_p["gamma"].astype(jnp.float32),
                   gdn_p["beta"].reshape(cout, 1).astype(jnp.float32)]
        in_specs += [pl.BlockSpec((cout, cout), lambda i: (0, 0)),
                     pl.BlockSpec((cout, 1), lambda i: (0, 0))]

    out = pl.pallas_call(
        functools.partial(_conv_kernel, act=act, gdn=mode),
        out_shape=jax.ShapeDtypeStruct((cout, rows_p), jnp.float32),
        grid=(rows_p // tn,),
        in_specs=in_specs,
        out_specs=pl.BlockSpec((cout, tn), lambda i: (0, i)),
        compiler_params=pltpu.CompilerParams(
            dimension_semantics=("parallel",)),
    )(*inputs)
    return out[:, :rows]


# --------------------------------------------------------------------------
# Conv / deconv glue (im2col, channel-major) -> fused Pallas matmul
# --------------------------------------------------------------------------
def conv2d(x, w, b, stride, pad, act="none", gdn=None, gdn_p=None):
    """x: (Cin, B, H, W); w: (kh, kw, Cin, Cout); pad: ((pt,pb),(pl,pr))."""
    kh, kw, cin, cout = w.shape
    (pt, pb), (pl_, pr) = pad
    xp = jnp.pad(x, ((0, 0), (0, 0), (pt, pb), (pl_, pr)))
    _, B, Hp, Wp = xp.shape
    oh = (Hp - kh) // stride + 1
    ow = (Wp - kw) // stride + 1
    cols = []
    for r in range(kh):
        for s in range(kw):
            cols.append(xp[:, :, r:r + stride * (oh - 1) + 1:stride,
                           s:s + stride * (ow - 1) + 1:stride])
    a = jnp.concatenate(cols, axis=0).reshape(kh * kw * cin, B * oh * ow)
    wm = jnp.transpose(w, (3, 0, 1, 2)).reshape(cout, kh * kw * cin)
    out = matmul_fused(a, wm, b, act=act, gdn=gdn, gdn_p=gdn_p)
    return out.reshape(cout, B, oh, ow)


def conv5s2(x, p, act="none", gdn=None, gdn_p=None):
    return conv2d(x, p["w"], p["b"], 2, ((2, 2), (2, 2)), act, gdn, gdn_p)


def conv3s1(x, p, act="none", gdn=None, gdn_p=None):
    return conv2d(x, p["w"], p["b"], 1, ((1, 1), (1, 1)), act, gdn, gdn_p)


def deconv2d(x, p, act="none", gdn=None, gdn_p=None):
    # ConvTranspose2d(k=5, s=2, pad=2, output_padding=1) via polyphase
    # decomposition into 4 stride-1 sub-convs (no zero-stuffing; same math
    # as dilate+pad((2,3),(2,3))+conv5x5).
    w, b = p["w"], p["b"]                     # w: (5, 5, cin, cout)
    subs = []
    for a_par in (0, 1):
        row = []
        for b_par in (0, 1):
            wsub = w[a_par::2, b_par::2]      # (3|2, 3|2, cin, cout)
            pad_h = (1, 1) if a_par == 0 else (0, 1)
            pad_w = (1, 1) if b_par == 0 else (0, 1)
            row.append(conv2d(x, wsub, b, 1, (pad_h, pad_w),
                              act=act, gdn=gdn, gdn_p=gdn_p))
        subs.append(row)
    cout, B, H, W = subs[0][0].shape
    top = jnp.stack([subs[0][0], subs[0][1]], axis=4)    # (C,B,H,W,2)  b-parity
    bot = jnp.stack([subs[1][0], subs[1][1]], axis=4)
    o = jnp.stack([top, bot], axis=3)                    # (C,B,H,2,W,2) a,b parity
    return o.reshape(cout, B, 2 * H, 2 * W)


# --------------------------------------------------------------------------
# Gaussian conditional (quantize + likelihood) — lane-dense, tiled
# --------------------------------------------------------------------------
def _std_cdf(x):
    # Phi(x) = 0.5 * erfc(-x / sqrt(2)); erf via Abramowitz-Stegun 7.1.26
    z = x * (1.0 / math.sqrt(2.0))
    a = jnp.abs(z)
    t = 1.0 / (1.0 + 0.3275911 * a)
    poly = t * (0.254829592 + t * (-0.284496736 + t * (1.421413741
               + t * (-1.453152027 + t * 1.061405429))))
    erf_a = 1.0 - poly * jnp.exp(-a * a)
    erf_z = jnp.where(z >= 0, erf_a, -erf_a)
    return 0.5 * (1.0 + erf_z)


def _gaussian_cond_kernel(y_ref, s_ref, m_ref, yhat_ref, lik_ref):
    y = y_ref[...]
    scales = jnp.maximum(s_ref[...], 0.11)        # LowerBound(SCALES_MIN)
    means = m_ref[...]
    y_hat = jnp.round(y - means) + means          # eval-mode "dequantize"
    values = jnp.abs(y_hat - means)
    upper = _std_cdf((0.5 - values) / scales)
    lower = _std_cdf((-0.5 - values) / scales)
    lik = jnp.maximum(upper - lower, 1e-9)        # likelihood lower bound
    yhat_ref[...] = y_hat
    lik_ref[...] = lik


def gaussian_conditional(y, scales, means):
    # channel-major (C, B, H, W) -> (C, rows_pad), rows on the lane axis
    C, B, H, W = y.shape
    rows = B * H * W
    rows_p, tn = _row_tiles(rows)

    def prep(t):
        return jnp.pad(t.reshape(C, rows), ((0, 0), (0, rows_p - rows)))

    spec = pl.BlockSpec((C, tn), lambda i: (0, i))
    y_hat, lik = pl.pallas_call(
        _gaussian_cond_kernel,
        out_shape=(jax.ShapeDtypeStruct((C, rows_p), jnp.float32),
                   jax.ShapeDtypeStruct((C, rows_p), jnp.float32)),
        grid=(rows_p // tn,),
        in_specs=[spec, spec, spec],
        out_specs=[spec, spec],
        compiler_params=pltpu.CompilerParams(
            dimension_semantics=("parallel",)),
    )(prep(y), prep(scales), prep(means))
    y_hat = y_hat[:, :rows].reshape(C, B, H, W)
    lik = lik[:, :rows].reshape(C, B, H, W)
    return y_hat, lik


# --------------------------------------------------------------------------
# Entropy bottleneck (factorized prior, filters=(3,3,3)) — fused elementwise
# --------------------------------------------------------------------------
def _eb_kernel(v_ref, med_ref, m0_ref, b0_ref, f0_ref, m1_ref, b1_ref, f1_ref,
               m2_ref, b2_ref, f2_ref, m3_ref, b3_ref, zhat_ref, lik_ref):
    def softplus(x):
        return jnp.maximum(x, 0.0) + jnp.log(1.0 + jnp.exp(-jnp.abs(x)))

    def sigmoid(x):
        return 1.0 / (1.0 + jnp.exp(-x))

    med = med_ref[...]                    # (C, 1)
    x = v_ref[...]                        # (C, L)
    xh = jnp.round(x - med) + med         # eval-mode quantization

    m0 = softplus(m0_ref[...]); b0 = b0_ref[...]; f0 = jnp.tanh(f0_ref[...])
    m1 = softplus(m1_ref[...]); b1 = b1_ref[...]; f1 = jnp.tanh(f1_ref[...])
    m2 = softplus(m2_ref[...]); b2 = b2_ref[...]; f2 = jnp.tanh(f2_ref[...])
    m3 = softplus(m3_ref[...]); b3 = b3_ref[...]

    def stage(logits, m, b, f, n_out, n_in):
        out = []
        for k in range(n_out):
            acc = b[:, k:k + 1]
            for j in range(n_in):
                acc = acc + m[:, k * n_in + j:k * n_in + j + 1] * logits[j]
            if f is not None:
                acc = acc + f[:, k:k + 1] * jnp.tanh(acc)
            out.append(acc)
        return out

    def logits_cumulative(inp):
        l = stage([inp], m0, b0, f0, 3, 1)
        l = stage(l, m1, b1, f1, 3, 3)
        l = stage(l, m2, b2, f2, 3, 3)
        l = stage(l, m3, b3, None, 1, 3)
        return l[0]

    lower = logits_cumulative(xh - 0.5)
    upper = logits_cumulative(xh + 0.5)
    s = lower + upper
    sgn = jnp.where(s > 0, -1.0, jnp.where(s < 0, 1.0, 0.0))
    lik = jnp.abs(sigmoid(sgn * upper) - sigmoid(sgn * lower))
    lik = jnp.maximum(lik, 1e-9)
    zhat_ref[...] = xh
    lik_ref[...] = lik


def entropy_bottleneck(z, eb):
    # z: (C, B, Hz, Wz) channel-major -> per-channel flattened values (C, L)
    C, B, Hz, Wz = z.shape
    L = B * Hz * Wz
    Lp = max(128, _round_up(L, 128))
    v = jnp.pad(z.reshape(C, L), ((0, 0), (0, Lp - L)))
    z_hat, lik = pl.pallas_call(
        _eb_kernel,
        out_shape=(jax.ShapeDtypeStruct((C, Lp), jnp.float32),
                   jax.ShapeDtypeStruct((C, Lp), jnp.float32)),
    )(v, eb["medians"], eb["m0"], eb["b0"], eb["f0"], eb["m1"], eb["b1"],
      eb["f1"], eb["m2"], eb["b2"], eb["f2"], eb["m3"], eb["b3"])
    z_hat = z_hat[:, :L].reshape(C, B, Hz, Wz)
    lik = lik[:, :L].reshape(C, B, Hz, Wz)
    return z_hat, lik


# --------------------------------------------------------------------------
# Parameter init (deterministic, synthetic — shapes per module __init__)
# --------------------------------------------------------------------------
def init_params(key):
    params = {}
    keys = iter(jax.random.split(key, 64))

    def add_conv(name, k, cin, cout):
        std = math.sqrt(2.0 / (cin * k * k))          # kaiming_normal, fan_in
        params[name] = {
            "w": std * jax.random.normal(next(keys), (k, k, cin, cout), jnp.float32),
            "b": jnp.zeros((cout,), jnp.float32),
        }

    # g_a: conv(3,N) GDN conv(N,N) GDN conv(N,N) GDN conv(N,M)      (k=5, s=2)
    add_conv("g_a0", 5, 3, N_CH); add_conv("g_a1", 5, N_CH, N_CH)
    add_conv("g_a2", 5, N_CH, N_CH); add_conv("g_a3", 5, N_CH, M_CH)
    # g_s: deconv(M,N) IGDN deconv(N,N) IGDN deconv(N,N) IGDN deconv(N,3)
    add_conv("g_s0", 5, M_CH, N_CH); add_conv("g_s1", 5, N_CH, N_CH)
    add_conv("g_s2", 5, N_CH, N_CH); add_conv("g_s3", 5, N_CH, 3)
    # h_a: conv(M,N,k3,s1) LReLU conv(N,N,k5,s2) LReLU conv(N,N,k5,s2)
    add_conv("h_a0", 3, M_CH, N_CH); add_conv("h_a1", 5, N_CH, N_CH)
    add_conv("h_a2", 5, N_CH, N_CH)
    # h_s: deconv(N,M) LReLU deconv(M,3M/2) LReLU conv(3M/2,2M,k3,s1)
    add_conv("h_s0", 5, N_CH, M_CH)
    add_conv("h_s1", 5, M_CH, M_CH * 3 // 2)
    add_conv("h_s2", 3, M_CH * 3 // 2, M_CH * 2)

    # GDN / IGDN effective params at init: gamma = 0.1*I, beta = 1
    for i in range(3):
        params[f"gdn{i}"] = {"gamma": 0.1 * jnp.eye(N_CH, dtype=jnp.float32),
                             "beta": jnp.ones((N_CH,), jnp.float32)}
        params[f"igdn{i}"] = {"gamma": 0.1 * jnp.eye(N_CH, dtype=jnp.float32),
                              "beta": jnp.ones((N_CH,), jnp.float32)}

    # EntropyBottleneck factorized prior: filters=(3,3,3), init_scale=10
    filters = (1, 3, 3, 3, 1)
    scale = 10.0 ** (1.0 / 4.0)
    eb = {}
    for i in range(4):
        init = math.log(math.expm1(1.0 / scale / filters[i + 1]))
        eb[f"m{i}"] = jnp.full((N_CH, filters[i + 1] * filters[i]), init, jnp.float32)
        eb[f"b{i}"] = jax.random.uniform(next(keys), (N_CH, filters[i + 1]),
                                         jnp.float32, -0.5, 0.5)
        if i < 3:
            eb[f"f{i}"] = jnp.zeros((N_CH, filters[i + 1]), jnp.float32)
    eb["medians"] = jnp.zeros((N_CH, 1), jnp.float32)   # quantiles init -> median 0
    params["eb"] = eb
    return params


# --------------------------------------------------------------------------
# MeanScaleHyperprior.forward
# --------------------------------------------------------------------------
def forward(params, x_nchw):
    p = params
    x = jnp.transpose(x_nchw, (1, 0, 2, 3)).astype(jnp.float32)  # NCHW -> (C,B,H,W)

    # g_a (GDN fused into the conv epilogue)
    y = conv5s2(x, p["g_a0"], gdn="fwd", gdn_p=p["gdn0"])
    y = conv5s2(y, p["g_a1"], gdn="fwd", gdn_p=p["gdn1"])
    y = conv5s2(y, p["g_a2"], gdn="fwd", gdn_p=p["gdn2"])
    y = conv5s2(y, p["g_a3"])

    # h_a
    z = conv3s1(y, p["h_a0"], act="leaky_relu")
    z = conv5s2(z, p["h_a1"], act="leaky_relu")
    z = conv5s2(z, p["h_a2"])

    # entropy bottleneck
    z_hat, z_lik = entropy_bottleneck(z, p["eb"])

    # h_s -> gaussian params, chunk(2) along channel
    g = deconv2d(z_hat, p["h_s0"], act="leaky_relu")
    g = deconv2d(g, p["h_s1"], act="leaky_relu")
    g = conv3s1(g, p["h_s2"])
    scales_hat = g[:M_CH]
    means_hat = g[M_CH:]

    # gaussian conditional
    y_hat, y_lik = gaussian_conditional(y, scales_hat, means_hat)

    # g_s (IGDN fused into the deconv epilogue)
    xh = deconv2d(y_hat, p["g_s0"], gdn="inv", gdn_p=p["igdn0"])
    xh = deconv2d(xh, p["g_s1"], gdn="inv", gdn_p=p["igdn1"])
    xh = deconv2d(xh, p["g_s2"], gdn="inv", gdn_p=p["igdn2"])
    xh = deconv2d(xh, p["g_s3"])

    x_hat = jnp.transpose(xh, (1, 0, 2, 3))       # back to NCHW
    y_lik = jnp.transpose(y_lik, (1, 0, 2, 3))    # back to NCHW
    z_lik = jnp.transpose(z_lik, (1, 0, 2, 3))    # back to NCHW
    return {"x_hat": x_hat, "likelihoods": {"y": y_lik, "z": z_lik}}


if __name__ == "__main__":
    key = jax.random.PRNGKey(0)
    pkey, xkey = jax.random.split(key)
    params = init_params(pkey)
    x = jax.random.uniform(xkey, (2, 3, 64, 64), jnp.float32)

    out = jax.jit(forward)(params, x)
    out = jax.block_until_ready(out)

    assert out["x_hat"].shape == (2, 3, 64, 64)
    assert out["likelihoods"]["y"].shape == (2, M_CH, 4, 4)
    assert out["likelihoods"]["z"].shape == (2, N_CH, 1, 1)
    assert bool(jnp.all(jnp.isfinite(out["x_hat"])))
    assert bool(jnp.all(out["likelihoods"]["y"] > 0))
    assert bool(jnp.all(out["likelihoods"]["z"] > 0))
    print("KERNEL_OK")
</pallas_src>

<mosaic_0001>
module attributes {stable_mosaic.version = 11 : i64} {
  func.func @_conv_kernel(%arg0: i32, %arg1: memref<80x1024xbf16, #tpu.memory_space<vmem>>, %arg2: memref<8x80xbf16, #tpu.memory_space<vmem>>, %arg3: memref<8x1xf32, #tpu.memory_space<vmem>>, %arg4: memref<8x8xf32, #tpu.memory_space<vmem>>, %arg5: memref<8x1xf32, #tpu.memory_space<vmem>>, %arg6: memref<8x1024xf32, #tpu.memory_space<vmem>>) attributes {dimension_semantics = [#tpu.dimension_semantics<parallel>], iteration_bounds = array<i64: 2>, scalar_prefetch = 0 : i64, scratch_operands = 0 : i64, tpu.core_type = #tpu.core_type<tc>, window_params = [{transform_indices = @transform_0, window_bounds = array<i64: 80, 1024>}, {pipeline_mode = #tpu.pipeline_mode<synchronous>, transform_indices = @transform_1, window_bounds = array<i64: 8, 80>}, {pipeline_mode = #tpu.pipeline_mode<synchronous>, transform_indices = @transform_2, window_bounds = array<i64: 8, 1>}, {pipeline_mode = #tpu.pipeline_mode<synchronous>, transform_indices = @transform_3, window_bounds = array<i64: 8, 8>}, {pipeline_mode = #tpu.pipeline_mode<synchronous>, transform_indices = @transform_4, window_bounds = array<i64: 8, 1>}, {transform_indices = @transform_5, window_bounds = array<i64: 8, 1024>}]} {
    %c0 = arith.constant 0 : index
    %c0_0 = arith.constant 0 : index
    %0 = vector.load %arg2[%c0, %c0_0] : memref<8x80xbf16, #tpu.memory_space<vmem>>, vector<8x80xbf16>
    %c0_1 = arith.constant 0 : index
    %c0_2 = arith.constant 0 : index
    %1 = vector.load %arg1[%c0_1, %c0_2] : memref<80x1024xbf16, #tpu.memory_space<vmem>>, vector<80x1024xbf16>
    %cst = arith.constant dense<0.000000e+00> : vector<8x1024xf32>
    %2 = tpu.matmul %0, %1, %cst {dimension_numbers = #tpu.dot_dimension_numbers<[1], [0], [0], [1], [0, 0, 1, 1], [], []>} : vector<8x80xbf16>, vector<80x1024xbf16>, vector<8x1024xf32> -> vector<8x1024xf32>
    %c0_3 = arith.constant 0 : index
    %c0_4 = arith.constant 0 : index
    %3 = vector.load %arg3[%c0_3, %c0_4] : memref<8x1xf32, #tpu.memory_space<vmem>>, vector<8x1xf32>
    %4 = vector.broadcast %3 : vector<8x1xf32> to vector<8x1024xf32>
    %5 = arith.addf %2, %4 : vector<8x1024xf32>
    %c0_5 = arith.constant 0 : index
    %c0_6 = arith.constant 0 : index
    %6 = vector.load %arg4[%c0_5, %c0_6] : memref<8x8xf32, #tpu.memory_space<vmem>>, vector<8x8xf32>
    %7 = arith.mulf %5, %5 : vector<8x1024xf32>
    %cst_7 = arith.constant dense<0.000000e+00> : vector<8x1024xf32>
    %8 = tpu.matmul %6, %7, %cst_7 {dimension_numbers = #tpu.dot_dimension_numbers<[1], [0], [0], [1], [0, 0, 1, 1], [], []>} : vector<8x8xf32>, vector<8x1024xf32>, vector<8x1024xf32> -> vector<8x1024xf32>
    %c0_8 = arith.constant 0 : index
    %c0_9 = arith.constant 0 : index
    %9 = vector.load %arg5[%c0_8, %c0_9] : memref<8x1xf32, #tpu.memory_space<vmem>>, vector<8x1xf32>
    %10 = vector.broadcast %9 : vector<8x1xf32> to vector<8x1024xf32>
    %11 = arith.addf %8, %10 : vector<8x1024xf32>
    %12 = math.rsqrt %11 : vector<8x1024xf32>
    %13 = arith.mulf %5, %12 : vector<8x1024xf32>
    %c0_10 = arith.constant 0 : index
    %c0_11 = arith.constant 0 : index
    %14 = vector.load %arg6[%c0_10, %c0_11] : memref<8x1024xf32, #tpu.memory_space<vmem>>, vector<8x1024xf32>
    tpu.vector_store %arg6[%c0_10, %c0_11], %13 {strides = array<i32>} : memref<8x1024xf32, #tpu.memory_space<vmem>>, vector<8x1024xf32>,
    return
  }
  func.func @transform_0(%arg0: i32) -> (i32, i32) {
    %c0_i32 = arith.constant 0 : i32
    %c0_i32_0 = arith.constant 0 : i32
    return %c0_i32, %arg0 : i32, i32
  }
  func.func @transform_1(%arg0: i32) -> (i32, i32) {
    %c0_i32 = arith.constant 0 : i32
    %c0_i32_0 = arith.constant 0 : i32
    %c0_i32_1 = arith.constant 0 : i32
    return %c0_i32, %c0_i32_0 : i32, i32
  }
  func.func @transform_2(%arg0: i32) -> (i32, i32) {
    %c0_i32 = arith.constant 0 : i32
    %c0_i32_0 = arith.constant 0 : i32
    %c0_i32_1 = arith.constant 0 : i32
    return %c0_i32, %c0_i32_0 : i32, i32
  }
  func.func @transform_3(%arg0: i32) -> (i32, i32) {
    %c0_i32 = arith.constant 0 : i32
    %c0_i32_0 = arith.constant 0 : i32
    %c0_i32_1 = arith.constant 0 : i32
    return %c0_i32, %c0_i32_0 : i32, i32
  }
  func.func @transform_4(%arg0: i32) -> (i32, i32) {
    %c0_i32 = arith.constant 0 : i32
    %c0_i32_0 = arith.constant 0 : i32
    %c0_i32_1 = arith.constant 0 : i32
    return %c0_i32, %c0_i32_0 : i32, i32
  }
  func.func @transform_5(%arg0: i32) -> (i32, i32) {
    %c0_i32 = arith.constant 0 : i32
    %c0_i32_0 = arith.constant 0 : i32
    return %c0_i32, %arg0 : i32, i32
  }
}

module attributes {stable_mosaic.version = 11 : i64} {
  func.func @_conv_kernel(%arg0: i32, %arg1: memref<208x512xbf16, #tpu.memory_space<vmem>>, %arg2: memref<8x208xbf16, #tpu.memory_space<vmem>>, %arg3: memref<8x1xf32, #tpu.memory_space<vmem>>, %arg4: memref<8x8xf32, #tpu.memory_space<vmem>>, %arg5: memref<8x1xf32, #tpu.memory_space<vmem>>, %arg6: memref<8x512xf32, #tpu.memory_space<vmem>>) attributes {dimension_semantics = [#tpu.dimension_semantics<parallel>], iteration_bounds = array<i64: 1>, scalar_prefetch = 0 : i64, scratch_operands = 0 : i64, tpu.core_type = #tpu.core_type<tc>, window_params = [{transform_indices = @transform_0, window_bounds = array<i64: 208, 512>}, {pipeline_mode = #tpu.pipeline_mode<synchronous>, transform_indices = @transform_1, window_bounds = array<i64: 8, 208>}, {pipeline_mode = #tpu.pipeline_mode<synchronous>, transform_indices = @transform_2, window_bounds = array<i64: 8, 1>}, {pipeline_mode = #tpu.pipeline_mode<synchronous>, transform_indices = @transform_3, window_bounds = array<i64: 8, 8>}, {pipeline_mode = #tpu.pipeline_mode<synchronous>, transform_indices = @transform_4, window_bounds = array<i64: 8, 1>}, {transform_indices = @transform_5, window_bounds = array<i64: 8, 512>}]} {
    %c0 = arith.constant 0 : index
    %c0_0 = arith.constant 0 : index
    %0 = vector.load %arg2[%c0, %c0_0] : memref<8x208xbf16, #tpu.memory_space<vmem>>, vector<8x208xbf16>
    %c0_1 = arith.constant 0 : index
    %c0_2 = arith.constant 0 : index
    %1 = vector.load %arg1[%c0_1, %c0_2] : memref<208x512xbf16, #tpu.memory_space<vmem>>, vector<208x512xbf16>
    %cst = arith.constant dense<0.000000e+00> : vector<8x512xf32>
    %2 = tpu.matmul %0, %1, %cst {dimension_numbers = #tpu.dot_dimension_numbers<[1], [0], [0], [1], [0, 0, 1, 1], [], []>} : vector<8x208xbf16>, vector<208x512xbf16>, vector<8x512xf32> -> vector<8x512xf32>
    %c0_3 = arith.constant 0 : index
    %c0_4 = arith.constant 0 : index
    %3 = vector.load %arg3[%c0_3, %c0_4] : memref<8x1xf32, #tpu.memory_space<vmem>>, vector<8x1xf32>
    %4 = vector.broadcast %3 : vector<8x1xf32> to vector<8x512xf32>
    %5 = arith.addf %2, %4 : vector<8x512xf32>
    %c0_5 = arith.constant 0 : index
    %c0_6 = arith.constant 0 : index
    %6 = vector.load %arg4[%c0_5, %c0_6] : memref<8x8xf32, #tpu.memory_space<vmem>>, vector<8x8xf32>
    %7 = arith.mulf %5, %5 : vector<8x512xf32>
    %cst_7 = arith.constant dense<0.000000e+00> : vector<8x512xf32>
    %8 = tpu.matmul %6, %7, %cst_7 {dimension_numbers = #tpu.dot_dimension_numbers<[1], [0], [0], [1], [0, 0, 1, 1], [], []>} : vector<8x8xf32>, vector<8x512xf32>, vector<8x512xf32> -> vector<8x512xf32>
    %c0_8 = arith.constant 0 : index
    %c0_9 = arith.constant 0 : index
    %9 = vector.load %arg5[%c0_8, %c0_9] : memref<8x1xf32, #tpu.memory_space<vmem>>, vector<8x1xf32>
    %10 = vector.broadcast %9 : vector<8x1xf32> to vector<8x512xf32>
    %11 = arith.addf %8, %10 : vector<8x512xf32>
    %12 = math.rsqrt %11 : vector<8x512xf32>
    %13 = arith.mulf %5, %12 : vector<8x512xf32>
    %c0_10 = arith.constant 0 : index
    %c0_11 = arith.constant 0 : index
    %14 = vector.load %arg6[%c0_10, %c0_11] : memref<8x512xf32, #tpu.memory_space<vmem>>, vector<8x512xf32>
    tpu.vector_store %arg6[%c0_10, %c0_11], %13 {strides = array<i32>} : memref<8x512xf32, #tpu.memory_space<vmem>>, vector<8x512xf32>,
    return
  }
  func.func @transform_0(%arg0: i32) -> (i32, i32) {
    %c0_i32 = arith.constant 0 : i32
    %c0_i32_0 = arith.constant 0 : i32
    return %c0_i32, %arg0 : i32, i32
  }
  func.func @transform_1(%arg0: i32) -> (i32, i32) {
    %c0_i32 = arith.constant 0 : i32
    %c0_i32_0 = arith.constant 0 : i32
    %c0_i32_1 = arith.constant 0 : i32
    return %c0_i32, %c0_i32_0 : i32, i32
  }
  func.func @transform_2(%arg0: i32) -> (i32, i32) {
    %c0_i32 = arith.constant 0 : i32
    %c0_i32_0 = arith.constant 0 : i32
    %c0_i32_1 = arith.constant 0 : i32
    return %c0_i32, %c0_i32_0 : i32, i32
  }
  func.func @transform_3(%arg0: i32) -> (i32, i32) {
    %c0_i32 = arith.constant 0 : i32
    %c0_i32_0 = arith.constant 0 : i32
    %c0_i32_1 = arith.constant 0 : i32
    return %c0_i32, %c0_i32_0 : i32, i32
  }
  func.func @transform_4(%arg0: i32) -> (i32, i32) {
    %c0_i32 = arith.constant 0 : i32
    %c0_i32_0 = arith.constant 0 : i32
    %c0_i32_1 = arith.constant 0 : i32
    return %c0_i32, %c0_i32_0 : i32, i32
  }
  func.func @transform_5(%arg0: i32) -> (i32, i32) {
    %c0_i32 = arith.constant 0 : i32
    %c0_i32_0 = arith.constant 0 : i32
    return %c0_i32, %arg0 : i32, i32
  }
}

module attributes {stable_mosaic.version = 11 : i64} {
  func.func @_conv_kernel(%arg0: i32, %arg1: memref<208x128xbf16, #tpu.memory_space<vmem>>, %arg2: memref<8x208xbf16, #tpu.memory_space<vmem>>, %arg3: memref<8x1xf32, #tpu.memory_space<vmem>>, %arg4: memref<8x8xf32, #tpu.memory_space<vmem>>, %arg5: memref<8x1xf32, #tpu.memory_space<vmem>>, %arg6: memref<8x128xf32, #tpu.memory_space<vmem>>) attributes {dimension_semantics = [#tpu.dimension_semantics<parallel>], iteration_bounds = array<i64: 1>, scalar_prefetch = 0 : i64, scratch_operands = 0 : i64, tpu.core_type = #tpu.core_type<tc>, window_params = [{transform_indices = @transform_0, window_bounds = array<i64: 208, 128>}, {pipeline_mode = #tpu.pipeline_mode<synchronous>, transform_indices = @transform_1, window_bounds = array<i64: 8, 208>}, {pipeline_mode = #tpu.pipeline_mode<synchronous>, transform_indices = @transform_2, window_bounds = array<i64: 8, 1>}, {pipeline_mode = #tpu.pipeline_mode<synchronous>, transform_indices = @transform_3, window_bounds = array<i64: 8, 8>}, {pipeline_mode = #tpu.pipeline_mode<synchronous>, transform_indices = @transform_4, window_bounds = array<i64: 8, 1>}, {transform_indices = @transform_5, window_bounds = array<i64: 8, 128>}]} {
    %c0 = arith.constant 0 : index
    %c0_0 = arith.constant 0 : index
    %0 = vector.load %arg2[%c0, %c0_0] : memref<8x208xbf16, #tpu.memory_space<vmem>>, vector<8x208xbf16>
    %c0_1 = arith.constant 0 : index
    %c0_2 = arith.constant 0 : index
    %1 = vector.load %arg1[%c0_1, %c0_2] : memref<208x128xbf16, #tpu.memory_space<vmem>>, vector<208x128xbf16>
    %cst = arith.constant dense<0.000000e+00> : vector<8x128xf32>
    %2 = tpu.matmul %0, %1, %cst {dimension_numbers = #tpu.dot_dimension_numbers<[1], [0], [0], [1], [0, 0, 1, 1], [], []>} : vector<8x208xbf16>, vector<208x128xbf16>, vector<8x128xf32> -> vector<8x128xf32>
    %c0_3 = arith.constant 0 : index
    %c0_4 = arith.constant 0 : index
    %3 = vector.load %arg3[%c0_3, %c0_4] : memref<8x1xf32, #tpu.memory_space<vmem>>, vector<8x1xf32>
    %4 = vector.broadcast %3 : vector<8x1xf32> to vector<8x128xf32>
    %5 = arith.addf %2, %4 : vector<8x128xf32>
    %c0_5 = arith.constant 0 : index
    %c0_6 = arith.constant 0 : index
    %6 = vector.load %arg4[%c0_5, %c0_6] : memref<8x8xf32, #tpu.memory_space<vmem>>, vector<8x8xf32>
    %7 = arith.mulf %5, %5 : vector<8x128xf32>
    %cst_7 = arith.constant dense<0.000000e+00> : vector<8x128xf32>
    %8 = tpu.matmul %6, %7, %cst_7 {dimension_numbers = #tpu.dot_dimension_numbers<[1], [0], [0], [1], [0, 0, 1, 1], [], []>} : vector<8x8xf32>, vector<8x128xf32>, vector<8x128xf32> -> vector<8x128xf32>
    %c0_8 = arith.constant 0 : index
    %c0_9 = arith.constant 0 : index
    %9 = vector.load %arg5[%c0_8, %c0_9] : memref<8x1xf32, #tpu.memory_space<vmem>>, vector<8x1xf32>
    %10 = vector.broadcast %9 : vector<8x1xf32> to vector<8x128xf32>
    %11 = arith.addf %8, %10 : vector<8x128xf32>
    %12 = math.rsqrt %11 : vector<8x128xf32>
    %13 = arith.mulf %5, %12 : vector<8x128xf32>
    %c0_10 = arith.constant 0 : index
    %c0_11 = arith.constant 0 : index
    %14 = vector.load %arg6[%c0_10, %c0_11] : memref<8x128xf32, #tpu.memory_space<vmem>>, vector<8x128xf32>
    tpu.vector_store %arg6[%c0_10, %c0_11], %13 {strides = array<i32>} : memref<8x128xf32, #tpu.memory_space<vmem>>, vector<8x128xf32>,
    return
  }
  func.func @transform_0(%arg0: i32) -> (i32, i32) {
    %c0_i32 = arith.constant 0 : i32
    %c0_i32_0 = arith.constant 0 : i32
    return %c0_i32, %arg0 : i32, i32
  }
  func.func @transform_1(%arg0: i32) -> (i32, i32) {
    %c0_i32 = arith.constant 0 : i32
    %c0_i32_0 = arith.constant 0 : i32
    %c0_i32_1 = arith.constant 0 : i32
    return %c0_i32, %c0_i32_0 : i32, i32
  }
  func.func @transform_2(%arg0: i32) -> (i32, i32) {
    %c0_i32 = arith.constant 0 : i32
    %c0_i32_0 = arith.constant 0 : i32
    %c0_i32_1 = arith.constant 0 : i32
    return %c0_i32, %c0_i32_0 : i32, i32
  }
  func.func @transform_3(%arg0: i32) -> (i32, i32) {
    %c0_i32 = arith.constant 0 : i32
    %c0_i32_0 = arith.constant 0 : i32
    %c0_i32_1 = arith.constant 0 : i32
    return %c0_i32, %c0_i32_0 : i32, i32
  }
  func.func @transform_4(%arg0: i32) -> (i32, i32) {
    %c0_i32 = arith.constant 0 : i32
    %c0_i32_0 = arith.constant 0 : i32
    %c0_i32_1 = arith.constant 0 : i32
    return %c0_i32, %c0_i32_0 : i32, i32
  }
  func.func @transform_5(%arg0: i32) -> (i32, i32) {
    %c0_i32 = arith.constant 0 : i32
    %c0_i32_0 = arith.constant 0 : i32
    return %c0_i32, %arg0 : i32, i32
  }
}

module attributes {stable_mosaic.version = 11 : i64} {
  func.func @_conv_kernel(%arg0: i32, %arg1: memref<208x128xbf16, #tpu.memory_space<vmem>>, %arg2: memref<12x208xbf16, #tpu.memory_space<vmem>>, %arg3: memref<12x1xf32, #tpu.memory_space<vmem>>, %arg4: memref<12x128xf32, #tpu.memory_space<vmem>>) attributes {dimension_semantics = [#tpu.dimension_semantics<parallel>], iteration_bounds = array<i64: 1>, scalar_prefetch = 0 : i64, scratch_operands = 0 : i64, tpu.core_type = #tpu.core_type<tc>, window_params = [{transform_indices = @transform_0, window_bounds = array<i64: 208, 128>}, {pipeline_mode = #tpu.pipeline_mode<synchronous>, transform_indices = @transform_1, window_bounds = array<i64: 12, 208>}, {pipeline_mode = #tpu.pipeline_mode<synchronous>, transform_indices = @transform_2, window_bounds = array<i64: 12, 1>}, {transform_indices = @transform_3, window_bounds = array<i64: 12, 128>}]} {
    %c0 = arith.constant 0 : index
    %c0_0 = arith.constant 0 : index
    %0 = vector.load %arg2[%c0, %c0_0] : memref<12x208xbf16, #tpu.memory_space<vmem>>, vector<12x208xbf16>
    %c0_1 = arith.constant 0 : index
    %c0_2 = arith.constant 0 : index
    %1 = vector.load %arg1[%c0_1, %c0_2] : memref<208x128xbf16, #tpu.memory_space<vmem>>, vector<208x128xbf16>
    %cst = arith.constant dense<0.000000e+00> : vector<12x128xf32>
    %2 = tpu.matmul %0, %1, %cst {dimension_numbers = #tpu.dot_dimension_numbers<[1], [0], [0], [1], [0, 0, 1, 1], [], []>} : vector<12x208xbf16>, vector<208x128xbf16>, vector<12x128xf32> -> vector<12x128xf32>
    %c0_3 = arith.constant 0 : index
    %c0_4 = arith.constant 0 : index
    %3 = vector.load %arg3[%c0_3, %c0_4] : memref<12x1xf32, #tpu.memory_space<vmem>>, vector<12x1xf32>
    %4 = vector.broadcast %3 : vector<12x1xf32> to vector<12x128xf32>
    %5 = arith.addf %2, %4 : vector<12x128xf32>
    %c0_5 = arith.constant 0 : index
    %c0_6 = arith.constant 0 : index
    %6 = vector.load %arg4[%c0_5, %c0_6] : memref<12x128xf32, #tpu.memory_space<vmem>>, vector<12x128xf32>
    tpu.vector_store %arg4[%c0_5, %c0_6], %5 {strides = array<i32>} : memref<12x128xf32, #tpu.memory_space<vmem>>, vector<12x128xf32>,
    return
  }
  func.func @transform_0(%arg0: i32) -> (i32, i32) {
    %c0_i32 = arith.constant 0 : i32
    %c0_i32_0 = arith.constant 0 : i32
    return %c0_i32, %arg0 : i32, i32
  }
  func.func @transform_1(%arg0: i32) -> (i32, i32) {
    %c0_i32 = arith.constant 0 : i32
    %c0_i32_0 = arith.constant 0 : i32
    %c0_i32_1 = arith.constant 0 : i32
    return %c0_i32, %c0_i32_0 : i32, i32
  }
  func.func @transform_2(%arg0: i32) -> (i32, i32) {
    %c0_i32 = arith.constant 0 : i32
    %c0_i32_0 = arith.constant 0 : i32
    %c0_i32_1 = arith.constant 0 : i32
    return %c0_i32, %c0_i32_0 : i32, i32
  }
  func.func @transform_3(%arg0: i32) -> (i32, i32) {
    %c0_i32 = arith.constant 0 : i32
    %c0_i32_0 = arith.constant 0 : i32
    return %c0_i32, %arg0 : i32, i32
  }
}

module attributes {stable_mosaic.version = 11 : i64} {
  func.func @_conv_kernel(%arg0: i32, %arg1: memref<112x128xbf16, #tpu.memory_space<vmem>>, %arg2: memref<8x112xbf16, #tpu.memory_space<vmem>>, %arg3: memref<8x1xf32, #tpu.memory_space<vmem>>, %arg4: memref<8x128xf32, #tpu.memory_space<vmem>>) attributes {dimension_semantics = [#tpu.dimension_semantics<parallel>], iteration_bounds = array<i64: 1>, scalar_prefetch = 0 : i64, scratch_operands = 0 : i64, tpu.core_type = #tpu.core_type<tc>, window_params = [{transform_indices = @transform_0, window_bounds = array<i64: 112, 128>}, {pipeline_mode = #tpu.pipeline_mode<synchronous>, transform_indices = @transform_1, window_bounds = array<i64: 8, 112>}, {pipeline_mode = #tpu.pipeline_mode<synchronous>, transform_indices = @transform_2, window_bounds = array<i64: 8, 1>}, {transform_indices = @transform_3, window_bounds = array<i64: 8, 128>}]} {
    %c0 = arith.constant 0 : index
    %c0_0 = arith.constant 0 : index
    %0 = vector.load %arg2[%c0, %c0_0] : memref<8x112xbf16, #tpu.memory_space<vmem>>, vector<8x112xbf16>
    %c0_1 = arith.constant 0 : index
    %c0_2 = arith.constant 0 : index
    %1 = vector.load %arg1[%c0_1, %c0_2] : memref<112x128xbf16, #tpu.memory_space<vmem>>, vector<112x128xbf16>
    %cst = arith.constant dense<0.000000e+00> : vector<8x128xf32>
    %2 = tpu.matmul %0, %1, %cst {dimension_numbers = #tpu.dot_dimension_numbers<[1], [0], [0], [1], [0, 0, 1, 1], [], []>} : vector<8x112xbf16>, vector<112x128xbf16>, vector<8x128xf32> -> vector<8x128xf32>
    %c0_3 = arith.constant 0 : index
    %c0_4 = arith.constant 0 : index
    %3 = vector.load %arg3[%c0_3, %c0_4] : memref<8x1xf32, #tpu.memory_space<vmem>>, vector<8x1xf32>
    %4 = vector.broadcast %3 : vector<8x1xf32> to vector<8x128xf32>
    %5 = arith.addf %2, %4 : vector<8x128xf32>
    %cst_5 = arith.constant 0.000000e+00 : f32
    %6 = vector.broadcast %cst_5 : f32 to vector<8x128xf32>
    %7 = arith.cmpf oge, %5, %6 : vector<8x128xf32>
    %cst_6 = arith.constant 0.00999999977 : f32
    %8 = vector.broadcast %cst_6 : f32 to vector<8x128xf32>
    %9 = arith.mulf %8, %5 : vector<8x128xf32>
    %10 = arith.select %7, %5, %9 : vector<8x128xi1>, vector<8x128xf32>
    %c0_7 = arith.constant 0 : index
    %c0_8 = arith.constant 0 : index
    %11 = vector.load %arg4[%c0_7, %c0_8] : memref<8x128xf32, #tpu.memory_space<vmem>>, vector<8x128xf32>
    tpu.vector_store %arg4[%c0_7, %c0_8], %10 {strides = array<i32>} : memref<8x128xf32, #tpu.memory_space<vmem>>, vector<8x128xf32>,
    return
  }
  func.func @transform_0(%arg0: i32) -> (i32, i32) {
    %c0_i32 = arith.constant 0 : i32
    %c0_i32_0 = arith.constant 0 : i32
    return %c0_i32, %arg0 : i32, i32
  }
  func.func @transform_1(%arg0: i32) -> (i32, i32) {
    %c0_i32 = arith.constant 0 : i32
    %c0_i32_0 = arith.constant 0 : i32
    %c0_i32_1 = arith.constant 0 : i32
    return %c0_i32, %c0_i32_0 : i32, i32
  }
  func.func @transform_2(%arg0: i32) -> (i32, i32) {
    %c0_i32 = arith.constant 0 : i32
    %c0_i32_0 = arith.constant 0 : i32
    %c0_i32_1 = arith.constant 0 : i32
    return %c0_i32, %c0_i32_0 : i32, i32
  }
  func.func @transform_3(%arg0: i32) -> (i32, i32) {
    %c0_i32 = arith.constant 0 : i32
    %c0_i32_0 = arith.constant 0 : i32
    return %c0_i32, %arg0 : i32, i32
  }
}

module attributes {stable_mosaic.version = 11 : i64} {
  func.func @_conv_kernel(%arg0: i32, %arg1: memref<208x128xbf16, #tpu.memory_space<vmem>>, %arg2: memref<8x208xbf16, #tpu.memory_space<vmem>>, %arg3: memref<8x1xf32, #tpu.memory_space<vmem>>, %arg4: memref<8x128xf32, #tpu.memory_space<vmem>>) attributes {dimension_semantics = [#tpu.dimension_semantics<parallel>], iteration_bounds = array<i64: 1>, scalar_prefetch = 0 : i64, scratch_operands = 0 : i64, tpu.core_type = #tpu.core_type<tc>, window_params = [{transform_indices = @transform_0, window_bounds = array<i64: 208, 128>}, {pipeline_mode = #tpu.pipeline_mode<synchronous>, transform_indices = @transform_1, window_bounds = array<i64: 8, 208>}, {pipeline_mode = #tpu.pipeline_mode<synchronous>, transform_indices = @transform_2, window_bounds = array<i64: 8, 1>}, {transform_indices = @transform_3, window_bounds = array<i64: 8, 128>}]} {
    %c0 = arith.constant 0 : index
    %c0_0 = arith.constant 0 : index
    %0 = vector.load %arg2[%c0, %c0_0] : memref<8x208xbf16, #tpu.memory_space<vmem>>, vector<8x208xbf16>
    %c0_1 = arith.constant 0 : index
    %c0_2 = arith.constant 0 : index
    %1 = vector.load %arg1[%c0_1, %c0_2] : memref<208x128xbf16, #tpu.memory_space<vmem>>, vector<208x128xbf16>
    %cst = arith.constant dense<0.000000e+00> : vector<8x128xf32>
    %2 = tpu.matmul %0, %1, %cst {dimension_numbers = #tpu.dot_dimension_numbers<[1], [0], [0], [1], [0, 0, 1, 1], [], []>} : vector<8x208xbf16>, vector<208x128xbf16>, vector<8x128xf32> -> vector<8x128xf32>
    %c0_3 = arith.constant 0 : index
    %c0_4 = arith.constant 0 : index
    %3 = vector.load %arg3[%c0_3, %c0_4] : memref<8x1xf32, #tpu.memory_space<vmem>>, vector<8x1xf32>
    %4 = vector.broadcast %3 : vector<8x1xf32> to vector<8x128xf32>
    %5 = arith.addf %2, %4 : vector<8x128xf32>
    %cst_5 = arith.constant 0.000000e+00 : f32
    %6 = vector.broadcast %cst_5 : f32 to vector<8x128xf32>
    %7 = arith.cmpf oge, %5, %6 : vector<8x128xf32>
    %cst_6 = arith.constant 0.00999999977 : f32
    %8 = vector.broadcast %cst_6 : f32 to vector<8x128xf32>
    %9 = arith.mulf %8, %5 : vector<8x128xf32>
    %10 = arith.select %7, %5, %9 : vector<8x128xi1>, vector<8x128xf32>
    %c0_7 = arith.constant 0 : index
    %c0_8 = arith.constant 0 : index
    %11 = vector.load %arg4[%c0_7, %c0_8] : memref<8x128xf32, #tpu.memory_space<vmem>>, vector<8x128xf32>
    tpu.vector_store %arg4[%c0_7, %c0_8], %10 {strides = array<i32>} : memref<8x128xf32, #tpu.memory_space<vmem>>, vector<8x128xf32>,
    return
  }
  func.func @transform_0(%arg0: i32) -> (i32, i32) {
    %c0_i32 = arith.constant 0 : i32
    %c0_i32_0 = arith.constant 0 : i32
    return %c0_i32, %arg0 : i32, i32
  }
  func.func @transform_1(%arg0: i32) -> (i32, i32) {
    %c0_i32 = arith.constant 0 : i32
    %c0_i32_0 = arith.constant 0 : i32
    %c0_i32_1 = arith.constant 0 : i32
    return %c0_i32, %c0_i32_0 : i32, i32
  }
  func.func @transform_2(%arg0: i32) -> (i32, i32) {
    %c0_i32 = arith.constant 0 : i32
    %c0_i32_0 = arith.constant 0 : i32
    %c0_i32_1 = arith.constant 0 : i32
    return %c0_i32, %c0_i32_0 : i32, i32
  }
  func.func @transform_3(%arg0: i32) -> (i32, i32) {
    %c0_i32 = arith.constant 0 : i32
    %c0_i32_0 = arith.constant 0 : i32
    return %c0_i32, %arg0 : i32, i32
  }
}

module attributes {stable_mosaic.version = 11 : i64} {
  func.func @_conv_kernel(%arg0: i32, %arg1: memref<208x128xbf16, #tpu.memory_space<vmem>>, %arg2: memref<8x208xbf16, #tpu.memory_space<vmem>>, %arg3: memref<8x1xf32, #tpu.memory_space<vmem>>, %arg4: memref<8x128xf32, #tpu.memory_space<vmem>>) attributes {dimension_semantics = [#tpu.dimension_semantics<parallel>], iteration_bounds = array<i64: 1>, scalar_prefetch = 0 : i64, scratch_operands = 0 : i64, tpu.core_type = #tpu.core_type<tc>, window_params = [{transform_indices = @transform_0, window_bounds = array<i64: 208, 128>}, {pipeline_mode = #tpu.pipeline_mode<synchronous>, transform_indices = @transform_1, window_bounds = array<i64: 8, 208>}, {pipeline_mode = #tpu.pipeline_mode<synchronous>, transform_indices = @transform_2, window_bounds = array<i64: 8, 1>}, {transform_indices = @transform_3, window_bounds = array<i64: 8, 128>}]} {
    %c0 = arith.constant 0 : index
    %c0_0 = arith.constant 0 : index
    %0 = vector.load %arg2[%c0, %c0_0] : memref<8x208xbf16, #tpu.memory_space<vmem>>, vector<8x208xbf16>
    %c0_1 = arith.constant 0 : index
    %c0_2 = arith.constant 0 : index
    %1 = vector.load %arg1[%c0_1, %c0_2] : memref<208x128xbf16, #tpu.memory_space<vmem>>, vector<208x128xbf16>
    %cst = arith.constant dense<0.000000e+00> : vector<8x128xf32>
    %2 = tpu.matmul %0, %1, %cst {dimension_numbers = #tpu.dot_dimension_numbers<[1], [0], [0], [1], [0, 0, 1, 1], [], []>} : vector<8x208xbf16>, vector<208x128xbf16>, vector<8x128xf32> -> vector<8x128xf32>
    %c0_3 = arith.constant 0 : index
    %c0_4 = arith.constant 0 : index
    %3 = vector.load %arg3[%c0_3, %c0_4] : memref<8x1xf32, #tpu.memory_space<vmem>>, vector<8x1xf32>
    %4 = vector.broadcast %3 : vector<8x1xf32> to vector<8x128xf32>
    %5 = arith.addf %2, %4 : vector<8x128xf32>
    %c0_5 = arith.constant 0 : index
    %c0_6 = arith.constant 0 : index
    %6 = vector.load %arg4[%c0_5, %c0_6] : memref<8x128xf32, #tpu.memory_space<vmem>>, vector<8x128xf32>
    tpu.vector_store %arg4[%c0_5, %c0_6], %5 {strides = array<i32>} : memref<8x128xf32, #tpu.memory_space<vmem>>, vector<8x128xf32>,
    return
  }
  func.func @transform_0(%arg0: i32) -> (i32, i32) {
    %c0_i32 = arith.constant 0 : i32
    %c0_i32_0 = arith.constant 0 : i32
    return %c0_i32, %arg0 : i32, i32
  }
  func.func @transform_1(%arg0: i32) -> (i32, i32) {
    %c0_i32 = arith.constant 0 : i32
    %c0_i32_0 = arith.constant 0 : i32
    %c0_i32_1 = arith.constant 0 : i32
    return %c0_i32, %c0_i32_0 : i32, i32
  }
  func.func @transform_2(%arg0: i32) -> (i32, i32) {
    %c0_i32 = arith.constant 0 : i32
    %c0_i32_0 = arith.constant 0 : i32
    %c0_i32_1 = arith.constant 0 : i32
    return %c0_i32, %c0_i32_0 : i32, i32
  }
  func.func @transform_3(%arg0: i32) -> (i32, i32) {
    %c0_i32 = arith.constant 0 : i32
    %c0_i32_0 = arith.constant 0 : i32
    return %c0_i32, %arg0 : i32, i32
  }
}

module attributes {stable_mosaic.version = 11 : i64} {
  func.func @_eb_kernel(%arg0: memref<8x128xf32, #tpu.memory_space<vmem>>, %arg1: memref<8x1xf32, #tpu.memory_space<vmem>>, %arg2: memref<8x3xf32, #tpu.memory_space<vmem>>, %arg3: memref<8x3xf32, #tpu.memory_space<vmem>>, %arg4: memref<8x3xf32, #tpu.memory_space<vmem>>, %arg5: memref<8x9xf32, #tpu.memory_space<vmem>>, %arg6: memref<8x3xf32, #tpu.memory_space<vmem>>, %arg7: memref<8x3xf32, #tpu.memory_space<vmem>>, %arg8: memref<8x9xf32, #tpu.memory_space<vmem>>, %arg9: memref<8x3xf32, #tpu.memory_space<vmem>>, %arg10: memref<8x3xf32, #tpu.memory_space<vmem>>, %arg11: memref<8x3xf32, #tpu.memory_space<vmem>>, %arg12: memref<8x1xf32, #tpu.memory_space<vmem>>, %arg13: memref<8x128xf32, #tpu.memory_space<vmem>>, %arg14: memref<8x128xf32, #tpu.memory_space<vmem>>) attributes {dimension_semantics = [], scalar_prefetch = 0 : i64, scratch_operands = 0 : i64, tpu.core_type = #tpu.core_type<tc>} {
    %c0 = arith.constant 0 : index
    %c0_0 = arith.constant 0 : index
    %0 = vector.load %arg1[%c0, %c0_0] : memref<8x1xf32, #tpu.memory_space<vmem>>, vector<8x1xf32>
    %c0_1 = arith.constant 0 : index
    %c0_2 = arith.constant 0 : index
    %1 = vector.load %arg0[%c0_1, %c0_2] : memref<8x128xf32, #tpu.memory_space<vmem>>, vector<8x128xf32>
    %2 = vector.broadcast %0 : vector<8x1xf32> to vector<8x128xf32>
    %3 = arith.subf %1, %2 : vector<8x128xf32>
    %4 = math.roundeven %3 : vector<8x128xf32>
    %5 = vector.broadcast %0 : vector<8x1xf32> to vector<8x128xf32>
    %6 = arith.addf %4, %5 : vector<8x128xf32>
    %c0_3 = arith.constant 0 : index
    %c0_4 = arith.constant 0 : index
    %7 = vector.load %arg2[%c0_3, %c0_4] : memref<8x3xf32, #tpu.memory_space<vmem>>, vector<8x3xf32>
    %cst = arith.constant 0.000000e+00 : f32
    %8 = vector.broadcast %cst : f32 to vector<8x3xf32>
    %9 = arith.maximumf %7, %8 : vector<8x3xf32>
    %10 = math.absf %7 : vector<8x3xf32>
    %cst_5 = arith.constant 0.000000e+00 : f32
    %11 = vector.broadcast %cst_5 : f32 to vector<8x3xf32>
    %12 = arith.subf %11, %10 : vector<8x3xf32>
    %13 = math.exp %12 : vector<8x3xf32>
    %cst_6 = arith.constant 1.000000e+00 : f32
    %14 = vector.broadcast %cst_6 : f32 to vector<8x3xf32>
    %15 = arith.addf %14, %13 : vector<8x3xf32>
    %16 = math.log %15 : vector<8x3xf32>
    %17 = arith.addf %9, %16 : vector<8x3xf32>
    %c0_7 = arith.constant 0 : index
    %c0_8 = arith.constant 0 : index
    %18 = vector.load %arg3[%c0_7, %c0_8] : memref<8x3xf32, #tpu.memory_space<vmem>>, vector<8x3xf32>
    %c0_9 = arith.constant 0 : index
    %c0_10 = arith.constant 0 : index
    %19 = vector.load %arg4[%c0_9, %c0_10] : memref<8x3xf32, #tpu.memory_space<vmem>>, vector<8x3xf32>
    %20 = math.tanh %19 : vector<8x3xf32>
    %c0_11 = arith.constant 0 : index
    %c0_12 = arith.constant 0 : index
    %21 = vector.load %arg5[%c0_11, %c0_12] : memref<8x9xf32, #tpu.memory_space<vmem>>, vector<8x9xf32>
    %cst_13 = arith.constant 0.000000e+00 : f32
    %22 = vector.broadcast %cst_13 : f32 to vector<8x9xf32>
    %23 = arith.maximumf %21, %22 : vector<8x9xf32>
    %24 = math.absf %21 : vector<8x9xf32>
    %cst_14 = arith.constant 0.000000e+00 : f32
    %25 = vector.broadcast %cst_14 : f32 to vector<8x9xf32>
    %26 = arith.subf %25, %24 : vector<8x9xf32>
    %27 = math.exp %26 : vector<8x9xf32>
    %cst_15 = arith.constant 1.000000e+00 : f32
    %28 = vector.broadcast %cst_15 : f32 to vector<8x9xf32>
    %29 = arith.addf %28, %27 : vector<8x9xf32>
    %30 = math.log %29 : vector<8x9xf32>
    %31 = arith.addf %23, %30 : vector<8x9xf32>
    %c0_16 = arith.constant 0 : index
    %c0_17 = arith.constant 0 : index
    %32 = vector.load %arg6[%c0_16, %c0_17] : memref<8x3xf32, #tpu.memory_space<vmem>>, vector<8x3xf32>
    %c0_18 = arith.constant 0 : index
    %c0_19 = arith.constant 0 : index
    %33 = vector.load %arg7[%c0_18, %c0_19] : memref<8x3xf32, #tpu.memory_space<vmem>>, vector<8x3xf32>
    %34 = math.tanh %33 : vector<8x3xf32>
    %c0_20 = arith.constant 0 : index
    %c0_21 = arith.constant 0 : index
    %35 = vector.load %arg8[%c0_20, %c0_21] : memref<8x9xf32, #tpu.memory_space<vmem>>, vector<8x9xf32>
    %cst_22 = arith.constant 0.000000e+00 : f32
    %36 = vector.broadcast %cst_22 : f32 to vector<8x9xf32>
    %37 = arith.maximumf %35, %36 : vector<8x9xf32>
    %38 = math.absf %35 : vector<8x9xf32>
    %cst_23 = arith.constant 0.000000e+00 : f32
    %39 = vector.broadcast %cst_23 : f32 to vector<8x9xf32>
    %40 = arith.subf %39, %38 : vector<8x9xf32>
    %41 = math.exp %40 : vector<8x9xf32>
    %cst_24 = arith.constant 1.000000e+00 : f32
    %42 = vector.broadcast %cst_24 : f32 to vector<8x9xf32>
    %43 = arith.addf %42, %41 : vector<8x9xf32>
    %44 = math.log %43 : vector<8x9xf32>
    %45 = arith.addf %37, %44 : vector<8x9xf32>
    %c0_25 = arith.constant 0 : index
    %c0_26 = arith.constant 0 : index
    %46 = vector.load %arg9[%c0_25, %c0_26] : memref<8x3xf32, #tpu.memory_space<vmem>>, vector<8x3xf32>
    %c0_27 = arith.constant 0 : index
    %c0_28 = arith.constant 0 : index
    %47 = vector.load %arg10[%c0_27, %c0_28] : memref<8x3xf32, #tpu.memory_space<vmem>>, vector<8x3xf32>
    %48 = math.tanh %47 : vector<8x3xf32>
    %c0_29 = arith.constant 0 : index
    %c0_30 = arith.constant 0 : index
    %49 = vector.load %arg11[%c0_29, %c0_30] : memref<8x3xf32, #tpu.memory_space<vmem>>, vector<8x3xf32>
    %cst_31 = arith.constant 0.000000e+00 : f32
    %50 = vector.broadcast %cst_31 : f32 to vector<8x3xf32>
    %51 = arith.maximumf %49, %50 : vector<8x3xf32>
    %52 = math.absf %49 : vector<8x3xf32>
    %cst_32 = arith.constant 0.000000e+00 : f32
    %53 = vector.broadcast %cst_32 : f32 to vector<8x3xf32>
    %54 = arith.subf %53, %52 : vector<8x3xf32>
    %55 = math.exp %54 : vector<8x3xf32>
    %cst_33 = arith.constant 1.000000e+00 : f32
    %56 = vector.broadcast %cst_33 : f32 to vector<8x3xf32>
    %57 = arith.addf %56, %55 : vector<8x3xf32>
    %58 = math.log %57 : vector<8x3xf32>
    %59 = arith.addf %51, %58 : vector<8x3xf32>
    %c0_34 = arith.constant 0 : index
    %c0_35 = arith.constant 0 : index
    %60 = vector.load %arg12[%c0_34, %c0_35] : memref<8x1xf32, #tpu.memory_space<vmem>>, vector<8x1xf32>
    %cst_36 = arith.constant 5.000000e-01 : f32
    %61 = vector.broadcast %cst_36 : f32 to vector<8x128xf32>
    %62 = arith.subf %6, %61 : vector<8x128xf32>
    %63 = vector.extract_strided_slice %18 {offsets = [0, 0], sizes = [8, 1], strides = [1, 1]} : vector<8x3xf32> to vector<8x1xf32>
    %64 = vector.extract_strided_slice %17 {offsets = [0, 0], sizes = [8, 1], strides = [1, 1]} : vector<8x3xf32> to vector<8x1xf32>
    %65 = vector.broadcast %64 : vector<8x1xf32> to vector<8x128xf32>
    %66 = arith.mulf %65, %62 : vector<8x128xf32>
    %67 = vector.broadcast %63 : vector<8x1xf32> to vector<8x128xf32>
    %68 = arith.addf %67, %66 : vector<8x128xf32>
    %69 = vector.extract_strided_slice %20 {offsets = [0, 0], sizes = [8, 1], strides = [1, 1]} : vector<8x3xf32> to vector<8x1xf32>
    %70 = math.tanh %68 : vector<8x128xf32>
    %71 = vector.broadcast %69 : vector<8x1xf32> to vector<8x128xf32>
    %72 = arith.mulf %71, %70 : vector<8x128xf32>
    %73 = arith.addf %68, %72 : vector<8x128xf32>
    %74 = vector.extract_strided_slice %18 {offsets = [0, 1], sizes = [8, 1], strides = [1, 1]} : vector<8x3xf32> to vector<8x1xf32>
    %75 = vector.extract_strided_slice %17 {offsets = [0, 1], sizes = [8, 1], strides = [1, 1]} : vector<8x3xf32> to vector<8x1xf32>
    %76 = vector.broadcast %75 : vector<8x1xf32> to vector<8x128xf32>
    %77 = arith.mulf %76, %62 : vector<8x128xf32>
    %78 = vector.broadcast %74 : vector<8x1xf32> to vector<8x128xf32>
    %79 = arith.addf %78, %77 : vector<8x128xf32>
    %80 = vector.extract_strided_slice %20 {offsets = [0, 1], sizes = [8, 1], strides = [1, 1]} : vector<8x3xf32> to vector<8x1xf32>
    %81 = math.tanh %79 : vector<8x128xf32>
    %82 = vector.broadcast %80 : vector<8x1xf32> to vector<8x128xf32>
    %83 = arith.mulf %82, %81 : vector<8x128xf32>
    %84 = arith.addf %79, %83 : vector<8x128xf32>
    %85 = vector.extract_strided_slice %18 {offsets = [0, 2], sizes = [8, 1], strides = [1, 1]} : vector<8x3xf32> to vector<8x1xf32>
    %86 = vector.extract_strided_slice %17 {offsets = [0, 2], sizes = [8, 1], strides = [1, 1]} : vector<8x3xf32> to vector<8x1xf32>
    %87 = vector.broadcast %86 : vector<8x1xf32> to vector<8x128xf32>
    %88 = arith.mulf %87, %62 : vector<8x128xf32>
    %89 = vector.broadcast %85 : vector<8x1xf32> to vector<8x128xf32>
    %90 = arith.addf %89, %88 : vector<8x128xf32>
    %91 = vector.extract_strided_slice %20 {offsets = [0, 2], sizes = [8, 1], strides = [1, 1]} : vector<8x3xf32> to vector<8x1xf32>
    %92 = math.tanh %90 : vector<8x128xf32>
    %93 = vector.broadcast %91 : vector<8x1xf32> to vector<8x128xf32>
    %94 = arith.mulf %93, %92 : vector<8x128xf32>
    %95 = arith.addf %90, %94 : vector<8x128xf32>
    %96 = vector.extract_strided_slice %32 {offsets = [0, 0], sizes = [8, 1], strides = [1, 1]} : vector<8x3xf32> to vector<8x1xf32>
    %97 = vector.extract_strided_slice %31 {offsets = [0, 0], sizes = [8, 1], strides = [1, 1]} : vector<8x9xf32> to vector<8x1xf32>
    %98 = vector.broadcast %97 : vector<8x1xf32> to vector<8x128xf32>
    %99 = arith.mulf %98, %73 : vector<8x128xf32>
    %100 = vector.broadcast %96 : vector<8x1xf32> to vector<8x128xf32>
    %101 = arith.addf %100, %99 : vector<8x128xf32>
    %102 = vector.extract_strided_slice %31 {offsets = [0, 1], sizes = [8, 1], strides = [1, 1]} : vector<8x9xf32> to vector<8x1xf32>
    %103 = vector.broadcast %102 : vector<8x1xf32> to vector<8x128xf32>
    %104 = arith.mulf %103, %84 : vector<8x128xf32>
    %105 = arith.addf %101, %104 : vector<8x128xf32>
    %106 = vector.extract_strided_slice %31 {offsets = [0, 2], sizes = [8, 1], strides = [1, 1]} : vector<8x9xf32> to vector<8x1xf32>
    %107 = vector.broadcast %106 : vector<8x1xf32> to vector<8x128xf32>
    %108 = arith.mulf %107, %95 : vector<8x128xf32>
    %109 = arith.addf %105, %108 : vector<8x128xf32>
    %110 = vector.extract_strided_slice %34 {offsets = [0, 0], sizes = [8, 1], strides = [1, 1]} : vector<8x3xf32> to vector<8x1xf32>
    %111 = math.tanh %109 : vector<8x128xf32>
    %112 = vector.broadcast %110 : vector<8x1xf32> to vector<8x128xf32>
    %113 = arith.mulf %112, %111 : vector<8x128xf32>
    %114 = arith.addf %109, %113 : vector<8x128xf32>
    %115 = vector.extract_strided_slice %32 {offsets = [0, 1], sizes = [8, 1], strides = [1, 1]} : vector<8x3xf32> to vector<8x1xf32>
    %116 = vector.extract_strided_slice %31 {offsets = [0, 3], sizes = [8, 1], strides = [1, 1]} : vector<8x9xf32> to vector<8x1xf32>
    %117 = vector.broadcast %116 : vector<8x1xf32> to vector<8x128xf32>
    %118 = arith.mulf %117, %73 : vector<8x128xf32>
    %119 = vector.broadcast %115 : vector<8x1xf32> to vector<8x128xf32>
    %120 = arith.addf %119, %118 : vector<8x128xf32>
    %121 = vector.extract_strided_slice %31 {offsets = [0, 4], sizes = [8, 1], strides = [1, 1]} : vector<8x9xf32> to vector<8x1xf32>
    %122 = vector.broadcast %121 : vector<8x1xf32> to vector<8x128xf32>
    %123 = arith.mulf %122, %84 : vector<8x128xf32>
    %124 = arith.addf %120, %123 : vector<8x128xf32>
    %125 = vector.extract_strided_slice %31 {offsets = [0, 5], sizes = [8, 1], strides = [1, 1]} : vector<8x9xf32> to vector<8x1xf32>
    %126 = vector.broadcast %125 : vector<8x1xf32> to vector<8x128xf32>
    %127 = arith.mulf %126, %95 : vector<8x128xf32>
    %128 = arith.addf %124, %127 : vector<8x128xf32>
    %129 = vector.extract_strided_slice %34 {offsets = [0, 1], sizes = [8, 1], strides = [1, 1]} : vector<8x3xf32> to vector<8x1xf32>
    %130 = math.tanh %128 : vector<8x128xf32>
    %131 = vector.broadcast %129 : vector<8x1xf32> to vector<8x128xf32>
    %132 = arith.mulf %131, %130 : vector<8x128xf32>
    %133 = arith.addf %128, %132 : vector<8x128xf32>
    %134 = vector.extract_strided_slice %32 {offsets = [0, 2], sizes = [8, 1], strides = [1, 1]} : vector<8x3xf32> to vector<8x1xf32>
    %135 = vector.extract_strided_slice %31 {offsets = [0, 6], sizes = [8, 1], strides = [1, 1]} : vector<8x9xf32> to vector<8x1xf32>
    %136 = vector.broadcast %135 : vector<8x1xf32> to vector<8x128xf32>
    %137 = arith.mulf %136, %73 : vector<8x128xf32>
    %138 = vector.broadcast %134 : vector<8x1xf32> to vector<8x128xf32>
    %139 = arith.addf %138, %137 : vector<8x128xf32>
    %140 = vector.extract_strided_slice %31 {offsets = [0, 7], sizes = [8, 1], strides = [1, 1]} : vector<8x9xf32> to vector<8x1xf32>
    %141 = vector.broadcast %140 : vector<8x1xf32> to vector<8x128xf32>
    %142 = arith.mulf %141, %84 : vector<8x128xf32>
    %143 = arith.addf %139, %142 : vector<8x128xf32>
    %144 = vector.extract_strided_slice %31 {offsets = [0, 8], sizes = [8, 1], strides = [1, 1]} : vector<8x9xf32> to vector<8x1xf32>
    %145 = vector.broadcast %144 : vector<8x1xf32> to vector<8x128xf32>
    %146 = arith.mulf %145, %95 : vector<8x128xf32>
    %147 = arith.addf %143, %146 : vector<8x128xf32>
    %148 = vector.extract_strided_slice %34 {offsets = [0, 2], sizes = [8, 1], strides = [1, 1]} : vector<8x3xf32> to vector<8x1xf32>
    %149 = math.tanh %147 : vector<8x128xf32>
    %150 = vector.broadcast %148 : vector<8x1xf32> to vector<8x128xf32>
    %151 = arith.mulf %150, %149 : vector<8x128xf32>
    %152 = arith.addf %147, %151 : vector<8x128xf32>
    %153 = vector.extract_strided_slice %46 {offsets = [0, 0], sizes = [8, 1], strides = [1, 1]} : vector<8x3xf32> to vector<8x1xf32>
    %154 = vector.extract_strided_slice %45 {offsets = [0, 0], sizes = [8, 1], strides = [1, 1]} : vector<8x9xf32> to vector<8x1xf32>
    %155 = vector.broadcast %154 : vector<8x1xf32> to vector<8x128xf32>
    %156 = arith.mulf %155, %114 : vector<8x128xf32>
    %157 = vector.broadcast %153 : vector<8x1xf32> to vector<8x128xf32>
    %158 = arith.addf %157, %156 : vector<8x128xf32>
    %159 = vector.extract_strided_slice %45 {offsets = [0, 1], sizes = [8, 1], strides = [1, 1]} : vector<8x9xf32> to vector<8x1xf32>
    %160 = vector.broadcast %159 : vector<8x1xf32> to vector<8x128xf32>
    %161 = arith.mulf %160, %133 : vector<8x128xf32>
    %162 = arith.addf %158, %161 : vector<8x128xf32>
    %163 = vector.extract_strided_slice %45 {offsets = [0, 2], sizes = [8, 1], strides = [1, 1]} : vector<8x9xf32> to vector<8x1xf32>
    %164 = vector.broadcast %163 : vector<8x1xf32> to vector<8x128xf32>
    %165 = arith.mulf %164, %152 : vector<8x128xf32>
    %166 = arith.addf %162, %165 : vector<8x128xf32>
    %167 = vector.extract_strided_slice %48 {offsets = [0, 0], sizes = [8, 1], strides = [1, 1]} : vector<8x3xf32> to vector<8x1xf32>
    %168 = math.tanh %166 : vector<8x128xf32>
    %169 = vector.broadcast %167 : vector<8x1xf32> to vector<8x128xf32>
    %170 = arith.mulf %169, %168 : vector<8x128xf32>
    %171 = arith.addf %166, %170 : vector<8x128xf32>
    %172 = vector.extract_strided_slice %46 {offsets = [0, 1], sizes = [8, 1], strides = [1, 1]} : vector<8x3xf32> to vector<8x1xf32>
    %173 = vector.extract_strided_slice %45 {offsets = [0, 3], sizes = [8, 1], strides = [1, 1]} : vector<8x9xf32> to vector<8x1xf32>
    %174 = vector.broadcast %173 : vector<8x1xf32> to vector<8x128xf32>
    %175 = arith.mulf %174, %114 : vector<8x128xf32>
    %176 = vector.broadcast %172 : vector<8x1xf32> to vector<8x128xf32>
    %177 = arith.addf %176, %175 : vector<8x128xf32>
    %178 = vector.extract_strided_slice %45 {offsets = [0, 4], sizes = [8, 1], strides = [1, 1]} : vector<8x9xf32> to vector<8x1xf32>
    %179 = vector.broadcast %178 : vector<8x1xf32> to vector<8x128xf32>
    %180 = arith.mulf %179, %133 : vector<8x128xf32>
    %181 = arith.addf %177, %180 : vector<8x128xf32>
    %182 = vector.extract_strided_slice %45 {offsets = [0, 5], sizes = [8, 1], strides = [1, 1]} : vector<8x9xf32> to vector<8x1xf32>
    %183 = vector.broadcast %182 : vector<8x1xf32> to vector<8x128xf32>
    %184 = arith.mulf %183, %152 : vector<8x128xf32>
    %185 = arith.addf %181, %184 : vector<8x128xf32>
    %186 = vector.extract_strided_slice %48 {offsets = [0, 1], sizes = [8, 1], strides = [1, 1]} : vector<8x3xf32> to vector<8x1xf32>
    %187 = math.tanh %185 : vector<8x128xf32>
    %188 = vector.broadcast %186 : vector<8x1xf32> to vector<8x128xf32>
    %189 = arith.mulf %188, %187 : vector<8x128xf32>
    %190 = arith.addf %185, %189 : vector<8x128xf32>
    %191 = vector.extract_strided_slice %46 {offsets = [0, 2], sizes = [8, 1], strides = [1, 1]} : vector<8x3xf32> to vector<8x1xf32>
    %192 = vector.extract_strided_slice %45 {offsets = [0, 6], sizes = [8, 1], strides = [1, 1]} : vector<8x9xf32> to vector<8x1xf32>
    %193 = vector.broadcast %192 : vector<8x1xf32> to vector<8x128xf32>
    %194 = arith.mulf %193, %114 : vector<8x128xf32>
    %195 = vector.broadcast %191 : vector<8x1xf32> to vector<8x128xf32>
    %196 = arith.addf %195, %194 : vector<8x128xf32>
    %197 = vector.extract_strided_slice %45 {offsets = [0, 7], sizes = [8, 1], strides = [1, 1]} : vector<8x9xf32> to vector<8x1xf32>
    %198 = vector.broadcast %197 : vector<8x1xf32> to vector<8x128xf32>
    %199 = arith.mulf %198, %133 : vector<8x128xf32>
    %200 = arith.addf %196, %199 : vector<8x128xf32>
    %201 = vector.extract_strided_slice %45 {offsets = [0, 8], sizes = [8, 1], strides = [1, 1]} : vector<8x9xf32> to vector<8x1xf32>
    %202 = vector.broadcast %201 : vector<8x1xf32> to vector<8x128xf32>
    %203 = arith.mulf %202, %152 : vector<8x128xf32>
    %204 = arith.addf %200, %203 : vector<8x128xf32>
    %205 = vector.extract_strided_slice %48 {offsets = [0, 2], sizes = [8, 1], strides = [1, 1]} : vector<8x3xf32> to vector<8x1xf32>
    %206 = math.tanh %204 : vector<8x128xf32>
    %207 = vector.broadcast %205 : vector<8x1xf32> to vector<8x128xf32>
    %208 = arith.mulf %207, %206 : vector<8x128xf32>
    %209 = arith.addf %204, %208 : vector<8x128xf32>
    %210 = vector.extract_strided_slice %59 {offsets = [0, 0], sizes = [8, 1], strides = [1, 1]} : vector<8x3xf32> to vector<8x1xf32>
    %211 = vector.broadcast %210 : vector<8x1xf32> to vector<8x128xf32>
    %212 = arith.mulf %211, %171 : vector<8x128xf32>
    %213 = vector.broadcast %60 : vector<8x1xf32> to vector<8x128xf32>
    %214 = arith.addf %213, %212 : vector<8x128xf32>
    %215 = vector.extract_strided_slice %59 {offsets = [0, 1], sizes = [8, 1], strides = [1, 1]} : vector<8x3xf32> to vector<8x1xf32>
    %216 = vector.broadcast %215 : vector<8x1xf32> to vector<8x128xf32>
    %217 = arith.mulf %216, %190 : vector<8x128xf32>
    %218 = arith.addf %214, %217 : vector<8x128xf32>
    %219 = vector.extract_strided_slice %59 {offsets = [0, 2], sizes = [8, 1], strides = [1, 1]} : vector<8x3xf32> to vector<8x1xf32>
    %220 = vector.broadcast %219 : vector<8x1xf32> to vector<8x128xf32>
    %221 = arith.mulf %220, %209 : vector<8x128xf32>
    %222 = arith.addf %218, %221 : vector<8x128xf32>
    %cst_37 = arith.constant 5.000000e-01 : f32
    %223 = vector.broadcast %cst_37 : f32 to vector<8x128xf32>
    %224 = arith.addf %6, %223 : vector<8x128xf32>
    %225 = vector.extract_strided_slice %18 {offsets = [0, 0], sizes = [8, 1], strides = [1, 1]} : vector<8x3xf32> to vector<8x1xf32>
    %226 = vector.extract_strided_slice %17 {offsets = [0, 0], sizes = [8, 1], strides = [1, 1]} : vector<8x3xf32> to vector<8x1xf32>
    %227 = vector.broadcast %226 : vector<8x1xf32> to vector<8x128xf32>
    %228 = arith.mulf %227, %224 : vector<8x128xf32>
    %229 = vector.broadcast %225 : vector<8x1xf32> to vector<8x128xf32>
    %230 = arith.addf %229, %228 : vector<8x128xf32>
    %231 = vector.extract_strided_slice %20 {offsets = [0, 0], sizes = [8, 1], strides = [1, 1]} : vector<8x3xf32> to vector<8x1xf32>
    %232 = math.tanh %230 : vector<8x128xf32>
    %233 = vector.broadcast %231 : vector<8x1xf32> to vector<8x128xf32>
    %234 = arith.mulf %233, %232 : vector<8x128xf32>
    %235 = arith.addf %230, %234 : vector<8x128xf32>
    %236 = vector.extract_strided_slice %18 {offsets = [0, 1], sizes = [8, 1], strides = [1, 1]} : vector<8x3xf32> to vector<8x1xf32>
    %237 = vector.extract_strided_slice %17 {offsets = [0, 1], sizes = [8, 1], strides = [1, 1]} : vector<8x3xf32> to vector<8x1xf32>
    %238 = vector.broadcast %237 : vector<8x1xf32> to vector<8x128xf32>
    %239 = arith.mulf %238, %224 : vector<8x128xf32>
    %240 = vector.broadcast %236 : vector<8x1xf32> to vector<8x128xf32>
    %241 = arith.addf %240, %239 : vector<8x128xf32>
    %242 = vector.extract_strided_slice %20 {offsets = [0, 1], sizes = [8, 1], strides = [1, 1]} : vector<8x3xf32> to vector<8x1xf32>
    %243 = math.tanh %241 : vector<8x128xf32>
    %244 = vector.broadcast %242 : vector<8x1xf32> to vector<8x128xf32>
    %245 = arith.mulf %244, %243 : vector<8x128xf32>
    %246 = arith.addf %241, %245 : vector<8x128xf32>
    %247 = vector.extract_strided_slice %18 {offsets = [0, 2], sizes = [8, 1], strides = [1, 1]} : vector<8x3xf32> to vector<8x1xf32>
    %248 = vector.extract_strided_slice %17 {offsets = [0, 2], sizes = [8, 1], strides = [1, 1]} : vector<8x3xf32> to vector<8x1xf32>
    %249 = vector.broadcast %248 : vector<8x1xf32> to vector<8x128xf32>
    %250 = arith.mulf %249, %224 : vector<8x128xf32>
    %251 = vector.broadcast %247 : vector<8x1xf32> to vector<8x128xf32>
    %252 = arith.addf %251, %250 : vector<8x128xf32>
    %253 = vector.extract_strided_slice %20 {offsets = [0, 2], sizes = [8, 1], strides = [1, 1]} : vector<8x3xf32> to vector<8x1xf32>
    %254 = math.tanh %252 : vector<8x128xf32>
    %255 = vector.broadcast %253 : vector<8x1xf32> to vector<8x128xf32>
    %256 = arith.mulf %255, %254 : vector<8x128xf32>
    %257 = arith.addf %252, %256 : vector<8x128xf32>
    %258 = vector.extract_strided_slice %32 {offsets = [0, 0], sizes = [8, 1], strides = [1, 1]} : vector<8x3xf32> to vector<8x1xf32>
    %259 = vector.extract_strided_slice %31 {offsets = [0, 0], sizes = [8, 1], strides = [1, 1]} : vector<8x9xf32> to vector<8x1xf32>
    %260 = vector.broadcast %259 : vector<8x1xf32> to vector<8x128xf32>
    %261 = arith.mulf %260, %235 : vector<8x128xf32>
    %262 = vector.broadcast %258 : vector<8x1xf32> to vector<8x128xf32>
    %263 = arith.addf %262, %261 : vector<8x128xf32>
    %264 = vector.extract_strided_slice %31 {offsets = [0, 1], sizes = [8, 1], strides = [1, 1]} : vector<8x9xf32> to vector<8x1xf32>
    %265 = vector.broadcast %264 : vector<8x1xf32> to vector<8x128xf32>
    %266 = arith.mulf %265, %246 : vector<8x128xf32>
    %267 = arith.addf %263, %266 : vector<8x128xf32>
    %268 = vector.extract_strided_slice %31 {offsets = [0, 2], sizes = [8, 1], strides = [1, 1]} : vector<8x9xf32> to vector<8x1xf32>
    %269 = vector.broadcast %268 : vector<8x1xf32> to vector<8x128xf32>
    %270 = arith.mulf %269, %257 : vector<8x128xf32>
    %271 = arith.addf %267, %270 : vector<8x128xf32>
    %272 = vector.extract_strided_slice %34 {offsets = [0, 0], sizes = [8, 1], strides = [1, 1]} : vector<8x3xf32> to vector<8x1xf32>
    %273 = math.tanh %271 : vector<8x128xf32>
    %274 = vector.broadcast %272 : vector<8x1xf32> to vector<8x128xf32>
    %275 = arith.mulf %274, %273 : vector<8x128xf32>
    %276 = arith.addf %271, %275 : vector<8x128xf32>
    %277 = vector.extract_strided_slice %32 {offsets = [0, 1], sizes = [8, 1], strides = [1, 1]} : vector<8x3xf32> to vector<8x1xf32>
    %278 = vector.extract_strided_slice %31 {offsets = [0, 3], sizes = [8, 1], strides = [1, 1]} : vector<8x9xf32> to vector<8x1xf32>
    %279 = vector.broadcast %278 : vector<8x1xf32> to vector<8x128xf32>
    %280 = arith.mulf %279, %235 : vector<8x128xf32>
    %281 = vector.broadcast %277 : vector<8x1xf32> to vector<8x128xf32>
    %282 = arith.addf %281, %280 : vector<8x128xf32>
    %283 = vector.extract_strided_slice %31 {offsets = [0, 4], sizes = [8, 1], strides = [1, 1]} : vector<8x9xf32> to vector<8x1xf32>
    %284 = vector.broadcast %283 : vector<8x1xf32> to vector<8x128xf32>
    %285 = arith.mulf %284, %246 : vector<8x128xf32>
    %286 = arith.addf %282, %285 : vector<8x128xf32>
    %287 = vector.extract_strided_slice %31 {offsets = [0, 5], sizes = [8, 1], strides = [1, 1]} : vector<8x9xf32> to vector<8x1xf32>
    %288 = vector.broadcast %287 : vector<8x1xf32> to vector<8x128xf32>
    %289 = arith.mulf %288, %257 : vector<8x128xf32>
    %290 = arith.addf %286, %289 : vector<8x128xf32>
    %291 = vector.extract_strided_slice %34 {offsets = [0, 1], sizes = [8, 1], strides = [1, 1]} : vector<8x3xf32> to vector<8x1xf32>
    %292 = math.tanh %290 : vector<8x128xf32>
    %293 = vector.broadcast %291 : vector<8x1xf32> to vector<8x128xf32>
    %294 = arith.mulf %293, %292 : vector<8x128xf32>
    %295 = arith.addf %290, %294 : vector<8x128xf32>
    %296 = vector.extract_strided_slice %32 {offsets = [0, 2], sizes = [8, 1], strides = [1, 1]} : vector<8x3xf32> to vector<8x1xf32>
    %297 = vector.extract_strided_slice %31 {offsets = [0, 6], sizes = [8, 1], strides = [1, 1]} : vector<8x9xf32> to vector<8x1xf32>
    %298 = vector.broadcast %297 : vector<8x1xf32> to vector<8x128xf32>
    %299 = arith.mulf %298, %235 : vector<8x128xf32>
    %300 = vector.broadcast %296 : vector<8x1xf32> to vector<8x128xf32>
    %301 = arith.addf %300, %299 : vector<8x128xf32>
    %302 = vector.extract_strided_slice %31 {offsets = [0, 7], sizes = [8, 1], strides = [1, 1]} : vector<8x9xf32> to vector<8x1xf32>
    %303 = vector.broadcast %302 : vector<8x1xf32> to vector<8x128xf32>
    %304 = arith.mulf %303, %246 : vector<8x128xf32>
    %305 = arith.addf %301, %304 : vector<8x128xf32>
    %306 = vector.extract_strided_slice %31 {offsets = [0, 8], sizes = [8, 1], strides = [1, 1]} : vector<8x9xf32> to vector<8x1xf32>
    %307 = vector.broadcast %306 : vector<8x1xf32> to vector<8x128xf32>
    %308 = arith.mulf %307, %257 : vector<8x128xf32>
    %309 = arith.addf %305, %308 : vector<8x128xf32>
    %310 = vector.extract_strided_slice %34 {offsets = [0, 2], sizes = [8, 1], strides = [1, 1]} : vector<8x3xf32> to vector<8x1xf32>
    %311 = math.tanh %309 : vector<8x128xf32>
    %312 = vector.broadcast %310 : vector<8x1xf32> to vector<8x128xf32>
    %313 = arith.mulf %312, %311 : vector<8x128xf32>
    %314 = arith.addf %309, %313 : vector<8x128xf32>
    %315 = vector.extract_strided_slice %46 {offsets = [0, 0], sizes = [8, 1], strides = [1, 1]} : vector<8x3xf32> to vector<8x1xf32>
    %316 = vector.extract_strided_slice %45 {offsets = [0, 0], sizes = [8, 1], strides = [1, 1]} : vector<8x9xf32> to vector<8x1xf32>
    %317 = vector.broadcast %316 : vector<8x1xf32> to vector<8x128xf32>
    %318 = arith.mulf %317, %276 : vector<8x128xf32>
    %319 = vector.broadcast %315 : vector<8x1xf32> to vector<8x128xf32>
    %320 = arith.addf %319, %318 : vector<8x128xf32>
    %321 = vector.extract_strided_slice %45 {offsets = [0, 1], sizes = [8, 1], strides = [1, 1]} : vector<8x9xf32> to vector<8x1xf32>
    %322 = vector.broadcast %321 : vector<8x1xf32> to vector<8x128xf32>
    %323 = arith.mulf %322, %295 : vector<8x128xf32>
    %324 = arith.addf %320, %323 : vector<8x128xf32>
    %325 = vector.extract_strided_slice %45 {offsets = [0, 2], sizes = [8, 1], strides = [1, 1]} : vector<8x9xf32> to vector<8x1xf32>
    %326 = vector.broadcast %325 : vector<8x1xf32> to vector<8x128xf32>
    %327 = arith.mulf %326, %314 : vector<8x128xf32>
    %328 = arith.addf %324, %327 : vector<8x128xf32>
    %329 = vector.extract_strided_slice %48 {offsets = [0, 0], sizes = [8, 1], strides = [1, 1]} : vector<8x3xf32> to vector<8x1xf32>
    %330 = math.tanh %328 : vector<8x128xf32>
    %331 = vector.broadcast %329 : vector<8x1xf32> to vector<8x128xf32>
    %332 = arith.mulf %331, %330 : vector<8x128xf32>
    %333 = arith.addf %328, %332 : vector<8x128xf32>
    %334 = vector.extract_strided_slice %46 {offsets = [0, 1], sizes = [8, 1], strides = [1, 1]} : vector<8x3xf32> to vector<8x1xf32>
    %335 = vector.extract_strided_slice %45 {offsets = [0, 3], sizes = [8, 1], strides = [1, 1]} : vector<8x9xf32> to vector<8x1xf32>
    %336 = vector.broadcast %335 : vector<8x1xf32> to vector<8x128xf32>
    %337 = arith.mulf %336, %276 : vector<8x128xf32>
    %338 = vector.broadcast %334 : vector<8x1xf32> to vector<8x128xf32>
    %339 = arith.addf %338, %337 : vector<8x128xf32>
    %340 = vector.extract_strided_slice %45 {offsets = [0, 4], sizes = [8, 1], strides = [1, 1]} : vector<8x9xf32> to vector<8x1xf32>
    %341 = vector.broadcast %340 : vector<8x1xf32> to vector<8x128xf32>
    %342 = arith.mulf %341, %295 : vector<8x128xf32>
    %343 = arith.addf %339, %342 : vector<8x128xf32>
    %344 = vector.extract_strided_slice %45 {offsets = [0, 5], sizes = [8, 1], strides = [1, 1]} : vector<8x9xf32> to vector<8x1xf32>
    %345 = vector.broadcast %344 : vector<8x1xf32> to vector<8x128xf32>
    %346 = arith.mulf %345, %314 : vector<8x128xf32>
    %347 = arith.addf %343, %346 : vector<8x128xf32>
    %348 = vector.extract_strided_slice %48 {offsets = [0, 1], sizes = [8, 1], strides = [1, 1]} : vector<8x3xf32> to vector<8x1xf32>
    %349 = math.tanh %347 : vector<8x128xf32>
    %350 = vector.broadcast %348 : vector<8x1xf32> to vector<8x128xf32>
    %351 = arith.mulf %350, %349 : vector<8x128xf32>
    %352 = arith.addf %347, %351 : vector<8x128xf32>
    %353 = vector.extract_strided_slice %46 {offsets = [0, 2], sizes = [8, 1], strides = [1, 1]} : vector<8x3xf32> to vector<8x1xf32>
    %354 = vector.extract_strided_slice %45 {offsets = [0, 6], sizes = [8, 1], strides = [1, 1]} : vector<8x9xf32> to vector<8x1xf32>
    %355 = vector.broadcast %354 : vector<8x1xf32> to vector<8x128xf32>
    %356 = arith.mulf %355, %276 : vector<8x128xf32>
    %357 = vector.broadcast %353 : vector<8x1xf32> to vector<8x128xf32>
    %358 = arith.addf %357, %356 : vector<8x128xf32>
    %359 = vector.extract_strided_slice %45 {offsets = [0, 7], sizes = [8, 1], strides = [1, 1]} : vector<8x9xf32> to vector<8x1xf32>
    %360 = vector.broadcast %359 : vector<8x1xf32> to vector<8x128xf32>
    %361 = arith.mulf %360, %295 : vector<8x128xf32>
    %362 = arith.addf %358, %361 : vector<8x128xf32>
    %363 = vector.extract_strided_slice %45 {offsets = [0, 8], sizes = [8, 1], strides = [1, 1]} : vector<8x9xf32> to vector<8x1xf32>
    %364 = vector.broadcast %363 : vector<8x1xf32> to vector<8x128xf32>
    %365 = arith.mulf %364, %314 : vector<8x128xf32>
    %366 = arith.addf %362, %365 : vector<8x128xf32>
    %367 = vector.extract_strided_slice %48 {offsets = [0, 2], sizes = [8, 1], strides = [1, 1]} : vector<8x3xf32> to vector<8x1xf32>
    %368 = math.tanh %366 : vector<8x128xf32>
    %369 = vector.broadcast %367 : vector<8x1xf32> to vector<8x128xf32>
    %370 = arith.mulf %369, %368 : vector<8x128xf32>
    %371 = arith.addf %366, %370 : vector<8x128xf32>
    %372 = vector.extract_strided_slice %59 {offsets = [0, 0], sizes = [8, 1], strides = [1, 1]} : vector<8x3xf32> to vector<8x1xf32>
    %373 = vector.broadcast %372 : vector<8x1xf32> to vector<8x128xf32>
    %374 = arith.mulf %373, %333 : vector<8x128xf32>
    %375 = vector.broadcast %60 : vector<8x1xf32> to vector<8x128xf32>
    %376 = arith.addf %375, %374 : vector<8x128xf32>
    %377 = vector.extract_strided_slice %59 {offsets = [0, 1], sizes = [8, 1], strides = [1, 1]} : vector<8x3xf32> to vector<8x1xf32>
    %378 = vector.broadcast %377 : vector<8x1xf32> to vector<8x128xf32>
    %379 = arith.mulf %378, %352 : vector<8x128xf32>
    %380 = arith.addf %376, %379 : vector<8x128xf32>
    %381 = vector.extract_strided_slice %59 {offsets = [0, 2], sizes = [8, 1], strides = [1, 1]} : vector<8x3xf32> to vector<8x1xf32>
    %382 = vector.broadcast %381 : vector<8x1xf32> to vector<8x128xf32>
    %383 = arith.mulf %382, %371 : vector<8x128xf32>
    %384 = arith.addf %380, %383 : vector<8x128xf32>
    %385 = arith.addf %222, %384 : vector<8x128xf32>
    %cst_38 = arith.constant 0.000000e+00 : f32
    %386 = vector.broadcast %cst_38 : f32 to vector<8x128xf32>
    %387 = arith.cmpf ogt, %385, %386 : vector<8x128xf32>
    %cst_39 = arith.constant 0.000000e+00 : f32
    %388 = vector.broadcast %cst_39 : f32 to vector<8x128xf32>
    %389 = arith.cmpf olt, %385, %388 : vector<8x128xf32>
    %cst_40 = arith.constant 1.000000e+00 : f32
    %cst_41 = arith.constant 0.000000e+00 : f32
    %390 = vector.broadcast %cst_40 : f32 to vector<8x128xf32>
    %391 = vector.broadcast %cst_41 : f32 to vector<8x128xf32>
    %392 = arith.select %389, %390, %391 : vector<8x128xi1>, vector<8x128xf32>
    %cst_42 = arith.constant -1.000000e+00 : f32
    %393 = vector.broadcast %cst_42 : f32 to vector<8x128xf32>
    %394 = arith.select %387, %393, %392 : vector<8x128xi1>, vector<8x128xf32>
    %395 = arith.mulf %394, %384 : vector<8x128xf32>
    %cst_43 = arith.constant 0.000000e+00 : f32
    %396 = vector.broadcast %cst_43 : f32 to vector<8x128xf32>
    %397 = arith.subf %396, %395 : vector<8x128xf32>
    %398 = math.exp %397 : vector<8x128xf32>
    %cst_44 = arith.constant 1.000000e+00 : f32
    %399 = vector.broadcast %cst_44 : f32 to vector<8x128xf32>
    %400 = arith.addf %399, %398 : vector<8x128xf32>
    %cst_45 = arith.constant 1.000000e+00 : f32
    %401 = vector.broadcast %cst_45 : f32 to vector<8x128xf32>
    %402 = arith.divf %401, %400 : vector<8x128xf32>
    %403 = arith.mulf %394, %222 : vector<8x128xf32>
    %cst_46 = arith.constant 0.000000e+00 : f32
    %404 = vector.broadcast %cst_46 : f32 to vector<8x128xf32>
    %405 = arith.subf %404, %403 : vector<8x128xf32>
    %406 = math.exp %405 : vector<8x128xf32>
    %cst_47 = arith.constant 1.000000e+00 : f32
    %407 = vector.broadcast %cst_47 : f32 to vector<8x128xf32>
    %408 = arith.addf %407, %406 : vector<8x128xf32>
    %cst_48 = arith.constant 1.000000e+00 : f32
    %409 = vector.broadcast %cst_48 : f32 to vector<8x128xf32>
    %410 = arith.divf %409, %408 : vector<8x128xf32>
    %411 = arith.subf %402, %410 : vector<8x128xf32>
    %412 = math.absf %411 : vector<8x128xf32>
    %cst_49 = arith.constant 9.99999971E-10 : f32
    %413 = vector.broadcast %cst_49 : f32 to vector<8x128xf32>
    %414 = arith.maximumf %412, %413 : vector<8x128xf32>
    %c0_50 = arith.constant 0 : index
    %c0_51 = arith.constant 0 : index
    %415 = vector.load %arg13[%c0_50, %c0_51] : memref<8x128xf32, #tpu.memory_space<vmem>>, vector<8x128xf32>
    tpu.vector_store %arg13[%c0_50, %c0_51], %6 {strides = array<i32>} : memref<8x128xf32, #tpu.memory_space<vmem>>, vector<8x128xf32>,
    %c0_52 = arith.constant 0 : index
    %c0_53 = arith.constant 0 : index
    %416 = vector.load %arg14[%c0_52, %c0_53] : memref<8x128xf32, #tpu.memory_space<vmem>>, vector<8x128xf32>
    tpu.vector_store %arg14[%c0_52, %c0_53], %414 {strides = array<i32>} : memref<8x128xf32, #tpu.memory_space<vmem>>, vector<8x128xf32>,
    return
  }
}

module attributes {stable_mosaic.version = 11 : i64} {
  func.func @_conv_kernel(%arg0: i32, %arg1: memref<80x128xbf16, #tpu.memory_space<vmem>>, %arg2: memref<12x80xbf16, #tpu.memory_space<vmem>>, %arg3: memref<12x1xf32, #tpu.memory_space<vmem>>, %arg4: memref<12x128xf32, #tpu.memory_space<vmem>>) attributes {dimension_semantics = [#tpu.dimension_semantics<parallel>], iteration_bounds = array<i64: 1>, scalar_prefetch = 0 : i64, scratch_operands = 0 : i64, tpu.core_type = #tpu.core_type<tc>, window_params = [{transform_indices = @transform_0, window_bounds = array<i64: 80, 128>}, {pipeline_mode = #tpu.pipeline_mode<synchronous>, transform_indices = @transform_1, window_bounds = array<i64: 12, 80>}, {pipeline_mode = #tpu.pipeline_mode<synchronous>, transform_indices = @transform_2, window_bounds = array<i64: 12, 1>}, {transform_indices = @transform_3, window_bounds = array<i64: 12, 128>}]} {
    %c0 = arith.constant 0 : index
    %c0_0 = arith.constant 0 : index
    %0 = vector.load %arg2[%c0, %c0_0] : memref<12x80xbf16, #tpu.memory_space<vmem>>, vector<12x80xbf16>
    %c0_1 = arith.constant 0 : index
    %c0_2 = arith.constant 0 : index
    %1 = vector.load %arg1[%c0_1, %c0_2] : memref<80x128xbf16, #tpu.memory_space<vmem>>, vector<80x128xbf16>
    %cst = arith.constant dense<0.000000e+00> : vector<12x128xf32>
    %2 = tpu.matmul %0, %1, %cst {dimension_numbers = #tpu.dot_dimension_numbers<[1], [0], [0], [1], [0, 0, 1, 1], [], []>} : vector<12x80xbf16>, vector<80x128xbf16>, vector<12x128xf32> -> vector<12x128xf32>
    %c0_3 = arith.constant 0 : index
    %c0_4 = arith.constant 0 : index
    %3 = vector.load %arg3[%c0_3, %c0_4] : memref<12x1xf32, #tpu.memory_space<vmem>>, vector<12x1xf32>
    %4 = vector.broadcast %3 : vector<12x1xf32> to vector<12x128xf32>
    %5 = arith.addf %2, %4 : vector<12x128xf32>
    %cst_5 = arith.constant 0.000000e+00 : f32
    %6 = vector.broadcast %cst_5 : f32 to vector<12x128xf32>
    %7 = arith.cmpf oge, %5, %6 : vector<12x128xf32>
    %cst_6 = arith.constant 0.00999999977 : f32
    %8 = vector.broadcast %cst_6 : f32 to vector<12x128xf32>
    %9 = arith.mulf %8, %5 : vector<12x128xf32>
    %10 = arith.select %7, %5, %9 : vector<12x128xi1>, vector<12x128xf32>
    %c0_7 = arith.constant 0 : index
    %c0_8 = arith.constant 0 : index
    %11 = vector.load %arg4[%c0_7, %c0_8] : memref<12x128xf32, #tpu.memory_space<vmem>>, vector<12x128xf32>
    tpu.vector_store %arg4[%c0_7, %c0_8], %10 {strides = array<i32>} : memref<12x128xf32, #tpu.memory_space<vmem>>, vector<12x128xf32>,
    return
  }
  func.func @transform_0(%arg0: i32) -> (i32, i32) {
    %c0_i32 = arith.constant 0 : i32
    %c0_i32_0 = arith.constant 0 : i32
    return %c0_i32, %arg0 : i32, i32
  }
  func.func @transform_1(%arg0: i32) -> (i32, i32) {
    %c0_i32 = arith.constant 0 : i32
    %c0_i32_0 = arith.constant 0 : i32
    %c0_i32_1 = arith.constant 0 : i32
    return %c0_i32, %c0_i32_0 : i32, i32
  }
  func.func @transform_2(%arg0: i32) -> (i32, i32) {
    %c0_i32 = arith.constant 0 : i32
    %c0_i32_0 = arith.constant 0 : i32
    %c0_i32_1 = arith.constant 0 : i32
    return %c0_i32, %c0_i32_0 : i32, i32
  }
  func.func @transform_3(%arg0: i32) -> (i32, i32) {
    %c0_i32 = arith.constant 0 : i32
    %c0_i32_0 = arith.constant 0 : i32
    return %c0_i32, %arg0 : i32, i32
  }
}

module attributes {stable_mosaic.version = 11 : i64} {
  func.func @_conv_kernel(%arg0: i32, %arg1: memref<48x128xbf16, #tpu.memory_space<vmem>>, %arg2: memref<12x48xbf16, #tpu.memory_space<vmem>>, %arg3: memref<12x1xf32, #tpu.memory_space<vmem>>, %arg4: memref<12x128xf32, #tpu.memory_space<vmem>>) attributes {dimension_semantics = [#tpu.dimension_semantics<parallel>], iteration_bounds = array<i64: 1>, scalar_prefetch = 0 : i64, scratch_operands = 0 : i64, tpu.core_type = #tpu.core_type<tc>, window_params = [{transform_indices = @transform_0, window_bounds = array<i64: 48, 128>}, {pipeline_mode = #tpu.pipeline_mode<synchronous>, transform_indices = @transform_1, window_bounds = array<i64: 12, 48>}, {pipeline_mode = #tpu.pipeline_mode<synchronous>, transform_indices = @transform_2, window_bounds = array<i64: 12, 1>}, {transform_indices = @transform_3, window_bounds = array<i64: 12, 128>}]} {
    %c0 = arith.constant 0 : index
    %c0_0 = arith.constant 0 : index
    %0 = vector.load %arg2[%c0, %c0_0] : memref<12x48xbf16, #tpu.memory_space<vmem>>, vector<12x48xbf16>
    %c0_1 = arith.constant 0 : index
    %c0_2 = arith.constant 0 : index
    %1 = vector.load %arg1[%c0_1, %c0_2] : memref<48x128xbf16, #tpu.memory_space<vmem>>, vector<48x128xbf16>
    %cst = arith.constant dense<0.000000e+00> : vector<12x128xf32>
    %2 = tpu.matmul %0, %1, %cst {dimension_numbers = #tpu.dot_dimension_numbers<[1], [0], [0], [1], [0, 0, 1, 1], [], []>} : vector<12x48xbf16>, vector<48x128xbf16>, vector<12x128xf32> -> vector<12x128xf32>
    %c0_3 = arith.constant 0 : index
    %c0_4 = arith.constant 0 : index
    %3 = vector.load %arg3[%c0_3, %c0_4] : memref<12x1xf32, #tpu.memory_space<vmem>>, vector<12x1xf32>
    %4 = vector.broadcast %3 : vector<12x1xf32> to vector<12x128xf32>
    %5 = arith.addf %2, %4 : vector<12x128xf32>
    %cst_5 = arith.constant 0.000000e+00 : f32
    %6 = vector.broadcast %cst_5 : f32 to vector<12x128xf32>
    %7 = arith.cmpf oge, %5, %6 : vector<12x128xf32>
    %cst_6 = arith.constant 0.00999999977 : f32
    %8 = vector.broadcast %cst_6 : f32 to vector<12x128xf32>
    %9 = arith.mulf %8, %5 : vector<12x128xf32>
    %10 = arith.select %7, %5, %9 : vector<12x128xi1>, vector<12x128xf32>
    %c0_7 = arith.constant 0 : index
    %c0_8 = arith.constant 0 : index
    %11 = vector.load %arg4[%c0_7, %c0_8] : memref<12x128xf32, #tpu.memory_space<vmem>>, vector<12x128xf32>
    tpu.vector_store %arg4[%c0_7, %c0_8], %10 {strides = array<i32>} : memref<12x128xf32, #tpu.memory_space<vmem>>, vector<12x128xf32>,
    return
  }
  func.func @transform_0(%arg0: i32) -> (i32, i32) {
    %c0_i32 = arith.constant 0 : i32
    %c0_i32_0 = arith.constant 0 : i32
    return %c0_i32, %arg0 : i32, i32
  }
  func.func @transform_1(%arg0: i32) -> (i32, i32) {
    %c0_i32 = arith.constant 0 : i32
    %c0_i32_0 = arith.constant 0 : i32
    %c0_i32_1 = arith.constant 0 : i32
    return %c0_i32, %c0_i32_0 : i32, i32
  }
  func.func @transform_2(%arg0: i32) -> (i32, i32) {
    %c0_i32 = arith.constant 0 : i32
    %c0_i32_0 = arith.constant 0 : i32
    %c0_i32_1 = arith.constant 0 : i32
    return %c0_i32, %c0_i32_0 : i32, i32
  }
  func.func @transform_3(%arg0: i32) -> (i32, i32) {
    %c0_i32 = arith.constant 0 : i32
    %c0_i32_0 = arith.constant 0 : i32
    return %c0_i32, %arg0 : i32, i32
  }
}

module attributes {stable_mosaic.version = 11 : i64} {
  func.func @_conv_kernel(%arg0: i32, %arg1: memref<32x128xbf16, #tpu.memory_space<vmem>>, %arg2: memref<12x32xbf16, #tpu.memory_space<vmem>>, %arg3: memref<12x1xf32, #tpu.memory_space<vmem>>, %arg4: memref<12x128xf32, #tpu.memory_space<vmem>>) attributes {dimension_semantics = [#tpu.dimension_semantics<parallel>], iteration_bounds = array<i64: 1>, scalar_prefetch = 0 : i64, scratch_operands = 0 : i64, tpu.core_type = #tpu.core_type<tc>, window_params = [{transform_indices = @transform_0, window_bounds = array<i64: 32, 128>}, {pipeline_mode = #tpu.pipeline_mode<synchronous>, transform_indices = @transform_1, window_bounds = array<i64: 12, 32>}, {pipeline_mode = #tpu.pipeline_mode<synchronous>, transform_indices = @transform_2, window_bounds = array<i64: 12, 1>}, {transform_indices = @transform_3, window_bounds = array<i64: 12, 128>}]} {
    %c0 = arith.constant 0 : index
    %c0_0 = arith.constant 0 : index
    %0 = vector.load %arg2[%c0, %c0_0] : memref<12x32xbf16, #tpu.memory_space<vmem>>, vector<12x32xbf16>
    %c0_1 = arith.constant 0 : index
    %c0_2 = arith.constant 0 : index
    %1 = vector.load %arg1[%c0_1, %c0_2] : memref<32x128xbf16, #tpu.memory_space<vmem>>, vector<32x128xbf16>
    %cst = arith.constant dense<0.000000e+00> : vector<12x128xf32>
    %2 = tpu.matmul %0, %1, %cst {dimension_numbers = #tpu.dot_dimension_numbers<[1], [0], [0], [1], [0, 0, 1, 1], [], []>} : vector<12x32xbf16>, vector<32x128xbf16>, vector<12x128xf32> -> vector<12x128xf32>
    %c0_3 = arith.constant 0 : index
    %c0_4 = arith.constant 0 : index
    %3 = vector.load %arg3[%c0_3, %c0_4] : memref<12x1xf32, #tpu.memory_space<vmem>>, vector<12x1xf32>
    %4 = vector.broadcast %3 : vector<12x1xf32> to vector<12x128xf32>
    %5 = arith.addf %2, %4 : vector<12x128xf32>
    %cst_5 = arith.constant 0.000000e+00 : f32
    %6 = vector.broadcast %cst_5 : f32 to vector<12x128xf32>
    %7 = arith.cmpf oge, %5, %6 : vector<12x128xf32>
    %cst_6 = arith.constant 0.00999999977 : f32
    %8 = vector.broadcast %cst_6 : f32 to vector<12x128xf32>
    %9 = arith.mulf %8, %5 : vector<12x128xf32>
    %10 = arith.select %7, %5, %9 : vector<12x128xi1>, vector<12x128xf32>
    %c0_7 = arith.constant 0 : index
    %c0_8 = arith.constant 0 : index
    %11 = vector.load %arg4[%c0_7, %c0_8] : memref<12x128xf32, #tpu.memory_space<vmem>>, vector<12x128xf32>
    tpu.vector_store %arg4[%c0_7, %c0_8], %10 {strides = array<i32>} : memref<12x128xf32, #tpu.memory_space<vmem>>, vector<12x128xf32>,
    return
  }
  func.func @transform_0(%arg0: i32) -> (i32, i32) {
    %c0_i32 = arith.constant 0 : i32
    %c0_i32_0 = arith.constant 0 : i32
    return %c0_i32, %arg0 : i32, i32
  }
  func.func @transform_1(%arg0: i32) -> (i32, i32) {
    %c0_i32 = arith.constant 0 : i32
    %c0_i32_0 = arith.constant 0 : i32
    %c0_i32_1 = arith.constant 0 : i32
    return %c0_i32, %c0_i32_0 : i32, i32
  }
  func.func @transform_2(%arg0: i32) -> (i32, i32) {
    %c0_i32 = arith.constant 0 : i32
    %c0_i32_0 = arith.constant 0 : i32
    %c0_i32_1 = arith.constant 0 : i32
    return %c0_i32, %c0_i32_0 : i32, i32
  }
  func.func @transform_3(%arg0: i32) -> (i32, i32) {
    %c0_i32 = arith.constant 0 : i32
    %c0_i32_0 = arith.constant 0 : i32
    return %c0_i32, %arg0 : i32, i32
  }
}

module attributes {stable_mosaic.version = 11 : i64} {
  func.func @_conv_kernel(%arg0: i32, %arg1: memref<112x128xbf16, #tpu.memory_space<vmem>>, %arg2: memref<18x112xbf16, #tpu.memory_space<vmem>>, %arg3: memref<18x1xf32, #tpu.memory_space<vmem>>, %arg4: memref<18x128xf32, #tpu.memory_space<vmem>>) attributes {dimension_semantics = [#tpu.dimension_semantics<parallel>], iteration_bounds = array<i64: 1>, scalar_prefetch = 0 : i64, scratch_operands = 0 : i64, tpu.core_type = #tpu.core_type<tc>, window_params = [{transform_indices = @transform_0, window_bounds = array<i64: 112, 128>}, {pipeline_mode = #tpu.pipeline_mode<synchronous>, transform_indices = @transform_1, window_bounds = array<i64: 18, 112>}, {pipeline_mode = #tpu.pipeline_mode<synchronous>, transform_indices = @transform_2, window_bounds = array<i64: 18, 1>}, {transform_indices = @transform_3, window_bounds = array<i64: 18, 128>}]} {
    %c0 = arith.constant 0 : index
    %c0_0 = arith.constant 0 : index
    %0 = vector.load %arg2[%c0, %c0_0] : memref<18x112xbf16, #tpu.memory_space<vmem>>, vector<18x112xbf16>
    %c0_1 = arith.constant 0 : index
    %c0_2 = arith.constant 0 : index
    %1 = vector.load %arg1[%c0_1, %c0_2] : memref<112x128xbf16, #tpu.memory_space<vmem>>, vector<112x128xbf16>
    %cst = arith.constant dense<0.000000e+00> : vector<18x128xf32>
    %2 = tpu.matmul %0, %1, %cst {dimension_numbers = #tpu.dot_dimension_numbers<[1], [0], [0], [1], [0, 0, 1, 1], [], []>} : vector<18x112xbf16>, vector<112x128xbf16>, vector<18x128xf32> -> vector<18x128xf32>
    %c0_3 = arith.constant 0 : index
    %c0_4 = arith.constant 0 : index
    %3 = vector.load %arg3[%c0_3, %c0_4] : memref<18x1xf32, #tpu.memory_space<vmem>>, vector<18x1xf32>
    %4 = vector.broadcast %3 : vector<18x1xf32> to vector<18x128xf32>
    %5 = arith.addf %2, %4 : vector<18x128xf32>
    %cst_5 = arith.constant 0.000000e+00 : f32
    %6 = vector.broadcast %cst_5 : f32 to vector<18x128xf32>
    %7 = arith.cmpf oge, %5, %6 : vector<18x128xf32>
    %cst_6 = arith.constant 0.00999999977 : f32
    %8 = vector.broadcast %cst_6 : f32 to vector<18x128xf32>
    %9 = arith.mulf %8, %5 : vector<18x128xf32>
    %10 = arith.select %7, %5, %9 : vector<18x128xi1>, vector<18x128xf32>
    %c0_7 = arith.constant 0 : index
    %c0_8 = arith.constant 0 : index
    %11 = vector.load %arg4[%c0_7, %c0_8] : memref<18x128xf32, #tpu.memory_space<vmem>>, vector<18x128xf32>
    tpu.vector_store %arg4[%c0_7, %c0_8], %10 {strides = array<i32>} : memref<18x128xf32, #tpu.memory_space<vmem>>, vector<18x128xf32>,
    return
  }
  func.func @transform_0(%arg0: i32) -> (i32, i32) {
    %c0_i32 = arith.constant 0 : i32
    %c0_i32_0 = arith.constant 0 : i32
    return %c0_i32, %arg0 : i32, i32
  }
  func.func @transform_1(%arg0: i32) -> (i32, i32) {
    %c0_i32 = arith.constant 0 : i32
    %c0_i32_0 = arith.constant 0 : i32
    %c0_i32_1 = arith.constant 0 : i32
    return %c0_i32, %c0_i32_0 : i32, i32
  }
  func.func @transform_2(%arg0: i32) -> (i32, i32) {
    %c0_i32 = arith.constant 0 : i32
    %c0_i32_0 = arith.constant 0 : i32
    %c0_i32_1 = arith.constant 0 : i32
    return %c0_i32, %c0_i32_0 : i32, i32
  }
  func.func @transform_3(%arg0: i32) -> (i32, i32) {
    %c0_i32 = arith.constant 0 : i32
    %c0_i32_0 = arith.constant 0 : i32
    return %c0_i32, %arg0 : i32, i32
  }
}

module attributes {stable_mosaic.version = 11 : i64} {
  func.func @_conv_kernel(%arg0: i32, %arg1: memref<80x128xbf16, #tpu.memory_space<vmem>>, %arg2: memref<18x80xbf16, #tpu.memory_space<vmem>>, %arg3: memref<18x1xf32, #tpu.memory_space<vmem>>, %arg4: memref<18x128xf32, #tpu.memory_space<vmem>>) attributes {dimension_semantics = [#tpu.dimension_semantics<parallel>], iteration_bounds = array<i64: 1>, scalar_prefetch = 0 : i64, scratch_operands = 0 : i64, tpu.core_type = #tpu.core_type<tc>, window_params = [{transform_indices = @transform_0, window_bounds = array<i64: 80, 128>}, {pipeline_mode = #tpu.pipeline_mode<synchronous>, transform_indices = @transform_1, window_bounds = array<i64: 18, 80>}, {pipeline_mode = #tpu.pipeline_mode<synchronous>, transform_indices = @transform_2, window_bounds = array<i64: 18, 1>}, {transform_indices = @transform_3, window_bounds = array<i64: 18, 128>}]} {
    %c0 = arith.constant 0 : index
    %c0_0 = arith.constant 0 : index
    %0 = vector.load %arg2[%c0, %c0_0] : memref<18x80xbf16, #tpu.memory_space<vmem>>, vector<18x80xbf16>
    %c0_1 = arith.constant 0 : index
    %c0_2 = arith.constant 0 : index
    %1 = vector.load %arg1[%c0_1, %c0_2] : memref<80x128xbf16, #tpu.memory_space<vmem>>, vector<80x128xbf16>
    %cst = arith.constant dense<0.000000e+00> : vector<18x128xf32>
    %2 = tpu.matmul %0, %1, %cst {dimension_numbers = #tpu.dot_dimension_numbers<[1], [0], [0], [1], [0, 0, 1, 1], [], []>} : vector<18x80xbf16>, vector<80x128xbf16>, vector<18x128xf32> -> vector<18x128xf32>
    %c0_3 = arith.constant 0 : index
    %c0_4 = arith.constant 0 : index
    %3 = vector.load %arg3[%c0_3, %c0_4] : memref<18x1xf32, #tpu.memory_space<vmem>>, vector<18x1xf32>
    %4 = vector.broadcast %3 : vector<18x1xf32> to vector<18x128xf32>
    %5 = arith.addf %2, %4 : vector<18x128xf32>
    %cst_5 = arith.constant 0.000000e+00 : f32
    %6 = vector.broadcast %cst_5 : f32 to vector<18x128xf32>
    %7 = arith.cmpf oge, %5, %6 : vector<18x128xf32>
    %cst_6 = arith.constant 0.00999999977 : f32
    %8 = vector.broadcast %cst_6 : f32 to vector<18x128xf32>
    %9 = arith.mulf %8, %5 : vector<18x128xf32>
    %10 = arith.select %7, %5, %9 : vector<18x128xi1>, vector<18x128xf32>
    %c0_7 = arith.constant 0 : index
    %c0_8 = arith.constant 0 : index
    %11 = vector.load %arg4[%c0_7, %c0_8] : memref<18x128xf32, #tpu.memory_space<vmem>>, vector<18x128xf32>
    tpu.vector_store %arg4[%c0_7, %c0_8], %10 {strides = array<i32>} : memref<18x128xf32, #tpu.memory_space<vmem>>, vector<18x128xf32>,
    return
  }
  func.func @transform_0(%arg0: i32) -> (i32, i32) {
    %c0_i32 = arith.constant 0 : i32
    %c0_i32_0 = arith.constant 0 : i32
    return %c0_i32, %arg0 : i32, i32
  }
  func.func @transform_1(%arg0: i32) -> (i32, i32) {
    %c0_i32 = arith.constant 0 : i32
    %c0_i32_0 = arith.constant 0 : i32
    %c0_i32_1 = arith.constant 0 : i32
    return %c0_i32, %c0_i32_0 : i32, i32
  }
  func.func @transform_2(%arg0: i32) -> (i32, i32) {
    %c0_i32 = arith.constant 0 : i32
    %c0_i32_0 = arith.constant 0 : i32
    %c0_i32_1 = arith.constant 0 : i32
    return %c0_i32, %c0_i32_0 : i32, i32
  }
  func.func @transform_3(%arg0: i32) -> (i32, i32) {
    %c0_i32 = arith.constant 0 : i32
    %c0_i32_0 = arith.constant 0 : i32
    return %c0_i32, %arg0 : i32, i32
  }
}

module attributes {stable_mosaic.version = 11 : i64} {
  func.func @_conv_kernel(%arg0: i32, %arg1: memref<48x128xbf16, #tpu.memory_space<vmem>>, %arg2: memref<18x48xbf16, #tpu.memory_space<vmem>>, %arg3: memref<18x1xf32, #tpu.memory_space<vmem>>, %arg4: memref<18x128xf32, #tpu.memory_space<vmem>>) attributes {dimension_semantics = [#tpu.dimension_semantics<parallel>], iteration_bounds = array<i64: 1>, scalar_prefetch = 0 : i64, scratch_operands = 0 : i64, tpu.core_type = #tpu.core_type<tc>, window_params = [{transform_indices = @transform_0, window_bounds = array<i64: 48, 128>}, {pipeline_mode = #tpu.pipeline_mode<synchronous>, transform_indices = @transform_1, window_bounds = array<i64: 18, 48>}, {pipeline_mode = #tpu.pipeline_mode<synchronous>, transform_indices = @transform_2, window_bounds = array<i64: 18, 1>}, {transform_indices = @transform_3, window_bounds = array<i64: 18, 128>}]} {
    %c0 = arith.constant 0 : index
    %c0_0 = arith.constant 0 : index
    %0 = vector.load %arg2[%c0, %c0_0] : memref<18x48xbf16, #tpu.memory_space<vmem>>, vector<18x48xbf16>
    %c0_1 = arith.constant 0 : index
    %c0_2 = arith.constant 0 : index
    %1 = vector.load %arg1[%c0_1, %c0_2] : memref<48x128xbf16, #tpu.memory_space<vmem>>, vector<48x128xbf16>
    %cst = arith.constant dense<0.000000e+00> : vector<18x128xf32>
    %2 = tpu.matmul %0, %1, %cst {dimension_numbers = #tpu.dot_dimension_numbers<[1], [0], [0], [1], [0, 0, 1, 1], [], []>} : vector<18x48xbf16>, vector<48x128xbf16>, vector<18x128xf32> -> vector<18x128xf32>
    %c0_3 = arith.constant 0 : index
    %c0_4 = arith.constant 0 : index
    %3 = vector.load %arg3[%c0_3, %c0_4] : memref<18x1xf32, #tpu.memory_space<vmem>>, vector<18x1xf32>
    %4 = vector.broadcast %3 : vector<18x1xf32> to vector<18x128xf32>
    %5 = arith.addf %2, %4 : vector<18x128xf32>
    %cst_5 = arith.constant 0.000000e+00 : f32
    %6 = vector.broadcast %cst_5 : f32 to vector<18x128xf32>
    %7 = arith.cmpf oge, %5, %6 : vector<18x128xf32>
    %cst_6 = arith.constant 0.00999999977 : f32
    %8 = vector.broadcast %cst_6 : f32 to vector<18x128xf32>
    %9 = arith.mulf %8, %5 : vector<18x128xf32>
    %10 = arith.select %7, %5, %9 : vector<18x128xi1>, vector<18x128xf32>
    %c0_7 = arith.constant 0 : index
    %c0_8 = arith.constant 0 : index
    %11 = vector.load %arg4[%c0_7, %c0_8] : memref<18x128xf32, #tpu.memory_space<vmem>>, vector<18x128xf32>
    tpu.vector_store %arg4[%c0_7, %c0_8], %10 {strides = array<i32>} : memref<18x128xf32, #tpu.memory_space<vmem>>, vector<18x128xf32>,
    return
  }
  func.func @transform_0(%arg0: i32) -> (i32, i32) {
    %c0_i32 = arith.constant 0 : i32
    %c0_i32_0 = arith.constant 0 : i32
    return %c0_i32, %arg0 : i32, i32
  }
  func.func @transform_1(%arg0: i32) -> (i32, i32) {
    %c0_i32 = arith.constant 0 : i32
    %c0_i32_0 = arith.constant 0 : i32
    %c0_i32_1 = arith.constant 0 : i32
    return %c0_i32, %c0_i32_0 : i32, i32
  }
  func.func @transform_2(%arg0: i32) -> (i32, i32) {
    %c0_i32 = arith.constant 0 : i32
    %c0_i32_0 = arith.constant 0 : i32
    %c0_i32_1 = arith.constant 0 : i32
    return %c0_i32, %c0_i32_0 : i32, i32
  }
  func.func @transform_3(%arg0: i32) -> (i32, i32) {
    %c0_i32 = arith.constant 0 : i32
    %c0_i32_0 = arith.constant 0 : i32
    return %c0_i32, %arg0 : i32, i32
  }
}

module attributes {stable_mosaic.version = 11 : i64} {
  func.func @_conv_kernel(%arg0: i32, %arg1: memref<176x128xbf16, #tpu.memory_space<vmem>>, %arg2: memref<24x176xbf16, #tpu.memory_space<vmem>>, %arg3: memref<24x1xf32, #tpu.memory_space<vmem>>, %arg4: memref<24x128xf32, #tpu.memory_space<vmem>>) attributes {dimension_semantics = [#tpu.dimension_semantics<parallel>], iteration_bounds = array<i64: 1>, scalar_prefetch = 0 : i64, scratch_operands = 0 : i64, tpu.core_type = #tpu.core_type<tc>, window_params = [{transform_indices = @transform_0, window_bounds = array<i64: 176, 128>}, {pipeline_mode = #tpu.pipeline_mode<synchronous>, transform_indices = @transform_1, window_bounds = array<i64: 24, 176>}, {pipeline_mode = #tpu.pipeline_mode<synchronous>, transform_indices = @transform_2, window_bounds = array<i64: 24, 1>}, {transform_indices = @transform_3, window_bounds = array<i64: 24, 128>}]} {
    %c0 = arith.constant 0 : index
    %c0_0 = arith.constant 0 : index
    %0 = vector.load %arg2[%c0, %c0_0] : memref<24x176xbf16, #tpu.memory_space<vmem>>, vector<24x176xbf16>
    %c0_1 = arith.constant 0 : index
    %c0_2 = arith.constant 0 : index
    %1 = vector.load %arg1[%c0_1, %c0_2] : memref<176x128xbf16, #tpu.memory_space<vmem>>, vector<176x128xbf16>
    %cst = arith.constant dense<0.000000e+00> : vector<24x128xf32>
    %2 = tpu.matmul %0, %1, %cst {dimension_numbers = #tpu.dot_dimension_numbers<[1], [0], [0], [1], [0, 0, 1, 1], [], []>} : vector<24x176xbf16>, vector<176x128xbf16>, vector<24x128xf32> -> vector<24x128xf32>
    %c0_3 = arith.constant 0 : index
    %c0_4 = arith.constant 0 : index
    %3 = vector.load %arg3[%c0_3, %c0_4] : memref<24x1xf32, #tpu.memory_space<vmem>>, vector<24x1xf32>
    %4 = vector.broadcast %3 : vector<24x1xf32> to vector<24x128xf32>
    %5 = arith.addf %2, %4 : vector<24x128xf32>
    %c0_5 = arith.constant 0 : index
    %c0_6 = arith.constant 0 : index
    %6 = vector.load %arg4[%c0_5, %c0_6] : memref<24x128xf32, #tpu.memory_space<vmem>>, vector<24x128xf32>
    tpu.vector_store %arg4[%c0_5, %c0_6], %5 {strides = array<i32>} : memref<24x128xf32, #tpu.memory_space<vmem>>, vector<24x128xf32>,
    return
  }
  func.func @transform_0(%arg0: i32) -> (i32, i32) {
    %c0_i32 = arith.constant 0 : i32
    %c0_i32_0 = arith.constant 0 : i32
    return %c0_i32, %arg0 : i32, i32
  }
  func.func @transform_1(%arg0: i32) -> (i32, i32) {
    %c0_i32 = arith.constant 0 : i32
    %c0_i32_0 = arith.constant 0 : i32
    %c0_i32_1 = arith.constant 0 : i32
    return %c0_i32, %c0_i32_0 : i32, i32
  }
  func.func @transform_2(%arg0: i32) -> (i32, i32) {
    %c0_i32 = arith.constant 0 : i32
    %c0_i32_0 = arith.constant 0 : i32
    %c0_i32_1 = arith.constant 0 : i32
    return %c0_i32, %c0_i32_0 : i32, i32
  }
  func.func @transform_3(%arg0: i32) -> (i32, i32) {
    %c0_i32 = arith.constant 0 : i32
    %c0_i32_0 = arith.constant 0 : i32
    return %c0_i32, %arg0 : i32, i32
  }
}

module attributes {stable_mosaic.version = 11 : i64} {
  func.func @_conv_kernel(%arg0: i32, %arg1: memref<112x128xbf16, #tpu.memory_space<vmem>>, %arg2: memref<8x112xbf16, #tpu.memory_space<vmem>>, %arg3: memref<8x1xf32, #tpu.memory_space<vmem>>, %arg4: memref<8x8xf32, #tpu.memory_space<vmem>>, %arg5: memref<8x1xf32, #tpu.memory_space<vmem>>, %arg6: memref<8x128xf32, #tpu.memory_space<vmem>>) attributes {dimension_semantics = [#tpu.dimension_semantics<parallel>], iteration_bounds = array<i64: 1>, scalar_prefetch = 0 : i64, scratch_operands = 0 : i64, tpu.core_type = #tpu.core_type<tc>, window_params = [{transform_indices = @transform_0, window_bounds = array<i64: 112, 128>}, {pipeline_mode = #tpu.pipeline_mode<synchronous>, transform_indices = @transform_1, window_bounds = array<i64: 8, 112>}, {pipeline_mode = #tpu.pipeline_mode<synchronous>, transform_indices = @transform_2, window_bounds = array<i64: 8, 1>}, {pipeline_mode = #tpu.pipeline_mode<synchronous>, transform_indices = @transform_3, window_bounds = array<i64: 8, 8>}, {pipeline_mode = #tpu.pipeline_mode<synchronous>, transform_indices = @transform_4, window_bounds = array<i64: 8, 1>}, {transform_indices = @transform_5, window_bounds = array<i64: 8, 128>}]} {
    %c0 = arith.constant 0 : index
    %c0_0 = arith.constant 0 : index
    %0 = vector.load %arg2[%c0, %c0_0] : memref<8x112xbf16, #tpu.memory_space<vmem>>, vector<8x112xbf16>
    %c0_1 = arith.constant 0 : index
    %c0_2 = arith.constant 0 : index
    %1 = vector.load %arg1[%c0_1, %c0_2] : memref<112x128xbf16, #tpu.memory_space<vmem>>, vector<112x128xbf16>
    %cst = arith.constant dense<0.000000e+00> : vector<8x128xf32>
    %2 = tpu.matmul %0, %1, %cst {dimension_numbers = #tpu.dot_dimension_numbers<[1], [0], [0], [1], [0, 0, 1, 1], [], []>} : vector<8x112xbf16>, vector<112x128xbf16>, vector<8x128xf32> -> vector<8x128xf32>
    %c0_3 = arith.constant 0 : index
    %c0_4 = arith.constant 0 : index
    %3 = vector.load %arg3[%c0_3, %c0_4] : memref<8x1xf32, #tpu.memory_space<vmem>>, vector<8x1xf32>
    %4 = vector.broadcast %3 : vector<8x1xf32> to vector<8x128xf32>
    %5 = arith.addf %2, %4 : vector<8x128xf32>
    %c0_5 = arith.constant 0 : index
    %c0_6 = arith.constant 0 : index
    %6 = vector.load %arg4[%c0_5, %c0_6] : memref<8x8xf32, #tpu.memory_space<vmem>>, vector<8x8xf32>
    %7 = arith.mulf %5, %5 : vector<8x128xf32>
    %cst_7 = arith.constant dense<0.000000e+00> : vector<8x128xf32>
    %8 = tpu.matmul %6, %7, %cst_7 {dimension_numbers = #tpu.dot_dimension_numbers<[1], [0], [0], [1], [0, 0, 1, 1], [], []>} : vector<8x8xf32>, vector<8x128xf32>, vector<8x128xf32> -> vector<8x128xf32>
    %c0_8 = arith.constant 0 : index
    %c0_9 = arith.constant 0 : index
    %9 = vector.load %arg5[%c0_8, %c0_9] : memref<8x1xf32, #tpu.memory_space<vmem>>, vector<8x1xf32>
    %10 = vector.broadcast %9 : vector<8x1xf32> to vector<8x128xf32>
    %11 = arith.addf %8, %10 : vector<8x128xf32>
    %12 = math.sqrt %11 : vector<8x128xf32>
    %13 = arith.mulf %5, %12 : vector<8x128xf32>
    %c0_10 = arith.constant 0 : index
    %c0_11 = arith.constant 0 : index
    %14 = vector.load %arg6[%c0_10, %c0_11] : memref<8x128xf32, #tpu.memory_space<vmem>>, vector<8x128xf32>
    tpu.vector_store %arg6[%c0_10, %c0_11], %13 {strides = array<i32>} : memref<8x128xf32, #tpu.memory_space<vmem>>, vector<8x128xf32>,
    return
  }
  func.func @transform_0(%arg0: i32) -> (i32, i32) {
    %c0_i32 = arith.constant 0 : i32
    %c0_i32_0 = arith.constant 0 : i32
    return %c0_i32, %arg0 : i32, i32
  }
  func.func @transform_1(%arg0: i32) -> (i32, i32) {
    %c0_i32 = arith.constant 0 : i32
    %c0_i32_0 = arith.constant 0 : i32
    %c0_i32_1 = arith.constant 0 : i32
    return %c0_i32, %c0_i32_0 : i32, i32
  }
  func.func @transform_2(%arg0: i32) -> (i32, i32) {
    %c0_i32 = arith.constant 0 : i32
    %c0_i32_0 = arith.constant 0 : i32
    %c0_i32_1 = arith.constant 0 : i32
    return %c0_i32, %c0_i32_0 : i32, i32
  }
  func.func @transform_3(%arg0: i32) -> (i32, i32) {
    %c0_i32 = arith.constant 0 : i32
    %c0_i32_0 = arith.constant 0 : i32
    %c0_i32_1 = arith.constant 0 : i32
    return %c0_i32, %c0_i32_0 : i32, i32
  }
  func.func @transform_4(%arg0: i32) -> (i32, i32) {
    %c0_i32 = arith.constant 0 : i32
    %c0_i32_0 = arith.constant 0 : i32
    %c0_i32_1 = arith.constant 0 : i32
    return %c0_i32, %c0_i32_0 : i32, i32
  }
  func.func @transform_5(%arg0: i32) -> (i32, i32) {
    %c0_i32 = arith.constant 0 : i32
    %c0_i32_0 = arith.constant 0 : i32
    return %c0_i32, %arg0 : i32, i32
  }
}

module attributes {stable_mosaic.version = 11 : i64} {
  func.func @_gaussian_cond_kernel(%arg0: i32, %arg1: memref<12x128xf32, #tpu.memory_space<vmem>>, %arg2: memref<12x128xf32, #tpu.memory_space<vmem>>, %arg3: memref<12x128xf32, #tpu.memory_space<vmem>>, %arg4: memref<12x128xf32, #tpu.memory_space<vmem>>, %arg5: memref<12x128xf32, #tpu.memory_space<vmem>>) attributes {dimension_semantics = [#tpu.dimension_semantics<parallel>], iteration_bounds = array<i64: 1>, scalar_prefetch = 0 : i64, scratch_operands = 0 : i64, tpu.core_type = #tpu.core_type<tc>, window_params = [{transform_indices = @transform_0, window_bounds = array<i64: 12, 128>}, {transform_indices = @transform_1, window_bounds = array<i64: 12, 128>}, {transform_indices = @transform_2, window_bounds = array<i64: 12, 128>}, {transform_indices = @transform_3, window_bounds = array<i64: 12, 128>}, {transform_indices = @transform_4, window_bounds = array<i64: 12, 128>}]} {
    %c0 = arith.constant 0 : index
    %c0_0 = arith.constant 0 : index
    %0 = vector.load %arg1[%c0, %c0_0] : memref<12x128xf32, #tpu.memory_space<vmem>>, vector<12x128xf32>
    %c0_1 = arith.constant 0 : index
    %c0_2 = arith.constant 0 : index
    %1 = vector.load %arg2[%c0_1, %c0_2] : memref<12x128xf32, #tpu.memory_space<vmem>>, vector<12x128xf32>
    %cst = arith.constant 1.100000e-01 : f32
    %2 = vector.broadcast %cst : f32 to vector<12x128xf32>
    %3 = arith.maximumf %1, %2 : vector<12x128xf32>
    %c0_3 = arith.constant 0 : index
    %c0_4 = arith.constant 0 : index
    %4 = vector.load %arg3[%c0_3, %c0_4] : memref<12x128xf32, #tpu.memory_space<vmem>>, vector<12x128xf32>
    %5 = arith.subf %0, %4 : vector<12x128xf32>
    %6 = math.roundeven %5 : vector<12x128xf32>
    %7 = arith.addf %6, %4 : vector<12x128xf32>
    %8 = arith.subf %7, %4 : vector<12x128xf32>
    %9 = math.absf %8 : vector<12x128xf32>
    %cst_5 = arith.constant 5.000000e-01 : f32
    %10 = vector.broadcast %cst_5 : f32 to vector<12x128xf32>
    %11 = arith.subf %10, %9 : vector<12x128xf32>
    %12 = arith.divf %11, %3 : vector<12x128xf32>
    %cst_6 = arith.constant 0.707106769 : f32
    %13 = vector.broadcast %cst_6 : f32 to vector<12x128xf32>
    %14 = arith.mulf %12, %13 : vector<12x128xf32>
    %15 = math.absf %14 : vector<12x128xf32>
    %cst_7 = arith.constant 0.327591091 : f32
    %16 = vector.broadcast %cst_7 : f32 to vector<12x128xf32>
    %17 = arith.mulf %16, %15 : vector<12x128xf32>
    %cst_8 = arith.constant 1.000000e+00 : f32
    %18 = vector.broadcast %cst_8 : f32 to vector<12x128xf32>
    %19 = arith.addf %18, %17 : vector<12x128xf32>
    %cst_9 = arith.constant 1.000000e+00 : f32
    %20 = vector.broadcast %cst_9 : f32 to vector<12x128xf32>
    %21 = arith.divf %20, %19 : vector<12x128xf32>
    %cst_10 = arith.constant 1.06140542 : f32
    %22 = vector.broadcast %cst_10 : f32 to vector<12x128xf32>
    %23 = arith.mulf %21, %22 : vector<12x128xf32>
    %cst_11 = arith.constant -1.45315206 : f32
    %24 = vector.broadcast %cst_11 : f32 to vector<12x128xf32>
    %25 = arith.addf %24, %23 : vector<12x128xf32>
    %26 = arith.mulf %21, %25 : vector<12x128xf32>
    %cst_12 = arith.constant 1.42141378 : f32
    %27 = vector.broadcast %cst_12 : f32 to vector<12x128xf32>
    %28 = arith.addf %27, %26 : vector<12x128xf32>
    %29 = arith.mulf %21, %28 : vector<12x128xf32>
    %cst_13 = arith.constant -0.284496725 : f32
    %30 = vector.broadcast %cst_13 : f32 to vector<12x128xf32>
    %31 = arith.addf %30, %29 : vector<12x128xf32>
    %32 = arith.mulf %21, %31 : vector<12x128xf32>
    %cst_14 = arith.constant 0.254829586 : f32
    %33 = vector.broadcast %cst_14 : f32 to vector<12x128xf32>
    %34 = arith.addf %33, %32 : vector<12x128xf32>
    %35 = arith.mulf %21, %34 : vector<12x128xf32>
    %cst_15 = arith.constant 0.000000e+00 : f32
    %36 = vector.broadcast %cst_15 : f32 to vector<12x128xf32>
    %37 = arith.subf %36, %15 : vector<12x128xf32>
    %38 = arith.mulf %37, %15 : vector<12x128xf32>
    %39 = math.exp %38 : vector<12x128xf32>
    %40 = arith.mulf %35, %39 : vector<12x128xf32>
    %cst_16 = arith.constant 1.000000e+00 : f32
    %41 = vector.broadcast %cst_16 : f32 to vector<12x128xf32>
    %42 = arith.subf %41, %40 : vector<12x128xf32>
    %cst_17 = arith.constant 0.000000e+00 : f32
    %43 = vector.broadcast %cst_17 : f32 to vector<12x128xf32>
    %44 = arith.cmpf oge, %14, %43 : vector<12x128xf32>
    %cst_18 = arith.constant 0.000000e+00 : f32
    %45 = vector.broadcast %cst_18 : f32 to vector<12x128xf32>
    %46 = arith.subf %45, %42 : vector<12x128xf32>
    %47 = arith.select %44, %42, %46 : vector<12x128xi1>, vector<12x128xf32>
    %cst_19 = arith.constant 1.000000e+00 : f32
    %48 = vector.broadcast %cst_19 : f32 to vector<12x128xf32>
    %49 = arith.addf %48, %47 : vector<12x128xf32>
    %cst_20 = arith.constant 5.000000e-01 : f32
    %50 = vector.broadcast %cst_20 : f32 to vector<12x128xf32>
    %51 = arith.mulf %50, %49 : vector<12x128xf32>
    %cst_21 = arith.constant -5.000000e-01 : f32
    %52 = vector.broadcast %cst_21 : f32 to vector<12x128xf32>
    %53 = arith.subf %52, %9 : vector<12x128xf32>
    %54 = arith.divf %53, %3 : vector<12x128xf32>
    %cst_22 = arith.constant 0.707106769 : f32
    %55 = vector.broadcast %cst_22 : f32 to vector<12x128xf32>
    %56 = arith.mulf %54, %55 : vector<12x128xf32>
    %57 = math.absf %56 : vector<12x128xf32>
    %cst_23 = arith.constant 0.327591091 : f32
    %58 = vector.broadcast %cst_23 : f32 to vector<12x128xf32>
    %59 = arith.mulf %58, %57 : vector<12x128xf32>
    %cst_24 = arith.constant 1.000000e+00 : f32
    %60 = vector.broadcast %cst_24 : f32 to vector<12x128xf32>
    %61 = arith.addf %60, %59 : vector<12x128xf32>
    %cst_25 = arith.constant 1.000000e+00 : f32
    %62 = vector.broadcast %cst_25 : f32 to vector<12x128xf32>
    %63 = arith.divf %62, %61 : vector<12x128xf32>
    %cst_26 = arith.constant 1.06140542 : f32
    %64 = vector.broadcast %cst_26 : f32 to vector<12x128xf32>
    %65 = arith.mulf %63, %64 : vector<12x128xf32>
    %cst_27 = arith.constant -1.45315206 : f32
    %66 = vector.broadcast %cst_27 : f32 to vector<12x128xf32>
    %67 = arith.addf %66, %65 : vector<12x128xf32>
    %68 = arith.mulf %63, %67 : vector<12x128xf32>
    %cst_28 = arith.constant 1.42141378 : f32
    %69 = vector.broadcast %cst_28 : f32 to vector<12x128xf32>
    %70 = arith.addf %69, %68 : vector<12x128xf32>
    %71 = arith.mulf %63, %70 : vector<12x128xf32>
    %cst_29 = arith.constant -0.284496725 : f32
    %72 = vector.broadcast %cst_29 : f32 to vector<12x128xf32>
    %73 = arith.addf %72, %71 : vector<12x128xf32>
    %74 = arith.mulf %63, %73 : vector<12x128xf32>
    %cst_30 = arith.constant 0.254829586 : f32
    %75 = vector.broadcast %cst_30 : f32 to vector<12x128xf32>
    %76 = arith.addf %75, %74 : vector<12x128xf32>
    %77 = arith.mulf %63, %76 : vector<12x128xf32>
    %cst_31 = arith.constant 0.000000e+00 : f32
    %78 = vector.broadcast %cst_31 : f32 to vector<12x128xf32>
    %79 = arith.subf %78, %57 : vector<12x128xf32>
    %80 = arith.mulf %79, %57 : vector<12x128xf32>
    %81 = math.exp %80 : vector<12x128xf32>
    %82 = arith.mulf %77, %81 : vector<12x128xf32>
    %cst_32 = arith.constant 1.000000e+00 : f32
    %83 = vector.broadcast %cst_32 : f32 to vector<12x128xf32>
    %84 = arith.subf %83, %82 : vector<12x128xf32>
    %cst_33 = arith.constant 0.000000e+00 : f32
    %85 = vector.broadcast %cst_33 : f32 to vector<12x128xf32>
    %86 = arith.cmpf oge, %56, %85 : vector<12x128xf32>
    %cst_34 = arith.constant 0.000000e+00 : f32
    %87 = vector.broadcast %cst_34 : f32 to vector<12x128xf32>
    %88 = arith.subf %87, %84 : vector<12x128xf32>
    %89 = arith.select %86, %84, %88 : vector<12x128xi1>, vector<12x128xf32>
    %cst_35 = arith.constant 1.000000e+00 : f32
    %90 = vector.broadcast %cst_35 : f32 to vector<12x128xf32>
    %91 = arith.addf %90, %89 : vector<12x128xf32>
    %cst_36 = arith.constant 5.000000e-01 : f32
    %92 = vector.broadcast %cst_36 : f32 to vector<12x128xf32>
    %93 = arith.mulf %92, %91 : vector<12x128xf32>
    %94 = arith.subf %51, %93 : vector<12x128xf32>
    %cst_37 = arith.constant 9.99999971E-10 : f32
    %95 = vector.broadcast %cst_37 : f32 to vector<12x128xf32>
    %96 = arith.maximumf %94, %95 : vector<12x128xf32>
    %c0_38 = arith.constant 0 : index
    %c0_39 = arith.constant 0 : index
    %97 = vector.load %arg4[%c0_38, %c0_39] : memref<12x128xf32, #tpu.memory_space<vmem>>, vector<12x128xf32>
    tpu.vector_store %arg4[%c0_38, %c0_39], %7 {strides = array<i32>} : memref<12x128xf32, #tpu.memory_space<vmem>>, vector<12x128xf32>,
    %c0_40 = arith.constant 0 : index
    %c0_41 = arith.constant 0 : index
    %98 = vector.load %arg5[%c0_40, %c0_41] : memref<12x128xf32, #tpu.memory_space<vmem>>, vector<12x128xf32>
    tpu.vector_store %arg5[%c0_40, %c0_41], %96 {strides = array<i32>} : memref<12x128xf32, #tpu.memory_space<vmem>>, vector<12x128xf32>,
    return
  }
  func.func @transform_0(%arg0: i32) -> (i32, i32) {
    %c0_i32 = arith.constant 0 : i32
    %c0_i32_0 = arith.constant 0 : i32
    return %c0_i32, %arg0 : i32, i32
  }
  func.func @transform_1(%arg0: i32) -> (i32, i32) {
    %c0_i32 = arith.constant 0 : i32
    %c0_i32_0 = arith.constant 0 : i32
    return %c0_i32, %arg0 : i32, i32
  }
  func.func @transform_2(%arg0: i32) -> (i32, i32) {
    %c0_i32 = arith.constant 0 : i32
    %c0_i32_0 = arith.constant 0 : i32
    return %c0_i32, %arg0 : i32, i32
  }
  func.func @transform_3(%arg0: i32) -> (i32, i32) {
    %c0_i32 = arith.constant 0 : i32
    %c0_i32_0 = arith.constant 0 : i32
    return %c0_i32, %arg0 : i32, i32
  }
  func.func @transform_4(%arg0: i32) -> (i32, i32) {
    %c0_i32 = arith.constant 0 : i32
    %c0_i32_0 = arith.constant 0 : i32
    return %c0_i32, %arg0 : i32, i32
  }
}

module attributes {stable_mosaic.version = 11 : i64} {
  func.func @_conv_kernel(%arg0: i32, %arg1: memref<80x128xbf16, #tpu.memory_space<vmem>>, %arg2: memref<8x80xbf16, #tpu.memory_space<vmem>>, %arg3: memref<8x1xf32, #tpu.memory_space<vmem>>, %arg4: memref<8x8xf32, #tpu.memory_space<vmem>>, %arg5: memref<8x1xf32, #tpu.memory_space<vmem>>, %arg6: memref<8x128xf32, #tpu.memory_space<vmem>>) attributes {dimension_semantics = [#tpu.dimension_semantics<parallel>], iteration_bounds = array<i64: 1>, scalar_prefetch = 0 : i64, scratch_operands = 0 : i64, tpu.core_type = #tpu.core_type<tc>, window_params = [{transform_indices = @transform_0, window_bounds = array<i64: 80, 128>}, {pipeline_mode = #tpu.pipeline_mode<synchronous>, transform_indices = @transform_1, window_bounds = array<i64: 8, 80>}, {pipeline_mode = #tpu.pipeline_mode<synchronous>, transform_indices = @transform_2, window_bounds = array<i64: 8, 1>}, {pipeline_mode = #tpu.pipeline_mode<synchronous>, transform_indices = @transform_3, window_bounds = array<i64: 8, 8>}, {pipeline_mode = #tpu.pipeline_mode<synchronous>, transform_indices = @transform_4, window_bounds = array<i64: 8, 1>}, {transform_indices = @transform_5, window_bounds = array<i64: 8, 128>}]} {
    %c0 = arith.constant 0 : index
    %c0_0 = arith.constant 0 : index
    %0 = vector.load %arg2[%c0, %c0_0] : memref<8x80xbf16, #tpu.memory_space<vmem>>, vector<8x80xbf16>
    %c0_1 = arith.constant 0 : index
    %c0_2 = arith.constant 0 : index
    %1 = vector.load %arg1[%c0_1, %c0_2] : memref<80x128xbf16, #tpu.memory_space<vmem>>, vector<80x128xbf16>
    %cst = arith.constant dense<0.000000e+00> : vector<8x128xf32>
    %2 = tpu.matmul %0, %1, %cst {dimension_numbers = #tpu.dot_dimension_numbers<[1], [0], [0], [1], [0, 0, 1, 1], [], []>} : vector<8x80xbf16>, vector<80x128xbf16>, vector<8x128xf32> -> vector<8x128xf32>
    %c0_3 = arith.constant 0 : index
    %c0_4 = arith.constant 0 : index
    %3 = vector.load %arg3[%c0_3, %c0_4] : memref<8x1xf32, #tpu.memory_space<vmem>>, vector<8x1xf32>
    %4 = vector.broadcast %3 : vector<8x1xf32> to vector<8x128xf32>
    %5 = arith.addf %2, %4 : vector<8x128xf32>
    %c0_5 = arith.constant 0 : index
    %c0_6 = arith.constant 0 : index
    %6 = vector.load %arg4[%c0_5, %c0_6] : memref<8x8xf32, #tpu.memory_space<vmem>>, vector<8x8xf32>
    %7 = arith.mulf %5, %5 : vector<8x128xf32>
    %cst_7 = arith.constant dense<0.000000e+00> : vector<8x128xf32>
    %8 = tpu.matmul %6, %7, %cst_7 {dimension_numbers = #tpu.dot_dimension_numbers<[1], [0], [0], [1], [0, 0, 1, 1], [], []>} : vector<8x8xf32>, vector<8x128xf32>, vector<8x128xf32> -> vector<8x128xf32>
    %c0_8 = arith.constant 0 : index
    %c0_9 = arith.constant 0 : index
    %9 = vector.load %arg5[%c0_8, %c0_9] : memref<8x1xf32, #tpu.memory_space<vmem>>, vector<8x1xf32>
    %10 = vector.broadcast %9 : vector<8x1xf32> to vector<8x128xf32>
    %11 = arith.addf %8, %10 : vector<8x128xf32>
    %12 = math.sqrt %11 : vector<8x128xf32>
    %13 = arith.mulf %5, %12 : vector<8x128xf32>
    %c0_10 = arith.constant 0 : index
    %c0_11 = arith.constant 0 : index
    %14 = vector.load %arg6[%c0_10, %c0_11] : memref<8x128xf32, #tpu.memory_space<vmem>>, vector<8x128xf32>
    tpu.vector_store %arg6[%c0_10, %c0_11], %13 {strides = array<i32>} : memref<8x128xf32, #tpu.memory_space<vmem>>, vector<8x128xf32>,
    return
  }
  func.func @transform_0(%arg0: i32) -> (i32, i32) {
    %c0_i32 = arith.constant 0 : i32
    %c0_i32_0 = arith.constant 0 : i32
    return %c0_i32, %arg0 : i32, i32
  }
  func.func @transform_1(%arg0: i32) -> (i32, i32) {
    %c0_i32 = arith.constant 0 : i32
    %c0_i32_0 = arith.constant 0 : i32
    %c0_i32_1 = arith.constant 0 : i32
    return %c0_i32, %c0_i32_0 : i32, i32
  }
  func.func @transform_2(%arg0: i32) -> (i32, i32) {
    %c0_i32 = arith.constant 0 : i32
    %c0_i32_0 = arith.constant 0 : i32
    %c0_i32_1 = arith.constant 0 : i32
    return %c0_i32, %c0_i32_0 : i32, i32
  }
  func.func @transform_3(%arg0: i32) -> (i32, i32) {
    %c0_i32 = arith.constant 0 : i32
    %c0_i32_0 = arith.constant 0 : i32
    %c0_i32_1 = arith.constant 0 : i32
    return %c0_i32, %c0_i32_0 : i32, i32
  }
  func.func @transform_4(%arg0: i32) -> (i32, i32) {
    %c0_i32 = arith.constant 0 : i32
    %c0_i32_0 = arith.constant 0 : i32
    %c0_i32_1 = arith.constant 0 : i32
    return %c0_i32, %c0_i32_0 : i32, i32
  }
  func.func @transform_5(%arg0: i32) -> (i32, i32) {
    %c0_i32 = arith.constant 0 : i32
    %c0_i32_0 = arith.constant 0 : i32
    return %c0_i32, %arg0 : i32, i32
  }
}

module attributes {stable_mosaic.version = 11 : i64} {
  func.func @_conv_kernel(%arg0: i32, %arg1: memref<48x128xbf16, #tpu.memory_space<vmem>>, %arg2: memref<8x48xbf16, #tpu.memory_space<vmem>>, %arg3: memref<8x1xf32, #tpu.memory_space<vmem>>, %arg4: memref<8x8xf32, #tpu.memory_space<vmem>>, %arg5: memref<8x1xf32, #tpu.memory_space<vmem>>, %arg6: memref<8x128xf32, #tpu.memory_space<vmem>>) attributes {dimension_semantics = [#tpu.dimension_semantics<parallel>], iteration_bounds = array<i64: 1>, scalar_prefetch = 0 : i64, scratch_operands = 0 : i64, tpu.core_type = #tpu.core_type<tc>, window_params = [{transform_indices = @transform_0, window_bounds = array<i64: 48, 128>}, {pipeline_mode = #tpu.pipeline_mode<synchronous>, transform_indices = @transform_1, window_bounds = array<i64: 8, 48>}, {pipeline_mode = #tpu.pipeline_mode<synchronous>, transform_indices = @transform_2, window_bounds = array<i64: 8, 1>}, {pipeline_mode = #tpu.pipeline_mode<synchronous>, transform_indices = @transform_3, window_bounds = array<i64: 8, 8>}, {pipeline_mode = #tpu.pipeline_mode<synchronous>, transform_indices = @transform_4, window_bounds = array<i64: 8, 1>}, {transform_indices = @transform_5, window_bounds = array<i64: 8, 128>}]} {
    %c0 = arith.constant 0 : index
    %c0_0 = arith.constant 0 : index
    %0 = vector.load %arg2[%c0, %c0_0] : memref<8x48xbf16, #tpu.memory_space<vmem>>, vector<8x48xbf16>
    %c0_1 = arith.constant 0 : index
    %c0_2 = arith.constant 0 : index
    %1 = vector.load %arg1[%c0_1, %c0_2] : memref<48x128xbf16, #tpu.memory_space<vmem>>, vector<48x128xbf16>
    %cst = arith.constant dense<0.000000e+00> : vector<8x128xf32>
    %2 = tpu.matmul %0, %1, %cst {dimension_numbers = #tpu.dot_dimension_numbers<[1], [0], [0], [1], [0, 0, 1, 1], [], []>} : vector<8x48xbf16>, vector<48x128xbf16>, vector<8x128xf32> -> vector<8x128xf32>
    %c0_3 = arith.constant 0 : index
    %c0_4 = arith.constant 0 : index
    %3 = vector.load %arg3[%c0_3, %c0_4] : memref<8x1xf32, #tpu.memory_space<vmem>>, vector<8x1xf32>
    %4 = vector.broadcast %3 : vector<8x1xf32> to vector<8x128xf32>
    %5 = arith.addf %2, %4 : vector<8x128xf32>
    %c0_5 = arith.constant 0 : index
    %c0_6 = arith.constant 0 : index
    %6 = vector.load %arg4[%c0_5, %c0_6] : memref<8x8xf32, #tpu.memory_space<vmem>>, vector<8x8xf32>
    %7 = arith.mulf %5, %5 : vector<8x128xf32>
    %cst_7 = arith.constant dense<0.000000e+00> : vector<8x128xf32>
    %8 = tpu.matmul %6, %7, %cst_7 {dimension_numbers = #tpu.dot_dimension_numbers<[1], [0], [0], [1], [0, 0, 1, 1], [], []>} : vector<8x8xf32>, vector<8x128xf32>, vector<8x128xf32> -> vector<8x128xf32>
    %c0_8 = arith.constant 0 : index
    %c0_9 = arith.constant 0 : index
    %9 = vector.load %arg5[%c0_8, %c0_9] : memref<8x1xf32, #tpu.memory_space<vmem>>, vector<8x1xf32>
    %10 = vector.broadcast %9 : vector<8x1xf32> to vector<8x128xf32>
    %11 = arith.addf %8, %10 : vector<8x128xf32>
    %12 = math.sqrt %11 : vector<8x128xf32>
    %13 = arith.mulf %5, %12 : vector<8x128xf32>
    %c0_10 = arith.constant 0 : index
    %c0_11 = arith.constant 0 : index
    %14 = vector.load %arg6[%c0_10, %c0_11] : memref<8x128xf32, #tpu.memory_space<vmem>>, vector<8x128xf32>
    tpu.vector_store %arg6[%c0_10, %c0_11], %13 {strides = array<i32>} : memref<8x128xf32, #tpu.memory_space<vmem>>, vector<8x128xf32>,
    return
  }
  func.func @transform_0(%arg0: i32) -> (i32, i32) {
    %c0_i32 = arith.constant 0 : i32
    %c0_i32_0 = arith.constant 0 : i32
    return %c0_i32, %arg0 : i32, i32
  }
  func.func @transform_1(%arg0: i32) -> (i32, i32) {
    %c0_i32 = arith.constant 0 : i32
    %c0_i32_0 = arith.constant 0 : i32
    %c0_i32_1 = arith.constant 0 : i32
    return %c0_i32, %c0_i32_0 : i32, i32
  }
  func.func @transform_2(%arg0: i32) -> (i32, i32) {
    %c0_i32 = arith.constant 0 : i32
    %c0_i32_0 = arith.constant 0 : i32
    %c0_i32_1 = arith.constant 0 : i32
    return %c0_i32, %c0_i32_0 : i32, i32
  }
  func.func @transform_3(%arg0: i32) -> (i32, i32) {
    %c0_i32 = arith.constant 0 : i32
    %c0_i32_0 = arith.constant 0 : i32
    %c0_i32_1 = arith.constant 0 : i32
    return %c0_i32, %c0_i32_0 : i32, i32
  }
  func.func @transform_4(%arg0: i32) -> (i32, i32) {
    %c0_i32 = arith.constant 0 : i32
    %c0_i32_0 = arith.constant 0 : i32
    %c0_i32_1 = arith.constant 0 : i32
    return %c0_i32, %c0_i32_0 : i32, i32
  }
  func.func @transform_5(%arg0: i32) -> (i32, i32) {
    %c0_i32 = arith.constant 0 : i32
    %c0_i32_0 = arith.constant 0 : i32
    return %c0_i32, %arg0 : i32, i32
  }
}

module attributes {stable_mosaic.version = 11 : i64} {
  func.func @_conv_kernel(%arg0: i32, %arg1: memref<32x128xbf16, #tpu.memory_space<vmem>>, %arg2: memref<8x32xbf16, #tpu.memory_space<vmem>>, %arg3: memref<8x1xf32, #tpu.memory_space<vmem>>, %arg4: memref<8x8xf32, #tpu.memory_space<vmem>>, %arg5: memref<8x1xf32, #tpu.memory_space<vmem>>, %arg6: memref<8x128xf32, #tpu.memory_space<vmem>>) attributes {dimension_semantics = [#tpu.dimension_semantics<parallel>], iteration_bounds = array<i64: 1>, scalar_prefetch = 0 : i64, scratch_operands = 0 : i64, tpu.core_type = #tpu.core_type<tc>, window_params = [{transform_indices = @transform_0, window_bounds = array<i64: 32, 128>}, {pipeline_mode = #tpu.pipeline_mode<synchronous>, transform_indices = @transform_1, window_bounds = array<i64: 8, 32>}, {pipeline_mode = #tpu.pipeline_mode<synchronous>, transform_indices = @transform_2, window_bounds = array<i64: 8, 1>}, {pipeline_mode = #tpu.pipeline_mode<synchronous>, transform_indices = @transform_3, window_bounds = array<i64: 8, 8>}, {pipeline_mode = #tpu.pipeline_mode<synchronous>, transform_indices = @transform_4, window_bounds = array<i64: 8, 1>}, {transform_indices = @transform_5, window_bounds = array<i64: 8, 128>}]} {
    %c0 = arith.constant 0 : index
    %c0_0 = arith.constant 0 : index
    %0 = vector.load %arg2[%c0, %c0_0] : memref<8x32xbf16, #tpu.memory_space<vmem>>, vector<8x32xbf16>
    %c0_1 = arith.constant 0 : index
    %c0_2 = arith.constant 0 : index
    %1 = vector.load %arg1[%c0_1, %c0_2] : memref<32x128xbf16, #tpu.memory_space<vmem>>, vector<32x128xbf16>
    %cst = arith.constant dense<0.000000e+00> : vector<8x128xf32>
    %2 = tpu.matmul %0, %1, %cst {dimension_numbers = #tpu.dot_dimension_numbers<[1], [0], [0], [1], [0, 0, 1, 1], [], []>} : vector<8x32xbf16>, vector<32x128xbf16>, vector<8x128xf32> -> vector<8x128xf32>
    %c0_3 = arith.constant 0 : index
    %c0_4 = arith.constant 0 : index
    %3 = vector.load %arg3[%c0_3, %c0_4] : memref<8x1xf32, #tpu.memory_space<vmem>>, vector<8x1xf32>
    %4 = vector.broadcast %3 : vector<8x1xf32> to vector<8x128xf32>
    %5 = arith.addf %2, %4 : vector<8x128xf32>
    %c0_5 = arith.constant 0 : index
    %c0_6 = arith.constant 0 : index
    %6 = vector.load %arg4[%c0_5, %c0_6] : memref<8x8xf32, #tpu.memory_space<vmem>>, vector<8x8xf32>
    %7 = arith.mulf %5, %5 : vector<8x128xf32>
    %cst_7 = arith.constant dense<0.000000e+00> : vector<8x128xf32>
    %8 = tpu.matmul %6, %7, %cst_7 {dimension_numbers = #tpu.dot_dimension_numbers<[1], [0], [0], [1], [0, 0, 1, 1], [], []>} : vector<8x8xf32>, vector<8x128xf32>, vector<8x128xf32> -> vector<8x128xf32>
    %c0_8 = arith.constant 0 : index
    %c0_9 = arith.constant 0 : index
    %9 = vector.load %arg5[%c0_8, %c0_9] : memref<8x1xf32, #tpu.memory_space<vmem>>, vector<8x1xf32>
    %10 = vector.broadcast %9 : vector<8x1xf32> to vector<8x128xf32>
    %11 = arith.addf %8, %10 : vector<8x128xf32>
    %12 = math.sqrt %11 : vector<8x128xf32>
    %13 = arith.mulf %5, %12 : vector<8x128xf32>
    %c0_10 = arith.constant 0 : index
    %c0_11 = arith.constant 0 : index
    %14 = vector.load %arg6[%c0_10, %c0_11] : memref<8x128xf32, #tpu.memory_space<vmem>>, vector<8x128xf32>
    tpu.vector_store %arg6[%c0_10, %c0_11], %13 {strides = array<i32>} : memref<8x128xf32, #tpu.memory_space<vmem>>, vector<8x128xf32>,
    return
  }
  func.func @transform_0(%arg0: i32) -> (i32, i32) {
    %c0_i32 = arith.constant 0 : i32
    %c0_i32_0 = arith.constant 0 : i32
    return %c0_i32, %arg0 : i32, i32
  }
  func.func @transform_1(%arg0: i32) -> (i32, i32) {
    %c0_i32 = arith.constant 0 : i32
    %c0_i32_0 = arith.constant 0 : i32
    %c0_i32_1 = arith.constant 0 : i32
    return %c0_i32, %c0_i32_0 : i32, i32
  }
  func.func @transform_2(%arg0: i32) -> (i32, i32) {
    %c0_i32 = arith.constant 0 : i32
    %c0_i32_0 = arith.constant 0 : i32
    %c0_i32_1 = arith.constant 0 : i32
    return %c0_i32, %c0_i32_0 : i32, i32
  }
  func.func @transform_3(%arg0: i32) -> (i32, i32) {
    %c0_i32 = arith.constant 0 : i32
    %c0_i32_0 = arith.constant 0 : i32
    %c0_i32_1 = arith.constant 0 : i32
    return %c0_i32, %c0_i32_0 : i32, i32
  }
  func.func @transform_4(%arg0: i32) -> (i32, i32) {
    %c0_i32 = arith.constant 0 : i32
    %c0_i32_0 = arith.constant 0 : i32
    %c0_i32_1 = arith.constant 0 : i32
    return %c0_i32, %c0_i32_0 : i32, i32
  }
  func.func @transform_5(%arg0: i32) -> (i32, i32) {
    %c0_i32 = arith.constant 0 : i32
    %c0_i32_0 = arith.constant 0 : i32
    return %c0_i32, %arg0 : i32, i32
  }
}

module attributes {stable_mosaic.version = 11 : i64} {
  func.func @_conv_kernel(%arg0: i32, %arg1: memref<80x512xbf16, #tpu.memory_space<vmem>>, %arg2: memref<8x80xbf16, #tpu.memory_space<vmem>>, %arg3: memref<8x1xf32, #tpu.memory_space<vmem>>, %arg4: memref<8x8xf32, #tpu.memory_space<vmem>>, %arg5: memref<8x1xf32, #tpu.memory_space<vmem>>, %arg6: memref<8x512xf32, #tpu.memory_space<vmem>>) attributes {dimension_semantics = [#tpu.dimension_semantics<parallel>], iteration_bounds = array<i64: 1>, scalar_prefetch = 0 : i64, scratch_operands = 0 : i64, tpu.core_type = #tpu.core_type<tc>, window_params = [{transform_indices = @transform_0, window_bounds = array<i64: 80, 512>}, {pipeline_mode = #tpu.pipeline_mode<synchronous>, transform_indices = @transform_1, window_bounds = array<i64: 8, 80>}, {pipeline_mode = #tpu.pipeline_mode<synchronous>, transform_indices = @transform_2, window_bounds = array<i64: 8, 1>}, {pipeline_mode = #tpu.pipeline_mode<synchronous>, transform_indices = @transform_3, window_bounds = array<i64: 8, 8>}, {pipeline_mode = #tpu.pipeline_mode<synchronous>, transform_indices = @transform_4, window_bounds = array<i64: 8, 1>}, {transform_indices = @transform_5, window_bounds = array<i64: 8, 512>}]} {
    %c0 = arith.constant 0 : index
    %c0_0 = arith.constant 0 : index
    %0 = vector.load %arg2[%c0, %c0_0] : memref<8x80xbf16, #tpu.memory_space<vmem>>, vector<8x80xbf16>
    %c0_1 = arith.constant 0 : index
    %c0_2 = arith.constant 0 : index
    %1 = vector.load %arg1[%c0_1, %c0_2] : memref<80x512xbf16, #tpu.memory_space<vmem>>, vector<80x512xbf16>
    %cst = arith.constant dense<0.000000e+00> : vector<8x512xf32>
    %2 = tpu.matmul %0, %1, %cst {dimension_numbers = #tpu.dot_dimension_numbers<[1], [0], [0], [1], [0, 0, 1, 1], [], []>} : vector<8x80xbf16>, vector<80x512xbf16>, vector<8x512xf32> -> vector<8x512xf32>
    %c0_3 = arith.constant 0 : index
    %c0_4 = arith.constant 0 : index
    %3 = vector.load %arg3[%c0_3, %c0_4] : memref<8x1xf32, #tpu.memory_space<vmem>>, vector<8x1xf32>
    %4 = vector.broadcast %3 : vector<8x1xf32> to vector<8x512xf32>
    %5 = arith.addf %2, %4 : vector<8x512xf32>
    %c0_5 = arith.constant 0 : index
    %c0_6 = arith.constant 0 : index
    %6 = vector.load %arg4[%c0_5, %c0_6] : memref<8x8xf32, #tpu.memory_space<vmem>>, vector<8x8xf32>
    %7 = arith.mulf %5, %5 : vector<8x512xf32>
    %cst_7 = arith.constant dense<0.000000e+00> : vector<8x512xf32>
    %8 = tpu.matmul %6, %7, %cst_7 {dimension_numbers = #tpu.dot_dimension_numbers<[1], [0], [0], [1], [0, 0, 1, 1], [], []>} : vector<8x8xf32>, vector<8x512xf32>, vector<8x512xf32> -> vector<8x512xf32>
    %c0_8 = arith.constant 0 : index
    %c0_9 = arith.constant 0 : index
    %9 = vector.load %arg5[%c0_8, %c0_9] : memref<8x1xf32, #tpu.memory_space<vmem>>, vector<8x1xf32>
    %10 = vector.broadcast %9 : vector<8x1xf32> to vector<8x512xf32>
    %11 = arith.addf %8, %10 : vector<8x512xf32>
    %12 = math.sqrt %11 : vector<8x512xf32>
    %13 = arith.mulf %5, %12 : vector<8x512xf32>
    %c0_10 = arith.constant 0 : index
    %c0_11 = arith.constant 0 : index
    %14 = vector.load %arg6[%c0_10, %c0_11] : memref<8x512xf32, #tpu.memory_space<vmem>>, vector<8x512xf32>
    tpu.vector_store %arg6[%c0_10, %c0_11], %13 {strides = array<i32>} : memref<8x512xf32, #tpu.memory_space<vmem>>, vector<8x512xf32>,
    return
  }
  func.func @transform_0(%arg0: i32) -> (i32, i32) {
    %c0_i32 = arith.constant 0 : i32
    %c0_i32_0 = arith.constant 0 : i32
    return %c0_i32, %arg0 : i32, i32
  }
  func.func @transform_1(%arg0: i32) -> (i32, i32) {
    %c0_i32 = arith.constant 0 : i32
    %c0_i32_0 = arith.constant 0 : i32
    %c0_i32_1 = arith.constant 0 : i32
    return %c0_i32, %c0_i32_0 : i32, i32
  }
  func.func @transform_2(%arg0: i32) -> (i32, i32) {
    %c0_i32 = arith.constant 0 : i32
    %c0_i32_0 = arith.constant 0 : i32
    %c0_i32_1 = arith.constant 0 : i32
    return %c0_i32, %c0_i32_0 : i32, i32
  }
  func.func @transform_3(%arg0: i32) -> (i32, i32) {
    %c0_i32 = arith.constant 0 : i32
    %c0_i32_0 = arith.constant 0 : i32
    %c0_i32_1 = arith.constant 0 : i32
    return %c0_i32, %c0_i32_0 : i32, i32
  }
  func.func @transform_4(%arg0: i32) -> (i32, i32) {
    %c0_i32 = arith.constant 0 : i32
    %c0_i32_0 = arith.constant 0 : i32
    %c0_i32_1 = arith.constant 0 : i32
    return %c0_i32, %c0_i32_0 : i32, i32
  }
  func.func @transform_5(%arg0: i32) -> (i32, i32) {
    %c0_i32 = arith.constant 0 : i32
    %c0_i32_0 = arith.constant 0 : i32
    return %c0_i32, %arg0 : i32, i32
  }
}

module attributes {stable_mosaic.version = 11 : i64} {
  func.func @_conv_kernel(%arg0: i32, %arg1: memref<48x512xbf16, #tpu.memory_space<vmem>>, %arg2: memref<8x48xbf16, #tpu.memory_space<vmem>>, %arg3: memref<8x1xf32, #tpu.memory_space<vmem>>, %arg4: memref<8x8xf32, #tpu.memory_space<vmem>>, %arg5: memref<8x1xf32, #tpu.memory_space<vmem>>, %arg6: memref<8x512xf32, #tpu.memory_space<vmem>>) attributes {dimension_semantics = [#tpu.dimension_semantics<parallel>], iteration_bounds = array<i64: 1>, scalar_prefetch = 0 : i64, scratch_operands = 0 : i64, tpu.core_type = #tpu.core_type<tc>, window_params = [{transform_indices = @transform_0, window_bounds = array<i64: 48, 512>}, {pipeline_mode = #tpu.pipeline_mode<synchronous>, transform_indices = @transform_1, window_bounds = array<i64: 8, 48>}, {pipeline_mode = #tpu.pipeline_mode<synchronous>, transform_indices = @transform_2, window_bounds = array<i64: 8, 1>}, {pipeline_mode = #tpu.pipeline_mode<synchronous>, transform_indices = @transform_3, window_bounds = array<i64: 8, 8>}, {pipeline_mode = #tpu.pipeline_mode<synchronous>, transform_indices = @transform_4, window_bounds = array<i64: 8, 1>}, {transform_indices = @transform_5, window_bounds = array<i64: 8, 512>}]} {
    %c0 = arith.constant 0 : index
    %c0_0 = arith.constant 0 : index
    %0 = vector.load %arg2[%c0, %c0_0] : memref<8x48xbf16, #tpu.memory_space<vmem>>, vector<8x48xbf16>
    %c0_1 = arith.constant 0 : index
    %c0_2 = arith.constant 0 : index
    %1 = vector.load %arg1[%c0_1, %c0_2] : memref<48x512xbf16, #tpu.memory_space<vmem>>, vector<48x512xbf16>
    %cst = arith.constant dense<0.000000e+00> : vector<8x512xf32>
    %2 = tpu.matmul %0, %1, %cst {dimension_numbers = #tpu.dot_dimension_numbers<[1], [0], [0], [1], [0, 0, 1, 1], [], []>} : vector<8x48xbf16>, vector<48x512xbf16>, vector<8x512xf32> -> vector<8x512xf32>
    %c0_3 = arith.constant 0 : index
    %c0_4 = arith.constant 0 : index
    %3 = vector.load %arg3[%c0_3, %c0_4] : memref<8x1xf32, #tpu.memory_space<vmem>>, vector<8x1xf32>
    %4 = vector.broadcast %3 : vector<8x1xf32> to vector<8x512xf32>
    %5 = arith.addf %2, %4 : vector<8x512xf32>
    %c0_5 = arith.constant 0 : index
    %c0_6 = arith.constant 0 : index
    %6 = vector.load %arg4[%c0_5, %c0_6] : memref<8x8xf32, #tpu.memory_space<vmem>>, vector<8x8xf32>
    %7 = arith.mulf %5, %5 : vector<8x512xf32>
    %cst_7 = arith.constant dense<0.000000e+00> : vector<8x512xf32>
    %8 = tpu.matmul %6, %7, %cst_7 {dimension_numbers = #tpu.dot_dimension_numbers<[1], [0], [0], [1], [0, 0, 1, 1], [], []>} : vector<8x8xf32>, vector<8x512xf32>, vector<8x512xf32> -> vector<8x512xf32>
    %c0_8 = arith.constant 0 : index
    %c0_9 = arith.constant 0 : index
    %9 = vector.load %arg5[%c0_8, %c0_9] : memref<8x1xf32, #tpu.memory_space<vmem>>, vector<8x1xf32>
    %10 = vector.broadcast %9 : vector<8x1xf32> to vector<8x512xf32>
    %11 = arith.addf %8, %10 : vector<8x512xf32>
    %12 = math.sqrt %11 : vector<8x512xf32>
    %13 = arith.mulf %5, %12 : vector<8x512xf32>
    %c0_10 = arith.constant 0 : index
    %c0_11 = arith.constant 0 : index
    %14 = vector.load %arg6[%c0_10, %c0_11] : memref<8x512xf32, #tpu.memory_space<vmem>>, vector<8x512xf32>
    tpu.vector_store %arg6[%c0_10, %c0_11], %13 {strides = array<i32>} : memref<8x512xf32, #tpu.memory_space<vmem>>, vector<8x512xf32>,
    return
  }
  func.func @transform_0(%arg0: i32) -> (i32, i32) {
    %c0_i32 = arith.constant 0 : i32
    %c0_i32_0 = arith.constant 0 : i32
    return %c0_i32, %arg0 : i32, i32
  }
  func.func @transform_1(%arg0: i32) -> (i32, i32) {
    %c0_i32 = arith.constant 0 : i32
    %c0_i32_0 = arith.constant 0 : i32
    %c0_i32_1 = arith.constant 0 : i32
    return %c0_i32, %c0_i32_0 : i32, i32
  }
  func.func @transform_2(%arg0: i32) -> (i32, i32) {
    %c0_i32 = arith.constant 0 : i32
    %c0_i32_0 = arith.constant 0 : i32
    %c0_i32_1 = arith.constant 0 : i32
    return %c0_i32, %c0_i32_0 : i32, i32
  }
  func.func @transform_3(%arg0: i32) -> (i32, i32) {
    %c0_i32 = arith.constant 0 : i32
    %c0_i32_0 = arith.constant 0 : i32
    %c0_i32_1 = arith.constant 0 : i32
    return %c0_i32, %c0_i32_0 : i32, i32
  }
  func.func @transform_4(%arg0: i32) -> (i32, i32) {
    %c0_i32 = arith.constant 0 : i32
    %c0_i32_0 = arith.constant 0 : i32
    %c0_i32_1 = arith.constant 0 : i32
    return %c0_i32, %c0_i32_0 : i32, i32
  }
  func.func @transform_5(%arg0: i32) -> (i32, i32) {
    %c0_i32 = arith.constant 0 : i32
    %c0_i32_0 = arith.constant 0 : i32
    return %c0_i32, %arg0 : i32, i32
  }
}

module attributes {stable_mosaic.version = 11 : i64} {
  func.func @_conv_kernel(%arg0: i32, %arg1: memref<32x512xbf16, #tpu.memory_space<vmem>>, %arg2: memref<8x32xbf16, #tpu.memory_space<vmem>>, %arg3: memref<8x1xf32, #tpu.memory_space<vmem>>, %arg4: memref<8x8xf32, #tpu.memory_space<vmem>>, %arg5: memref<8x1xf32, #tpu.memory_space<vmem>>, %arg6: memref<8x512xf32, #tpu.memory_space<vmem>>) attributes {dimension_semantics = [#tpu.dimension_semantics<parallel>], iteration_bounds = array<i64: 1>, scalar_prefetch = 0 : i64, scratch_operands = 0 : i64, tpu.core_type = #tpu.core_type<tc>, window_params = [{transform_indices = @transform_0, window_bounds = array<i64: 32, 512>}, {pipeline_mode = #tpu.pipeline_mode<synchronous>, transform_indices = @transform_1, window_bounds = array<i64: 8, 32>}, {pipeline_mode = #tpu.pipeline_mode<synchronous>, transform_indices = @transform_2, window_bounds = array<i64: 8, 1>}, {pipeline_mode = #tpu.pipeline_mode<synchronous>, transform_indices = @transform_3, window_bounds = array<i64: 8, 8>}, {pipeline_mode = #tpu.pipeline_mode<synchronous>, transform_indices = @transform_4, window_bounds = array<i64: 8, 1>}, {transform_indices = @transform_5, window_bounds = array<i64: 8, 512>}]} {
    %c0 = arith.constant 0 : index
    %c0_0 = arith.constant 0 : index
    %0 = vector.load %arg2[%c0, %c0_0] : memref<8x32xbf16, #tpu.memory_space<vmem>>, vector<8x32xbf16>
    %c0_1 = arith.constant 0 : index
    %c0_2 = arith.constant 0 : index
    %1 = vector.load %arg1[%c0_1, %c0_2] : memref<32x512xbf16, #tpu.memory_space<vmem>>, vector<32x512xbf16>
    %cst = arith.constant dense<0.000000e+00> : vector<8x512xf32>
    %2 = tpu.matmul %0, %1, %cst {dimension_numbers = #tpu.dot_dimension_numbers<[1], [0], [0], [1], [0, 0, 1, 1], [], []>} : vector<8x32xbf16>, vector<32x512xbf16>, vector<8x512xf32> -> vector<8x512xf32>
    %c0_3 = arith.constant 0 : index
    %c0_4 = arith.constant 0 : index
    %3 = vector.load %arg3[%c0_3, %c0_4] : memref<8x1xf32, #tpu.memory_space<vmem>>, vector<8x1xf32>
    %4 = vector.broadcast %3 : vector<8x1xf32> to vector<8x512xf32>
    %5 = arith.addf %2, %4 : vector<8x512xf32>
    %c0_5 = arith.constant 0 : index
    %c0_6 = arith.constant 0 : index
    %6 = vector.load %arg4[%c0_5, %c0_6] : memref<8x8xf32, #tpu.memory_space<vmem>>, vector<8x8xf32>
    %7 = arith.mulf %5, %5 : vector<8x512xf32>
    %cst_7 = arith.constant dense<0.000000e+00> : vector<8x512xf32>
    %8 = tpu.matmul %6, %7, %cst_7 {dimension_numbers = #tpu.dot_dimension_numbers<[1], [0], [0], [1], [0, 0, 1, 1], [], []>} : vector<8x8xf32>, vector<8x512xf32>, vector<8x512xf32> -> vector<8x512xf32>
    %c0_8 = arith.constant 0 : index
    %c0_9 = arith.constant 0 : index
    %9 = vector.load %arg5[%c0_8, %c0_9] : memref<8x1xf32, #tpu.memory_space<vmem>>, vector<8x1xf32>
    %10 = vector.broadcast %9 : vector<8x1xf32> to vector<8x512xf32>
    %11 = arith.addf %8, %10 : vector<8x512xf32>
    %12 = math.sqrt %11 : vector<8x512xf32>
    %13 = arith.mulf %5, %12 : vector<8x512xf32>
    %c0_10 = arith.constant 0 : index
    %c0_11 = arith.constant 0 : index
    %14 = vector.load %arg6[%c0_10, %c0_11] : memref<8x512xf32, #tpu.memory_space<vmem>>, vector<8x512xf32>
    tpu.vector_store %arg6[%c0_10, %c0_11], %13 {strides = array<i32>} : memref<8x512xf32, #tpu.memory_space<vmem>>, vector<8x512xf32>,
    return
  }
  func.func @transform_0(%arg0: i32) -> (i32, i32) {
    %c0_i32 = arith.constant 0 : i32
    %c0_i32_0 = arith.constant 0 : i32
    return %c0_i32, %arg0 : i32, i32
  }
  func.func @transform_1(%arg0: i32) -> (i32, i32) {
    %c0_i32 = arith.constant 0 : i32
    %c0_i32_0 = arith.constant 0 : i32
    %c0_i32_1 = arith.constant 0 : i32
    return %c0_i32, %c0_i32_0 : i32, i32
  }
  func.func @transform_2(%arg0: i32) -> (i32, i32) {
    %c0_i32 = arith.constant 0 : i32
    %c0_i32_0 = arith.constant 0 : i32
    %c0_i32_1 = arith.constant 0 : i32
    return %c0_i32, %c0_i32_0 : i32, i32
  }
  func.func @transform_3(%arg0: i32) -> (i32, i32) {
    %c0_i32 = arith.constant 0 : i32
    %c0_i32_0 = arith.constant 0 : i32
    %c0_i32_1 = arith.constant 0 : i32
    return %c0_i32, %c0_i32_0 : i32, i32
  }
  func.func @transform_4(%arg0: i32) -> (i32, i32) {
    %c0_i32 = arith.constant 0 : i32
    %c0_i32_0 = arith.constant 0 : i32
    %c0_i32_1 = arith.constant 0 : i32
    return %c0_i32, %c0_i32_0 : i32, i32
  }
  func.func @transform_5(%arg0: i32) -> (i32, i32) {
    %c0_i32 = arith.constant 0 : i32
    %c0_i32_0 = arith.constant 0 : i32
    return %c0_i32, %arg0 : i32, i32
  }
}

module attributes {stable_mosaic.version = 11 : i64} {
  func.func @_conv_kernel(%arg0: i32, %arg1: memref<80x1024xbf16, #tpu.memory_space<vmem>>, %arg2: memref<3x80xbf16, #tpu.memory_space<vmem>>, %arg3: memref<3x1xf32, #tpu.memory_space<vmem>>, %arg4: memref<3x1024xf32, #tpu.memory_space<vmem>>) attributes {dimension_semantics = [#tpu.dimension_semantics<parallel>], iteration_bounds = array<i64: 2>, scalar_prefetch = 0 : i64, scratch_operands = 0 : i64, tpu.core_type = #tpu.core_type<tc>, window_params = [{transform_indices = @transform_0, window_bounds = array<i64: 80, 1024>}, {pipeline_mode = #tpu.pipeline_mode<synchronous>, transform_indices = @transform_1, window_bounds = array<i64: 3, 80>}, {pipeline_mode = #tpu.pipeline_mode<synchronous>, transform_indices = @transform_2, window_bounds = array<i64: 3, 1>}, {transform_indices = @transform_3, window_bounds = array<i64: 3, 1024>}]} {
    %c0 = arith.constant 0 : index
    %c0_0 = arith.constant 0 : index
    %0 = vector.load %arg2[%c0, %c0_0] : memref<3x80xbf16, #tpu.memory_space<vmem>>, vector<3x80xbf16>
    %c0_1 = arith.constant 0 : index
    %c0_2 = arith.constant 0 : index
    %1 = vector.load %arg1[%c0_1, %c0_2] : memref<80x1024xbf16, #tpu.memory_space<vmem>>, vector<80x1024xbf16>
    %cst = arith.constant dense<0.000000e+00> : vector<3x1024xf32>
    %2 = tpu.matmul %0, %1, %cst {dimension_numbers = #tpu.dot_dimension_numbers<[1], [0], [0], [1], [0, 0, 1, 1], [], []>} : vector<3x80xbf16>, vector<80x1024xbf16>, vector<3x1024xf32> -> vector<3x1024xf32>
    %c0_3 = arith.constant 0 : index
    %c0_4 = arith.constant 0 : index
    %3 = vector.load %arg3[%c0_3, %c0_4] : memref<3x1xf32, #tpu.memory_space<vmem>>, vector<3x1xf32>
    %4 = vector.broadcast %3 : vector<3x1xf32> to vector<3x1024xf32>
    %5 = arith.addf %2, %4 : vector<3x1024xf32>
    %c0_5 = arith.constant 0 : index
    %c0_6 = arith.constant 0 : index
    %6 = vector.load %arg4[%c0_5, %c0_6] : memref<3x1024xf32, #tpu.memory_space<vmem>>, vector<3x1024xf32>
    tpu.vector_store %arg4[%c0_5, %c0_6], %5 {strides = array<i32>} : memref<3x1024xf32, #tpu.memory_space<vmem>>, vector<3x1024xf32>,
    return
  }
  func.func @transform_0(%arg0: i32) -> (i32, i32) {
    %c0_i32 = arith.constant 0 : i32
    %c0_i32_0 = arith.constant 0 : i32
    return %c0_i32, %arg0 : i32, i32
  }
  func.func @transform_1(%arg0: i32) -> (i32, i32) {
    %c0_i32 = arith.constant 0 : i32
    %c0_i32_0 = arith.constant 0 : i32
    %c0_i32_1 = arith.constant 0 : i32
    return %c0_i32, %c0_i32_0 : i32, i32
  }
  func.func @transform_2(%arg0: i32) -> (i32, i32) {
    %c0_i32 = arith.constant 0 : i32
    %c0_i32_0 = arith.constant 0 : i32
    %c0_i32_1 = arith.constant 0 : i32
    return %c0_i32, %c0_i32_0 : i32, i32
  }
  func.func @transform_3(%arg0: i32) -> (i32, i32) {
    %c0_i32 = arith.constant 0 : i32
    %c0_i32_0 = arith.constant 0 : i32
    return %c0_i32, %arg0 : i32, i32
  }
}

module attributes {stable_mosaic.version = 11 : i64} {
  func.func @_conv_kernel(%arg0: i32, %arg1: memref<48x1024xbf16, #tpu.memory_space<vmem>>, %arg2: memref<3x48xbf16, #tpu.memory_space<vmem>>, %arg3: memref<3x1xf32, #tpu.memory_space<vmem>>, %arg4: memref<3x1024xf32, #tpu.memory_space<vmem>>) attributes {dimension_semantics = [#tpu.dimension_semantics<parallel>], iteration_bounds = array<i64: 2>, scalar_prefetch = 0 : i64, scratch_operands = 0 : i64, tpu.core_type = #tpu.core_type<tc>, window_params = [{transform_indices = @transform_0, window_bounds = array<i64: 48, 1024>}, {pipeline_mode = #tpu.pipeline_mode<synchronous>, transform_indices = @transform_1, window_bounds = array<i64: 3, 48>}, {pipeline_mode = #tpu.pipeline_mode<synchronous>, transform_indices = @transform_2, window_bounds = array<i64: 3, 1>}, {transform_indices = @transform_3, window_bounds = array<i64: 3, 1024>}]} {
    %c0 = arith.constant 0 : index
    %c0_0 = arith.constant 0 : index
    %0 = vector.load %arg2[%c0, %c0_0] : memref<3x48xbf16, #tpu.memory_space<vmem>>, vector<3x48xbf16>
    %c0_1 = arith.constant 0 : index
    %c0_2 = arith.constant 0 : index
    %1 = vector.load %arg1[%c0_1, %c0_2] : memref<48x1024xbf16, #tpu.memory_space<vmem>>, vector<48x1024xbf16>
    %cst = arith.constant dense<0.000000e+00> : vector<3x1024xf32>
    %2 = tpu.matmul %0, %1, %cst {dimension_numbers = #tpu.dot_dimension_numbers<[1], [0], [0], [1], [0, 0, 1, 1], [], []>} : vector<3x48xbf16>, vector<48x1024xbf16>, vector<3x1024xf32> -> vector<3x1024xf32>
    %c0_3 = arith.constant 0 : index
    %c0_4 = arith.constant 0 : index
    %3 = vector.load %arg3[%c0_3, %c0_4] : memref<3x1xf32, #tpu.memory_space<vmem>>, vector<3x1xf32>
    %4 = vector.broadcast %3 : vector<3x1xf32> to vector<3x1024xf32>
    %5 = arith.addf %2, %4 : vector<3x1024xf32>
    %c0_5 = arith.constant 0 : index
    %c0_6 = arith.constant 0 : index
    %6 = vector.load %arg4[%c0_5, %c0_6] : memref<3x1024xf32, #tpu.memory_space<vmem>>, vector<3x1024xf32>
    tpu.vector_store %arg4[%c0_5, %c0_6], %5 {strides = array<i32>} : memref<3x1024xf32, #tpu.memory_space<vmem>>, vector<3x1024xf32>,
    return
  }
  func.func @transform_0(%arg0: i32) -> (i32, i32) {
    %c0_i32 = arith.constant 0 : i32
    %c0_i32_0 = arith.constant 0 : i32
    return %c0_i32, %arg0 : i32, i32
  }
  func.func @transform_1(%arg0: i32) -> (i32, i32) {
    %c0_i32 = arith.constant 0 : i32
    %c0_i32_0 = arith.constant 0 : i32
    %c0_i32_1 = arith.constant 0 : i32
    return %c0_i32, %c0_i32_0 : i32, i32
  }
  func.func @transform_2(%arg0: i32) -> (i32, i32) {
    %c0_i32 = arith.constant 0 : i32
    %c0_i32_0 = arith.constant 0 : i32
    %c0_i32_1 = arith.constant 0 : i32
    return %c0_i32, %c0_i32_0 : i32, i32
  }
  func.func @transform_3(%arg0: i32) -> (i32, i32) {
    %c0_i32 = arith.constant 0 : i32
    %c0_i32_0 = arith.constant 0 : i32
    return %c0_i32, %arg0 : i32, i32
  }
}

module attributes {stable_mosaic.version = 11 : i64} {
  func.func @_conv_kernel(%arg0: i32, %arg1: memref<32x1024xbf16, #tpu.memory_space<vmem>>, %arg2: memref<3x32xbf16, #tpu.memory_space<vmem>>, %arg3: memref<3x1xf32, #tpu.memory_space<vmem>>, %arg4: memref<3x1024xf32, #tpu.memory_space<vmem>>) attributes {dimension_semantics = [#tpu.dimension_semantics<parallel>], iteration_bounds = array<i64: 2>, scalar_prefetch = 0 : i64, scratch_operands = 0 : i64, tpu.core_type = #tpu.core_type<tc>, window_params = [{transform_indices = @transform_0, window_bounds = array<i64: 32, 1024>}, {pipeline_mode = #tpu.pipeline_mode<synchronous>, transform_indices = @transform_1, window_bounds = array<i64: 3, 32>}, {pipeline_mode = #tpu.pipeline_mode<synchronous>, transform_indices = @transform_2, window_bounds = array<i64: 3, 1>}, {transform_indices = @transform_3, window_bounds = array<i64: 3, 1024>}]} {
    %c0 = arith.constant 0 : index
    %c0_0 = arith.constant 0 : index
    %0 = vector.load %arg2[%c0, %c0_0] : memref<3x32xbf16, #tpu.memory_space<vmem>>, vector<3x32xbf16>
    %c0_1 = arith.constant 0 : index
    %c0_2 = arith.constant 0 : index
    %1 = vector.load %arg1[%c0_1, %c0_2] : memref<32x1024xbf16, #tpu.memory_space<vmem>>, vector<32x1024xbf16>
    %cst = arith.constant dense<0.000000e+00> : vector<3x1024xf32>
    %2 = tpu.matmul %0, %1, %cst {dimension_numbers = #tpu.dot_dimension_numbers<[1], [0], [0], [1], [0, 0, 1, 1], [], []>} : vector<3x32xbf16>, vector<32x1024xbf16>, vector<3x1024xf32> -> vector<3x1024xf32>
    %c0_3 = arith.constant 0 : index
    %c0_4 = arith.constant 0 : index
    %3 = vector.load %arg3[%c0_3, %c0_4] : memref<3x1xf32, #tpu.memory_space<vmem>>, vector<3x1xf32>
    %4 = vector.broadcast %3 : vector<3x1xf32> to vector<3x1024xf32>
    %5 = arith.addf %2, %4 : vector<3x1024xf32>
    %c0_5 = arith.constant 0 : index
    %c0_6 = arith.constant 0 : index
    %6 = vector.load %arg4[%c0_5, %c0_6] : memref<3x1024xf32, #tpu.memory_space<vmem>>, vector<3x1024xf32>
    tpu.vector_store %arg4[%c0_5, %c0_6], %5 {strides = array<i32>} : memref<3x1024xf32, #tpu.memory_space<vmem>>, vector<3x1024xf32>,
    return
  }
  func.func @transform_0(%arg0: i32) -> (i32, i32) {
    %c0_i32 = arith.constant 0 : i32
    %c0_i32_0 = arith.constant 0 : i32
    return %c0_i32, %arg0 : i32, i32
  }
  func.func @transform_1(%arg0: i32) -> (i32, i32) {
    %c0_i32 = arith.constant 0 : i32
    %c0_i32_0 = arith.constant 0 : i32
    %c0_i32_1 = arith.constant 0 : i32
    return %c0_i32, %c0_i32_0 : i32, i32
  }
  func.func @transform_2(%arg0: i32) -> (i32, i32) {
    %c0_i32 = arith.constant 0 : i32
    %c0_i32_0 = arith.constant 0 : i32
    %c0_i32_1 = arith.constant 0 : i32
    return %c0_i32, %c0_i32_0 : i32, i32
  }
  func.func @transform_3(%arg0: i32) -> (i32, i32) {
    %c0_i32 = arith.constant 0 : i32
    %c0_i32_0 = arith.constant 0 : i32
    return %c0_i32, %arg0 : i32, i32
  }
}

</mosaic_0001>

<llo_original>
// kernel: forward.34
$region0: #{forward.34}
  #allocation0 [shape = 'u32[]', space=smem, size = 0x4, offset = 0x4, fixed_abs, tag = 'smem constant byte address 0x4 - core index']
  #allocation1 [shape = 'u32[144,128]{1,0:T(1,128)}', space=vmem, size = 0x12000, scoped, tag = 'internal scratch']
  %s0 = inlined_call_operand.vmem [shape: bf16[80,2048], index: 0, kind: input, shape index: {}]
  %s1 = inlined_call_operand.vmem [shape: bf16[8,80], index: 1, kind: input, shape index: {}]
  %s2 = inlined_call_operand.vmem [shape: f32[8,1], index: 2, kind: input, shape index: {}]
  %s3 = inlined_call_operand.vmem [shape: f32[8,8], index: 3, kind: input, shape index: {}]
  %s4 = inlined_call_operand.vmem [shape: f32[8,1], index: 4, kind: input, shape index: {}]
  %s5 = inlined_call_operand.vmem [shape: f32[8,2048], index: 5, kind: output, shape index: {}]
  %s6 = sld [smem:[#allocation0]]
  $region76: #{forward.34} parent=0
    _
  %s8 = ssub.s32 1, %s6
  %s9 = scalar_select 0, %s8, %s6
  $region1: #{forward.34} parent=0
    #allocation2 [shape = 'u8[327680]{0}', space=vmem, size = 0x50000, scoped, tag = 'input window, operand 0']
    loop: start=0, step=1, limit=4
    $region2: #{forward.34} parent=1 // loop_pre_header
      _
    $region3: #{forward.34} parent=1 // loop_header
      %s11 = sphi 0, %s15
      %p12 = scmp.ge.s32.totalorder %s11, 4
      %s21 = sphi 0, %s23
      %s24 = sphi 0, %s21
      %s25 = sphi 0, %s24
      %s41 = sphi 0, %s25
      %s45 = sphi 0, %s45
      %s47 = sphi 0, %s45
      %s48 = sphi 0, %s47
      %s62 = sphi 0, %s48
      %s66 = sphi 0, %s66
      %s68 = sphi 0, %s66
      %s69 = sphi 0, %s68
      %s83 = sphi 0, %s69
      %s87 = sphi 0, %s87
      %s89 = sphi 0, %s87
      %s90 = sphi 0, %s89
      %s104 = sphi 0, %s90
      %s108 = sphi 0, %s108
      %s110 = sphi 0, %s108
      %s111 = sphi 0, %s110
      %s125 = sphi 0, %s111
      %s131 = sphi 0, %s133
      %s134 = sphi 0, %s131
      %s135 = sphi 0, %s134
      %s151 = sphi 0, %s135
    $region4: #{forward.34} parent=1 // loop_header_branch
      %14 = sbr.rel (%p12) target = $region8
    $region5: #{forward.34} parent=1 // loop_body
      %s16 = ssub.s32 %s11, 1
      %s17 = ssub.s32 %s11, 2
      %s18 = sadd.s32 %s11, 1
      %s19 = ssub.s32 %s11, %s18
      %p20 = scmp.eq.s32.totalorder %s19, 0
      %s22 = sadd.s32 %s21, 1
      %s23 = scalar_select %p20, %s21, %s22
      %p26 = pneg %p20
      %p27 = scmp.eq.s32.totalorder %s11, 1
      %p28 = por %p26, %p27
      %p29 = scmp.ne.s32.totalorder %s21, %s24
      %p30 = scmp.eq.s32.totalorder %s11, 0
      %p31 = por %p29, %p30
      %p32 = scmp.ne.s32.totalorder %s21, %s24
      %p33 = scmp.eq.s32.totalorder %s16, 1
      %p34 = por %p32, %p33
      %p35 = scmp.ne.s32.totalorder %s24, %s25
      %p36 = scmp.eq.s32.totalorder %s16, 0
      %p37 = por %p35, %p36
      %p38 = scmp.ne.s32.totalorder %s24, %s25
      %p39 = scmp.eq.s32.totalorder %s17, 1
      %p40 = por %p38, %p39
      %p42 = scmp.ne.s32.totalorder %s25, %s41
      %p43 = scmp.eq.s32.totalorder %s17, 0
      %p44 = por %p42, %p43
      %s46 = sadd.s32 %s45, 1
      %p49 = scmp.eq.s32.totalorder %s11, 1
      %p50 = scmp.ne.s32.totalorder %s45, %s47
      %p51 = scmp.eq.s32.totalorder %s11, 0
      %p52 = por %p50, %p51
      %p53 = scmp.ne.s32.totalorder %s45, %s47
      %p54 = scmp.eq.s32.totalorder %s16, 1
      %p55 = por %p53, %p54
      %p56 = scmp.ne.s32.totalorder %s47, %s48
      %p57 = scmp.eq.s32.totalorder %s16, 0
      %p58 = por %p56, %p57
      %p59 = scmp.ne.s32.totalorder %s47, %s48
      %p60 = scmp.eq.s32.totalorder %s17, 1
      %p61 = por %p59, %p60
      %p63 = scmp.ne.s32.totalorder %s48, %s62
      %p64 = scmp.eq.s32.totalorder %s17, 0
      %p65 = por %p63, %p64
      %s67 = sadd.s32 %s66, 1
      %p70 = scmp.eq.s32.totalorder %s11, 1
      %p71 = scmp.ne.s32.totalorder %s66, %s68
      %p72 = scmp.eq.s32.totalorder %s11, 0
      %p73 = por %p71, %p72
      %p74 = scmp.ne.s32.totalorder %s66, %s68
      %p75 = scmp.eq.s32.totalorder %s16, 1
      %p76 = por %p74, %p75
      %p77 = scmp.ne.s32.totalorder %s68, %s69
      %p78 = scmp.eq.s32.totalorder %s16, 0
      %p79 = por %p77, %p78
      %p80 = scmp.ne.s32.totalorder %s68, %s69
      %p81 = scmp.eq.s32.totalorder %s17, 1
      %p82 = por %p80, %p81
      %p84 = scmp.ne.s32.totalorder %s69, %s83
      %p85 = scmp.eq.s32.totalorder %s17, 0
      %p86 = por %p84, %p85
      %s88 = sadd.s32 %s87, 1
      %p91 = scmp.eq.s32.totalorder %s11, 1
      %p92 = scmp.ne.s32.totalorder %s87, %s89
      %p93 = scmp.eq.s32.totalorder %s11, 0
      %p94 = por %p92, %p93
      %p95 = scmp.ne.s32.totalorder %s87, %s89
      %p96 = scmp.eq.s32.totalorder %s16, 1
      %p97 = por %p95, %p96
      %p98 = scmp.ne.s32.totalorder %s89, %s90
      %p99 = scmp.eq.s32.totalorder %s16, 0
      %p100 = por %p98, %p99
      %p101 = scmp.ne.s32.totalorder %s89, %s90
      %p102 = scmp.eq.s32.totalorder %s17, 1
      %p103 = por %p101, %p102
      %p105 = scmp.ne.s32.totalorder %s90, %s104
      %p106 = scmp.eq.s32.totalorder %s17, 0
      %p107 = por %p105, %p106
      %s109 = sadd.s32 %s108, 1
      %p112 = scmp.eq.s32.totalorder %s11, 1
      %p113 = scmp.ne.s32.totalorder %s108, %s110
      %p114 = scmp.eq.s32.totalorder %s11, 0
      %p115 = por %p113, %p114
      %p116 = scmp.ne.s32.totalorder %s108, %s110
      %p117 = scmp.eq.s32.totalorder %s16, 1
      %p118 = por %p116, %p117
      %p119 = scmp.ne.s32.totalorder %s110, %s111
      %p120 = scmp.eq.s32.totalorder %s16, 0
      %p121 = por %p119, %p120
      %p122 = scmp.ne.s32.totalorder %s110, %s111
      %p123 = scmp.eq.s32.totalorder %s17, 1
      %p124 = por %p122, %p123
      %p126 = scmp.ne.s32.totalorder %s111, %s125
      %p127 = scmp.eq.s32.totalorder %s17, 0
      %p128 = por %p126, %p127
      %s129 = ssub.s32 %s11, %s18
      %p130 = scmp.eq.s32.totalorder %s129, 0
      %s132 = sadd.s32 %s131, 1
      %s133 = scalar_select %p130, %s131, %s132
      %p136 = pneg %p130
      %p137 = scmp.eq.s32.totalorder %s11, 1
      %p138 = por %p136, %p137
      %p139 = scmp.ne.s32.totalorder %s131, %s134
      %p140 = scmp.eq.s32.totalorder %s11, 0
      %p141 = por %p139, %p140
      %p142 = scmp.ne.s32.totalorder %s131, %s134
      %p143 = scmp.eq.s32.totalorder %s16, 1
      %p144 = por %p142, %p143
      %p145 = scmp.ne.s32.totalorder %s134, %s135
      %p146 = scmp.eq.s32.totalorder %s16, 0
      %p147 = por %p145, %p146
      %p148 = scmp.ne.s32.totalorder %s134, %s135
      %p149 = scmp.eq.s32.totalorder %s17, 1
      %p150 = por %p148, %p149
      %p152 = scmp.ne.s32.totalorder %s135, %s151
      %p153 = scmp.eq.s32.totalorder %s17, 0
      %p154 = por %p152, %p153
      %p155 = scmp.le.s32.totalorder 1, %s11
      %p156 = scmp.lt.s32.totalorder %s11, 3
      %p157 = pnand %p155, %p156
      %p158 = pneg %p157
      // Predicated region
      $region9: #{forward.34} parent=5 // pred_check
        _
      $region10: #{forward.34} parent=5 // pred_check_branch
        %160 = sbr.rel (%p157) target = $region12
      $region11: #{forward.34} parent=5 // pred_region
        %s161 = ssub.s32 %s11, 1
        // Predicated region
        $region13: #{forward.34} parent=11 // pred_check
          %p162 = pneg %p58
        $region14: #{forward.34} parent=11 // pred_check_branch
          %164 = sbr.rel (%p162) target = $region16
        $region15: #{forward.34} parent=11 // pred_region
          _
        $region16: #{forward.34} parent=11 // pred_fallthru
          _
        // Predicated region
        $region17: #{forward.34} parent=11 // pred_check
          %p165 = pneg %p79
        $region18: #{forward.34} parent=11 // pred_check_branch
          %167 = sbr.rel (%p165) target = $region20
        $region19: #{forward.34} parent=11 // pred_region
          _
        $region20: #{forward.34} parent=11 // pred_fallthru
          _
        // Predicated region
        $region21: #{forward.34} parent=11 // pred_check
          %p168 = pneg %p100
        $region22: #{forward.34} parent=11 // pred_check_branch
          %170 = sbr.rel (%p168) target = $region24
        $region23: #{forward.34} parent=11 // pred_region
          _
        $region24: #{forward.34} parent=11 // pred_fallthru
          _
        // Predicated region
        $region25: #{forward.34} parent=11 // pred_check
          %p171 = pneg %p121
        $region26: #{forward.34} parent=11 // pred_check_branch
          %173 = sbr.rel (%p171) target = $region28
        $region27: #{forward.34} parent=11 // pred_region
          _
        $region28: #{forward.34} parent=11 // pred_fallthru
          _
      $region12: #{forward.34} parent=5 // pred_fallthru
        _
      %p174 = scmp.lt.s32.totalorder %s11, 2
      // Predicated region
      $region29: #{forward.34} parent=5 // pred_check
        %p175 = pneg %p174
      $region30: #{forward.34} parent=5 // pred_check_branch
        %177 = sbr.rel (%p175) target = $region32
      $region31: #{forward.34} parent=5 // pred_region
        // Predicated region
        $region33: #{forward.34} parent=31 // pred_check
          %p178 = pneg %p31
        $region34: #{forward.34} parent=31 // pred_check_branch
          %180 = sbr.rel (%p178) target = $region36
        $region35: #{forward.34} parent=31 // pred_region
          %s181 = sand.u32 %s21, 1
          %s182 = sand.u32 %s21, 1
          %s183 = smul.addr %s182, 320
          %s184 = scalar_lea.vmem [#allocation2], %s183
          %s185 = smul.u32 8, %s11
          %s186 = smul.addr %s185, 4
          %s187 = scalar_lea.vmem %s0, %s186
          // Predicated region
          $region37: #{forward.34} parent=35 // pred_check
            _
          $region38: #{forward.34} parent=35 // pred_check_branch
            %189 = sbr.rel (0) target = $region40
          $region39: #{forward.34} parent=35 // pred_region
            // Predicated region
            $region41: #{forward.34} parent=39 // pred_check
              _
            $region42: #{forward.34} parent=39 // pred_check_branch
              %191 = sbr.rel (0) target = $region44
            $region43: #{forward.34} parent=39 // pred_region
              loop: start=0, step=1, limit=1
              $region45: #{forward.34} parent=43 // loop_pre_header
                _
              $region46: #{forward.34} parent=43 // loop_header
                %s193 = sphi 0, %s197
                %p194 = scmp.ge.s32.totalorder %s193, 1
                %s198 = sphi %s187, %s187
                %s199 = sphi %s184, %s184
              $region47: #{forward.34} parent=43 // loop_header_branch
                %196 = sbr.rel (%p194) target = $region51
              $region48: #{forward.34} parent=43 // loop_body
                %v200 = vld [vmem:[%s198] sm:$0xff]
                %201 = vst [vmem:[%s199] sm:$0xff] %v200
                %v202 = vld [vmem:[%s198 + $0x8] sm:$0xff]
                %203 = vst [vmem:[%s199 + $0x8] sm:$0xff] %v202
                %v204 = vld [vmem:[%s198 + $0x10] sm:$0xff]
                %205 = vst [vmem:[%s199 + $0x10] sm:$0xff] %v204
                %v206 = vld [vmem:[%s198 + $0x18] sm:$0xff]
                %207 = vst [vmem:[%s199 + $0x18] sm:$0xff] %v206
                %v208 = vld [vmem:[%s198 + $0x40] sm:$0xff]
                %209 = vst [vmem:[%s199 + $0x20] sm:$0xff] %v208
                %v210 = vld [vmem:[%s198 + $0x48] sm:$0xff]
                %211 = vst [vmem:[%s199 + $0x28] sm:$0xff] %v210
                %v212 = vld [vmem:[%s198 + $0x50] sm:$0xff]
                %213 = vst [vmem:[%s199 + $0x30] sm:$0xff] %v212
                %v214 = vld [vmem:[%s198 + $0x58] sm:$0xff]
                %215 = vst [vmem:[%s199 + $0x38] sm:$0xff] %v214
                %v216 = vld [vmem:[%s198 + $0x80] sm:$0xff]
                %217 = vst [vmem:[%s199 + $0x40] sm:$0xff] %v216
                %v218 = vld [vmem:[%s198 + $0x88] sm:$0xff]
                %219 = vst [vmem:[%s199 + $0x48] sm:$0xff] %v218
                %v220 = vld [vmem:[%s198 + $0x90] sm:$0xff]
                %221 = vst [vmem:[%s199 + $0x50] sm:$0xff] %v220
                %v222 = vld [vmem:[%s198 + $0x98] sm:$0xff]
                %223 = vst [vmem:[%s199 + $0x58] sm:$0xff] %v222
                %v224 = vld [vmem:[%s198 + $0xc0] sm:$0xff]
                %225 = vst [vmem:[%s199 + $0x60] sm:$0xff] %v224
                %v226 = vld [vmem:[%s198 + $0xc8] sm:$0xff]
                %227 = vst [vmem:[%s199 + $0x68] sm:$0xff] %v226
                %v228 = vld [vmem:[%s198 + $0xd0] sm:$0xff]
                %229 = vst [vmem:[%s199 + $0x70] sm:$0xff] %v228
                %v230 = vld [vmem:[%s198 + $0xd8] sm:$0xff]
                %231 = vst [vmem:[%s199 + $0x78] sm:$0xff] %v230
                %v232 = vld [vmem:[%s198 + $0x100] sm:$0xff]
                %233 = vst [vmem:[%s199 + $0x80] sm:$0xff] %v232
                %v234 = vld [vmem:[%s198 + $0x108] sm:$0xff]
                %235 = vst [vmem:[%s199 + $0x88] sm:$0xff] %v234
                %v236 = vld [vmem:[%s198 + $0x110] sm:$0xff]
                %237 = vst [vmem:[%s199 + $0x90] sm:$0xff] %v236
                %v238 = vld [vmem:[%s198 + $0x118] sm:$0xff]
                %239 = vst [vmem:[%s199 + $0x98] sm:$0xff] %v238
                %v240 = vld [vmem:[%s198 + $0x140] sm:$0xff]
                %241 = vst [vmem:[%s199 + $0xa0] sm:$0xff] %v240
                %v242 = vld [vmem:[%s198 + $0x148] sm:$0xff]
                %243 = vst [vmem:[%s199 + $0xa8] sm:$0xff] %v242
                %v244 = vld [vmem:[%s198 + $0x150] sm:$0xff]
                %245 = vst [vmem:[%s199 + $0xb0] sm:$0xff] %v244
                %v246 = vld [vmem:[%s198 + $0x158] sm:$0xff]
                %247 = vst [vmem:[%s199 + $0xb8] sm:$0xff] %v246
                %v248 = vld [vmem:[%s198 + $0x180] sm:$0xff]
                %249 = vst [vmem:[%s199 + $0xc0] sm:$0xff] %v248
                %v250 = vld [vmem:[%s198 + $0x188] sm:$0xff]
                %251 = vst [vmem:[%s199 + $0xc8] sm:$0xff] %v250
                %v252 = vld [vmem:[%s198 + $0x190] sm:$0xff]
                %253 = vst [vmem:[%s199 + $0xd0] sm:$0xff] %v252
                %v254 = vld [vmem:[%s198 + $0x198] sm:$0xff]
                %255 = vst [vmem:[%s199 + $0xd8] sm:$0xff] %v254
                %v256 = vld [vmem:[%s198 + $0x1c0] sm:$0xff]
                %257 = vst [vmem:[%s199 + $0xe0] sm:$0xff] %v256
                %v258 = vld [vmem:[%s198 + $0x1c8] sm:$0xff]
                %259 = vst [vmem:[%s199 + $0xe8] sm:$0xff] %v258
                %v260 = vld [vmem:[%s198 + $0x1d0] sm:$0xff]
                %261 = vst [vmem:[%s199 + $0xf0] sm:$0xff] %v260
                %v262 = vld [vmem:[%s198 + $0x1d8] sm:$0xff]
                %263 = vst [vmem:[%s199 + $0xf8] sm:$0xff] %v262
                %v264 = vld [vmem:[%s198 + $0x200] sm:$0xff]
                %265 = vst [vmem:[%s199 + $0x100] sm:$0xff] %v264
                %v266 = vld [vmem:[%s198 + $0x208] sm:$0xff]
                %267 = vst [vmem:[%s199 + $0x108] sm:$0xff] %v266
                %v268 = vld [vmem:[%s198 + $0x210] sm:$0xff]
                %269 = vst [vmem:[%s199 + $0x110] sm:$0xff] %v268
                %v270 = vld [vmem:[%s198 + $0x218] sm:$0xff]
                %271 = vst [vmem:[%s199 + $0x118] sm:$0xff] %v270
                %v272 = vld [vmem:[%s198 + $0x240] sm:$0xff]
                %273 = vst [vmem:[%s199 + $0x120] sm:$0xff] %v272
                %v274 = vld [vmem:[%s198 + $0x248] sm:$0xff]
                %275 = vst [vmem:[%s199 + $0x128] sm:$0xff] %v274
                %v276 = vld [vmem:[%s198 + $0x250] sm:$0xff]
                %277 = vst [vmem:[%s199 + $0x130] sm:$0xff] %v276
                %v278 = vld [vmem:[%s198 + $0x258] sm:$0xff]
                %279 = vst [vmem:[%s199 + $0x138] sm:$0xff] %v278
              $region49: #{forward.34} parent=43 // loop_footer
                %s197 = sadd.s32 1, %s193
              $region50: #{forward.34} parent=43 // loop_footer_branch
                %192 = sbr.rel target = $region46
              $region51: #{forward.34} parent=43 // loop_exit
                _
            $region44: #{forward.34} parent=39 // pred_fallthru
              _
            // Predicated region
            $region52: #{forward.34} parent=39 // pred_check
              _
            $region53: #{forward.34} parent=39 // pred_check_branch
              %281 = sbr.rel target = $region55
            $region54: #{forward.34} parent=39 // pred_region
              _
            $region55: #{forward.34} parent=39 // pred_fallthru
              _
          $region40: #{forward.34} parent=35 // pred_fallthru
            _
          %282 = vnop
        $region36: #{forward.34} parent=31 // pred_fallthru
          _
      $region32: #{forward.34} parent=5 // pred_fallthru
        _
      %p283 = scmp.le.s32.totalorder 1, %s11
      %p284 = scmp.lt.s32.totalorder %s11, 3
      %p285 = pnand %p283, %p284
      %p286 = pneg %p285
      // Predicated region
      $region56: #{forward.34} parent=5 // pred_check
        _
      $region57: #{forward.34} parent=5 // pred_check_branch
        %288 = sbr.rel (%p285) target = $region59
      $region58: #{forward.34} parent=5 // pred_region
        %s289 = ssub.s32 %s11, 1
        %s290 = sand.u32 %s24, 1
        %s291 = sand.u32 %s24, 1
        %s292 = smul.addr %s291, 320
        %s293 = scalar_lea.vmem [#allocation2], %s292
        // Predicated region
        $region60: #{forward.34} parent=58 // pred_check
          %p294 = pneg %p37
        $region61: #{forward.34} parent=58 // pred_check_branch
          %296 = sbr.rel (%p294) target = $region63
        $region62: #{forward.34} parent=58 // pred_region
          _
        $region63: #{forward.34} parent=58 // pred_fallthru
          _
        %s297 = sand.u32 %s24, 1
        %s298 = sand.u32 %s24, 1
        %s299 = smul.addr %s298, 320
        %s300 = scalar_lea.vmem [#allocation2], %s299
        %p301 = pneg %p37
        %p302 = pneg %p34
        %p303 = pneg %p58
        %p304 = pneg %p55
        %p305 = pneg %p79
        %p306 = pneg %p76
        %p307 = pneg %p100
        %p308 = pneg %p97
        %p309 = pneg %p121
        %p310 = pneg %p118
        %p311 = pneg %p147
        %p312 = pneg %p144
        %s313 = smul.u32 8, %s16
        %p314 = scmp.lt.s32.totalorder %s313, 15
        %s315 = scalar_select %p314, %s313, 15
        %s316 = smul.addr %s315, 8
        %s317 = scalar_lea.vmem %s5, %s316
        %s318 = smul.u32 8, %s16
        %s319 = smul.u32 8, %s16
        %p320 = scmp.lt.s32.totalorder %s319, 15
        %s321 = scalar_select %p320, %s319, 15
        %s322 = smul.addr %s321, 8
        %s323 = scalar_lea.vmem %s5, %s322
        %s324 = smul.u32 8, %s16
        %v326 = vld [vmem:[%s1] sm:$0xf]
        %v327 = vld [vmem:[%s293] sm:$0xff]
        %v328 = vld [vmem:[%s293 + $0x8] sm:$0xff]
        %v329 = vld [vmem:[%s293 + $0x10] sm:$0xff]
        %v330 = vld [vmem:[%s293 + $0x18] sm:$0xff]
        %v331 = vld [vmem:[%s293 + $0x20] sm:$0xff]
        %v332 = vld [vmem:[%s293 + $0x28] sm:$0xff]
        %v333 = vld [vmem:[%s293 + $0x30] sm:$0xff]
        %v334 = vld [vmem:[%s293 + $0x38] sm:$0xff]
        %v335 = vld [vmem:[%s293 + $0x40] sm:$0xff]
        %v336 = vld [vmem:[%s293 + $0x48] sm:$0xff]
        %v337 = vld [vmem:[%s293 + $0x50] sm:$0xff]
        %v338 = vld [vmem:[%s293 + $0x58] sm:$0xff]
        %v339 = vld [vmem:[%s293 + $0x60] sm:$0xff]
        %v340 = vld [vmem:[%s293 + $0x68] sm:$0xff]
        %v341 = vld [vmem:[%s293 + $0x70] sm:$0xff]
        %v342 = vld [vmem:[%s293 + $0x78] sm:$0xff]
        %v343 = vld [vmem:[%s293 + $0x80] sm:$0xff]
        %v344 = vld [vmem:[%s293 + $0x88] sm:$0xff]
        %v345 = vld [vmem:[%s293 + $0x90] sm:$0xff]
        %v346 = vld [vmem:[%s293 + $0x98] sm:$0xff]
        %v347 = vld [vmem:[%s293 + $0xa0] sm:$0xff]
        %v348 = vld [vmem:[%s293 + $0xa8] sm:$0xff]
        %v349 = vld [vmem:[%s293 + $0xb0] sm:$0xff]
        %v350 = vld [vmem:[%s293 + $0xb8] sm:$0xff]
        %v351 = vld [vmem:[%s293 + $0xc0] sm:$0xff]
        %v352 = vld [vmem:[%s293 + $0xc8] sm:$0xff]
        %v353 = vld [vmem:[%s293 + $0xd0] sm:$0xff]
        %v354 = vld [vmem:[%s293 + $0xd8] sm:$0xff]
        %v355 = vld [vmem:[%s293 + $0xe0] sm:$0xff]
        %v356 = vld [vmem:[%s293 + $0xe8] sm:$0xff]
        %v357 = vld [vmem:[%s293 + $0xf0] sm:$0xff]
        %v358 = vld [vmem:[%s293 + $0xf8] sm:$0xff]
        %v359 = vld [vmem:[%s293 + $0x100] sm:$0xff]
        %v360 = vld [vmem:[%s293 + $0x108] sm:$0xff]
        %v361 = vld [vmem:[%s293 + $0x110] sm:$0xff]
        %v362 = vld [vmem:[%s293 + $0x118] sm:$0xff]
        %v363 = vld [vmem:[%s293 + $0x120] sm:$0xff]
        %v364 = vld [vmem:[%s293 + $0x128] sm:$0xff]
        %v365 = vld [vmem:[%s293 + $0x130] sm:$0xff]
        %v366 = vld [vmem:[%s293 + $0x138] sm:$0xff]
        %v367 = vld [vmem:[%s2] sm:$0xff]
        %369 = vset.pattern.permute.xlu0 0
        %370 = vperm.xlu0 %369, %v367
        %v371 = vpop.permute.xlu0 %370
        %v413 = vunpack.c.l.b16 %v327
        %v414 = vunpack.c.h.b16 %v327
        %v415 = vunpack.c.l.b16 %v328
        %v416 = vunpack.c.h.b16 %v328
        %v417 = vunpack.c.l.b16 %v329
        %v418 = vunpack.c.h.b16 %v329
        %v419 = vunpack.c.l.b16 %v330
        %v420 = vunpack.c.h.b16 %v330
        %v421 = vunpack.c.l.b16 %v331
        %v422 = vunpack.c.h.b16 %v331
        %v423 = vunpack.c.l.b16 %v332
        %v424 = vunpack.c.h.b16 %v332
        %v425 = vunpack.c.l.b16 %v333
        %v426 = vunpack.c.h.b16 %v333
        %v427 = vunpack.c.l.b16 %v334
        %v428 = vunpack.c.h.b16 %v334
        %v429 = vunpack.c.l.b16 %v335
        %v430 = vunpack.c.h.b16 %v335
        %v431 = vunpack.c.l.b16 %v336
        %v432 = vunpack.c.h.b16 %v336
        %v433 = vunpack.c.l.b16 %v337
        %v434 = vunpack.c.h.b16 %v337
        %v435 = vunpack.c.l.b16 %v338
        %v436 = vunpack.c.h.b16 %v338
        %v437 = vunpack.c.l.b16 %v339
        %v438 = vunpack.c.h.b16 %v339
        %v439 = vunpack.c.l.b16 %v340
        %v440 = vunpack.c.h.b16 %v340
        %v441 = vunpack.c.l.b16 %v341
        %v442 = vunpack.c.h.b16 %v341
        %v443 = vunpack.c.l.b16 %v342
        %v444 = vunpack.c.h.b16 %v342
        %v445 = vunpack.c.l.b16 %v343
        %v446 = vunpack.c.h.b16 %v343
        %v447 = vunpack.c.l.b16 %v344
        %v448 = vunpack.c.h.b16 %v344
        %v449 = vunpack.c.l.b16 %v345
        %v450 = vunpack.c.h.b16 %v345
        %v451 = vunpack.c.l.b16 %v346
        %v452 = vunpack.c.h.b16 %v346
        %v453 = vunpack.c.l.b16 %v347
        %v454 = vunpack.c.h.b16 %v347
        %v455 = vunpack.c.l.b16 %v348
        %v456 = vunpack.c.h.b16 %v348
        %v457 = vunpack.c.l.b16 %v349
        %v458 = vunpack.c.h.b16 %v349
        %v459 = vunpack.c.l.b16 %v350
        %v460 = vunpack.c.h.b16 %v350
        %v461 = vunpack.c.l.b16 %v351
        %v462 = vunpack.c.h.b16 %v351
        %v463 = vunpack.c.l.b16 %v352
        %v464 = vunpack.c.h.b16 %v352
        %v465 = vunpack.c.l.b16 %v353
        %v466 = vunpack.c.h.b16 %v353
        %v467 = vunpack.c.l.b16 %v354
        %v468 = vunpack.c.h.b16 %v354
        %v469 = vunpack.c.l.b16 %v355
        %v470 = vunpack.c.h.b16 %v355
        %v471 = vunpack.c.l.b16 %v356
        %v472 = vunpack.c.h.b16 %v356
        %v473 = vunpack.c.l.b16 %v357
        %v474 = vunpack.c.h.b16 %v357
        %v475 = vunpack.c.l.b16 %v358
        %v476 = vunpack.c.h.b16 %v358
        %v477 = vunpack.c.l.b16 %v359
        %v478 = vunpack.c.h.b16 %v359
        %v479 = vunpack.c.l.b16 %v360
        %v480 = vunpack.c.h.b16 %v360
        %v481 = vunpack.c.l.b16 %v361
        %v482 = vunpack.c.h.b16 %v361
        %v483 = vunpack.c.l.b16 %v362
        %v484 = vunpack.c.h.b16 %v362
        %v485 = vunpack.c.l.b16 %v363
        %v486 = vunpack.c.h.b16 %v363
        %v487 = vunpack.c.l.b16 %v364
        %v488 = vunpack.c.h.b16 %v364
        %v489 = vunpack.c.l.b16 %v365
        %v490 = vunpack.c.h.b16 %v365
        %v491 = vunpack.c.l.b16 %v366
        %v492 = vunpack.c.h.b16 %v366
        %v493 = vpack.c.b16 %v421, %v413
        %v494 = vpack.c.b16 %v422, %v414
        %v495 = vpack.c.b16 %v423, %v415
        %v496 = vpack.c.b16 %v424, %v416
        %v497 = vpack.c.b16 %v425, %v417
        %v498 = vpack.c.b16 %v426, %v418
        %v499 = vpack.c.b16 %v427, %v419
        %v500 = vpack.c.b16 %v428, %v420
        %v501 = vpack.c.b16 %v437, %v429
        %v502 = vpack.c.b16 %v438, %v430
        %v503 = vpack.c.b16 %v439, %v431
        %v504 = vpack.c.b16 %v440, %v432
        %v505 = vpack.c.b16 %v441, %v433
        %v506 = vpack.c.b16 %v442, %v434
        %v507 = vpack.c.b16 %v443, %v435
        %v508 = vpack.c.b16 %v444, %v436
        %v509 = vpack.c.b16 %v453, %v445
        %v510 = vpack.c.b16 %v454, %v446
        %v511 = vpack.c.b16 %v455, %v447
        %v512 = vpack.c.b16 %v456, %v448
        %v513 = vpack.c.b16 %v457, %v449
        %v514 = vpack.c.b16 %v458, %v450
        %v515 = vpack.c.b16 %v459, %v451
        %v516 = vpack.c.b16 %v460, %v452
        %v517 = vpack.c.b16 %v469, %v461
        %v518 = vpack.c.b16 %v470, %v462
        %v519 = vpack.c.b16 %v471, %v463
        %v520 = vpack.c.b16 %v472, %v464
        %v521 = vpack.c.b16 %v473, %v465
        %v522 = vpack.c.b16 %v474, %v466
        %v523 = vpack.c.b16 %v475, %v467
        %v524 = vpack.c.b16 %v476, %v468
        %v525 = vpack.c.b16 %v485, %v477
        %v526 = vpack.c.b16 %v486, %v478
        %v527 = vpack.c.b16 %v487, %v479
        %v528 = vpack.c.b16 %v488, %v480
        %v529 = vpack.c.b16 %v489, %v481
        %v530 = vpack.c.b16 %v490, %v482
        %v531 = vpack.c.b16 %v491, %v483
        %v532 = vpack.c.b16 %v492, %v484
        %vm573 = vcmask 654336
        %v575 = vsel %vm573, %v326, 0
        %577 = vmatprep.subr.bf16.mxu0 %v494
        %578 = vmatpush1.bf16.msra.mxu0 %v493
        %579 = vmatprep.subr.bf16.mxu0 %v502
        %580 = vmatpush1.bf16.msra.mxu0 %v501
        %581 = vmatprep.subr.bf16.mxu0 %v510
        %582 = vmatpush1.bf16.msra.mxu0 %v509
        %583 = vmatprep.subr.bf16.mxu0 %v518
        %584 = vmatpush1.bf16.msra.mxu0 %v517
        %585 = vmatprep.subr.bf16.mxu0 %v526
        %586 = vmatpush1.bf16.msra.mxu0 %v525
        %587 = vmatprep.subr.bf16.mxu0 0
        %588 = vmatpush1.bf16.msra.mxu0 0
        %589 = vmatprep.subr.bf16.mxu0 0
        %590 = vmatpush1.bf16.msra.mxu0 0
        %591 = vmatprep.subr.bf16.mxu0 0
        %592 = vmatpush1.bf16.msra.mxu0 0
        %593 = vmatprep.subr.bf16.mxu0 0
        %594 = vmatpush1.bf16.msra.mxu0 0
        %595 = vmatprep.subr.bf16.mxu0 0
        %596 = vmatpush1.bf16.msra.mxu0 0
        %597 = vmatprep.subr.bf16.mxu0 0
        %598 = vmatpush1.bf16.msra.mxu0 0
        %599 = vmatprep.subr.bf16.mxu0 0
        %600 = vmatpush1.bf16.msra.mxu0 0
        %601 = vmatprep.subr.bf16.mxu0 0
        %602 = vmatpush1.bf16.msra.mxu0 0
        %603 = vmatprep.subr.bf16.mxu0 0
        %604 = vmatpush1.bf16.msra.mxu0 0
        %605 = vmatprep.subr.bf16.mxu0 0
        %606 = vmatpush1.bf16.msra.mxu0 0
        %607 = vmatprep.subr.bf16.mxu0 0
        %608 = vmatpush1.bf16.msra.mxu0 0
        %609 = vmatprep.mubr.bf16.mxu0 0
        %610 = vmatmul.mubr.bf16.gmra.mrb[0].mxu0 %v575
        %v611 = vpop.f32.mrb[0].mxu0
        %v612 = vadd.f32 %v371, %v611
        %v613 = vpop.f32.mrb[0].mxu0
        %v614 = vadd.f32 %v371, %v613
        %v615 = vpop.f32.mrb[0].mxu0
        %v616 = vpop.f32.mrb[0].mxu0
        %617 = vdwg.mxu0
        %618 = vmatprep.subr.bf16.mxu0 %v496
        %619 = vmatpush1.bf16.msra.mxu0 %v495
        %620 = vmatprep.subr.bf16.mxu0 %v504
        %621 = vmatpush1.bf16.msra.mxu0 %v503
        %622 = vmatprep.subr.bf16.mxu0 %v512
        %623 = vmatpush1.bf16.msra.mxu0 %v511
        %624 = vmatprep.subr.bf16.mxu0 %v520
        %625 = vmatpush1.bf16.msra.mxu0 %v519
        %626 = vmatprep.subr.bf16.mxu0 %v528
        %627 = vmatpush1.bf16.msra.mxu0 %v527
        %628 = vmatprep.subr.bf16.mxu0 0
        %629 = vmatpush1.bf16.msra.mxu0 0
        %630 = vmatprep.subr.bf16.mxu0 0
        %631 = vmatpush1.bf16.msra.mxu0 0
        %632 = vmatprep.subr.bf16.mxu0 0
        %633 = vmatpush1.bf16.msra.mxu0 0
        %634 = vmatprep.subr.bf16.mxu0 0
        %635 = vmatpush1.bf16.msra.mxu0 0
        %636 = vmatprep.subr.bf16.mxu0 0
        %637 = vmatpush1.bf16.msra.mxu0 0
        %638 = vmatprep.subr.bf16.mxu0 0
        %639 = vmatpush1.bf16.msra.mxu0 0
        %640 = vmatprep.subr.bf16.mxu0 0
        %641 = vmatpush1.bf16.msra.mxu0 0
        %642 = vmatprep.subr.bf16.mxu0 0
        %643 = vmatpush1.bf16.msra.mxu0 0
        %644 = vmatprep.subr.bf16.mxu0 0
        %645 = vmatpush1.bf16.msra.mxu0 0
        %646 = vmatprep.subr.bf16.mxu0 0
        %647 = vmatpush1.bf16.msra.mxu0 0
        %648 = vmatprep.subr.bf16.mxu0 0
        %649 = vmatpush1.bf16.msra.mxu0 0
        %650 = vmatprep.mubr.bf16.mxu0 0
        %651 = vmatmul.mubr.bf16.gmra.mrb[0].mxu0 %v575
        %v652 = vpop.f32.mrb[0].mxu0
        %v653 = vadd.f32 %v371, %v652
        %v654 = vpop.f32.mrb[0].mxu0
        %v655 = vadd.f32 %v371, %v654
        %v656 = vpop.f32.mrb[0].mxu0
        %v657 = vpop.f32.mrb[0].mxu0
        %658 = vdwg.mxu0
        %659 = vmatprep.subr.bf16.mxu0 %v498
        %660 = vmatpush1.bf16.msra.mxu0 %v497
        %661 = vmatprep.subr.bf16.mxu0 %v506
        %662 = vmatpush1.bf16.msra.mxu0 %v505
        %663 = vmatprep.subr.bf16.mxu0 %v514
        %664 = vmatpush1.bf16.msra.mxu0 %v513
        %665 = vmatprep.subr.bf16.mxu0 %v522
        %666 = vmatpush1.bf16.msra.mxu0 %v521
        %667 = vmatprep.subr.bf16.mxu0 %v530
        %668 = vmatpush1.bf16.msra.mxu0 %v529
        %669 = vmatprep.subr.bf16.mxu0 0
        %670 = vmatpush1.bf16.msra.mxu0 0
        %671 = vmatprep.subr.bf16.mxu0 0
        %672 = vmatpush1.bf16.msra.mxu0 0
        %673 = vmatprep.subr.bf16.mxu0 0
        %674 = vmatpush1.bf16.msra.mxu0 0
        %675 = vmatprep.subr.bf16.mxu0 0
        %676 = vmatpush1.bf16.msra.mxu0 0
        %677 = vmatprep.subr.bf16.mxu0 0
        %678 = vmatpush1.bf16.msra.mxu0 0
        %679 = vmatprep.subr.bf16.mxu0 0
        %680 = vmatpush1.bf16.msra.mxu0 0
        %681 = vmatprep.subr.bf16.mxu0 0
        %682 = vmatpush1.bf16.msra.mxu0 0
        %683 = vmatprep.subr.bf16.mxu0 0
        %684 = vmatpush1.bf16.msra.mxu0 0
        %685 = vmatprep.subr.bf16.mxu0 0
        %686 = vmatpush1.bf16.msra.mxu0 0
        %687 = vmatprep.subr.bf16.mxu0 0
        %688 = vmatpush1.bf16.msra.mxu0 0
        %689 = vmatprep.subr.bf16.mxu0 0
        %690 = vmatpush1.bf16.msra.mxu0 0
        %691 = vmatprep.mubr.bf16.mxu0 0
        %692 = vmatmul.mubr.bf16.gmra.mrb[0].mxu0 %v575
        %v693 = vpop.f32.mrb[0].mxu0
        %v694 = vadd.f32 %v371, %v693
        %v695 = vpop.f32.mrb[0].mxu0
        %v696 = vadd.f32 %v371, %v695
        %v697 = vpop.f32.mrb[0].mxu0
        %v698 = vpop.f32.mrb[0].mxu0
        %699 = vdwg.mxu0
        %700 = vmatprep.subr.bf16.mxu0 %v500
        %701 = vmatpush1.bf16.msra.mxu0 %v499
        %702 = vmatprep.subr.bf16.mxu0 %v508
        %703 = vmatpush1.bf16.msra.mxu0 %v507
        %704 = vmatprep.subr.bf16.mxu0 %v516
        %705 = vmatpush1.bf16.msra.mxu0 %v515
        %706 = vmatprep.subr.bf16.mxu0 %v524
        %707 = vmatpush1.bf16.msra.mxu0 %v523
        %708 = vmatprep.subr.bf16.mxu0 %v532
        %709 = vmatpush1.bf16.msra.mxu0 %v531
        %710 = vmatprep.subr.bf16.mxu0 0
        %711 = vmatpush1.bf16.msra.mxu0 0
        %712 = vmatprep.subr.bf16.mxu0 0
        %713 = vmatpush1.bf16.msra.mxu0 0
        %714 = vmatprep.subr.bf16.mxu0 0
        %715 = vmatpush1.bf16.msra.mxu0 0
        %716 = vmatprep.subr.bf16.mxu0 0
        %717 = vmatpush1.bf16.msra.mxu0 0
        %718 = vmatprep.subr.bf16.mxu0 0
        %719 = vmatpush1.bf16.msra.mxu0 0
        %720 = vmatprep.subr.bf16.mxu0 0
        %721 = vmatpush1.bf16.msra.mxu0 0
        %722 = vmatprep.subr.bf16.mxu0 0
        %723 = vmatpush1.bf16.msra.mxu0 0
        %724 = vmatprep.subr.bf16.mxu0 0
        %725 = vmatpush1.bf16.msra.mxu0 0
        %726 = vmatprep.subr.bf16.mxu0 0
        %727 = vmatpush1.bf16.msra.mxu0 0
        %728 = vmatprep.subr.bf16.mxu0 0
        %729 = vmatpush1.bf16.msra.mxu0 0
        %730 = vmatprep.subr.bf16.mxu0 0
        %731 = vmatpush1.bf16.msra.mxu0 0
        %732 = vmatprep.mubr.bf16.mxu0 0
        %733 = vmatmul.mubr.bf16.gmra.mrb[0].mxu0 %v575
        %v734 = vpop.f32.mrb[0].mxu0
        %v735 = vadd.f32 %v371, %v734
        %v736 = vpop.f32.mrb[0].mxu0
        %v737 = vadd.f32 %v371, %v736
        %v738 = vpop.f32.mrb[0].mxu0
        %v739 = vpop.f32.mrb[0].mxu0
        %740 = vdwg.mxu0
        %v741 = vld [vmem:[%s3] sm:$0xff]
        %v742 = vmul.f32 %v612, %v612
        %v743 = vmul.f32 %v614, %v614
        %v744 = vmul.f32 %v653, %v653
        %v745 = vmul.f32 %v655, %v655
        %v746 = vmul.f32 %v694, %v694
        %v747 = vmul.f32 %v696, %v696
        %v748 = vmul.f32 %v735, %v735
        %v749 = vmul.f32 %v737, %v737
        %v750 = vld [vmem:[%s4] sm:$0xff]
        %752 = vset.pattern.permute.xlu0 0
        %753 = vperm.xlu0 %752, %v750
        %v754 = vpop.permute.xlu0 %753
        %vm756 = vcmask 64512
        %v758 = vsel %vm756, %v741, 0
        %760 = vmatprep.subr.mxu0 %v743
        %761 = vmatpush1.msra.mxu0 %v742
        %762 = vmatprep.subr.mxu0 0.0
        %763 = vmatpush1.msra.mxu0 0.0
        %764 = vmatprep.subr.mxu0 0.0
        %765 = vmatpush1.msra.mxu0 0.0
        %766 = vmatprep.subr.mxu0 0.0
        %767 = vmatpush1.msra.mxu0 0.0
        %768 = vmatprep.subr.mxu0 0.0
        %769 = vmatpush1.msra.mxu0 0.0
        %770 = vmatprep.subr.mxu0 0.0
        %771 = vmatpush1.msra.mxu0 0.0
        %772 = vmatprep.subr.mxu0 0.0
        %773 = vmatpush1.msra.mxu0 0.0
        %774 = vmatprep.subr.mxu0 0.0
        %775 = vmatpush1.msra.mxu0 0.0
        %776 = vmatprep.subr.mxu0 0.0
        %777 = vmatpush1.msra.mxu0 0.0
        %778 = vmatprep.subr.mxu0 0.0
        %779 = vmatpush1.msra.mxu0 0.0
        %780 = vmatprep.subr.mxu0 0.0
        %781 = vmatpush1.msra.mxu0 0.0
        %782 = vmatprep.subr.mxu0 0.0
        %783 = vmatpush1.msra.mxu0 0.0
        %784 = vmatprep.subr.mxu0 0.0
        %785 = vmatpush1.msra.mxu0 0.0
        %786 = vmatprep.subr.mxu0 0.0
        %787 = vmatpush1.msra.mxu0 0.0
        %788 = vmatprep.subr.mxu0 0.0
        %789 = vmatpush1.msra.mxu0 0.0
        %790 = vmatprep.subr.mxu0 0.0
        %791 = vmatpush1.msra.mxu0 0.0
        %792 = vmatprep.subr.mxu0 0.0
        %793 = vmatpush1.msra.mxu0 0.0
        %794 = vmatprep.subr.mxu0 0.0
        %795 = vmatpush1.msra.mxu0 0.0
        %796 = vmatprep.subr.mxu0 0.0
        %797 = vmatpush1.msra.mxu0 0.0
        %798 = vmatprep.subr.mxu0 0.0
        %799 = vmatpush1.msra.mxu0 0.0
        %800 = vmatprep.subr.mxu0 0.0
        %801 = vmatpush1.msra.mxu0 0.0
        %802 = vmatprep.subr.mxu0 0.0
        %803 = vmatpush1.msra.mxu0 0.0
        %804 = vmatprep.subr.mxu0 0.0
        %805 = vmatpush1.msra.mxu0 0.0
        %806 = vmatprep.subr.mxu0 0.0
        %807 = vmatpush1.msra.mxu0 0.0
        %808 = vmatprep.subr.mxu0 0.0
        %809 = vmatpush1.msra.mxu0 0.0
        %810 = vmatprep.subr.mxu0 0.0
        %811 = vmatpush1.msra.mxu0 0.0
        %812 = vmatprep.subr.mxu0 0.0
        %813 = vmatpush1.msra.mxu0 0.0
        %814 = vmatprep.subr.mxu0 0.0
        %815 = vmatpush1.msra.mxu0 0.0
        %816 = vmatprep.subr.mxu0 0.0
        %817 = vmatpush1.msra.mxu0 0.0
        %818 = vmatprep.subr.mxu0 0.0
        %819 = vmatpush1.msra.mxu0 0.0
        %820 = vmatprep.subr.mxu0 0.0
        %821 = vmatpush1.msra.mxu0 0.0
        %822 = vmatprep.subr.mxu0 0.0
        %823 = vmatpush1.msra.mxu0 0.0
        %824 = vmatprep.mubr.f32.mxu0 0.0
        %825 = vmatmul.mubr.f32.gmra.mrb[0].mxu0 %v758
        %v826 = vpop.f32.mrb[0].mxu0
        %v827 = vadd.f32 %v754, %v826
        %v828 = vpop.f32.mrb[0].mxu0
        %v829 = vadd.f32 %v754, %v828
        %830 = vdwg.mxu0
        %831 = vmatprep.subr.mxu0 %v745
        %832 = vmatpush1.msra.mxu0 %v744
        %833 = vmatprep.subr.mxu0 0.0
        %834 = vmatpush1.msra.mxu0 0.0
        %835 = vmatprep.subr.mxu0 0.0
        %836 = vmatpush1.msra.mxu0 0.0
        %837 = vmatprep.subr.mxu0 0.0
        %838 = vmatpush1.msra.mxu0 0.0
        %839 = vmatprep.subr.mxu0 0.0
        %840 = vmatpush1.msra.mxu0 0.0
        %841 = vmatprep.subr.mxu0 0.0
        %842 = vmatpush1.msra.mxu0 0.0
        %843 = vmatprep.subr.mxu0 0.0
        %844 = vmatpush1.msra.mxu0 0.0
        %845 = vmatprep.subr.mxu0 0.0
        %846 = vmatpush1.msra.mxu0 0.0
        %847 = vmatprep.subr.mxu0 0.0
        %848 = vmatpush1.msra.mxu0 0.0
        %849 = vmatprep.subr.mxu0 0.0
        %850 = vmatpush1.msra.mxu0 0.0
        %851 = vmatprep.subr.mxu0 0.0
        %852 = vmatpush1.msra.mxu0 0.0
        %853 = vmatprep.subr.mxu0 0.0
        %854 = vmatpush1.msra.mxu0 0.0
        %855 = vmatprep.subr.mxu0 0.0
        %856 = vmatpush1.msra.mxu0 0.0
        %857 = vmatprep.subr.mxu0 0.0
        %858 = vmatpush1.msra.mxu0 0.0
        %859 = vmatprep.subr.mxu0 0.0
        %860 = vmatpush1.msra.mxu0 0.0
        %861 = vmatprep.subr.mxu0 0.0
        %862 = vmatpush1.msra.mxu0 0.0
        %863 = vmatprep.subr.mxu0 0.0
        %864 = vmatpush1.msra.mxu0 0.0
        %865 = vmatprep.subr.mxu0 0.0
        %866 = vmatpush1.msra.mxu0 0.0
        %867 = vmatprep.subr.mxu0 0.0
        %868 = vmatpush1.msra.mxu0 0.0
        %869 = vmatprep.subr.mxu0 0.0
        %870 = vmatpush1.msra.mxu0 0.0
        %871 = vmatprep.subr.mxu0 0.0
        %872 = vmatpush1.msra.mxu0 0.0
        %873 = vmatprep.subr.mxu0 0.0
        %874 = vmatpush1.msra.mxu0 0.0
        %875 = vmatprep.subr.mxu0 0.0
        %876 = vmatpush1.msra.mxu0 0.0
        %877 = vmatprep.subr.mxu0 0.0
        %878 = vmatpush1.msra.mxu0 0.0
        %879 = vmatprep.subr.mxu0 0.0
        %880 = vmatpush1.msra.mxu0 0.0
        %881 = vmatprep.subr.mxu0 0.0
        %882 = vmatpush1.msra.mxu0 0.0
        %883 = vmatprep.subr.mxu0 0.0
        %884 = vmatpush1.msra.mxu0 0.0
        %885 = vmatprep.subr.mxu0 0.0
        %886 = vmatpush1.msra.mxu0 0.0
        %887 = vmatprep.subr.mxu0 0.0
        %888 = vmatpush1.msra.mxu0 0.0
        %889 = vmatprep.subr.mxu0 0.0
        %890 = vmatpush1.msra.mxu0 0.0
        %891 = vmatprep.subr.mxu0 0.0
        %892 = vmatpush1.msra.mxu0 0.0
        %893 = vmatprep.subr.mxu0 0.0
        %894 = vmatpush1.msra.mxu0 0.0
        %895 = vmatprep.mubr.f32.mxu0 0.0
        %896 = vmatmul.mubr.f32.gmra.mrb[0].mxu0 %v758
        %v897 = vpop.f32.mrb[0].mxu0
        %v898 = vadd.f32 %v754, %v897
        %v899 = vpop.f32.mrb[0].mxu0
        %v900 = vadd.f32 %v754, %v899
        %901 = vdwg.mxu0
        %902 = vmatprep.subr.mxu0 %v747
        %903 = vmatpush1.msra.mxu0 %v746
        %904 = vmatprep.subr.mxu0 0.0
        %905 = vmatpush1.msra.mxu0 0.0
        %906 = vmatprep.subr.mxu0 0.0
        %907 = vmatpush1.msra.mxu0 0.0
        %908 = vmatprep.subr.mxu0 0.0
        %909 = vmatpush1.msra.mxu0 0.0
        %910 = vmatprep.subr.mxu0 0.0
        %911 = vmatpush1.msra.mxu0 0.0
        %912 = vmatprep.subr.mxu0 0.0
        %913 = vmatpush1.msra.mxu0 0.0
        %914 = vmatprep.subr.mxu0 0.0
        %915 = vmatpush1.msra.mxu0 0.0
        %916 = vmatprep.subr.mxu0 0.0
        %917 = vmatpush1.msra.mxu0 0.0
        %918 = vmatprep.subr.mxu0 0.0
        %919 = vmatpush1.msra.mxu0 0.0
        %920 = vmatprep.subr.mxu0 0.0
        %921 = vmatpush1.msra.mxu0 0.0
        %922 = vmatprep.subr.mxu0 0.0
        %923 = vmatpush1.msra.mxu0 0.0
        %924 = vmatprep.subr.mxu0 0.0
        %925 = vmatpush1.msra.mxu0 0.0
        %926 = vmatprep.subr.mxu0 0.0
        %927 = vmatpush1.msra.mxu0 0.0
        %928 = vmatprep.subr.mxu0 0.0
        %929 = vmatpush1.msra.mxu0 0.0
        %930 = vmatprep.subr.mxu0 0.0
        %931 = vmatpush1.msra.mxu0 0.0
        %932 = vmatprep.subr.mxu0 0.0
        %933 = vmatpush1.msra.mxu0 0.0
        %934 = vmatprep.subr.mxu0 0.0
        %935 = vmatpush1.msra.mxu0 0.0
        %936 = vmatprep.subr.mxu0 0.0
        %937 = vmatpush1.msra.mxu0 0.0
        %938 = vmatprep.subr.mxu0 0.0
        %939 = vmatpush1.msra.mxu0 0.0
        %940 = vmatprep.subr.mxu0 0.0
        %941 = vmatpush1.msra.mxu0 0.0
        %942 = vmatprep.subr.mxu0 0.0
        %943 = vmatpush1.msra.mxu0 0.0
        %944 = vmatprep.subr.mxu0 0.0
        %945 = vmatpush1.msra.mxu0 0.0
        %946 = vmatprep.subr.mxu0 0.0
        %947 = vmatpush1.msra.mxu0 0.0
        %948 = vmatprep.subr.mxu0 0.0
        %949 = vmatpush1.msra.mxu0 0.0
        %950 = vmatprep.subr.mxu0 0.0
        %951 = vmatpush1.msra.mxu0 0.0
        %952 = vmatprep.subr.mxu0 0.0
        %953 = vmatpush1.msra.mxu0 0.0
        %954 = vmatprep.subr.mxu0 0.0
        %955 = vmatpush1.msra.mxu0 0.0
        %956 = vmatprep.subr.mxu0 0.0
        %957 = vmatpush1.msra.mxu0 0.0
        %958 = vmatprep.subr.mxu0 0.0
        %959 = vmatpush1.msra.mxu0 0.0
        %960 = vmatprep.subr.mxu0 0.0
        %961 = vmatpush1.msra.mxu0 0.0
        %962 = vmatprep.subr.mxu0 0.0
        %963 = vmatpush1.msra.mxu0 0.0
        %964 = vmatprep.subr.mxu0 0.0
        %965 = vmatpush1.msra.mxu0 0.0
        %966 = vmatprep.mubr.f32.mxu0 0.0
        %967 = vmatmul.mubr.f32.gmra.mrb[0].mxu0 %v758
        %v968 = vpop.f32.mrb[0].mxu0
        %v969 = vadd.f32 %v754, %v968
        %v970 = vpop.f32.mrb[0].mxu0
        %v971 = vadd.f32 %v754, %v970
        %972 = vdwg.mxu0
        %973 = vmatprep.subr.mxu0 %v749
        %974 = vmatpush1.msra.mxu0 %v748
        %975 = vmatprep.subr.mxu0 0.0
        %976 = vmatpush1.msra.mxu0 0.0
        %977 = vmatprep.subr.mxu0 0.0
        %978 = vmatpush1.msra.mxu0 0.0
        %979 = vmatprep.subr.mxu0 0.0
        %980 = vmatpush1.msra.mxu0 0.0
        %981 = vmatprep.subr.mxu0 0.0
        %982 = vmatpush1.msra.mxu0 0.0
        %983 = vmatprep.subr.mxu0 0.0
        %984 = vmatpush1.msra.mxu0 0.0
        %985 = vmatprep.subr.mxu0 0.0
        %986 = vmatpush1.msra.mxu0 0.0
        %987 = vmatprep.subr.mxu0 0.0
        %988 = vmatpush1.msra.mxu0 0.0
        %989 = vmatprep.subr.mxu0 0.0
        %990 = vmatpush1.msra.mxu0 0.0
        %991 = vmatprep.subr.mxu0 0.0
        %992 = vmatpush1.msra.mxu0 0.0
        %993 = vmatprep.subr.mxu0 0.0
        %994 = vmatpush1.msra.mxu0 0.0
        %995 = vmatprep.subr.mxu0 0.0
        %996 = vmatpush1.msra.mxu0 0.0
        %997 = vmatprep.subr.mxu0 0.0
        %998 = vmatpush1.msra.mxu0 0.0
        %999 = vmatprep.subr.mxu0 0.0
        %1000 = vmatpush1.msra.mxu0 0.0
        %1001 = vmatprep.subr.mxu0 0.0
        %1002 = vmatpush1.msra.mxu0 0.0
        %1003 = vmatprep.subr.mxu0 0.0
        %1004 = vmatpush1.msra.mxu0 0.0
        %1005 = vmatprep.subr.mxu0 0.0
        %1006 = vmatpush1.msra.mxu0 0.0
        %1007 = vmatprep.subr.mxu0 0.0
        %1008 = vmatpush1.msra.mxu0 0.0
        %1009 = vmatprep.subr.mxu0 0.0
        %1010 = vmatpush1.msra.mxu0 0.0
        %1011 = vmatprep.subr.mxu0 0.0
        %1012 = vmatpush1.msra.mxu0 0.0
        %1013 = vmatprep.subr.mxu0 0.0
        %1014 = vmatpush1.msra.mxu0 0.0
        %1015 = vmatprep.subr.mxu0 0.0
        %1016 = vmatpush1.msra.mxu0 0.0
        %1017 = vmatprep.subr.mxu0 0.0
        %1018 = vmatpush1.msra.mxu0 0.0
        %1019 = vmatprep.subr.mxu0 0.0
        %1020 = vmatpush1.msra.mxu0 0.0
        %1021 = vmatprep.subr.mxu0 0.0
        %1022 = vmatpush1.msra.mxu0 0.0
        %1023 = vmatprep.subr.mxu0 0.0
        %1024 = vmatpush1.msra.mxu0 0.0
        %1025 = vmatprep.subr.mxu0 0.0
        %1026 = vmatpush1.msra.mxu0 0.0
        %1027 = vmatprep.subr.mxu0 0.0
        %1028 = vmatpush1.msra.mxu0 0.0
        %1029 = vmatprep.subr.mxu0 0.0
        %1030 = vmatpush1.msra.mxu0 0.0
        %1031 = vmatprep.subr.mxu0 0.0
        %1032 = vmatpush1.msra.mxu0 0.0
        %1033 = vmatprep.subr.mxu0 0.0
        %1034 = vmatpush1.msra.mxu0 0.0
        %1035 = vmatprep.subr.mxu0 0.0
        %1036 = vmatpush1.msra.mxu0 0.0
        %1037 = vmatprep.mubr.f32.mxu0 0.0
        %1038 = vmatmul.mubr.f32.gmra.mrb[0].mxu0 %v758
        %v1039 = vpop.f32.mrb[0].mxu0
        %v1040 = vadd.f32 %v754, %v1039
        %v1041 = vpop.f32.mrb[0].mxu0
        %v1042 = vadd.f32 %v754, %v1041
        %1043 = vdwg.mxu0
        %v1044 = vrsqrt.pop %v827
        %v1045 = vrsqrt.pop %v829
        %v1046 = vrsqrt.pop %v898
        %v1047 = vrsqrt.pop %v900
        %v1048 = vrsqrt.pop %v969
        %v1049 = vrsqrt.pop %v971
        %v1050 = vrsqrt.pop %v1040
        %v1051 = vrsqrt.pop %v1042
        %v1052 = vmul.f32 %v612, %v1044
        %v1053 = vmul.f32 %v614, %v1045
        %v1054 = vmul.f32 %v653, %v1046
        %v1055 = vmul.f32 %v655, %v1047
        %v1056 = vmul.f32 %v694, %v1048
        %v1057 = vmul.f32 %v696, %v1049
        %v1058 = vmul.f32 %v735, %v1050
        %v1059 = vmul.f32 %v737, %v1051
        %1060 = vst [vmem:[%s323] sm:$0xff] %v1052
        %1061 = vst [vmem:[%s323 + $0x8] sm:$0xff] %v1053
        %1062 = vst [vmem:[%s323 + $0x10] sm:$0xff] %v1054
        %1063 = vst [vmem:[%s323 + $0x18] sm:$0xff] %v1055
        %1064 = vst [vmem:[%s323 + $0x20] sm:$0xff] %v1056
        %1065 = vst [vmem:[%s323 + $0x28] sm:$0xff] %v1057
        %1066 = vst [vmem:[%s323 + $0x30] sm:$0xff] %v1058
        %1067 = vst [vmem:[%s323 + $0x38] sm:$0xff] %v1059
        %s1068 = smul.u32 8, %s16
        %p1069 = scmp.lt.s32.totalorder %s1068, 15
        %s1070 = scalar_select %p1069, %s1068, 15
        %s1071 = smul.addr %s1070, 8
        %s1072 = scalar_lea.vmem %s5, %s1071
        // Predicated region
        $region64: #{forward.34} parent=58 // pred_check
          %p1073 = pneg %p144
        $region65: #{forward.34} parent=58 // pred_check_branch
          %1075 = sbr.rel (%p1073) target = $region67
        $region66: #{forward.34} parent=58 // pred_region
          %s1076 = smul.u32 8, %s16
        $region67: #{forward.34} parent=58 // pred_fallthru
          _
      $region59: #{forward.34} parent=5 // pred_fallthru
        _
      %p1077 = scmp.le.s32.totalorder 2, %s11
      // Predicated region
      $region68: #{forward.34} parent=5 // pred_check
        %p1078 = pneg %p1077
      $region69: #{forward.34} parent=5 // pred_check_branch
        %1080 = sbr.rel (%p1078) target = $region71
      $region70: #{forward.34} parent=5 // pred_region
        %s1081 = ssub.s32 %s11, 2
        // Predicated region
        $region72: #{forward.34} parent=70 // pred_check
          %p1082 = pneg %p150
        $region73: #{forward.34} parent=70 // pred_check_branch
          %1084 = sbr.rel (%p1082) target = $region75
        $region74: #{forward.34} parent=70 // pred_region
          %s1085 = smul.u32 8, %s17
          %p1086 = scmp.lt.s32.totalorder %s1085, 15
          %s1087 = scalar_select %p1086, %s1085, 15
          %s1088 = smul.addr %s1087, 8
          %s1089 = scalar_lea.vmem %s5, %s1088
        $region75: #{forward.34} parent=70 // pred_fallthru
          _
      $region71: #{forward.34} parent=5 // pred_fallthru
        _
    $region6: #{forward.34} parent=1 // loop_footer
      %s15 = sadd.s32 1, %s11
    $region7: #{forward.34} parent=1 // loop_footer_branch
      %10 = sbr.rel target = $region3
    $region8: #{forward.34} parent=1 // loop_exit
      _

// kernel: forward.35
$region0: #{forward.35}
  #allocation0 [shape = 'u32[]', space=smem, size = 0x4, offset = 0x4, fixed_abs, tag = 'smem constant byte address 0x4 - core index']
  #allocation1 [shape = 'u32[144,128]{1,0:T(1,128)}', space=vmem, size = 0x12000, scoped, tag = 'internal scratch']
  %s0 = inlined_call_operand.vmem [shape: bf16[208,512], index: 0, kind: input, shape index: {}]
  %s1 = inlined_call_operand.vmem [shape: bf16[8,208], index: 1, kind: input, shape index: {}]
  %s2 = inlined_call_operand.vmem [shape: f32[8,1], index: 2, kind: input, shape index: {}]
  %s3 = inlined_call_operand.vmem [shape: f32[8,8], index: 3, kind: input, shape index: {}]
  %s4 = inlined_call_operand.vmem [shape: f32[8,1], index: 4, kind: input, shape index: {}]
  %s5 = inlined_call_operand.vmem [shape: f32[8,512], index: 5, kind: output, shape index: {}]
  %s6 = sld [smem:[#allocation0]]
  $region30: #{forward.35} parent=0
    _
  %s8 = ssub.s32 1, %s6
  %s9 = scalar_select 0, %s8, %s6
  // Predicated region
  $region2: #{forward.35} parent=0 // pred_check
    _
  $region3: #{forward.35} parent=0 // pred_check_branch
    %11 = sbr.rel (0) target = $region5
  $region4: #{forward.35} parent=0 // pred_region
    _
  $region5: #{forward.35} parent=0 // pred_fallthru
    _
  // Predicated region
  $region6: #{forward.35} parent=0 // pred_check
    _
  $region7: #{forward.35} parent=0 // pred_check_branch
    %13 = sbr.rel (0) target = $region9
  $region8: #{forward.35} parent=0 // pred_region
    _
  $region9: #{forward.35} parent=0 // pred_fallthru
    _
  // Predicated region
  $region10: #{forward.35} parent=0 // pred_check
    _
  $region11: #{forward.35} parent=0 // pred_check_branch
    %15 = sbr.rel (0) target = $region13
  $region12: #{forward.35} parent=0 // pred_region
    _
  $region13: #{forward.35} parent=0 // pred_fallthru
    _
  // Predicated region
  $region14: #{forward.35} parent=0 // pred_check
    _
  $region15: #{forward.35} parent=0 // pred_check_branch
    %17 = sbr.rel (0) target = $region17
  $region16: #{forward.35} parent=0 // pred_region
    _
  $region17: #{forward.35} parent=0 // pred_fallthru
    _
  // Predicated region
  $region18: #{forward.35} parent=0 // pred_check
    _
  $region19: #{forward.35} parent=0 // pred_check_branch
    %19 = sbr.rel (0) target = $region21
  $region20: #{forward.35} parent=0 // pred_region
    _
  $region21: #{forward.35} parent=0 // pred_fallthru
    _
  %v21 = vld [vmem:[%s1] sm:$0xff]
  %v22 = vld [vmem:[%s0] sm:$0xff]
  %v23 = vld [vmem:[%s0 + $0x8] sm:$0xff]
  %v24 = vld [vmem:[%s0 + $0x10] sm:$0xff]
  %v25 = vld [vmem:[%s0 + $0x18] sm:$0xff]
  %v26 = vld [vmem:[%s0 + $0x20] sm:$0xff]
  %v27 = vld [vmem:[%s0 + $0x28] sm:$0xff]
  %v28 = vld [vmem:[%s0 + $0x30] sm:$0xff]
  %v29 = vld [vmem:[%s0 + $0x38] sm:$0xff]
  %v30 = vld [vmem:[%s0 + $0x40] sm:$0xff]
  %v31 = vld [vmem:[%s0 + $0x48] sm:$0xff]
  %v32 = vld [vmem:[%s0 + $0x50] sm:$0xff]
  %v33 = vld [vmem:[%s0 + $0x58] sm:$0xff]
  %v34 = vld [vmem:[%s0 + $0x60] sm:$0xff]
  %v35 = vld [vmem:[%s0 + $0x68] sm:$0xff]
  %v36 = vld [vmem:[%s0 + $0x70] sm:$0xff]
  %v37 = vld [vmem:[%s0 + $0x78] sm:$0xff]
  %v38 = vld [vmem:[%s0 + $0x80] sm:$0xff]
  %v39 = vld [vmem:[%s0 + $0x88] sm:$0xff]
  %v40 = vld [vmem:[%s0 + $0x90] sm:$0xff]
  %v41 = vld [vmem:[%s0 + $0x98] sm:$0xff]
  %v42 = vld [vmem:[%s0 + $0xa0] sm:$0xff]
  %v43 = vld [vmem:[%s0 + $0xa8] sm:$0xff]
  %v44 = vld [vmem:[%s0 + $0xb0] sm:$0xff]
  %v45 = vld [vmem:[%s0 + $0xb8] sm:$0xff]
  %v46 = vld [vmem:[%s0 + $0xc0] sm:$0xff]
  %v47 = vld [vmem:[%s0 + $0xc8] sm:$0xff]
  %v48 = vld [vmem:[%s0 + $0xd0] sm:$0xff]
  %v49 = vld [vmem:[%s0 + $0xd8] sm:$0xff]
  %v50 = vld [vmem:[%s0 + $0xe0] sm:$0xff]
  %v51 = vld [vmem:[%s0 + $0xe8] sm:$0xff]
  %v52 = vld [vmem:[%s0 + $0xf0] sm:$0xff]
  %v53 = vld [vmem:[%s0 + $0xf8] sm:$0xff]
  %v54 = vld [vmem:[%s0 + $0x100] sm:$0xff]
  %v55 = vld [vmem:[%s0 + $0x108] sm:$0xff]
  %v56 = vld [vmem:[%s0 + $0x110] sm:$0xff]
  %v57 = vld [vmem:[%s0 + $0x118] sm:$0xff]
  %v58 = vld [vmem:[%s0 + $0x120] sm:$0xff]
  %v59 = vld [vmem:[%s0 + $0x128] sm:$0xff]
  %v60 = vld [vmem:[%s0 + $0x130] sm:$0xff]
  %v61 = vld [vmem:[%s0 + $0x138] sm:$0xff]
  %v62 = vld [vmem:[%s0 + $0x140] sm:$0xff]
  %v63 = vld [vmem:[%s0 + $0x148] sm:$0xff]
  %v64 = vld [vmem:[%s0 + $0x150] sm:$0xff]
  %v65 = vld [vmem:[%s0 + $0x158] sm:$0xff]
  %v66 = vld [vmem:[%s0 + $0x160] sm:$0xff]
  %v67 = vld [vmem:[%s0 + $0x168] sm:$0xff]
  %v68 = vld [vmem:[%s0 + $0x170] sm:$0xff]
  %v69 = vld [vmem:[%s0 + $0x178] sm:$0xff]
  %v70 = vld [vmem:[%s0 + $0x180] sm:$0xff]
  %v71 = vld [vmem:[%s0 + $0x188] sm:$0xff]
  %v72 = vld [vmem:[%s0 + $0x190] sm:$0xff]
  %v73 = vld [vmem:[%s0 + $0x198] sm:$0xff]
  %v74 = vld [vmem:[%s2] sm:$0xff]
  %76 = vset.pattern.permute.xlu0 0
  %77 = vperm.xlu0 %76, %v74
  %v78 = vpop.permute.xlu0 %77
  %v81 = vunpack.c.l.b16 %v21
  %v82 = vunpack.c.h.b16 %v21
  %v83 = vpack.c.b16 %v81, %v81
  %v84 = vpack.c.b16 %v82, %v82
  %v138 = vunpack.c.l.b16 %v22
  %v139 = vunpack.c.h.b16 %v22
  %v140 = vunpack.c.l.b16 %v23
  %v141 = vunpack.c.h.b16 %v23
  %v142 = vunpack.c.l.b16 %v24
  %v143 = vunpack.c.h.b16 %v24
  %v144 = vunpack.c.l.b16 %v25
  %v145 = vunpack.c.h.b16 %v25
  %v146 = vunpack.c.l.b16 %v26
  %v147 = vunpack.c.h.b16 %v26
  %v148 = vunpack.c.l.b16 %v27
  %v149 = vunpack.c.h.b16 %v27
  %v150 = vunpack.c.l.b16 %v28
  %v151 = vunpack.c.h.b16 %v28
  %v152 = vunpack.c.l.b16 %v29
  %v153 = vunpack.c.h.b16 %v29
  %v154 = vunpack.c.l.b16 %v30
  %v155 = vunpack.c.h.b16 %v30
  %v156 = vunpack.c.l.b16 %v31
  %v157 = vunpack.c.h.b16 %v31
  %v158 = vunpack.c.l.b16 %v32
  %v159 = vunpack.c.h.b16 %v32
  %v160 = vunpack.c.l.b16 %v33
  %v161 = vunpack.c.h.b16 %v33
  %v162 = vunpack.c.l.b16 %v34
  %v163 = vunpack.c.h.b16 %v34
  %v164 = vunpack.c.l.b16 %v35
  %v165 = vunpack.c.h.b16 %v35
  %v166 = vunpack.c.l.b16 %v36
  %v167 = vunpack.c.h.b16 %v36
  %v168 = vunpack.c.l.b16 %v37
  %v169 = vunpack.c.h.b16 %v37
  %v170 = vunpack.c.l.b16 %v38
  %v171 = vunpack.c.h.b16 %v38
  %v172 = vunpack.c.l.b16 %v39
  %v173 = vunpack.c.h.b16 %v39
  %v174 = vunpack.c.l.b16 %v40
  %v175 = vunpack.c.h.b16 %v40
  %v176 = vunpack.c.l.b16 %v41
  %v177 = vunpack.c.h.b16 %v41
  %v178 = vunpack.c.l.b16 %v42
  %v179 = vunpack.c.h.b16 %v42
  %v180 = vunpack.c.l.b16 %v43
  %v181 = vunpack.c.h.b16 %v43
  %v182 = vunpack.c.l.b16 %v44
  %v183 = vunpack.c.h.b16 %v44
  %v184 = vunpack.c.l.b16 %v45
  %v185 = vunpack.c.h.b16 %v45
  %v186 = vunpack.c.l.b16 %v46
  %v187 = vunpack.c.h.b16 %v46
  %v188 = vunpack.c.l.b16 %v47
  %v189 = vunpack.c.h.b16 %v47
  %v190 = vunpack.c.l.b16 %v48
  %v191 = vunpack.c.h.b16 %v48
  %v192 = vunpack.c.l.b16 %v49
  %v193 = vunpack.c.h.b16 %v49
  %v194 = vunpack.c.l.b16 %v50
  %v195 = vunpack.c.h.b16 %v50
  %v196 = vunpack.c.l.b16 %v51
  %v197 = vunpack.c.h.b16 %v51
  %v198 = vunpack.c.l.b16 %v52
  %v199 = vunpack.c.h.b16 %v52
  %v200 = vunpack.c.l.b16 %v53
  %v201 = vunpack.c.h.b16 %v53
  %v202 = vunpack.c.l.b16 %v54
  %v203 = vunpack.c.h.b16 %v54
  %v204 = vunpack.c.l.b16 %v55
  %v205 = vunpack.c.h.b16 %v55
  %v206 = vunpack.c.l.b16 %v56
  %v207 = vunpack.c.h.b16 %v56
  %v208 = vunpack.c.l.b16 %v57
  %v209 = vunpack.c.h.b16 %v57
  %v210 = vunpack.c.l.b16 %v58
  %v211 = vunpack.c.h.b16 %v58
  %v212 = vunpack.c.l.b16 %v59
  %v213 = vunpack.c.h.b16 %v59
  %v214 = vunpack.c.l.b16 %v60
  %v215 = vunpack.c.h.b16 %v60
  %v216 = vunpack.c.l.b16 %v61
  %v217 = vunpack.c.h.b16 %v61
  %v218 = vunpack.c.l.b16 %v62
  %v219 = vunpack.c.h.b16 %v62
  %v220 = vunpack.c.l.b16 %v63
  %v221 = vunpack.c.h.b16 %v63
  %v222 = vunpack.c.l.b16 %v64
  %v223 = vunpack.c.h.b16 %v64
  %v224 = vunpack.c.l.b16 %v65
  %v225 = vunpack.c.h.b16 %v65
  %v226 = vunpack.c.l.b16 %v66
  %v227 = vunpack.c.h.b16 %v66
  %v228 = vunpack.c.l.b16 %v67
  %v229 = vunpack.c.h.b16 %v67
  %v230 = vunpack.c.l.b16 %v68
  %v231 = vunpack.c.h.b16 %v68
  %v232 = vunpack.c.l.b16 %v69
  %v233 = vunpack.c.h.b16 %v69
  %v234 = vunpack.c.l.b16 %v70
  %v235 = vunpack.c.h.b16 %v70
  %v236 = vunpack.c.l.b16 %v71
  %v237 = vunpack.c.h.b16 %v71
  %v238 = vunpack.c.l.b16 %v72
  %v239 = vunpack.c.h.b16 %v72
  %v240 = vunpack.c.l.b16 %v73
  %v241 = vunpack.c.h.b16 %v73
  %v242 = vpack.c.b16 %v142, %v138
  %v243 = vpack.c.b16 %v143, %v139
  %v244 = vpack.c.b16 %v144, %v140
  %v245 = vpack.c.b16 %v145, %v141
  %v246 = vpack.c.b16 %v150, %v146
  %v247 = vpack.c.b16 %v151, %v147
  %v248 = vpack.c.b16 %v152, %v148
  %v249 = vpack.c.b16 %v153, %v149
  %v250 = vpack.c.b16 %v158, %v154
  %v251 = vpack.c.b16 %v159, %v155
  %v252 = vpack.c.b16 %v160, %v156
  %v253 = vpack.c.b16 %v161, %v157
  %v254 = vpack.c.b16 %v166, %v162
  %v255 = vpack.c.b16 %v167, %v163
  %v256 = vpack.c.b16 %v168, %v164
  %v257 = vpack.c.b16 %v169, %v165
  %v258 = vpack.c.b16 %v174, %v170
  %v259 = vpack.c.b16 %v175, %v171
  %v260 = vpack.c.b16 %v176, %v172
  %v261 = vpack.c.b16 %v177, %v173
  %v262 = vpack.c.b16 %v182, %v178
  %v263 = vpack.c.b16 %v183, %v179
  %v264 = vpack.c.b16 %v184, %v180
  %v265 = vpack.c.b16 %v185, %v181
  %v266 = vpack.c.b16 %v190, %v186
  %v267 = vpack.c.b16 %v191, %v187
  %v268 = vpack.c.b16 %v192, %v188
  %v269 = vpack.c.b16 %v193, %v189
  %v270 = vpack.c.b16 %v198, %v194
  %v271 = vpack.c.b16 %v199, %v195
  %v272 = vpack.c.b16 %v200, %v196
  %v273 = vpack.c.b16 %v201, %v197
  %v274 = vpack.c.b16 %v206, %v202
  %v275 = vpack.c.b16 %v207, %v203
  %v276 = vpack.c.b16 %v208, %v204
  %v277 = vpack.c.b16 %v209, %v205
  %v278 = vpack.c.b16 %v214, %v210
  %v279 = vpack.c.b16 %v215, %v211
  %v280 = vpack.c.b16 %v216, %v212
  %v281 = vpack.c.b16 %v217, %v213
  %v282 = vpack.c.b16 %v222, %v218
  %v283 = vpack.c.b16 %v223, %v219
  %v284 = vpack.c.b16 %v224, %v220
  %v285 = vpack.c.b16 %v225, %v221
  %v286 = vpack.c.b16 %v230, %v226
  %v287 = vpack.c.b16 %v231, %v227
  %v288 = vpack.c.b16 %v232, %v228
  %v289 = vpack.c.b16 %v233, %v229
  %v290 = vpack.c.b16 %v238, %v234
  %v291 = vpack.c.b16 %v239, %v235
  %v292 = vpack.c.b16 %v240, %v236
  %v293 = vpack.c.b16 %v241, %v237
  %vm346 = vcmask 654336
  %v348 = vsel %vm346, %v84, 0
  %350 = vmatprep.subr.bf16.mxu0 %v243
  %351 = vmatpush1.bf16.msra.mxu0 %v242
  %352 = vmatprep.subr.bf16.mxu0 %v247
  %353 = vmatpush1.bf16.msra.mxu0 %v246
  %354 = vmatprep.subr.bf16.mxu0 %v251
  %355 = vmatpush1.bf16.msra.mxu0 %v250
  %356 = vmatprep.subr.bf16.mxu0 %v255
  %357 = vmatpush1.bf16.msra.mxu0 %v254
  %358 = vmatprep.subr.bf16.mxu0 %v259
  %359 = vmatpush1.bf16.msra.mxu0 %v258
  %360 = vmatprep.subr.bf16.mxu0 %v263
  %361 = vmatpush1.bf16.msra.mxu0 %v262
  %362 = vmatprep.subr.bf16.mxu0 %v267
  %363 = vmatpush1.bf16.msra.mxu0 %v266
  %364 = vmatprep.subr.bf16.mxu0 %v271
  %365 = vmatpush1.bf16.msra.mxu0 %v270
  %366 = vmatprep.subr.bf16.mxu0 %v275
  %367 = vmatpush1.bf16.msra.mxu0 %v274
  %368 = vmatprep.subr.bf16.mxu0 %v279
  %369 = vmatpush1.bf16.msra.mxu0 %v278
  %370 = vmatprep.subr.bf16.mxu0 %v283
  %371 = vmatpush1.bf16.msra.mxu0 %v282
  %372 = vmatprep.subr.bf16.mxu0 %v287
  %373 = vmatpush1.bf16.msra.mxu0 %v286
  %374 = vmatprep.subr.bf16.mxu0 %v291
  %375 = vmatpush1.bf16.msra.mxu0 %v290
  %376 = vmatprep.subr.bf16.mxu0 0
  %377 = vmatpush1.bf16.msra.mxu0 0
  %378 = vmatprep.subr.bf16.mxu0 0
  %379 = vmatpush1.bf16.msra.mxu0 0
  %380 = vmatprep.subr.bf16.mxu0 0
  %381 = vmatpush1.bf16.msra.mxu0 0
  %382 = vmatprep.mubr.bf16.mxu0 %v348
  %383 = vmatmul.mubr.bf16.gmra.mrb[0].mxu0 %v83
  %v384 = vpop.f32.mrb[0].mxu0
  %v385 = vadd.f32 %v78, %v384
  %v386 = vpop.f32.mrb[0].mxu0
  %v387 = vadd.f32 %v78, %v386
  %v388 = vpop.f32.mrb[0].mxu0
  %v389 = vpop.f32.mrb[0].mxu0
  %390 = vdwg.mxu0
  %391 = vmatprep.subr.bf16.mxu0 %v245
  %392 = vmatpush1.bf16.msra.mxu0 %v244
  %393 = vmatprep.subr.bf16.mxu0 %v249
  %394 = vmatpush1.bf16.msra.mxu0 %v248
  %395 = vmatprep.subr.bf16.mxu0 %v253
  %396 = vmatpush1.bf16.msra.mxu0 %v252
  %397 = vmatprep.subr.bf16.mxu0 %v257
  %398 = vmatpush1.bf16.msra.mxu0 %v256
  %399 = vmatprep.subr.bf16.mxu0 %v261
  %400 = vmatpush1.bf16.msra.mxu0 %v260
  %401 = vmatprep.subr.bf16.mxu0 %v265
  %402 = vmatpush1.bf16.msra.mxu0 %v264
  %403 = vmatprep.subr.bf16.mxu0 %v269
  %404 = vmatpush1.bf16.msra.mxu0 %v268
  %405 = vmatprep.subr.bf16.mxu0 %v273
  %406 = vmatpush1.bf16.msra.mxu0 %v272
  %407 = vmatprep.subr.bf16.mxu0 %v277
  %408 = vmatpush1.bf16.msra.mxu0 %v276
  %409 = vmatprep.subr.bf16.mxu0 %v281
  %410 = vmatpush1.bf16.msra.mxu0 %v280
  %411 = vmatprep.subr.bf16.mxu0 %v285
  %412 = vmatpush1.bf16.msra.mxu0 %v284
  %413 = vmatprep.subr.bf16.mxu0 %v289
  %414 = vmatpush1.bf16.msra.mxu0 %v288
  %415 = vmatprep.subr.bf16.mxu0 %v293
  %416 = vmatpush1.bf16.msra.mxu0 %v292
  %417 = vmatprep.subr.bf16.mxu0 0
  %418 = vmatpush1.bf16.msra.mxu0 0
  %419 = vmatprep.subr.bf16.mxu0 0
  %420 = vmatpush1.bf16.msra.mxu0 0
  %421 = vmatprep.subr.bf16.mxu0 0
  %422 = vmatpush1.bf16.msra.mxu0 0
  %423 = vmatprep.mubr.bf16.mxu0 %v348
  %424 = vmatmul.mubr.bf16.gmra.mrb[0].mxu0 %v83
  %v425 = vpop.f32.mrb[0].mxu0
  %v426 = vadd.f32 %v78, %v425
  %v427 = vpop.f32.mrb[0].mxu0
  %v428 = vadd.f32 %v78, %v427
  %v429 = vpop.f32.mrb[0].mxu0
  %v430 = vpop.f32.mrb[0].mxu0
  %431 = vdwg.mxu0
  %v432 = vld [vmem:[%s3] sm:$0xff]
  %v433 = vmul.f32 %v385, %v385
  %v434 = vmul.f32 %v387, %v387
  %v435 = vmul.f32 %v426, %v426
  %v436 = vmul.f32 %v428, %v428
  %v437 = vld [vmem:[%s4] sm:$0xff]
  %439 = vset.pattern.permute.xlu0 0
  %440 = vperm.xlu0 %439, %v437
  %v441 = vpop.permute.xlu0 %440
  %vm443 = vcmask 64512
  %v445 = vsel %vm443, %v432, 0
  %447 = vmatprep.subr.mxu0 %v434
  %448 = vmatpush1.msra.mxu0 %v433
  %449 = vmatprep.subr.mxu0 0.0
  %450 = vmatpush1.msra.mxu0 0.0
  %451 = vmatprep.subr.mxu0 0.0
  %452 = vmatpush1.msra.mxu0 0.0
  %453 = vmatprep.subr.mxu0 0.0
  %454 = vmatpush1.msra.mxu0 0.0
  %455 = vmatprep.subr.mxu0 0.0
  %456 = vmatpush1.msra.mxu0 0.0
  %457 = vmatprep.subr.mxu0 0.0
  %458 = vmatpush1.msra.mxu0 0.0
  %459 = vmatprep.subr.mxu0 0.0
  %460 = vmatpush1.msra.mxu0 0.0
  %461 = vmatprep.subr.mxu0 0.0
  %462 = vmatpush1.msra.mxu0 0.0
  %463 = vmatprep.subr.mxu0 0.0
  %464 = vmatpush1.msra.mxu0 0.0
  %465 = vmatprep.subr.mxu0 0.0
  %466 = vmatpush1.msra.mxu0 0.0
  %467 = vmatprep.subr.mxu0 0.0
  %468 = vmatpush1.msra.mxu0 0.0
  %469 = vmatprep.subr.mxu0 0.0
  %470 = vmatpush1.msra.mxu0 0.0
  %471 = vmatprep.subr.mxu0 0.0
  %472 = vmatpush1.msra.mxu0 0.0
  %473 = vmatprep.subr.mxu0 0.0
  %474 = vmatpush1.msra.mxu0 0.0
  %475 = vmatprep.subr.mxu0 0.0
  %476 = vmatpush1.msra.mxu0 0.0
  %477 = vmatprep.subr.mxu0 0.0
  %478 = vmatpush1.msra.mxu0 0.0
  %479 = vmatprep.subr.mxu0 0.0
  %480 = vmatpush1.msra.mxu0 0.0
  %481 = vmatprep.subr.mxu0 0.0
  %482 = vmatpush1.msra.mxu0 0.0
  %483 = vmatprep.subr.mxu0 0.0
  %484 = vmatpush1.msra.mxu0 0.0
  %485 = vmatprep.subr.mxu0 0.0
  %486 = vmatpush1.msra.mxu0 0.0
  %487 = vmatprep.subr.mxu0 0.0
  %488 = vmatpush1.msra.mxu0 0.0
  %489 = vmatprep.subr.mxu0 0.0
  %490 = vmatpush1.msra.mxu0 0.0
  %491 = vmatprep.subr.mxu0 0.0
  %492 = vmatpush1.msra.mxu0 0.0
  %493 = vmatprep.subr.mxu0 0.0
  %494 = vmatpush1.msra.mxu0 0.0
  %495 = vmatprep.subr.mxu0 0.0
  %496 = vmatpush1.msra.mxu0 0.0
  %497 = vmatprep.subr.mxu0 0.0
  %498 = vmatpush1.msra.mxu0 0.0
  %499 = vmatprep.subr.mxu0 0.0
  %500 = vmatpush1.msra.mxu0 0.0
  %501 = vmatprep.subr.mxu0 0.0
  %502 = vmatpush1.msra.mxu0 0.0
  %503 = vmatprep.subr.mxu0 0.0
  %504 = vmatpush1.msra.mxu0 0.0
  %505 = vmatprep.subr.mxu0 0.0
  %506 = vmatpush1.msra.mxu0 0.0
  %507 = vmatprep.subr.mxu0 0.0
  %508 = vmatpush1.msra.mxu0 0.0
  %509 = vmatprep.subr.mxu0 0.0
  %510 = vmatpush1.msra.mxu0 0.0
  %511 = vmatprep.mubr.f32.mxu0 0.0
  %512 = vmatmul.mubr.f32.gmra.mrb[0].mxu0 %v445
  %v513 = vpop.f32.mrb[0].mxu0
  %v514 = vadd.f32 %v441, %v513
  %v515 = vpop.f32.mrb[0].mxu0
  %v516 = vadd.f32 %v441, %v515
  %517 = vdwg.mxu0
  %518 = vmatprep.subr.mxu0 %v436
  %519 = vmatpush1.msra.mxu0 %v435
  %520 = vmatprep.subr.mxu0 0.0
  %521 = vmatpush1.msra.mxu0 0.0
  %522 = vmatprep.subr.mxu0 0.0
  %523 = vmatpush1.msra.mxu0 0.0
  %524 = vmatprep.subr.mxu0 0.0
  %525 = vmatpush1.msra.mxu0 0.0
  %526 = vmatprep.subr.mxu0 0.0
  %527 = vmatpush1.msra.mxu0 0.0
  %528 = vmatprep.subr.mxu0 0.0
  %529 = vmatpush1.msra.mxu0 0.0
  %530 = vmatprep.subr.mxu0 0.0
  %531 = vmatpush1.msra.mxu0 0.0
  %532 = vmatprep.subr.mxu0 0.0
  %533 = vmatpush1.msra.mxu0 0.0
  %534 = vmatprep.subr.mxu0 0.0
  %535 = vmatpush1.msra.mxu0 0.0
  %536 = vmatprep.subr.mxu0 0.0
  %537 = vmatpush1.msra.mxu0 0.0
  %538 = vmatprep.subr.mxu0 0.0
  %539 = vmatpush1.msra.mxu0 0.0
  %540 = vmatprep.subr.mxu0 0.0
  %541 = vmatpush1.msra.mxu0 0.0
  %542 = vmatprep.subr.mxu0 0.0
  %543 = vmatpush1.msra.mxu0 0.0
  %544 = vmatprep.subr.mxu0 0.0
  %545 = vmatpush1.msra.mxu0 0.0
  %546 = vmatprep.subr.mxu0 0.0
  %547 = vmatpush1.msra.mxu0 0.0
  %548 = vmatprep.subr.mxu0 0.0
  %549 = vmatpush1.msra.mxu0 0.0
  %550 = vmatprep.subr.mxu0 0.0
  %551 = vmatpush1.msra.mxu0 0.0
  %552 = vmatprep.subr.mxu0 0.0
  %553 = vmatpush1.msra.mxu0 0.0
  %554 = vmatprep.subr.mxu0 0.0
  %555 = vmatpush1.msra.mxu0 0.0
  %556 = vmatprep.subr.mxu0 0.0
  %557 = vmatpush1.msra.mxu0 0.0
  %558 = vmatprep.subr.mxu0 0.0
  %559 = vmatpush1.msra.mxu0 0.0
  %560 = vmatprep.subr.mxu0 0.0
  %561 = vmatpush1.msra.mxu0 0.0
  %562 = vmatprep.subr.mxu0 0.0
  %563 = vmatpush1.msra.mxu0 0.0
  %564 = vmatprep.subr.mxu0 0.0
  %565 = vmatpush1.msra.mxu0 0.0
  %566 = vmatprep.subr.mxu0 0.0
  %567 = vmatpush1.msra.mxu0 0.0
  %568 = vmatprep.subr.mxu0 0.0
  %569 = vmatpush1.msra.mxu0 0.0
  %570 = vmatprep.subr.mxu0 0.0
  %571 = vmatpush1.msra.mxu0 0.0
  %572 = vmatprep.subr.mxu0 0.0
  %573 = vmatpush1.msra.mxu0 0.0
  %574 = vmatprep.subr.mxu0 0.0
  %575 = vmatpush1.msra.mxu0 0.0
  %576 = vmatprep.subr.mxu0 0.0
  %577 = vmatpush1.msra.mxu0 0.0
  %578 = vmatprep.subr.mxu0 0.0
  %579 = vmatpush1.msra.mxu0 0.0
  %580 = vmatprep.subr.mxu0 0.0
  %581 = vmatpush1.msra.mxu0 0.0
  %582 = vmatprep.mubr.f32.mxu0 0.0
  %583 = vmatmul.mubr.f32.gmra.mrb[0].mxu0 %v445
  %v584 = vpop.f32.mrb[0].mxu0
  %v585 = vadd.f32 %v441, %v584
  %v586 = vpop.f32.mrb[0].mxu0
  %v587 = vadd.f32 %v441, %v586
  %588 = vdwg.mxu0
  %v589 = vrsqrt.pop %v514
  %v590 = vrsqrt.pop %v516
  %v591 = vrsqrt.pop %v585
  %v592 = vrsqrt.pop %v587
  %v593 = vmul.f32 %v385, %v589
  %v594 = vmul.f32 %v387, %v590
  %v595 = vmul.f32 %v426, %v591
  %v596 = vmul.f32 %v428, %v592
  %597 = vst [vmem:[%s5] sm:$0xff] %v593
  %598 = vst [vmem:[%s5 + $0x8] sm:$0xff] %v594
  %599 = vst [vmem:[%s5 + $0x10] sm:$0xff] %v595
  %600 = vst [vmem:[%s5 + $0x18] sm:$0xff] %v596
  // Predicated region
  $region22: #{forward.35} parent=0 // pred_check
    _
  $region23: #{forward.35} parent=0 // pred_check_branch
    %602 = sbr.rel (0) target = $region25
  $region24: #{forward.35} parent=0 // pred_region
    _
  $region25: #{forward.35} parent=0 // pred_fallthru
    _
  // Predicated region
  $region26: #{forward.35} parent=0 // pred_check
    _
  $region27: #{forward.35} parent=0 // pred_check_branch
    %604 = sbr.rel (0) target = $region29
  $region28: #{forward.35} parent=0 // pred_region
    _
  $region29: #{forward.35} parent=0 // pred_fallthru
    _

// kernel: forward.36
$region0: #{forward.36}
  #allocation0 [shape = 'u32[]', space=smem, size = 0x4, offset = 0x4, fixed_abs, tag = 'smem constant byte address 0x4 - core index']
  #allocation1 [shape = 'u32[144,128]{1,0:T(1,128)}', space=vmem, size = 0x12000, scoped, tag = 'internal scratch']
  %s0 = inlined_call_operand.vmem [shape: bf16[208,128], index: 0, kind: input, shape index: {}]
  %s1 = inlined_call_operand.vmem [shape: bf16[8,208], index: 1, kind: input, shape index: {}]
  %s2 = inlined_call_operand.vmem [shape: f32[8,1], index: 2, kind: input, shape index: {}]
  %s3 = inlined_call_operand.vmem [shape: f32[8,8], index: 3, kind: input, shape index: {}]
  %s4 = inlined_call_operand.vmem [shape: f32[8,1], index: 4, kind: input, shape index: {}]
  %s5 = inlined_call_operand.vmem [shape: f32[8,128], index: 5, kind: output, shape index: {}]
  %s6 = sld [smem:[#allocation0]]
  $region30: #{forward.36} parent=0
    _
  %s8 = ssub.s32 1, %s6
  %s9 = scalar_select 0, %s8, %s6
  // Predicated region
  $region2: #{forward.36} parent=0 // pred_check
    _
  $region3: #{forward.36} parent=0 // pred_check_branch
    %11 = sbr.rel (0) target = $region5
  $region4: #{forward.36} parent=0 // pred_region
    _
  $region5: #{forward.36} parent=0 // pred_fallthru
    _
  // Predicated region
  $region6: #{forward.36} parent=0 // pred_check
    _
  $region7: #{forward.36} parent=0 // pred_check_branch
    %13 = sbr.rel (0) target = $region9
  $region8: #{forward.36} parent=0 // pred_region
    _
  $region9: #{forward.36} parent=0 // pred_fallthru
    _
  // Predicated region
  $region10: #{forward.36} parent=0 // pred_check
    _
  $region11: #{forward.36} parent=0 // pred_check_branch
    %15 = sbr.rel (0) target = $region13
  $region12: #{forward.36} parent=0 // pred_region
    _
  $region13: #{forward.36} parent=0 // pred_fallthru
    _
  // Predicated region
  $region14: #{forward.36} parent=0 // pred_check
    _
  $region15: #{forward.36} parent=0 // pred_check_branch
    %17 = sbr.rel (0) target = $region17
  $region16: #{forward.36} parent=0 // pred_region
    _
  $region17: #{forward.36} parent=0 // pred_fallthru
    _
  // Predicated region
  $region18: #{forward.36} parent=0 // pred_check
    _
  $region19: #{forward.36} parent=0 // pred_check_branch
    %19 = sbr.rel (0) target = $region21
  $region20: #{forward.36} parent=0 // pred_region
    _
  $region21: #{forward.36} parent=0 // pred_fallthru
    _
  %v21 = vld [vmem:[%s1] sm:$0xff]
  %v22 = vld [vmem:[%s0] sm:$0xf]
  %v23 = vld [vmem:[%s0 + $0x4] sm:$0xf]
  %v24 = vld [vmem:[%s0 + $0x8] sm:$0xf]
  %v25 = vld [vmem:[%s0 + $0xc] sm:$0xf]
  %v26 = vld [vmem:[%s0 + $0x10] sm:$0xf]
  %v27 = vld [vmem:[%s0 + $0x14] sm:$0xf]
  %v28 = vld [vmem:[%s0 + $0x18] sm:$0xf]
  %v29 = vld [vmem:[%s0 + $0x1c] sm:$0xf]
  %v30 = vld [vmem:[%s0 + $0x20] sm:$0xf]
  %v31 = vld [vmem:[%s0 + $0x24] sm:$0xf]
  %v32 = vld [vmem:[%s0 + $0x28] sm:$0xf]
  %v33 = vld [vmem:[%s0 + $0x2c] sm:$0xf]
  %v34 = vld [vmem:[%s0 + $0x30] sm:$0xf]
  %v35 = vld [vmem:[%s0 + $0x34] sm:$0xf]
  %v36 = vld [vmem:[%s0 + $0x38] sm:$0xf]
  %v37 = vld [vmem:[%s0 + $0x3c] sm:$0xf]
  %v38 = vld [vmem:[%s0 + $0x40] sm:$0xf]
  %v39 = vld [vmem:[%s0 + $0x44] sm:$0xf]
  %v40 = vld [vmem:[%s0 + $0x48] sm:$0xf]
  %v41 = vld [vmem:[%s0 + $0x4c] sm:$0xf]
  %v42 = vld [vmem:[%s0 + $0x50] sm:$0xf]
  %v43 = vld [vmem:[%s0 + $0x54] sm:$0xf]
  %v44 = vld [vmem:[%s0 + $0x58] sm:$0xf]
  %v45 = vld [vmem:[%s0 + $0x5c] sm:$0xf]
  %v46 = vld [vmem:[%s0 + $0x60] sm:$0xf]
  %v47 = vld [vmem:[%s0 + $0x64] sm:$0xf]
  %v48 = vld [vmem:[%s2] sm:$0xff]
  %50 = vset.pattern.permute.xlu0 0
  %51 = vperm.xlu0 %50, %v48
  %v52 = vpop.permute.xlu0 %51
  %v55 = vunpack.c.l.b16 %v21
  %v56 = vunpack.c.h.b16 %v21
  %v57 = vpack.c.b16 %v55, %v55
  %v58 = vpack.c.b16 %v56, %v56
  %v86 = vunpack.c.l.b16 %v22
  %v87 = vunpack.c.l.b16 %v23
  %v88 = vunpack.c.l.b16 %v24
  %v89 = vunpack.c.l.b16 %v25
  %v90 = vunpack.c.l.b16 %v26
  %v91 = vunpack.c.l.b16 %v27
  %v92 = vunpack.c.l.b16 %v28
  %v93 = vunpack.c.l.b16 %v29
  %v94 = vunpack.c.l.b16 %v30
  %v95 = vunpack.c.l.b16 %v31
  %v96 = vunpack.c.l.b16 %v32
  %v97 = vunpack.c.l.b16 %v33
  %v98 = vunpack.c.l.b16 %v34
  %v99 = vunpack.c.l.b16 %v35
  %v100 = vunpack.c.l.b16 %v36
  %v101 = vunpack.c.l.b16 %v37
  %v102 = vunpack.c.l.b16 %v38
  %v103 = vunpack.c.l.b16 %v39
  %v104 = vunpack.c.l.b16 %v40
  %v105 = vunpack.c.l.b16 %v41
  %v106 = vunpack.c.l.b16 %v42
  %v107 = vunpack.c.l.b16 %v43
  %v108 = vunpack.c.l.b16 %v44
  %v109 = vunpack.c.l.b16 %v45
  %v110 = vunpack.c.l.b16 %v46
  %v111 = vunpack.c.l.b16 %v47
  %v112 = vpack.c.b16 %v87, %v86
  %v113 = vpack.c.b16 %v89, %v88
  %v114 = vpack.c.b16 %v91, %v90
  %v115 = vpack.c.b16 %v93, %v92
  %v116 = vpack.c.b16 %v95, %v94
  %v117 = vpack.c.b16 %v97, %v96
  %v118 = vpack.c.b16 %v99, %v98
  %v119 = vpack.c.b16 %v101, %v100
  %v120 = vpack.c.b16 %v103, %v102
  %v121 = vpack.c.b16 %v105, %v104
  %v122 = vpack.c.b16 %v107, %v106
  %v123 = vpack.c.b16 %v109, %v108
  %v124 = vpack.c.b16 %v111, %v110
  %vm138 = vcmask 654336
  %v140 = vsel %vm138, %v58, 0
  %142 = vmatprep.subr.bf16.mxu0 0
  %143 = vmatpush1.bf16.msra.mxu0 %v112
  %144 = vmatprep.subr.bf16.mxu0 0
  %145 = vmatpush1.bf16.msra.mxu0 %v113
  %146 = vmatprep.subr.bf16.mxu0 0
  %147 = vmatpush1.bf16.msra.mxu0 %v114
  %148 = vmatprep.subr.bf16.mxu0 0
  %149 = vmatpush1.bf16.msra.mxu0 %v115
  %150 = vmatprep.subr.bf16.mxu0 0
  %151 = vmatpush1.bf16.msra.mxu0 %v116
  %152 = vmatprep.subr.bf16.mxu0 0
  %153 = vmatpush1.bf16.msra.mxu0 %v117
  %154 = vmatprep.subr.bf16.mxu0 0
  %155 = vmatpush1.bf16.msra.mxu0 %v118
  %156 = vmatprep.subr.bf16.mxu0 0
  %157 = vmatpush1.bf16.msra.mxu0 %v119
  %158 = vmatprep.subr.bf16.mxu0 0
  %159 = vmatpush1.bf16.msra.mxu0 %v120
  %160 = vmatprep.subr.bf16.mxu0 0
  %161 = vmatpush1.bf16.msra.mxu0 %v121
  %162 = vmatprep.subr.bf16.mxu0 0
  %163 = vmatpush1.bf16.msra.mxu0 %v122
  %164 = vmatprep.subr.bf16.mxu0 0
  %165 = vmatpush1.bf16.msra.mxu0 %v123
  %166 = vmatprep.subr.bf16.mxu0 0
  %167 = vmatpush1.bf16.msra.mxu0 %v124
  %168 = vmatprep.subr.bf16.mxu0 0
  %169 = vmatpush1.bf16.msra.mxu0 0
  %170 = vmatprep.subr.bf16.mxu0 0
  %171 = vmatpush1.bf16.msra.mxu0 0
  %172 = vmatprep.subr.bf16.mxu0 0
  %173 = vmatpush1.bf16.msra.mxu0 0
  %174 = vmatprep.mubr.bf16.mxu0 %v140
  %175 = vmatmul.mubr.bf16.gmra.mrb[0].mxu0 %v57
  %v176 = vpop.f32.mrb[0].mxu0
  %v177 = vadd.f32 %v52, %v176
  %v178 = vpop.f32.mrb[0].mxu0
  %v179 = vpop.f32.mrb[0].mxu0
  %v180 = vpop.f32.mrb[0].mxu0
  %181 = vdwg.mxu0
  %v182 = vld [vmem:[%s3] sm:$0xff]
  %v183 = vmul.f32 %v177, %v177
  %v184 = vld [vmem:[%s4] sm:$0xff]
  %186 = vset.pattern.permute.xlu0 0
  %187 = vperm.xlu0 %186, %v184
  %v188 = vpop.permute.xlu0 %187
  %vm190 = vcmask 64512
  %v192 = vsel %vm190, %v182, 0
  %194 = vmatprep.subr.mxu0 0.0
  %195 = vmatpush1.msra.mxu0 %v183
  %196 = vmatprep.subr.mxu0 0.0
  %197 = vmatpush1.msra.mxu0 0.0
  %198 = vmatprep.subr.mxu0 0.0
  %199 = vmatpush1.msra.mxu0 0.0
  %200 = vmatprep.subr.mxu0 0.0
  %201 = vmatpush1.msra.mxu0 0.0
  %202 = vmatprep.subr.mxu0 0.0
  %203 = vmatpush1.msra.mxu0 0.0
  %204 = vmatprep.subr.mxu0 0.0
  %205 = vmatpush1.msra.mxu0 0.0
  %206 = vmatprep.subr.mxu0 0.0
  %207 = vmatpush1.msra.mxu0 0.0
  %208 = vmatprep.subr.mxu0 0.0
  %209 = vmatpush1.msra.mxu0 0.0
  %210 = vmatprep.subr.mxu0 0.0
  %211 = vmatpush1.msra.mxu0 0.0
  %212 = vmatprep.subr.mxu0 0.0
  %213 = vmatpush1.msra.mxu0 0.0
  %214 = vmatprep.subr.mxu0 0.0
  %215 = vmatpush1.msra.mxu0 0.0
  %216 = vmatprep.subr.mxu0 0.0
  %217 = vmatpush1.msra.mxu0 0.0
  %218 = vmatprep.subr.mxu0 0.0
  %219 = vmatpush1.msra.mxu0 0.0
  %220 = vmatprep.subr.mxu0 0.0
  %221 = vmatpush1.msra.mxu0 0.0
  %222 = vmatprep.subr.mxu0 0.0
  %223 = vmatpush1.msra.mxu0 0.0
  %224 = vmatprep.subr.mxu0 0.0
  %225 = vmatpush1.msra.mxu0 0.0
  %226 = vmatprep.subr.mxu0 0.0
  %227 = vmatpush1.msra.mxu0 0.0
  %228 = vmatprep.subr.mxu0 0.0
  %229 = vmatpush1.msra.mxu0 0.0
  %230 = vmatprep.subr.mxu0 0.0
  %231 = vmatpush1.msra.mxu0 0.0
  %232 = vmatprep.subr.mxu0 0.0
  %233 = vmatpush1.msra.mxu0 0.0
  %234 = vmatprep.subr.mxu0 0.0
  %235 = vmatpush1.msra.mxu0 0.0
  %236 = vmatprep.subr.mxu0 0.0
  %237 = vmatpush1.msra.mxu0 0.0
  %238 = vmatprep.subr.mxu0 0.0
  %239 = vmatpush1.msra.mxu0 0.0
  %240 = vmatprep.subr.mxu0 0.0
  %241 = vmatpush1.msra.mxu0 0.0
  %242 = vmatprep.subr.mxu0 0.0
  %243 = vmatpush1.msra.mxu0 0.0
  %244 = vmatprep.subr.mxu0 0.0
  %245 = vmatpush1.msra.mxu0 0.0
  %246 = vmatprep.subr.mxu0 0.0
  %247 = vmatpush1.msra.mxu0 0.0
  %248 = vmatprep.subr.mxu0 0.0
  %249 = vmatpush1.msra.mxu0 0.0
  %250 = vmatprep.subr.mxu0 0.0
  %251 = vmatpush1.msra.mxu0 0.0
  %252 = vmatprep.subr.mxu0 0.0
  %253 = vmatpush1.msra.mxu0 0.0
  %254 = vmatprep.subr.mxu0 0.0
  %255 = vmatpush1.msra.mxu0 0.0
  %256 = vmatprep.subr.mxu0 0.0
  %257 = vmatpush1.msra.mxu0 0.0
  %258 = vmatprep.mubr.f32.mxu0 0.0
  %259 = vmatmul.mubr.f32.gmra.mrb[0].mxu0 %v192
  %v260 = vpop.f32.mrb[0].mxu0
  %v261 = vadd.f32 %v188, %v260
  %v262 = vpop.f32.mrb[0].mxu0
  %263 = vdwg.mxu0
  %v264 = vrsqrt.pop %v261
  %v265 = vmul.f32 %v177, %v264
  %266 = vst [vmem:[%s5] sm:$0xff] %v265
  // Predicated region
  $region22: #{forward.36} parent=0 // pred_check
    _
  $region23: #{forward.36} parent=0 // pred_check_branch
    %268 = sbr.rel (0) target = $region25
  $region24: #{forward.36} parent=0 // pred_region
    _
  $region25: #{forward.36} parent=0 // pred_fallthru
    _
  // Predicated region
  $region26: #{forward.36} parent=0 // pred_check
    _
  $region27: #{forward.36} parent=0 // pred_check_branch
    %270 = sbr.rel (0) target = $region29
  $region28: #{forward.36} parent=0 // pred_region
    _
  $region29: #{forward.36} parent=0 // pred_fallthru
    _

// kernel: forward.37
$region0: #{forward.37}
  #allocation0 [shape = 'u32[]', space=smem, size = 0x4, offset = 0x4, fixed_abs, tag = 'smem constant byte address 0x4 - core index']
  #allocation1 [shape = 'u32[144,128]{1,0:T(1,128)}', space=vmem, size = 0x12000, scoped, tag = 'internal scratch']
  %s0 = inlined_call_operand.vmem [shape: bf16[208,128], index: 0, kind: input, shape index: {}]
  %s1 = inlined_call_operand.vmem [shape: bf16[12,208], index: 1, kind: input, shape index: {}]
  %s2 = inlined_call_operand.vmem [shape: f32[12,1], index: 2, kind: input, shape index: {}]
  %s3 = inlined_call_operand.vmem [shape: f32[12,128], index: 3, kind: output, shape index: {}]
  %s4 = sld [smem:[#allocation0]]
  $region22: #{forward.37} parent=0
    _
  %s6 = ssub.s32 1, %s4
  %s7 = scalar_select 0, %s6, %s4
  // Predicated region
  $region2: #{forward.37} parent=0 // pred_check
    _
  $region3: #{forward.37} parent=0 // pred_check_branch
    %9 = sbr.rel (0) target = $region5
  $region4: #{forward.37} parent=0 // pred_region
    _
  $region5: #{forward.37} parent=0 // pred_fallthru
    _
  // Predicated region
  $region6: #{forward.37} parent=0 // pred_check
    _
  $region7: #{forward.37} parent=0 // pred_check_branch
    %11 = sbr.rel (0) target = $region9
  $region8: #{forward.37} parent=0 // pred_region
    _
  $region9: #{forward.37} parent=0 // pred_fallthru
    _
  // Predicated region
  $region10: #{forward.37} parent=0 // pred_check
    _
  $region11: #{forward.37} parent=0 // pred_check_branch
    %13 = sbr.rel (0) target = $region13
  $region12: #{forward.37} parent=0 // pred_region
    _
  $region13: #{forward.37} parent=0 // pred_fallthru
    _
  %v15 = vld [vmem:[%s1] sm:$0xff]
  %v16 = vld [vmem:[%s1 + $0x8] sm:$0x33]
  %v17 = vld [vmem:[%s0] sm:$0xf]
  %v18 = vld [vmem:[%s0 + $0x4] sm:$0xf]
  %v19 = vld [vmem:[%s0 + $0x8] sm:$0xf]
  %v20 = vld [vmem:[%s0 + $0xc] sm:$0xf]
  %v21 = vld [vmem:[%s0 + $0x10] sm:$0xf]
  %v22 = vld [vmem:[%s0 + $0x14] sm:$0xf]
  %v23 = vld [vmem:[%s0 + $0x18] sm:$0xf]
  %v24 = vld [vmem:[%s0 + $0x1c] sm:$0xf]
  %v25 = vld [vmem:[%s0 + $0x20] sm:$0xf]
  %v26 = vld [vmem:[%s0 + $0x24] sm:$0xf]
  %v27 = vld [vmem:[%s0 + $0x28] sm:$0xf]
  %v28 = vld [vmem:[%s0 + $0x2c] sm:$0xf]
  %v29 = vld [vmem:[%s0 + $0x30] sm:$0xf]
  %v30 = vld [vmem:[%s0 + $0x34] sm:$0xf]
  %v31 = vld [vmem:[%s0 + $0x38] sm:$0xf]
  %v32 = vld [vmem:[%s0 + $0x3c] sm:$0xf]
  %v33 = vld [vmem:[%s0 + $0x40] sm:$0xf]
  %v34 = vld [vmem:[%s0 + $0x44] sm:$0xf]
  %v35 = vld [vmem:[%s0 + $0x48] sm:$0xf]
  %v36 = vld [vmem:[%s0 + $0x4c] sm:$0xf]
  %v37 = vld [vmem:[%s0 + $0x50] sm:$0xf]
  %v38 = vld [vmem:[%s0 + $0x54] sm:$0xf]
  %v39 = vld [vmem:[%s0 + $0x58] sm:$0xf]
  %v40 = vld [vmem:[%s0 + $0x5c] sm:$0xf]
  %v41 = vld [vmem:[%s0 + $0x60] sm:$0xf]
  %v42 = vld [vmem:[%s0 + $0x64] sm:$0xf]
  %v43 = vld [vmem:[%s2] sm:$0xff]
  %v44 = vld [vmem:[%s2 + $0x8] sm:$0xf]
  %46 = vset.pattern.permute.xlu0 0
  %47 = vperm.xlu0 %46, %v43
  %v48 = vpop.permute.xlu0 %47
  %51 = vset.pattern.permute.xlu0 0
  %52 = vperm.xlu0 %51, %v44
  %v53 = vpop.permute.xlu0 %52
  %v57 = vunpack.c.l.b16 %v15
  %v58 = vunpack.c.h.b16 %v15
  %v59 = vunpack.c.l.b16 %v16
  %v60 = vunpack.c.h.b16 %v16
  %v61 = vpack.c.b16 %v59, %v57
  %v62 = vpack.c.b16 %v60, %v58
  %v90 = vunpack.c.l.b16 %v17
  %v91 = vunpack.c.l.b16 %v18
  %v92 = vunpack.c.l.b16 %v19
  %v93 = vunpack.c.l.b16 %v20
  %v94 = vunpack.c.l.b16 %v21
  %v95 = vunpack.c.l.b16 %v22
  %v96 = vunpack.c.l.b16 %v23
  %v97 = vunpack.c.l.b16 %v24
  %v98 = vunpack.c.l.b16 %v25
  %v99 = vunpack.c.l.b16 %v26
  %v100 = vunpack.c.l.b16 %v27
  %v101 = vunpack.c.l.b16 %v28
  %v102 = vunpack.c.l.b16 %v29
  %v103 = vunpack.c.l.b16 %v30
  %v104 = vunpack.c.l.b16 %v31
  %v105 = vunpack.c.l.b16 %v32
  %v106 = vunpack.c.l.b16 %v33
  %v107 = vunpack.c.l.b16 %v34
  %v108 = vunpack.c.l.b16 %v35
  %v109 = vunpack.c.l.b16 %v36
  %v110 = vunpack.c.l.b16 %v37
  %v111 = vunpack.c.l.b16 %v38
  %v112 = vunpack.c.l.b16 %v39
  %v113 = vunpack.c.l.b16 %v40
  %v114 = vunpack.c.l.b16 %v41
  %v115 = vunpack.c.l.b16 %v42
  %v116 = vpack.c.b16 %v91, %v90
  %v117 = vpack.c.b16 %v93, %v92
  %v118 = vpack.c.b16 %v95, %v94
  %v119 = vpack.c.b16 %v97, %v96
  %v120 = vpack.c.b16 %v99, %v98
  %v121 = vpack.c.b16 %v101, %v100
  %v122 = vpack.c.b16 %v103, %v102
  %v123 = vpack.c.b16 %v105, %v104
  %v124 = vpack.c.b16 %v107, %v106
  %v125 = vpack.c.b16 %v109, %v108
  %v126 = vpack.c.b16 %v111, %v110
  %v127 = vpack.c.b16 %v113, %v112
  %v128 = vpack.c.b16 %v115, %v114
  %vm142 = vcmask 654336
  %v144 = vsel %vm142, %v62, 0
  %146 = vmatprep.subr.bf16.mxu0 0
  %147 = vmatpush1.bf16.msra.mxu0 %v116
  %148 = vmatprep.subr.bf16.mxu0 0
  %149 = vmatpush1.bf16.msra.mxu0 %v117
  %150 = vmatprep.subr.bf16.mxu0 0
  %151 = vmatpush1.bf16.msra.mxu0 %v118
  %152 = vmatprep.subr.bf16.mxu0 0
  %153 = vmatpush1.bf16.msra.mxu0 %v119
  %154 = vmatprep.subr.bf16.mxu0 0
  %155 = vmatpush1.bf16.msra.mxu0 %v120
  %156 = vmatprep.subr.bf16.mxu0 0
  %157 = vmatpush1.bf16.msra.mxu0 %v121
  %158 = vmatprep.subr.bf16.mxu0 0
  %159 = vmatpush1.bf16.msra.mxu0 %v122
  %160 = vmatprep.subr.bf16.mxu0 0
  %161 = vmatpush1.bf16.msra.mxu0 %v123
  %162 = vmatprep.subr.bf16.mxu0 0
  %163 = vmatpush1.bf16.msra.mxu0 %v124
  %164 = vmatprep.subr.bf16.mxu0 0
  %165 = vmatpush1.bf16.msra.mxu0 %v125
  %166 = vmatprep.subr.bf16.mxu0 0
  %167 = vmatpush1.bf16.msra.mxu0 %v126
  %168 = vmatprep.subr.bf16.mxu0 0
  %169 = vmatpush1.bf16.msra.mxu0 %v127
  %170 = vmatprep.subr.bf16.mxu0 0
  %171 = vmatpush1.bf16.msra.mxu0 %v128
  %172 = vmatprep.subr.bf16.mxu0 0
  %173 = vmatpush1.bf16.msra.mxu0 0
  %174 = vmatprep.subr.bf16.mxu0 0
  %175 = vmatpush1.bf16.msra.mxu0 0
  %176 = vmatprep.subr.bf16.mxu0 0
  %177 = vmatpush1.bf16.msra.mxu0 0
  %178 = vmatprep.mubr.bf16.mxu0 %v144
  %179 = vmatmul.mubr.bf16.gmra.mrb[0].mxu0 %v61
  %v180 = vpop.f32.mrb[0].mxu0
  %v181 = vadd.f32 %v48, %v180
  %v182 = vpop.f32.mrb[0].mxu0
  %v183 = vpop.f32.mrb[0].mxu0
  %v184 = vadd.f32 %v53, %v183
  %v185 = vpop.f32.mrb[0].mxu0
  %186 = vdwg.mxu0
  %187 = vst [vmem:[%s3] sm:$0xff] %v181
  %188 = vst [vmem:[%s3 + $0x8] sm:$0xf] %v184
  // Predicated region
  $region14: #{forward.37} parent=0 // pred_check
    _
  $region15: #{forward.37} parent=0 // pred_check_branch
    %190 = sbr.rel (0) target = $region17
  $region16: #{forward.37} parent=0 // pred_region
    _
  $region17: #{forward.37} parent=0 // pred_fallthru
    _
  // Predicated region
  $region18: #{forward.37} parent=0 // pred_check
    _
  $region19: #{forward.37} parent=0 // pred_check_branch
    %192 = sbr.rel (0) target = $region21
  $region20: #{forward.37} parent=0 // pred_region
    _
  $region21: #{forward.37} parent=0 // pred_fallthru
    _

// kernel: forward.38
$region0: #{forward.38}
  #allocation0 [shape = 'u32[]', space=smem, size = 0x4, offset = 0x4, fixed_abs, tag = 'smem constant byte address 0x4 - core index']
  #allocation1 [shape = 'u32[144,128]{1,0:T(1,128)}', space=vmem, size = 0x12000, scoped, tag = 'internal scratch']
  %s0 = inlined_call_operand.vmem [shape: bf16[112,128], index: 0, kind: input, shape index: {}]
  %s1 = inlined_call_operand.vmem [shape: bf16[8,112], index: 1, kind: input, shape index: {}]
  %s2 = inlined_call_operand.vmem [shape: f32[8,1], index: 2, kind: input, shape index: {}]
  %s3 = inlined_call_operand.vmem [shape: f32[8,128], index: 3, kind: output, shape index: {}]
  %s4 = sld [smem:[#allocation0]]
  $region22: #{forward.38} parent=0
    _
  %s6 = ssub.s32 1, %s4
  %s7 = scalar_select 0, %s6, %s4
  // Predicated region
  $region2: #{forward.38} parent=0 // pred_check
    _
  $region3: #{forward.38} parent=0 // pred_check_branch
    %9 = sbr.rel (0) target = $region5
  $region4: #{forward.38} parent=0 // pred_region
    _
  $region5: #{forward.38} parent=0 // pred_fallthru
    _
  // Predicated region
  $region6: #{forward.38} parent=0 // pred_check
    _
  $region7: #{forward.38} parent=0 // pred_check_branch
    %11 = sbr.rel (0) target = $region9
  $region8: #{forward.38} parent=0 // pred_region
    _
  $region9: #{forward.38} parent=0 // pred_fallthru
    _
  // Predicated region
  $region10: #{forward.38} parent=0 // pred_check
    _
  $region11: #{forward.38} parent=0 // pred_check_branch
    %13 = sbr.rel (0) target = $region13
  $region12: #{forward.38} parent=0 // pred_region
    _
  $region13: #{forward.38} parent=0 // pred_fallthru
    _
  %v15 = vld [vmem:[%s1] sm:$0xf]
  %v16 = vld [vmem:[%s0] sm:$0xf]
  %v17 = vld [vmem:[%s0 + $0x4] sm:$0xf]
  %v18 = vld [vmem:[%s0 + $0x8] sm:$0xf]
  %v19 = vld [vmem:[%s0 + $0xc] sm:$0xf]
  %v20 = vld [vmem:[%s0 + $0x10] sm:$0xf]
  %v21 = vld [vmem:[%s0 + $0x14] sm:$0xf]
  %v22 = vld [vmem:[%s0 + $0x18] sm:$0xf]
  %v23 = vld [vmem:[%s0 + $0x1c] sm:$0xf]
  %v24 = vld [vmem:[%s0 + $0x20] sm:$0xf]
  %v25 = vld [vmem:[%s0 + $0x24] sm:$0xf]
  %v26 = vld [vmem:[%s0 + $0x28] sm:$0xf]
  %v27 = vld [vmem:[%s0 + $0x2c] sm:$0xf]
  %v28 = vld [vmem:[%s0 + $0x30] sm:$0xf]
  %v29 = vld [vmem:[%s0 + $0x34] sm:$0xf]
  %v30 = vld [vmem:[%s2] sm:$0xff]
  %32 = vset.pattern.permute.xlu0 0
  %33 = vperm.xlu0 %32, %v30
  %v34 = vpop.permute.xlu0 %33
  %v50 = vunpack.c.l.b16 %v16
  %v51 = vunpack.c.l.b16 %v17
  %v52 = vunpack.c.l.b16 %v18
  %v53 = vunpack.c.l.b16 %v19
  %v54 = vunpack.c.l.b16 %v20
  %v55 = vunpack.c.l.b16 %v21
  %v56 = vunpack.c.l.b16 %v22
  %v57 = vunpack.c.l.b16 %v23
  %v58 = vunpack.c.l.b16 %v24
  %v59 = vunpack.c.l.b16 %v25
  %v60 = vunpack.c.l.b16 %v26
  %v61 = vunpack.c.l.b16 %v27
  %v62 = vunpack.c.l.b16 %v28
  %v63 = vunpack.c.l.b16 %v29
  %v64 = vpack.c.b16 %v51, %v50
  %v65 = vpack.c.b16 %v53, %v52
  %v66 = vpack.c.b16 %v55, %v54
  %v67 = vpack.c.b16 %v57, %v56
  %v68 = vpack.c.b16 %v59, %v58
  %v69 = vpack.c.b16 %v61, %v60
  %v70 = vpack.c.b16 %v63, %v62
  %vm78 = vcmask 916480
  %v80 = vsel %vm78, %v15, 0
  %82 = vmatprep.subr.bf16.mxu0 0
  %83 = vmatpush1.bf16.msra.mxu0 %v64
  %84 = vmatprep.subr.bf16.mxu0 0
  %85 = vmatpush1.bf16.msra.mxu0 %v65
  %86 = vmatprep.subr.bf16.mxu0 0
  %87 = vmatpush1.bf16.msra.mxu0 %v66
  %88 = vmatprep.subr.bf16.mxu0 0
  %89 = vmatpush1.bf16.msra.mxu0 %v67
  %90 = vmatprep.subr.bf16.mxu0 0
  %91 = vmatpush1.bf16.msra.mxu0 %v68
  %92 = vmatprep.subr.bf16.mxu0 0
  %93 = vmatpush1.bf16.msra.mxu0 %v69
  %94 = vmatprep.subr.bf16.mxu0 0
  %95 = vmatpush1.bf16.msra.mxu0 %v70
  %96 = vmatprep.subr.bf16.mxu0 0
  %97 = vmatpush1.bf16.msra.mxu0 0
  %98 = vmatprep.subr.bf16.mxu0 0
  %99 = vmatpush1.bf16.msra.mxu0 0
  %100 = vmatprep.subr.bf16.mxu0 0
  %101 = vmatpush1.bf16.msra.mxu0 0
  %102 = vmatprep.subr.bf16.mxu0 0
  %103 = vmatpush1.bf16.msra.mxu0 0
  %104 = vmatprep.subr.bf16.mxu0 0
  %105 = vmatpush1.bf16.msra.mxu0 0
  %106 = vmatprep.subr.bf16.mxu0 0
  %107 = vmatpush1.bf16.msra.mxu0 0
  %108 = vmatprep.subr.bf16.mxu0 0
  %109 = vmatpush1.bf16.msra.mxu0 0
  %110 = vmatprep.subr.bf16.mxu0 0
  %111 = vmatpush1.bf16.msra.mxu0 0
  %112 = vmatprep.subr.bf16.mxu0 0
  %113 = vmatpush1.bf16.msra.mxu0 0
  %114 = vmatprep.mubr.bf16.mxu0 0
  %115 = vmatmul.mubr.bf16.gmra.mrb[0].mxu0 %v80
  %v116 = vpop.f32.mrb[0].mxu0
  %v117 = vadd.f32 %v34, %v116
  %v118 = vpop.f32.mrb[0].mxu0
  %v119 = vpop.f32.mrb[0].mxu0
  %v120 = vpop.f32.mrb[0].mxu0
  %121 = vdwg.mxu0
  %vm122 = vcmp.ge.f32.partialorder %v117, 0.0
  %v123 = vmul.f32 %v117, 0.01
  %v124 = vsel %vm122, %v117, %v123
  %125 = vst [vmem:[%s3] sm:$0xff] %v124
  // Predicated region
  $region14: #{forward.38} parent=0 // pred_check
    _
  $region15: #{forward.38} parent=0 // pred_check_branch
    %127 = sbr.rel (0) target = $region17
  $region16: #{forward.38} parent=0 // pred_region
    _
  $region17: #{forward.38} parent=0 // pred_fallthru
    _
  // Predicated region
  $region18: #{forward.38} parent=0 // pred_check
    _
  $region19: #{forward.38} parent=0 // pred_check_branch
    %129 = sbr.rel (0) target = $region21
  $region20: #{forward.38} parent=0 // pred_region
    _
  $region21: #{forward.38} parent=0 // pred_fallthru
    _

// kernel: forward.39
$region0: #{forward.39}
  #allocation0 [shape = 'u32[]', space=smem, size = 0x4, offset = 0x4, fixed_abs, tag = 'smem constant byte address 0x4 - core index']
  #allocation1 [shape = 'u32[144,128]{1,0:T(1,128)}', space=vmem, size = 0x12000, scoped, tag = 'internal scratch']
  %s0 = inlined_call_operand.vmem [shape: bf16[208,128], index: 0, kind: input, shape index: {}]
  %s1 = inlined_call_operand.vmem [shape: bf16[8,208], index: 1, kind: input, shape index: {}]
  %s2 = inlined_call_operand.vmem [shape: f32[8,1], index: 2, kind: input, shape index: {}]
  %s3 = inlined_call_operand.vmem [shape: f32[8,128], index: 3, kind: output, shape index: {}]
  %s4 = sld [smem:[#allocation0]]
  $region22: #{forward.39} parent=0
    _
  %s6 = ssub.s32 1, %s4
  %s7 = scalar_select 0, %s6, %s4
  // Predicated region
  $region2: #{forward.39} parent=0 // pred_check
    _
  $region3: #{forward.39} parent=0 // pred_check_branch
    %9 = sbr.rel (0) target = $region5
  $region4: #{forward.39} parent=0 // pred_region
    _
  $region5: #{forward.39} parent=0 // pred_fallthru
    _
  // Predicated region
  $region6: #{forward.39} parent=0 // pred_check
    _
  $region7: #{forward.39} parent=0 // pred_check_branch
    %11 = sbr.rel (0) target = $region9
  $region8: #{forward.39} parent=0 // pred_region
    _
  $region9: #{forward.39} parent=0 // pred_fallthru
    _
  // Predicated region
  $region10: #{forward.39} parent=0 // pred_check
    _
  $region11: #{forward.39} parent=0 // pred_check_branch
    %13 = sbr.rel (0) target = $region13
  $region12: #{forward.39} parent=0 // pred_region
    _
  $region13: #{forward.39} parent=0 // pred_fallthru
    _
  %v15 = vld [vmem:[%s1] sm:$0xff]
  %v16 = vld [vmem:[%s0] sm:$0xf]
  %v17 = vld [vmem:[%s0 + $0x4] sm:$0xf]
  %v18 = vld [vmem:[%s0 + $0x8] sm:$0xf]
  %v19 = vld [vmem:[%s0 + $0xc] sm:$0xf]
  %v20 = vld [vmem:[%s0 + $0x10] sm:$0xf]
  %v21 = vld [vmem:[%s0 + $0x14] sm:$0xf]
  %v22 = vld [vmem:[%s0 + $0x18] sm:$0xf]
  %v23 = vld [vmem:[%s0 + $0x1c] sm:$0xf]
  %v24 = vld [vmem:[%s0 + $0x20] sm:$0xf]
  %v25 = vld [vmem:[%s0 + $0x24] sm:$0xf]
  %v26 = vld [vmem:[%s0 + $0x28] sm:$0xf]
  %v27 = vld [vmem:[%s0 + $0x2c] sm:$0xf]
  %v28 = vld [vmem:[%s0 + $0x30] sm:$0xf]
  %v29 = vld [vmem:[%s0 + $0x34] sm:$0xf]
  %v30 = vld [vmem:[%s0 + $0x38] sm:$0xf]
  %v31 = vld [vmem:[%s0 + $0x3c] sm:$0xf]
  %v32 = vld [vmem:[%s0 + $0x40] sm:$0xf]
  %v33 = vld [vmem:[%s0 + $0x44] sm:$0xf]
  %v34 = vld [vmem:[%s0 + $0x48] sm:$0xf]
  %v35 = vld [vmem:[%s0 + $0x4c] sm:$0xf]
  %v36 = vld [vmem:[%s0 + $0x50] sm:$0xf]
  %v37 = vld [vmem:[%s0 + $0x54] sm:$0xf]
  %v38 = vld [vmem:[%s0 + $0x58] sm:$0xf]
  %v39 = vld [vmem:[%s0 + $0x5c] sm:$0xf]
  %v40 = vld [vmem:[%s0 + $0x60] sm:$0xf]
  %v41 = vld [vmem:[%s0 + $0x64] sm:$0xf]
  %v42 = vld [vmem:[%s2] sm:$0xff]
  %44 = vset.pattern.permute.xlu0 0
  %45 = vperm.xlu0 %44, %v42
  %v46 = vpop.permute.xlu0 %45
  %v49 = vunpack.c.l.b16 %v15
  %v50 = vunpack.c.h.b16 %v15
  %v51 = vpack.c.b16 %v49, %v49
  %v52 = vpack.c.b16 %v50, %v50
  %v80 = vunpack.c.l.b16 %v16
  %v81 = vunpack.c.l.b16 %v17
  %v82 = vunpack.c.l.b16 %v18
  %v83 = vunpack.c.l.b16 %v19
  %v84 = vunpack.c.l.b16 %v20
  %v85 = vunpack.c.l.b16 %v21
  %v86 = vunpack.c.l.b16 %v22
  %v87 = vunpack.c.l.b16 %v23
  %v88 = vunpack.c.l.b16 %v24
  %v89 = vunpack.c.l.b16 %v25
  %v90 = vunpack.c.l.b16 %v26
  %v91 = vunpack.c.l.b16 %v27
  %v92 = vunpack.c.l.b16 %v28
  %v93 = vunpack.c.l.b16 %v29
  %v94 = vunpack.c.l.b16 %v30
  %v95 = vunpack.c.l.b16 %v31
  %v96 = vunpack.c.l.b16 %v32
  %v97 = vunpack.c.l.b16 %v33
  %v98 = vunpack.c.l.b16 %v34
  %v99 = vunpack.c.l.b16 %v35
  %v100 = vunpack.c.l.b16 %v36
  %v101 = vunpack.c.l.b16 %v37
  %v102 = vunpack.c.l.b16 %v38
  %v103 = vunpack.c.l.b16 %v39
  %v104 = vunpack.c.l.b16 %v40
  %v105 = vunpack.c.l.b16 %v41
  %v106 = vpack.c.b16 %v81, %v80
  %v107 = vpack.c.b16 %v83, %v82
  %v108 = vpack.c.b16 %v85, %v84
  %v109 = vpack.c.b16 %v87, %v86
  %v110 = vpack.c.b16 %v89, %v88
  %v111 = vpack.c.b16 %v91, %v90
  %v112 = vpack.c.b16 %v93, %v92
  %v113 = vpack.c.b16 %v95, %v94
  %v114 = vpack.c.b16 %v97, %v96
  %v115 = vpack.c.b16 %v99, %v98
  %v116 = vpack.c.b16 %v101, %v100
  %v117 = vpack.c.b16 %v103, %v102
  %v118 = vpack.c.b16 %v105, %v104
  %vm132 = vcmask 654336
  %v134 = vsel %vm132, %v52, 0
  %136 = vmatprep.subr.bf16.mxu0 0
  %137 = vmatpush1.bf16.msra.mxu0 %v106
  %138 = vmatprep.subr.bf16.mxu0 0
  %139 = vmatpush1.bf16.msra.mxu0 %v107
  %140 = vmatprep.subr.bf16.mxu0 0
  %141 = vmatpush1.bf16.msra.mxu0 %v108
  %142 = vmatprep.subr.bf16.mxu0 0
  %143 = vmatpush1.bf16.msra.mxu0 %v109
  %144 = vmatprep.subr.bf16.mxu0 0
  %145 = vmatpush1.bf16.msra.mxu0 %v110
  %146 = vmatprep.subr.bf16.mxu0 0
  %147 = vmatpush1.bf16.msra.mxu0 %v111
  %148 = vmatprep.subr.bf16.mxu0 0
  %149 = vmatpush1.bf16.msra.mxu0 %v112
  %150 = vmatprep.subr.bf16.mxu0 0
  %151 = vmatpush1.bf16.msra.mxu0 %v113
  %152 = vmatprep.subr.bf16.mxu0 0
  %153 = vmatpush1.bf16.msra.mxu0 %v114
  %154 = vmatprep.subr.bf16.mxu0 0
  %155 = vmatpush1.bf16.msra.mxu0 %v115
  %156 = vmatprep.subr.bf16.mxu0 0
  %157 = vmatpush1.bf16.msra.mxu0 %v116
  %158 = vmatprep.subr.bf16.mxu0 0
  %159 = vmatpush1.bf16.msra.mxu0 %v117
  %160 = vmatprep.subr.bf16.mxu0 0
  %161 = vmatpush1.bf16.msra.mxu0 %v118
  %162 = vmatprep.subr.bf16.mxu0 0
  %163 = vmatpush1.bf16.msra.mxu0 0
  %164 = vmatprep.subr.bf16.mxu0 0
  %165 = vmatpush1.bf16.msra.mxu0 0
  %166 = vmatprep.subr.bf16.mxu0 0
  %167 = vmatpush1.bf16.msra.mxu0 0
  %168 = vmatprep.mubr.bf16.mxu0 %v134
  %169 = vmatmul.mubr.bf16.gmra.mrb[0].mxu0 %v51
  %v170 = vpop.f32.mrb[0].mxu0
  %v171 = vadd.f32 %v46, %v170
  %v172 = vpop.f32.mrb[0].mxu0
  %v173 = vpop.f32.mrb[0].mxu0
  %v174 = vpop.f32.mrb[0].mxu0
  %175 = vdwg.mxu0
  %vm176 = vcmp.ge.f32.partialorder %v171, 0.0
  %v177 = vmul.f32 %v171, 0.01
  %v178 = vsel %vm176, %v171, %v177
  %179 = vst [vmem:[%s3] sm:$0xff] %v178
  // Predicated region
  $region14: #{forward.39} parent=0 // pred_check
    _
  $region15: #{forward.39} parent=0 // pred_check_branch
    %181 = sbr.rel (0) target = $region17
  $region16: #{forward.39} parent=0 // pred_region
    _
  $region17: #{forward.39} parent=0 // pred_fallthru
    _
  // Predicated region
  $region18: #{forward.39} parent=0 // pred_check
    _
  $region19: #{forward.39} parent=0 // pred_check_branch
    %183 = sbr.rel (0) target = $region21
  $region20: #{forward.39} parent=0 // pred_region
    _
  $region21: #{forward.39} parent=0 // pred_fallthru
    _

// kernel: forward.40
$region0: #{forward.40}
  #allocation0 [shape = 'u32[]', space=smem, size = 0x4, offset = 0x4, fixed_abs, tag = 'smem constant byte address 0x4 - core index']
  #allocation1 [shape = 'u32[144,128]{1,0:T(1,128)}', space=vmem, size = 0x12000, scoped, tag = 'internal scratch']
  %s0 = inlined_call_operand.vmem [shape: bf16[208,128], index: 0, kind: input, shape index: {}]
  %s1 = inlined_call_operand.vmem [shape: bf16[8,208], index: 1, kind: input, shape index: {}]
  %s2 = inlined_call_operand.vmem [shape: f32[8,1], index: 2, kind: input, shape index: {}]
  %s3 = inlined_call_operand.vmem [shape: f32[8,128], index: 3, kind: output, shape index: {}]
  %s4 = sld [smem:[#allocation0]]
  $region22: #{forward.40} parent=0
    _
  %s6 = ssub.s32 1, %s4
  %s7 = scalar_select 0, %s6, %s4
  // Predicated region
  $region2: #{forward.40} parent=0 // pred_check
    _
  $region3: #{forward.40} parent=0 // pred_check_branch
    %9 = sbr.rel (0) target = $region5
  $region4: #{forward.40} parent=0 // pred_region
    _
  $region5: #{forward.40} parent=0 // pred_fallthru
    _
  // Predicated region
  $region6: #{forward.40} parent=0 // pred_check
    _
  $region7: #{forward.40} parent=0 // pred_check_branch
    %11 = sbr.rel (0) target = $region9
  $region8: #{forward.40} parent=0 // pred_region
    _
  $region9: #{forward.40} parent=0 // pred_fallthru
    _
  // Predicated region
  $region10: #{forward.40} parent=0 // pred_check
    _
  $region11: #{forward.40} parent=0 // pred_check_branch
    %13 = sbr.rel (0) target = $region13
  $region12: #{forward.40} parent=0 // pred_region
    _
  $region13: #{forward.40} parent=0 // pred_fallthru
    _
  %v15 = vld [vmem:[%s1] sm:$0xff]
  %v16 = vld [vmem:[%s0] sm:$0xf]
  %v17 = vld [vmem:[%s0 + $0x4] sm:$0xf]
  %v18 = vld [vmem:[%s0 + $0x8] sm:$0xf]
  %v19 = vld [vmem:[%s0 + $0xc] sm:$0xf]
  %v20 = vld [vmem:[%s0 + $0x10] sm:$0xf]
  %v21 = vld [vmem:[%s0 + $0x14] sm:$0xf]
  %v22 = vld [vmem:[%s0 + $0x18] sm:$0xf]
  %v23 = vld [vmem:[%s0 + $0x1c] sm:$0xf]
  %v24 = vld [vmem:[%s0 + $0x20] sm:$0xf]
  %v25 = vld [vmem:[%s0 + $0x24] sm:$0xf]
  %v26 = vld [vmem:[%s0 + $0x28] sm:$0xf]
  %v27 = vld [vmem:[%s0 + $0x2c] sm:$0xf]
  %v28 = vld [vmem:[%s0 + $0x30] sm:$0xf]
  %v29 = vld [vmem:[%s0 + $0x34] sm:$0xf]
  %v30 = vld [vmem:[%s0 + $0x38] sm:$0xf]
  %v31 = vld [vmem:[%s0 + $0x3c] sm:$0xf]
  %v32 = vld [vmem:[%s0 + $0x40] sm:$0xf]
  %v33 = vld [vmem:[%s0 + $0x44] sm:$0xf]
  %v34 = vld [vmem:[%s0 + $0x48] sm:$0xf]
  %v35 = vld [vmem:[%s0 + $0x4c] sm:$0xf]
  %v36 = vld [vmem:[%s0 + $0x50] sm:$0xf]
  %v37 = vld [vmem:[%s0 + $0x54] sm:$0xf]
  %v38 = vld [vmem:[%s0 + $0x58] sm:$0xf]
  %v39 = vld [vmem:[%s0 + $0x5c] sm:$0xf]
  %v40 = vld [vmem:[%s0 + $0x60] sm:$0xf]
  %v41 = vld [vmem:[%s0 + $0x64] sm:$0xf]
  %v42 = vld [vmem:[%s2] sm:$0xff]
  %44 = vset.pattern.permute.xlu0 0
  %45 = vperm.xlu0 %44, %v42
  %v46 = vpop.permute.xlu0 %45
  %v49 = vunpack.c.l.b16 %v15
  %v50 = vunpack.c.h.b16 %v15
  %v51 = vpack.c.b16 %v49, %v49
  %v52 = vpack.c.b16 %v50, %v50
  %v80 = vunpack.c.l.b16 %v16
  %v81 = vunpack.c.l.b16 %v17
  %v82 = vunpack.c.l.b16 %v18
  %v83 = vunpack.c.l.b16 %v19
  %v84 = vunpack.c.l.b16 %v20
  %v85 = vunpack.c.l.b16 %v21
  %v86 = vunpack.c.l.b16 %v22
  %v87 = vunpack.c.l.b16 %v23
  %v88 = vunpack.c.l.b16 %v24
  %v89 = vunpack.c.l.b16 %v25
  %v90 = vunpack.c.l.b16 %v26
  %v91 = vunpack.c.l.b16 %v27
  %v92 = vunpack.c.l.b16 %v28
  %v93 = vunpack.c.l.b16 %v29
  %v94 = vunpack.c.l.b16 %v30
  %v95 = vunpack.c.l.b16 %v31
  %v96 = vunpack.c.l.b16 %v32
  %v97 = vunpack.c.l.b16 %v33
  %v98 = vunpack.c.l.b16 %v34
  %v99 = vunpack.c.l.b16 %v35
  %v100 = vunpack.c.l.b16 %v36
  %v101 = vunpack.c.l.b16 %v37
  %v102 = vunpack.c.l.b16 %v38
  %v103 = vunpack.c.l.b16 %v39
  %v104 = vunpack.c.l.b16 %v40
  %v105 = vunpack.c.l.b16 %v41
  %v106 = vpack.c.b16 %v81, %v80
  %v107 = vpack.c.b16 %v83, %v82
  %v108 = vpack.c.b16 %v85, %v84
  %v109 = vpack.c.b16 %v87, %v86
  %v110 = vpack.c.b16 %v89, %v88
  %v111 = vpack.c.b16 %v91, %v90
  %v112 = vpack.c.b16 %v93, %v92
  %v113 = vpack.c.b16 %v95, %v94
  %v114 = vpack.c.b16 %v97, %v96
  %v115 = vpack.c.b16 %v99, %v98
  %v116 = vpack.c.b16 %v101, %v100
  %v117 = vpack.c.b16 %v103, %v102
  %v118 = vpack.c.b16 %v105, %v104
  %vm132 = vcmask 654336
  %v134 = vsel %vm132, %v52, 0
  %136 = vmatprep.subr.bf16.mxu0 0
  %137 = vmatpush1.bf16.msra.mxu0 %v106
  %138 = vmatprep.subr.bf16.mxu0 0
  %139 = vmatpush1.bf16.msra.mxu0 %v107
  %140 = vmatprep.subr.bf16.mxu0 0
  %141 = vmatpush1.bf16.msra.mxu0 %v108
  %142 = vmatprep.subr.bf16.mxu0 0
  %143 = vmatpush1.bf16.msra.mxu0 %v109
  %144 = vmatprep.subr.bf16.mxu0 0
  %145 = vmatpush1.bf16.msra.mxu0 %v110
  %146 = vmatprep.subr.bf16.mxu0 0
  %147 = vmatpush1.bf16.msra.mxu0 %v111
  %148 = vmatprep.subr.bf16.mxu0 0
  %149 = vmatpush1.bf16.msra.mxu0 %v112
  %150 = vmatprep.subr.bf16.mxu0 0
  %151 = vmatpush1.bf16.msra.mxu0 %v113
  %152 = vmatprep.subr.bf16.mxu0 0
  %153 = vmatpush1.bf16.msra.mxu0 %v114
  %154 = vmatprep.subr.bf16.mxu0 0
  %155 = vmatpush1.bf16.msra.mxu0 %v115
  %156 = vmatprep.subr.bf16.mxu0 0
  %157 = vmatpush1.bf16.msra.mxu0 %v116
  %158 = vmatprep.subr.bf16.mxu0 0
  %159 = vmatpush1.bf16.msra.mxu0 %v117
  %160 = vmatprep.subr.bf16.mxu0 0
  %161 = vmatpush1.bf16.msra.mxu0 %v118
  %162 = vmatprep.subr.bf16.mxu0 0
  %163 = vmatpush1.bf16.msra.mxu0 0
  %164 = vmatprep.subr.bf16.mxu0 0
  %165 = vmatpush1.bf16.msra.mxu0 0
  %166 = vmatprep.subr.bf16.mxu0 0
  %167 = vmatpush1.bf16.msra.mxu0 0
  %168 = vmatprep.mubr.bf16.mxu0 %v134
  %169 = vmatmul.mubr.bf16.gmra.mrb[0].mxu0 %v51
  %v170 = vpop.f32.mrb[0].mxu0
  %v171 = vadd.f32 %v46, %v170
  %v172 = vpop.f32.mrb[0].mxu0
  %v173 = vpop.f32.mrb[0].mxu0
  %v174 = vpop.f32.mrb[0].mxu0
  %175 = vdwg.mxu0
  %176 = vst [vmem:[%s3] sm:$0xff] %v171
  // Predicated region
  $region14: #{forward.40} parent=0 // pred_check
    _
  $region15: #{forward.40} parent=0 // pred_check_branch
    %178 = sbr.rel (0) target = $region17
  $region16: #{forward.40} parent=0 // pred_region
    _
  $region17: #{forward.40} parent=0 // pred_fallthru
    _
  // Predicated region
  $region18: #{forward.40} parent=0 // pred_check
    _
  $region19: #{forward.40} parent=0 // pred_check_branch
    %180 = sbr.rel (0) target = $region21
  $region20: #{forward.40} parent=0 // pred_region
    _
  $region21: #{forward.40} parent=0 // pred_fallthru
    _

// kernel: forward.42
$region0: #{forward.42}
  #allocation0 [shape = 'u32[]', space=smem, size = 0x4, offset = 0x4, fixed_abs, tag = 'smem constant byte address 0x4 - core index']
  #allocation1 [shape = 'u32[144,128]{1,0:T(1,128)}', space=vmem, size = 0x12000, scoped, tag = 'internal scratch']
  %s0 = inlined_call_operand.vmem [shape: bf16[80,128], index: 0, kind: input, shape index: {}]
  %s1 = inlined_call_operand.vmem [shape: bf16[12,80], index: 1, kind: input, shape index: {}]
  %s2 = inlined_call_operand.vmem [shape: f32[12,1], index: 2, kind: input, shape index: {}]
  %s3 = inlined_call_operand.vmem [shape: f32[12,128], index: 3, kind: output, shape index: {}]
  %s4 = sld [smem:[#allocation0]]
  $region22: #{forward.42} parent=0
    _
  %s6 = ssub.s32 1, %s4
  %s7 = scalar_select 0, %s6, %s4
  // Predicated region
  $region2: #{forward.42} parent=0 // pred_check
    _
  $region3: #{forward.42} parent=0 // pred_check_branch
    %9 = sbr.rel (0) target = $region5
  $region4: #{forward.42} parent=0 // pred_region
    _
  $region5: #{forward.42} parent=0 // pred_fallthru
    _
  // Predicated region
  $region6: #{forward.42} parent=0 // pred_check
    _
  $region7: #{forward.42} parent=0 // pred_check_branch
    %11 = sbr.rel (0) target = $region9
  $region8: #{forward.42} parent=0 // pred_region
    _
  $region9: #{forward.42} parent=0 // pred_fallthru
    _
  // Predicated region
  $region10: #{forward.42} parent=0 // pred_check
    _
  $region11: #{forward.42} parent=0 // pred_check_branch
    %13 = sbr.rel (0) target = $region13
  $region12: #{forward.42} parent=0 // pred_region
    _
  $region13: #{forward.42} parent=0 // pred_fallthru
    _
  %v15 = vld [vmem:[%s1] sm:$0xf]
  %v16 = vld [vmem:[%s1 + $0x4] sm:$0x3]
  %v17 = vld [vmem:[%s0] sm:$0xf]
  %v18 = vld [vmem:[%s0 + $0x4] sm:$0xf]
  %v19 = vld [vmem:[%s0 + $0x8] sm:$0xf]
  %v20 = vld [vmem:[%s0 + $0xc] sm:$0xf]
  %v21 = vld [vmem:[%s0 + $0x10] sm:$0xf]
  %v22 = vld [vmem:[%s0 + $0x14] sm:$0xf]
  %v23 = vld [vmem:[%s0 + $0x18] sm:$0xf]
  %v24 = vld [vmem:[%s0 + $0x1c] sm:$0xf]
  %v25 = vld [vmem:[%s0 + $0x20] sm:$0xf]
  %v26 = vld [vmem:[%s0 + $0x24] sm:$0xf]
  %v27 = vld [vmem:[%s2] sm:$0xff]
  %v28 = vld [vmem:[%s2 + $0x8] sm:$0xf]
  %30 = vset.pattern.permute.xlu0 0
  %31 = vperm.xlu0 %30, %v27
  %v32 = vpop.permute.xlu0 %31
  %35 = vset.pattern.permute.xlu0 0
  %36 = vperm.xlu0 %35, %v28
  %v37 = vpop.permute.xlu0 %36
  %v41 = vunpack.c.l.b16 %v15
  %v42 = vunpack.c.l.b16 %v16
  %v43 = vpack.c.b16 %v42, %v41
  %v54 = vunpack.c.l.b16 %v17
  %v55 = vunpack.c.l.b16 %v18
  %v56 = vunpack.c.l.b16 %v19
  %v57 = vunpack.c.l.b16 %v20
  %v58 = vunpack.c.l.b16 %v21
  %v59 = vunpack.c.l.b16 %v22
  %v60 = vunpack.c.l.b16 %v23
  %v61 = vunpack.c.l.b16 %v24
  %v62 = vunpack.c.l.b16 %v25
  %v63 = vunpack.c.l.b16 %v26
  %v64 = vpack.c.b16 %v55, %v54
  %v65 = vpack.c.b16 %v57, %v56
  %v66 = vpack.c.b16 %v59, %v58
  %v67 = vpack.c.b16 %v61, %v60
  %v68 = vpack.c.b16 %v63, %v62
  %vm74 = vcmask 654336
  %v76 = vsel %vm74, %v43, 0
  %78 = vmatprep.subr.bf16.mxu0 0
  %79 = vmatpush1.bf16.msra.mxu0 %v64
  %80 = vmatprep.subr.bf16.mxu0 0
  %81 = vmatpush1.bf16.msra.mxu0 %v65
  %82 = vmatprep.subr.bf16.mxu0 0
  %83 = vmatpush1.bf16.msra.mxu0 %v66
  %84 = vmatprep.subr.bf16.mxu0 0
  %85 = vmatpush1.bf16.msra.mxu0 %v67
  %86 = vmatprep.subr.bf16.mxu0 0
  %87 = vmatpush1.bf16.msra.mxu0 %v68
  %88 = vmatprep.subr.bf16.mxu0 0
  %89 = vmatpush1.bf16.msra.mxu0 0
  %90 = vmatprep.subr.bf16.mxu0 0
  %91 = vmatpush1.bf16.msra.mxu0 0
  %92 = vmatprep.subr.bf16.mxu0 0
  %93 = vmatpush1.bf16.msra.mxu0 0
  %94 = vmatprep.subr.bf16.mxu0 0
  %95 = vmatpush1.bf16.msra.mxu0 0
  %96 = vmatprep.subr.bf16.mxu0 0
  %97 = vmatpush1.bf16.msra.mxu0 0
  %98 = vmatprep.subr.bf16.mxu0 0
  %99 = vmatpush1.bf16.msra.mxu0 0
  %100 = vmatprep.subr.bf16.mxu0 0
  %101 = vmatpush1.bf16.msra.mxu0 0
  %102 = vmatprep.subr.bf16.mxu0 0
  %103 = vmatpush1.bf16.msra.mxu0 0
  %104 = vmatprep.subr.bf16.mxu0 0
  %105 = vmatpush1.bf16.msra.mxu0 0
  %106 = vmatprep.subr.bf16.mxu0 0
  %107 = vmatpush1.bf16.msra.mxu0 0
  %108 = vmatprep.subr.bf16.mxu0 0
  %109 = vmatpush1.bf16.msra.mxu0 0
  %110 = vmatprep.mubr.bf16.mxu0 0
  %111 = vmatmul.mubr.bf16.gmra.mrb[0].mxu0 %v76
  %v112 = vpop.f32.mrb[0].mxu0
  %v113 = vadd.f32 %v32, %v112
  %v114 = vpop.f32.mrb[0].mxu0
  %v115 = vpop.f32.mrb[0].mxu0
  %v116 = vadd.f32 %v37, %v115
  %v117 = vpop.f32.mrb[0].mxu0
  %118 = vdwg.mxu0
  %vm119 = vcmp.ge.f32.partialorder %v113, 0.0
  %vm120 = vcmp.ge.f32.partialorder %v116, 0.0
  %v121 = vmul.f32 %v113, 0.01
  %v122 = vmul.f32 %v116, 0.01
  %v123 = vsel %vm119, %v113, %v121
  %v124 = vsel %vm120, %v116, %v122
  %125 = vst [vmem:[%s3] sm:$0xff] %v123
  %126 = vst [vmem:[%s3 + $0x8] sm:$0xf] %v124
  // Predicated region
  $region14: #{forward.42} parent=0 // pred_check
    _
  $region15: #{forward.42} parent=0 // pred_check_branch
    %128 = sbr.rel (0) target = $region17
  $region16: #{forward.42} parent=0 // pred_region
    _
  $region17: #{forward.42} parent=0 // pred_fallthru
    _
  // Predicated region
  $region18: #{forward.42} parent=0 // pred_check
    _
  $region19: #{forward.42} parent=0 // pred_check_branch
    %130 = sbr.rel (0) target = $region21
  $region20: #{forward.42} parent=0 // pred_region
    _
  $region21: #{forward.42} parent=0 // pred_fallthru
    _

// kernel: forward.41
$region0: #{forward.41}
  #allocation0 [shape = 'u32[]', space=smem, size = 0x4, offset = 0x4, fixed_abs, tag = 'smem constant byte address 0x4 - core index']
  #allocation1 [shape = 'u32[144,128]{1,0:T(1,128)}', space=vmem, size = 0x12000, scoped, tag = 'internal scratch']
  %s0 = inlined_call_operand.vmem [shape: f32[8,128], index: 0, kind: input, shape index: {}]
  %s1 = inlined_call_operand.vmem [shape: f32[8,1], index: 1, kind: input, shape index: {}]
  %s2 = inlined_call_operand.vmem [shape: f32[8,3], index: 2, kind: input, shape index: {}]
  %s3 = inlined_call_operand.vmem [shape: f32[8,3], index: 3, kind: input, shape index: {}]
  %s4 = inlined_call_operand.vmem [shape: f32[8,3], index: 4, kind: input, shape index: {}]
  %s5 = inlined_call_operand.vmem [shape: f32[8,9], index: 5, kind: input, shape index: {}]
  %s6 = inlined_call_operand.vmem [shape: f32[8,3], index: 6, kind: input, shape index: {}]
  %s7 = inlined_call_operand.vmem [shape: f32[8,3], index: 7, kind: input, shape index: {}]
  %s8 = inlined_call_operand.vmem [shape: f32[8,9], index: 8, kind: input, shape index: {}]
  %s9 = inlined_call_operand.vmem [shape: f32[8,3], index: 9, kind: input, shape index: {}]
  %s10 = inlined_call_operand.vmem [shape: f32[8,3], index: 10, kind: input, shape index: {}]
  %s11 = inlined_call_operand.vmem [shape: f32[8,3], index: 11, kind: input, shape index: {}]
  %s12 = inlined_call_operand.vmem [shape: f32[8,1], index: 12, kind: input, shape index: {}]
  %s13 = inlined_call_operand.vmem [shape: f32[8,128], index: 13, kind: output, shape index: {0}]
  %s14 = inlined_call_operand.vmem [shape: f32[8,128], index: 14, kind: output, shape index: {1}]
  %15 = xla_tuple %s13, %s14
  %s16 = sld [smem:[#allocation0]]
  $region70: #{forward.41} parent=0
    _
  %s18 = ssub.s32 1, %s16
  %s19 = scalar_select 0, %s18, %s16
  // Predicated region
  $region2: #{forward.41} parent=0 // pred_check
    _
  $region3: #{forward.41} parent=0 // pred_check_branch
    %21 = sbr.rel (0) target = $region5
  $region4: #{forward.41} parent=0 // pred_region
    _
  $region5: #{forward.41} parent=0 // pred_fallthru
    _
  // Predicated region
  $region6: #{forward.41} parent=0 // pred_check
    _
  $region7: #{forward.41} parent=0 // pred_check_branch
    %23 = sbr.rel (0) target = $region9
  $region8: #{forward.41} parent=0 // pred_region
    _
  $region9: #{forward.41} parent=0 // pred_fallthru
    _
  // Predicated region
  $region10: #{forward.41} parent=0 // pred_check
    _
  $region11: #{forward.41} parent=0 // pred_check_branch
    %25 = sbr.rel (0) target = $region13
  $region12: #{forward.41} parent=0 // pred_region
    _
  $region13: #{forward.41} parent=0 // pred_fallthru
    _
  // Predicated region
  $region14: #{forward.41} parent=0 // pred_check
    _
  $region15: #{forward.41} parent=0 // pred_check_branch
    %27 = sbr.rel (0) target = $region17
  $region16: #{forward.41} parent=0 // pred_region
    _
  $region17: #{forward.41} parent=0 // pred_fallthru
    _
  // Predicated region
  $region18: #{forward.41} parent=0 // pred_check
    _
  $region19: #{forward.41} parent=0 // pred_check_branch
    %29 = sbr.rel (0) target = $region21
  $region20: #{forward.41} parent=0 // pred_region
    _
  $region21: #{forward.41} parent=0 // pred_fallthru
    _
  // Predicated region
  $region22: #{forward.41} parent=0 // pred_check
    _
  $region23: #{forward.41} parent=0 // pred_check_branch
    %31 = sbr.rel (0) target = $region25
  $region24: #{forward.41} parent=0 // pred_region
    _
  $region25: #{forward.41} parent=0 // pred_fallthru
    _
  // Predicated region
  $region26: #{forward.41} parent=0 // pred_check
    _
  $region27: #{forward.41} parent=0 // pred_check_branch
    %33 = sbr.rel (0) target = $region29
  $region28: #{forward.41} parent=0 // pred_region
    _
  $region29: #{forward.41} parent=0 // pred_fallthru
    _
  // Predicated region
  $region30: #{forward.41} parent=0 // pred_check
    _
  $region31: #{forward.41} parent=0 // pred_check_branch
    %35 = sbr.rel (0) target = $region33
  $region32: #{forward.41} parent=0 // pred_region
    _
  $region33: #{forward.41} parent=0 // pred_fallthru
    _
  // Predicated region
  $region34: #{forward.41} parent=0 // pred_check
    _
  $region35: #{forward.41} parent=0 // pred_check_branch
    %37 = sbr.rel (0) target = $region37
  $region36: #{forward.41} parent=0 // pred_region
    _
  $region37: #{forward.41} parent=0 // pred_fallthru
    _
  // Predicated region
  $region38: #{forward.41} parent=0 // pred_check
    _
  $region39: #{forward.41} parent=0 // pred_check_branch
    %39 = sbr.rel (0) target = $region41
  $region40: #{forward.41} parent=0 // pred_region
    _
  $region41: #{forward.41} parent=0 // pred_fallthru
    _
  // Predicated region
  $region42: #{forward.41} parent=0 // pred_check
    _
  $region43: #{forward.41} parent=0 // pred_check_branch
    %41 = sbr.rel (0) target = $region45
  $region44: #{forward.41} parent=0 // pred_region
    _
  $region45: #{forward.41} parent=0 // pred_fallthru
    _
  // Predicated region
  $region46: #{forward.41} parent=0 // pred_check
    _
  $region47: #{forward.41} parent=0 // pred_check_branch
    %43 = sbr.rel (0) target = $region49
  $region48: #{forward.41} parent=0 // pred_region
    _
  $region49: #{forward.41} parent=0 // pred_fallthru
    _
  // Predicated region
  $region50: #{forward.41} parent=0 // pred_check
    _
  $region51: #{forward.41} parent=0 // pred_check_branch
    %45 = sbr.rel (0) target = $region53
  $region52: #{forward.41} parent=0 // pred_region
    _
  $region53: #{forward.41} parent=0 // pred_fallthru
    _
  %v46 = vld [vmem:[%s1] sm:$0xff]
  %v47 = vld [vmem:[%s0] sm:$0xff]
  %49 = vset.pattern.permute.xlu0 0
  %50 = vperm.xlu0 %49, %v46
  %v51 = vpop.permute.xlu0 %50
  %v53 = vsub.f32 %v47, %v51
  %v54 = vround.ne.pseudo %v53
  %v55 = vadd.f32 %v54, %v51
  %v56 = vld [vmem:[%s2] sm:$0xff]
  %v57 = vmax.f32 %v56, 0.0
  %v58 = vand.u32 2147483647, %v56
  %v59 = vsub.f32 0.0, %v58
  %v60 = vmul.f32 %v59, 1.442695
  %v61 = vpow.pop %v60
  %v62 = vadd.f32 %v61, 1.0
  %v63 = vlog2.pop %v62
  %v64 = vmul.f32 %v63, 0.6931472
  %v65 = vadd.f32 %v57, %v64
  %v66 = vld [vmem:[%s3] sm:$0xff]
  %v67 = vld [vmem:[%s4] sm:$0xff]
  %v68 = vtanh.pop %v67
  %v69 = vld [vmem:[%s5] sm:$0xff]
  %v70 = vmax.f32 %v69, 0.0
  %v71 = vand.u32 2147483647, %v69
  %v72 = vsub.f32 0.0, %v71
  %v73 = vmul.f32 %v72, 1.442695
  %v74 = vpow.pop %v73
  %v75 = vadd.f32 %v74, 1.0
  %v76 = vlog2.pop %v75
  %v77 = vmul.f32 %v76, 0.6931472
  %v78 = vadd.f32 %v70, %v77
  %v79 = vld [vmem:[%s6] sm:$0xff]
  %v80 = vld [vmem:[%s7] sm:$0xff]
  %v81 = vtanh.pop %v80
  %v82 = vld [vmem:[%s8] sm:$0xff]
  %v83 = vmax.f32 %v82, 0.0
  %v84 = vand.u32 2147483647, %v82
  %v85 = vsub.f32 0.0, %v84
  %v86 = vmul.f32 %v85, 1.442695
  %v87 = vpow.pop %v86
  %v88 = vadd.f32 %v87, 1.0
  %v89 = vlog2.pop %v88
  %v90 = vmul.f32 %v89, 0.6931472
  %v91 = vadd.f32 %v83, %v90
  %v92 = vld [vmem:[%s9] sm:$0xff]
  %v93 = vld [vmem:[%s10] sm:$0xff]
  %v94 = vtanh.pop %v93
  %v95 = vld [vmem:[%s11] sm:$0xff]
  %v96 = vmax.f32 %v95, 0.0
  %v97 = vand.u32 2147483647, %v95
  %v98 = vsub.f32 0.0, %v97
  %v99 = vmul.f32 %v98, 1.442695
  %v100 = vpow.pop %v99
  %v101 = vadd.f32 %v100, 1.0
  %v102 = vlog2.pop %v101
  %v103 = vmul.f32 %v102, 0.6931472
  %v104 = vadd.f32 %v96, %v103
  %v105 = vld [vmem:[%s12] sm:$0xff]
  %v106 = vsub.f32 %v55, 0.5
  %108 = vset.pattern.permute.xlu0 0
  %109 = vperm.xlu0 %108, %v65
  %v110 = vpop.permute.xlu0 %109
  %v112 = vmul.f32 %v110, %v106
  %114 = vset.pattern.permute.xlu0 0
  %115 = vperm.xlu0 %114, %v66
  %v116 = vpop.permute.xlu0 %115
  %v118 = vadd.f32 %v116, %v112
  %v119 = vtanh.pop %v118
  %121 = vset.pattern.permute.xlu0 0
  %122 = vperm.xlu0 %121, %v68
  %v123 = vpop.permute.xlu0 %122
  %v125 = vmul.f32 %v123, %v119
  %v126 = vadd.f32 %v118, %v125
  %127 = vset.pattern.permute.xlu0 1
  %128 = vperm.xlu0 %127, %v65
  %v129 = vpop.permute.xlu0 %128
  %v131 = vmul.f32 %v129, %v106
  %132 = vset.pattern.permute.xlu0 1
  %133 = vperm.xlu0 %132, %v66
  %v134 = vpop.permute.xlu0 %133
  %v136 = vadd.f32 %v134, %v131
  %v137 = vtanh.pop %v136
  %138 = vset.pattern.permute.xlu0 1
  %139 = vperm.xlu0 %138, %v68
  %v140 = vpop.permute.xlu0 %139
  %v142 = vmul.f32 %v140, %v137
  %v143 = vadd.f32 %v136, %v142
  %144 = vset.pattern.permute.xlu0 2
  %145 = vperm.xlu0 %144, %v65
  %v146 = vpop.permute.xlu0 %145
  %v148 = vmul.f32 %v146, %v106
  %149 = vset.pattern.permute.xlu0 2
  %150 = vperm.xlu0 %149, %v66
  %v151 = vpop.permute.xlu0 %150
  %v153 = vadd.f32 %v151, %v148
  %v154 = vtanh.pop %v153
  %155 = vset.pattern.permute.xlu0 2
  %156 = vperm.xlu0 %155, %v68
  %v157 = vpop.permute.xlu0 %156
  %v159 = vmul.f32 %v157, %v154
  %v160 = vadd.f32 %v153, %v159
  %162 = vset.pattern.permute.xlu0 0
  %163 = vperm.xlu0 %162, %v78
  %v164 = vpop.permute.xlu0 %163
  %v166 = vmul.f32 %v164, %v126
  %168 = vset.pattern.permute.xlu0 0
  %169 = vperm.xlu0 %168, %v79
  %v170 = vpop.permute.xlu0 %169
  %v172 = vadd.f32 %v170, %v166
  %173 = vset.pattern.permute.xlu0 1
  %174 = vperm.xlu0 %173, %v78
  %v175 = vpop.permute.xlu0 %174
  %v177 = vmul.f32 %v175, %v143
  %v178 = vadd.f32 %v172, %v177
  %179 = vset.pattern.permute.xlu0 2
  %180 = vperm.xlu0 %179, %v78
  %v181 = vpop.permute.xlu0 %180
  %v183 = vmul.f32 %v181, %v160
  %v184 = vadd.f32 %v178, %v183
  %v185 = vtanh.pop %v184
  %187 = vset.pattern.permute.xlu0 0
  %188 = vperm.xlu0 %187, %v81
  %v189 = vpop.permute.xlu0 %188
  %v191 = vmul.f32 %v189, %v185
  %v192 = vadd.f32 %v184, %v191
  %193 = vset.pattern.permute.xlu0 3
  %194 = vperm.xlu0 %193, %v78
  %v195 = vpop.permute.xlu0 %194
  %v197 = vmul.f32 %v195, %v126
  %198 = vset.pattern.permute.xlu0 1
  %199 = vperm.xlu0 %198, %v79
  %v200 = vpop.permute.xlu0 %199
  %v202 = vadd.f32 %v200, %v197
  %203 = vset.pattern.permute.xlu0 4
  %204 = vperm.xlu0 %203, %v78
  %v205 = vpop.permute.xlu0 %204
  %v207 = vmul.f32 %v205, %v143
  %v208 = vadd.f32 %v202, %v207
  %209 = vset.pattern.permute.xlu0 5
  %210 = vperm.xlu0 %209, %v78
  %v211 = vpop.permute.xlu0 %210
  %v213 = vmul.f32 %v211, %v160
  %v214 = vadd.f32 %v208, %v213
  %v215 = vtanh.pop %v214
  %216 = vset.pattern.permute.xlu0 1
  %217 = vperm.xlu0 %216, %v81
  %v218 = vpop.permute.xlu0 %217
  %v220 = vmul.f32 %v218, %v215
  %v221 = vadd.f32 %v214, %v220
  %222 = vset.pattern.permute.xlu0 6
  %223 = vperm.xlu0 %222, %v78
  %v224 = vpop.permute.xlu0 %223
  %v226 = vmul.f32 %v224, %v126
  %227 = vset.pattern.permute.xlu0 2
  %228 = vperm.xlu0 %227, %v79
  %v229 = vpop.permute.xlu0 %228
  %v231 = vadd.f32 %v229, %v226
  %232 = vset.pattern.permute.xlu0 7
  %233 = vperm.xlu0 %232, %v78
  %v234 = vpop.permute.xlu0 %233
  %v236 = vmul.f32 %v234, %v143
  %v237 = vadd.f32 %v231, %v236
  %238 = vset.pattern.permute.xlu0 8
  %239 = vperm.xlu0 %238, %v78
  %v240 = vpop.permute.xlu0 %239
  %v242 = vmul.f32 %v240, %v160
  %v243 = vadd.f32 %v237, %v242
  %v244 = vtanh.pop %v243
  %245 = vset.pattern.permute.xlu0 2
  %246 = vperm.xlu0 %245, %v81
  %v247 = vpop.permute.xlu0 %246
  %v249 = vmul.f32 %v247, %v244
  %v250 = vadd.f32 %v243, %v249
  %252 = vset.pattern.permute.xlu0 0
  %253 = vperm.xlu0 %252, %v91
  %v254 = vpop.permute.xlu0 %253
  %v256 = vmul.f32 %v254, %v192
  %258 = vset.pattern.permute.xlu0 0
  %259 = vperm.xlu0 %258, %v92
  %v260 = vpop.permute.xlu0 %259
  %v262 = vadd.f32 %v260, %v256
  %263 = vset.pattern.permute.xlu0 1
  %264 = vperm.xlu0 %263, %v91
  %v265 = vpop.permute.xlu0 %264
  %v267 = vmul.f32 %v265, %v221
  %v268 = vadd.f32 %v262, %v267
  %269 = vset.pattern.permute.xlu0 2
  %270 = vperm.xlu0 %269, %v91
  %v271 = vpop.permute.xlu0 %270
  %v273 = vmul.f32 %v271, %v250
  %v274 = vadd.f32 %v268, %v273
  %v275 = vtanh.pop %v274
  %277 = vset.pattern.permute.xlu0 0
  %278 = vperm.xlu0 %277, %v94
  %v279 = vpop.permute.xlu0 %278
  %v281 = vmul.f32 %v279, %v275
  %v282 = vadd.f32 %v274, %v281
  %283 = vset.pattern.permute.xlu0 3
  %284 = vperm.xlu0 %283, %v91
  %v285 = vpop.permute.xlu0 %284
  %v287 = vmul.f32 %v285, %v192
  %288 = vset.pattern.permute.xlu0 1
  %289 = vperm.xlu0 %288, %v92
  %v290 = vpop.permute.xlu0 %289
  %v292 = vadd.f32 %v290, %v287
  %293 = vset.pattern.permute.xlu0 4
  %294 = vperm.xlu0 %293, %v91
  %v295 = vpop.permute.xlu0 %294
  %v297 = vmul.f32 %v295, %v221
  %v298 = vadd.f32 %v292, %v297
  %299 = vset.pattern.permute.xlu0 5
  %300 = vperm.xlu0 %299, %v91
  %v301 = vpop.permute.xlu0 %300
  %v303 = vmul.f32 %v301, %v250
  %v304 = vadd.f32 %v298, %v303
  %v305 = vtanh.pop %v304
  %306 = vset.pattern.permute.xlu0 1
  %307 = vperm.xlu0 %306, %v94
  %v308 = vpop.permute.xlu0 %307
  %v310 = vmul.f32 %v308, %v305
  %v311 = vadd.f32 %v304, %v310
  %312 = vset.pattern.permute.xlu0 6
  %313 = vperm.xlu0 %312, %v91
  %v314 = vpop.permute.xlu0 %313
  %v316 = vmul.f32 %v314, %v192
  %317 = vset.pattern.permute.xlu0 2
  %318 = vperm.xlu0 %317, %v92
  %v319 = vpop.permute.xlu0 %318
  %v321 = vadd.f32 %v319, %v316
  %322 = vset.pattern.permute.xlu0 7
  %323 = vperm.xlu0 %322, %v91
  %v324 = vpop.permute.xlu0 %323
  %v326 = vmul.f32 %v324, %v221
  %v327 = vadd.f32 %v321, %v326
  %328 = vset.pattern.permute.xlu0 8
  %329 = vperm.xlu0 %328, %v91
  %v330 = vpop.permute.xlu0 %329
  %v332 = vmul.f32 %v330, %v250
  %v333 = vadd.f32 %v327, %v332
  %v334 = vtanh.pop %v333
  %335 = vset.pattern.permute.xlu0 2
  %336 = vperm.xlu0 %335, %v94
  %v337 = vpop.permute.xlu0 %336
  %v339 = vmul.f32 %v337, %v334
  %v340 = vadd.f32 %v333, %v339
  %342 = vset.pattern.permute.xlu0 0
  %343 = vperm.xlu0 %342, %v104
  %v344 = vpop.permute.xlu0 %343
  %v346 = vmul.f32 %v344, %v282
  %348 = vset.pattern.permute.xlu0 0
  %349 = vperm.xlu0 %348, %v105
  %v350 = vpop.permute.xlu0 %349
  %v352 = vadd.f32 %v350, %v346
  %353 = vset.pattern.permute.xlu0 1
  %354 = vperm.xlu0 %353, %v104
  %v355 = vpop.permute.xlu0 %354
  %v357 = vmul.f32 %v355, %v311
  %v358 = vadd.f32 %v352, %v357
  %359 = vset.pattern.permute.xlu0 2
  %360 = vperm.xlu0 %359, %v104
  %v361 = vpop.permute.xlu0 %360
  %v363 = vmul.f32 %v361, %v340
  %v364 = vadd.f32 %v358, %v363
  %v365 = vadd.f32 %v55, 0.5
  %v366 = vmul.f32 %v110, %v365
  %v367 = vadd.f32 %v116, %v366
  %v368 = vtanh.pop %v367
  %v369 = vmul.f32 %v123, %v368
  %v370 = vadd.f32 %v367, %v369
  %v371 = vmul.f32 %v129, %v365
  %v372 = vadd.f32 %v134, %v371
  %v373 = vtanh.pop %v372
  %v374 = vmul.f32 %v140, %v373
  %v375 = vadd.f32 %v372, %v374
  %v376 = vmul.f32 %v146, %v365
  %v377 = vadd.f32 %v151, %v376
  %v378 = vtanh.pop %v377
  %v379 = vmul.f32 %v157, %v378
  %v380 = vadd.f32 %v377, %v379
  %v381 = vmul.f32 %v164, %v370
  %v382 = vadd.f32 %v170, %v381
  %v383 = vmul.f32 %v175, %v375
  %v384 = vadd.f32 %v382, %v383
  %v385 = vmul.f32 %v181, %v380
  %v386 = vadd.f32 %v384, %v385
  %v387 = vtanh.pop %v386
  %v388 = vmul.f32 %v189, %v387
  %v389 = vadd.f32 %v386, %v388
  %v390 = vmul.f32 %v195, %v370
  %v391 = vadd.f32 %v200, %v390
  %v392 = vmul.f32 %v205, %v375
  %v393 = vadd.f32 %v391, %v392
  %v394 = vmul.f32 %v211, %v380
  %v395 = vadd.f32 %v393, %v394
  %v396 = vtanh.pop %v395
  %v397 = vmul.f32 %v218, %v396
  %v398 = vadd.f32 %v395, %v397
  %v399 = vmul.f32 %v224, %v370
  %v400 = vadd.f32 %v229, %v399
  %v401 = vmul.f32 %v234, %v375
  %v402 = vadd.f32 %v400, %v401
  %v403 = vmul.f32 %v240, %v380
  %v404 = vadd.f32 %v402, %v403
  %v405 = vtanh.pop %v404
  %v406 = vmul.f32 %v247, %v405
  %v407 = vadd.f32 %v404, %v406
  %v408 = vmul.f32 %v254, %v389
  %v409 = vadd.f32 %v260, %v408
  %v410 = vmul.f32 %v265, %v398
  %v411 = vadd.f32 %v409, %v410
  %v412 = vmul.f32 %v271, %v407
  %v413 = vadd.f32 %v411, %v412
  %v414 = vtanh.pop %v413
  %v415 = vmul.f32 %v279, %v414
  %v416 = vadd.f32 %v413, %v415
  %v417 = vmul.f32 %v285, %v389
  %v418 = vadd.f32 %v290, %v417
  %v419 = vmul.f32 %v295, %v398
  %v420 = vadd.f32 %v418, %v419
  %v421 = vmul.f32 %v301, %v407
  %v422 = vadd.f32 %v420, %v421
  %v423 = vtanh.pop %v422
  %v424 = vmul.f32 %v308, %v423
  %v425 = vadd.f32 %v422, %v424
  %v426 = vmul.f32 %v314, %v389
  %v427 = vadd.f32 %v319, %v426
  %v428 = vmul.f32 %v324, %v398
  %v429 = vadd.f32 %v427, %v428
  %v430 = vmul.f32 %v330, %v407
  %v431 = vadd.f32 %v429, %v430
  %v432 = vtanh.pop %v431
  %v433 = vmul.f32 %v337, %v432
  %v434 = vadd.f32 %v431, %v433
  %v435 = vmul.f32 %v344, %v416
  %v436 = vadd.f32 %v350, %v435
  %v437 = vmul.f32 %v355, %v425
  %v438 = vadd.f32 %v436, %v437
  %v439 = vmul.f32 %v361, %v434
  %v440 = vadd.f32 %v438, %v439
  %v441 = vadd.f32 %v364, %v440
  %vm442 = vcmp.gt.f32.partialorder %v441, 0.0
  %vm443 = vcmp.lt.f32.partialorder %v441, 0.0
  %v444 = vsel %vm443, 1.0, 0.0
  %v445 = vsel %vm442, -1.0, %v444
  %v446 = vmul.f32 %v445, %v440
  %v447 = vsub.f32 0.0, %v446
  %v448 = vmul.f32 %v447, 1.442695
  %v449 = vpow.pop %v448
  %v450 = vadd.f32 %v449, 1.0
  %v451 = vrcp.pop %v450
  %v452 = vmul.f32 1.0, %v451
  %v453 = vmul.f32 %v445, %v364
  %v454 = vsub.f32 0.0, %v453
  %v455 = vmul.f32 %v454, 1.442695
  %v456 = vpow.pop %v455
  %v457 = vadd.f32 %v456, 1.0
  %v458 = vrcp.pop %v457
  %v459 = vmul.f32 1.0, %v458
  %v460 = vsub.f32 %v452, %v459
  %v461 = vand.u32 2147483647, %v460
  %v462 = vmax.f32 %v461, 1e-09
  %463 = vst [vmem:[%s13] sm:$0xff] %v55
  %464 = vst [vmem:[%s14] sm:$0xff] %v462
  // Predicated region
  $region54: #{forward.41} parent=0 // pred_check
    _
  $region55: #{forward.41} parent=0 // pred_check_branch
    %466 = sbr.rel (0) target = $region57
  $region56: #{forward.41} parent=0 // pred_region
    _
  $region57: #{forward.41} parent=0 // pred_fallthru
    _
  // Predicated region
  $region58: #{forward.41} parent=0 // pred_check
    _
  $region59: #{forward.41} parent=0 // pred_check_branch
    %468 = sbr.rel (0) target = $region61
  $region60: #{forward.41} parent=0 // pred_region
    _
  $region61: #{forward.41} parent=0 // pred_fallthru
    _
  // Predicated region
  $region62: #{forward.41} parent=0 // pred_check
    _
  $region63: #{forward.41} parent=0 // pred_check_branch
    %470 = sbr.rel (0) target = $region65
  $region64: #{forward.41} parent=0 // pred_region
    _
  $region65: #{forward.41} parent=0 // pred_fallthru
    _
  // Predicated region
  $region66: #{forward.41} parent=0 // pred_check
    _
  $region67: #{forward.41} parent=0 // pred_check_branch
    %472 = sbr.rel (0) target = $region69
  $region68: #{forward.41} parent=0 // pred_region
    _
  $region69: #{forward.41} parent=0 // pred_fallthru
    _

// kernel: forward.43
$region0: #{forward.43}
  #allocation0 [shape = 'u32[]', space=smem, size = 0x4, offset = 0x4, fixed_abs, tag = 'smem constant byte address 0x4 - core index']
  #allocation1 [shape = 'u32[144,128]{1,0:T(1,128)}', space=vmem, size = 0x12000, scoped, tag = 'internal scratch']
  %s0 = inlined_call_operand.vmem [shape: bf16[48,128], index: 0, kind: input, shape index: {}]
  %s1 = inlined_call_operand.vmem [shape: bf16[12,48], index: 1, kind: input, shape index: {}]
  %s2 = inlined_call_operand.vmem [shape: f32[12,1], index: 2, kind: input, shape index: {}]
  %s3 = inlined_call_operand.vmem [shape: f32[12,128], index: 3, kind: output, shape index: {}]
  %s4 = sld [smem:[#allocation0]]
  $region22: #{forward.43} parent=0
    _
  %s6 = ssub.s32 1, %s4
  %s7 = scalar_select 0, %s6, %s4
  // Predicated region
  $region2: #{forward.43} parent=0 // pred_check
    _
  $region3: #{forward.43} parent=0 // pred_check_branch
    %9 = sbr.rel (0) target = $region5
  $region4: #{forward.43} parent=0 // pred_region
    _
  $region5: #{forward.43} parent=0 // pred_fallthru
    _
  // Predicated region
  $region6: #{forward.43} parent=0 // pred_check
    _
  $region7: #{forward.43} parent=0 // pred_check_branch
    %11 = sbr.rel (0) target = $region9
  $region8: #{forward.43} parent=0 // pred_region
    _
  $region9: #{forward.43} parent=0 // pred_fallthru
    _
  // Predicated region
  $region10: #{forward.43} parent=0 // pred_check
    _
  $region11: #{forward.43} parent=0 // pred_check_branch
    %13 = sbr.rel (0) target = $region13
  $region12: #{forward.43} parent=0 // pred_region
    _
  $region13: #{forward.43} parent=0 // pred_fallthru
    _
  %v15 = vld [vmem:[%s1] sm:$0xf]
  %v16 = vld [vmem:[%s1 + $0x4] sm:$0x3]
  %v17 = vld [vmem:[%s0] sm:$0xf]
  %v18 = vld [vmem:[%s0 + $0x4] sm:$0xf]
  %v19 = vld [vmem:[%s0 + $0x8] sm:$0xf]
  %v20 = vld [vmem:[%s0 + $0xc] sm:$0xf]
  %v21 = vld [vmem:[%s0 + $0x10] sm:$0xf]
  %v22 = vld [vmem:[%s0 + $0x14] sm:$0xf]
  %v23 = vld [vmem:[%s2] sm:$0xff]
  %v24 = vld [vmem:[%s2 + $0x8] sm:$0xf]
  %26 = vset.pattern.permute.xlu0 0
  %27 = vperm.xlu0 %26, %v23
  %v28 = vpop.permute.xlu0 %27
  %31 = vset.pattern.permute.xlu0 0
  %32 = vperm.xlu0 %31, %v24
  %v33 = vpop.permute.xlu0 %32
  %v37 = vunpack.c.l.b16 %v15
  %v38 = vunpack.c.l.b16 %v16
  %v39 = vpack.c.b16 %v38, %v37
  %v46 = vunpack.c.l.b16 %v17
  %v47 = vunpack.c.l.b16 %v18
  %v48 = vunpack.c.l.b16 %v19
  %v49 = vunpack.c.l.b16 %v20
  %v50 = vunpack.c.l.b16 %v21
  %v51 = vunpack.c.l.b16 %v22
  %v52 = vpack.c.b16 %v47, %v46
  %v53 = vpack.c.b16 %v49, %v48
  %v54 = vpack.c.b16 %v51, %v50
  %vm58 = vcmask 392192
  %v60 = vsel %vm58, %v39, 0
  %62 = vmatprep.subr.bf16.mxu0 0
  %63 = vmatpush1.bf16.msra.mxu0 %v52
  %64 = vmatprep.subr.bf16.mxu0 0
  %65 = vmatpush1.bf16.msra.mxu0 %v53
  %66 = vmatprep.subr.bf16.mxu0 0
  %67 = vmatpush1.bf16.msra.mxu0 %v54
  %68 = vmatprep.subr.bf16.mxu0 0
  %69 = vmatpush1.bf16.msra.mxu0 0
  %70 = vmatprep.subr.bf16.mxu0 0
  %71 = vmatpush1.bf16.msra.mxu0 0
  %72 = vmatprep.subr.bf16.mxu0 0
  %73 = vmatpush1.bf16.msra.mxu0 0
  %74 = vmatprep.subr.bf16.mxu0 0
  %75 = vmatpush1.bf16.msra.mxu0 0
  %76 = vmatprep.subr.bf16.mxu0 0
  %77 = vmatpush1.bf16.msra.mxu0 0
  %78 = vmatprep.subr.bf16.mxu0 0
  %79 = vmatpush1.bf16.msra.mxu0 0
  %80 = vmatprep.subr.bf16.mxu0 0
  %81 = vmatpush1.bf16.msra.mxu0 0
  %82 = vmatprep.subr.bf16.mxu0 0
  %83 = vmatpush1.bf16.msra.mxu0 0
  %84 = vmatprep.subr.bf16.mxu0 0
  %85 = vmatpush1.bf16.msra.mxu0 0
  %86 = vmatprep.subr.bf16.mxu0 0
  %87 = vmatpush1.bf16.msra.mxu0 0
  %88 = vmatprep.subr.bf16.mxu0 0
  %89 = vmatpush1.bf16.msra.mxu0 0
  %90 = vmatprep.subr.bf16.mxu0 0
  %91 = vmatpush1.bf16.msra.mxu0 0
  %92 = vmatprep.subr.bf16.mxu0 0
  %93 = vmatpush1.bf16.msra.mxu0 0
  %94 = vmatprep.mubr.bf16.mxu0 0
  %95 = vmatmul.mubr.bf16.gmra.mrb[0].mxu0 %v60
  %v96 = vpop.f32.mrb[0].mxu0
  %v97 = vadd.f32 %v28, %v96
  %v98 = vpop.f32.mrb[0].mxu0
  %v99 = vpop.f32.mrb[0].mxu0
  %v100 = vadd.f32 %v33, %v99
  %v101 = vpop.f32.mrb[0].mxu0
  %102 = vdwg.mxu0
  %vm103 = vcmp.ge.f32.partialorder %v97, 0.0
  %vm104 = vcmp.ge.f32.partialorder %v100, 0.0
  %v105 = vmul.f32 %v97, 0.01
  %v106 = vmul.f32 %v100, 0.01
  %v107 = vsel %vm103, %v97, %v105
  %v108 = vsel %vm104, %v100, %v106
  %109 = vst [vmem:[%s3] sm:$0xff] %v107
  %110 = vst [vmem:[%s3 + $0x8] sm:$0xf] %v108
  // Predicated region
  $region14: #{forward.43} parent=0 // pred_check
    _
  $region15: #{forward.43} parent=0 // pred_check_branch
    %112 = sbr.rel (0) target = $region17
  $region16: #{forward.43} parent=0 // pred_region
    _
  $region17: #{forward.43} parent=0 // pred_fallthru
    _
  // Predicated region
  $region18: #{forward.43} parent=0 // pred_check
    _
  $region19: #{forward.43} parent=0 // pred_check_branch
    %114 = sbr.rel (0) target = $region21
  $region20: #{forward.43} parent=0 // pred_region
    _
  $region21: #{forward.43} parent=0 // pred_fallthru
    _

// kernel: forward.45
$region0: #{forward.45}
  #allocation0 [shape = 'u32[]', space=smem, size = 0x4, offset = 0x4, fixed_abs, tag = 'smem constant byte address 0x4 - core index']
  #allocation1 [shape = 'u32[144,128]{1,0:T(1,128)}', space=vmem, size = 0x12000, scoped, tag = 'internal scratch']
  %s0 = inlined_call_operand.vmem [shape: bf16[32,128], index: 0, kind: input, shape index: {}]
  %s1 = inlined_call_operand.vmem [shape: bf16[12,32], index: 1, kind: input, shape index: {}]
  %s2 = inlined_call_operand.vmem [shape: f32[12,1], index: 2, kind: input, shape index: {}]
  %s3 = inlined_call_operand.vmem [shape: f32[12,128], index: 3, kind: output, shape index: {}]
  %s4 = sld [smem:[#allocation0]]
  $region22: #{forward.45} parent=0
    _
  %s6 = ssub.s32 1, %s4
  %s7 = scalar_select 0, %s6, %s4
  // Predicated region
  $region2: #{forward.45} parent=0 // pred_check
    _
  $region3: #{forward.45} parent=0 // pred_check_branch
    %9 = sbr.rel (0) target = $region5
  $region4: #{forward.45} parent=0 // pred_region
    _
  $region5: #{forward.45} parent=0 // pred_fallthru
    _
  // Predicated region
  $region6: #{forward.45} parent=0 // pred_check
    _
  $region7: #{forward.45} parent=0 // pred_check_branch
    %11 = sbr.rel (0) target = $region9
  $region8: #{forward.45} parent=0 // pred_region
    _
  $region9: #{forward.45} parent=0 // pred_fallthru
    _
  // Predicated region
  $region10: #{forward.45} parent=0 // pred_check
    _
  $region11: #{forward.45} parent=0 // pred_check_branch
    %13 = sbr.rel (0) target = $region13
  $region12: #{forward.45} parent=0 // pred_region
    _
  $region13: #{forward.45} parent=0 // pred_fallthru
    _
  %v15 = vld [vmem:[%s1] sm:$0xf]
  %v16 = vld [vmem:[%s1 + $0x4] sm:$0x3]
  %v17 = vld [vmem:[%s0] sm:$0xf]
  %v18 = vld [vmem:[%s0 + $0x4] sm:$0xf]
  %v19 = vld [vmem:[%s0 + $0x8] sm:$0xf]
  %v20 = vld [vmem:[%s0 + $0xc] sm:$0xf]
  %v21 = vld [vmem:[%s2] sm:$0xff]
  %v22 = vld [vmem:[%s2 + $0x8] sm:$0xf]
  %24 = vset.pattern.permute.xlu0 0
  %25 = vperm.xlu0 %24, %v21
  %v26 = vpop.permute.xlu0 %25
  %29 = vset.pattern.permute.xlu0 0
  %30 = vperm.xlu0 %29, %v22
  %v31 = vpop.permute.xlu0 %30
  %v35 = vunpack.c.l.b16 %v15
  %v36 = vunpack.c.l.b16 %v16
  %v37 = vpack.c.b16 %v36, %v35
  %v42 = vunpack.c.l.b16 %v17
  %v43 = vunpack.c.l.b16 %v18
  %v44 = vunpack.c.l.b16 %v19
  %v45 = vunpack.c.l.b16 %v20
  %v46 = vpack.c.b16 %v43, %v42
  %v47 = vpack.c.b16 %v45, %v44
  %vm50 = vcmask 261120
  %v52 = vsel %vm50, %v37, 0
  %54 = vmatprep.subr.bf16.mxu0 0
  %55 = vmatpush1.bf16.msra.mxu0 %v46
  %56 = vmatprep.subr.bf16.mxu0 0
  %57 = vmatpush1.bf16.msra.mxu0 %v47
  %58 = vmatprep.subr.bf16.mxu0 0
  %59 = vmatpush1.bf16.msra.mxu0 0
  %60 = vmatprep.subr.bf16.mxu0 0
  %61 = vmatpush1.bf16.msra.mxu0 0
  %62 = vmatprep.subr.bf16.mxu0 0
  %63 = vmatpush1.bf16.msra.mxu0 0
  %64 = vmatprep.subr.bf16.mxu0 0
  %65 = vmatpush1.bf16.msra.mxu0 0
  %66 = vmatprep.subr.bf16.mxu0 0
  %67 = vmatpush1.bf16.msra.mxu0 0
  %68 = vmatprep.subr.bf16.mxu0 0
  %69 = vmatpush1.bf16.msra.mxu0 0
  %70 = vmatprep.subr.bf16.mxu0 0
  %71 = vmatpush1.bf16.msra.mxu0 0
  %72 = vmatprep.subr.bf16.mxu0 0
  %73 = vmatpush1.bf16.msra.mxu0 0
  %74 = vmatprep.subr.bf16.mxu0 0
  %75 = vmatpush1.bf16.msra.mxu0 0
  %76 = vmatprep.subr.bf16.mxu0 0
  %77 = vmatpush1.bf16.msra.mxu0 0
  %78 = vmatprep.subr.bf16.mxu0 0
  %79 = vmatpush1.bf16.msra.mxu0 0
  %80 = vmatprep.subr.bf16.mxu0 0
  %81 = vmatpush1.bf16.msra.mxu0 0
  %82 = vmatprep.subr.bf16.mxu0 0
  %83 = vmatpush1.bf16.msra.mxu0 0
  %84 = vmatprep.subr.bf16.mxu0 0
  %85 = vmatpush1.bf16.msra.mxu0 0
  %86 = vmatprep.mubr.bf16.mxu0 0
  %87 = vmatmul.mubr.bf16.gmra.mrb[0].mxu0 %v52
  %v88 = vpop.f32.mrb[0].mxu0
  %v89 = vadd.f32 %v26, %v88
  %v90 = vpop.f32.mrb[0].mxu0
  %v91 = vpop.f32.mrb[0].mxu0
  %v92 = vadd.f32 %v31, %v91
  %v93 = vpop.f32.mrb[0].mxu0
  %94 = vdwg.mxu0
  %vm95 = vcmp.ge.f32.partialorder %v89, 0.0
  %vm96 = vcmp.ge.f32.partialorder %v92, 0.0
  %v97 = vmul.f32 %v89, 0.01
  %v98 = vmul.f32 %v92, 0.01
  %v99 = vsel %vm95, %v89, %v97
  %v100 = vsel %vm96, %v92, %v98
  %101 = vst [vmem:[%s3] sm:$0xff] %v99
  %102 = vst [vmem:[%s3 + $0x8] sm:$0xf] %v100
  // Predicated region
  $region14: #{forward.45} parent=0 // pred_check
    _
  $region15: #{forward.45} parent=0 // pred_check_branch
    %104 = sbr.rel (0) target = $region17
  $region16: #{forward.45} parent=0 // pred_region
    _
  $region17: #{forward.45} parent=0 // pred_fallthru
    _
  // Predicated region
  $region18: #{forward.45} parent=0 // pred_check
    _
  $region19: #{forward.45} parent=0 // pred_check_branch
    %106 = sbr.rel (0) target = $region21
  $region20: #{forward.45} parent=0 // pred_region
    _
  $region21: #{forward.45} parent=0 // pred_fallthru
    _

// kernel: forward.46
$region0: #{forward.46}
  #allocation0 [shape = 'u32[]', space=smem, size = 0x4, offset = 0x4, fixed_abs, tag = 'smem constant byte address 0x4 - core index']
  #allocation1 [shape = 'u32[144,128]{1,0:T(1,128)}', space=vmem, size = 0x12000, scoped, tag = 'internal scratch']
  %s0 = inlined_call_operand.vmem [shape: bf16[112,128], index: 0, kind: input, shape index: {}]
  %s1 = inlined_call_operand.vmem [shape: bf16[18,112], index: 1, kind: input, shape index: {}]
  %s2 = inlined_call_operand.vmem [shape: f32[18,1], index: 2, kind: input, shape index: {}]
  %s3 = inlined_call_operand.vmem [shape: f32[18,128], index: 3, kind: output, shape index: {}]
  %s4 = sld [smem:[#allocation0]]
  $region22: #{forward.46} parent=0
    _
  %s6 = ssub.s32 1, %s4
  %s7 = scalar_select 0, %s6, %s4
  // Predicated region
  $region2: #{forward.46} parent=0 // pred_check
    _
  $region3: #{forward.46} parent=0 // pred_check_branch
    %9 = sbr.rel (0) target = $region5
  $region4: #{forward.46} parent=0 // pred_region
    _
  $region5: #{forward.46} parent=0 // pred_fallthru
    _
  // Predicated region
  $region6: #{forward.46} parent=0 // pred_check
    _
  $region7: #{forward.46} parent=0 // pred_check_branch
    %11 = sbr.rel (0) target = $region9
  $region8: #{forward.46} parent=0 // pred_region
    _
  $region9: #{forward.46} parent=0 // pred_fallthru
    _
  // Predicated region
  $region10: #{forward.46} parent=0 // pred_check
    _
  $region11: #{forward.46} parent=0 // pred_check_branch
    %13 = sbr.rel (0) target = $region13
  $region12: #{forward.46} parent=0 // pred_region
    _
  $region13: #{forward.46} parent=0 // pred_fallthru
    _
  %v15 = vld [vmem:[%s1] sm:$0xf]
  %v16 = vld [vmem:[%s1 + $0x4] sm:$0xf]
  %v17 = vld [vmem:[%s1 + $0x8] sm:$0x1]
  %v18 = vld [vmem:[%s0] sm:$0xf]
  %v19 = vld [vmem:[%s0 + $0x4] sm:$0xf]
  %v20 = vld [vmem:[%s0 + $0x8] sm:$0xf]
  %v21 = vld [vmem:[%s0 + $0xc] sm:$0xf]
  %v22 = vld [vmem:[%s0 + $0x10] sm:$0xf]
  %v23 = vld [vmem:[%s0 + $0x14] sm:$0xf]
  %v24 = vld [vmem:[%s0 + $0x18] sm:$0xf]
  %v25 = vld [vmem:[%s0 + $0x1c] sm:$0xf]
  %v26 = vld [vmem:[%s0 + $0x20] sm:$0xf]
  %v27 = vld [vmem:[%s0 + $0x24] sm:$0xf]
  %v28 = vld [vmem:[%s0 + $0x28] sm:$0xf]
  %v29 = vld [vmem:[%s0 + $0x2c] sm:$0xf]
  %v30 = vld [vmem:[%s0 + $0x30] sm:$0xf]
  %v31 = vld [vmem:[%s0 + $0x34] sm:$0xf]
  %v32 = vld [vmem:[%s2] sm:$0xff]
  %v33 = vld [vmem:[%s2 + $0x8] sm:$0xff]
  %v34 = vld [vmem:[%s2 + $0x10] sm:$0x3]
  %36 = vset.pattern.permute.xlu0 0
  %37 = vperm.xlu0 %36, %v32
  %v38 = vpop.permute.xlu0 %37
  %41 = vset.pattern.permute.xlu0 0
  %42 = vperm.xlu0 %41, %v33
  %v43 = vpop.permute.xlu0 %42
  %46 = vset.pattern.permute.xlu0 0
  %47 = vperm.xlu0 %46, %v34
  %v48 = vpop.permute.xlu0 %47
  %v53 = vunpack.c.l.b16 %v15
  %v54 = vunpack.c.l.b16 %v16
  %v55 = vunpack.c.l.b16 %v17
  %v56 = vpack.c.b16 %v54, %v53
  %v57 = vpack.c.b16 %v55, %v55
  %v72 = vunpack.c.l.b16 %v18
  %v73 = vunpack.c.l.b16 %v19
  %v74 = vunpack.c.l.b16 %v20
  %v75 = vunpack.c.l.b16 %v21
  %v76 = vunpack.c.l.b16 %v22
  %v77 = vunpack.c.l.b16 %v23
  %v78 = vunpack.c.l.b16 %v24
  %v79 = vunpack.c.l.b16 %v25
  %v80 = vunpack.c.l.b16 %v26
  %v81 = vunpack.c.l.b16 %v27
  %v82 = vunpack.c.l.b16 %v28
  %v83 = vunpack.c.l.b16 %v29
  %v84 = vunpack.c.l.b16 %v30
  %v85 = vunpack.c.l.b16 %v31
  %v86 = vpack.c.b16 %v73, %v72
  %v87 = vpack.c.b16 %v75, %v74
  %v88 = vpack.c.b16 %v77, %v76
  %v89 = vpack.c.b16 %v79, %v78
  %v90 = vpack.c.b16 %v81, %v80
  %v91 = vpack.c.b16 %v83, %v82
  %v92 = vpack.c.b16 %v85, %v84
  %vm100 = vcmask 916480
  %v102 = vsel %vm100, %v56, 0
  %v105 = vsel %vm100, %v57, 0
  %107 = vmatprep.subr.bf16.mxu0 0
  %108 = vmatpush1.bf16.msra.mxu0 %v86
  %109 = vmatprep.subr.bf16.mxu0 0
  %110 = vmatpush1.bf16.msra.mxu0 %v87
  %111 = vmatprep.subr.bf16.mxu0 0
  %112 = vmatpush1.bf16.msra.mxu0 %v88
  %113 = vmatprep.subr.bf16.mxu0 0
  %114 = vmatpush1.bf16.msra.mxu0 %v89
  %115 = vmatprep.subr.bf16.mxu0 0
  %116 = vmatpush1.bf16.msra.mxu0 %v90
  %117 = vmatprep.subr.bf16.mxu0 0
  %118 = vmatpush1.bf16.msra.mxu0 %v91
  %119 = vmatprep.subr.bf16.mxu0 0
  %120 = vmatpush1.bf16.msra.mxu0 %v92
  %121 = vmatprep.subr.bf16.mxu0 0
  %122 = vmatpush1.bf16.msra.mxu0 0
  %123 = vmatprep.subr.bf16.mxu0 0
  %124 = vmatpush1.bf16.msra.mxu0 0
  %125 = vmatprep.subr.bf16.mxu0 0
  %126 = vmatpush1.bf16.msra.mxu0 0
  %127 = vmatprep.subr.bf16.mxu0 0
  %128 = vmatpush1.bf16.msra.mxu0 0
  %129 = vmatprep.subr.bf16.mxu0 0
  %130 = vmatpush1.bf16.msra.mxu0 0
  %131 = vmatprep.subr.bf16.mxu0 0
  %132 = vmatpush1.bf16.msra.mxu0 0
  %133 = vmatprep.subr.bf16.mxu0 0
  %134 = vmatpush1.bf16.msra.mxu0 0
  %135 = vmatprep.subr.bf16.mxu0 0
  %136 = vmatpush1.bf16.msra.mxu0 0
  %137 = vmatprep.subr.bf16.mxu0 0
  %138 = vmatpush1.bf16.msra.mxu0 0
  %139 = vmatprep.mubr.bf16.mxu0 0
  %140 = vmatmul.mubr.bf16.gmra.mrb[0].mxu0 %v102
  %v141 = vpop.f32.mrb[0].mxu0
  %v142 = vadd.f32 %v38, %v141
  %v143 = vpop.f32.mrb[0].mxu0
  %v144 = vpop.f32.mrb[0].mxu0
  %v145 = vadd.f32 %v43, %v144
  %v146 = vpop.f32.mrb[0].mxu0
  %147 = vmatprep.mubr.bf16.mxu0 0
  %148 = vmatmul.mubr.bf16.gmra.mrb[0].mxu0 %v105
  %v149 = vpop.f32.mrb[0].mxu0
  %v150 = vadd.f32 %v48, %v149
  %v151 = vpop.f32.mrb[0].mxu0
  %v152 = vpop.f32.mrb[0].mxu0
  %v153 = vpop.f32.mrb[0].mxu0
  %154 = vdwg.mxu0
  %vm155 = vcmp.ge.f32.partialorder %v142, 0.0
  %vm156 = vcmp.ge.f32.partialorder %v145, 0.0
  %vm157 = vcmp.ge.f32.partialorder %v150, 0.0
  %v158 = vmul.f32 %v142, 0.01
  %v159 = vmul.f32 %v145, 0.01
  %v160 = vmul.f32 %v150, 0.01
  %v161 = vsel %vm155, %v142, %v158
  %v162 = vsel %vm156, %v145, %v159
  %v163 = vsel %vm157, %v150, %v160
  %164 = vst [vmem:[%s3] sm:$0xff] %v161
  %165 = vst [vmem:[%s3 + $0x8] sm:$0xff] %v162
  %166 = vst [vmem:[%s3 + $0x10] sm:$0x3] %v163
  // Predicated region
  $region14: #{forward.46} parent=0 // pred_check
    _
  $region15: #{forward.46} parent=0 // pred_check_branch
    %168 = sbr.rel (0) target = $region17
  $region16: #{forward.46} parent=0 // pred_region
    _
  $region17: #{forward.46} parent=0 // pred_fallthru
    _
  // Predicated region
  $region18: #{forward.46} parent=0 // pred_check
    _
  $region19: #{forward.46} parent=0 // pred_check_branch
    %170 = sbr.rel (0) target = $region21
  $region20: #{forward.46} parent=0 // pred_region
    _
  $region21: #{forward.46} parent=0 // pred_fallthru
    _

// kernel: forward.47
$region0: #{forward.47}
  #allocation0 [shape = 'u32[]', space=smem, size = 0x4, offset = 0x4, fixed_abs, tag = 'smem constant byte address 0x4 - core index']
  #allocation1 [shape = 'u32[144,128]{1,0:T(1,128)}', space=vmem, size = 0x12000, scoped, tag = 'internal scratch']
  %s0 = inlined_call_operand.vmem [shape: bf16[80,128], index: 0, kind: input, shape index: {}]
  %s1 = inlined_call_operand.vmem [shape: bf16[18,80], index: 1, kind: input, shape index: {}]
  %s2 = inlined_call_operand.vmem [shape: f32[18,1], index: 2, kind: input, shape index: {}]
  %s3 = inlined_call_operand.vmem [shape: f32[18,128], index: 3, kind: output, shape index: {}]
  %s4 = sld [smem:[#allocation0]]
  $region22: #{forward.47} parent=0
    _
  %s6 = ssub.s32 1, %s4
  %s7 = scalar_select 0, %s6, %s4
  // Predicated region
  $region2: #{forward.47} parent=0 // pred_check
    _
  $region3: #{forward.47} parent=0 // pred_check_branch
    %9 = sbr.rel (0) target = $region5
  $region4: #{forward.47} parent=0 // pred_region
    _
  $region5: #{forward.47} parent=0 // pred_fallthru
    _
  // Predicated region
  $region6: #{forward.47} parent=0 // pred_check
    _
  $region7: #{forward.47} parent=0 // pred_check_branch
    %11 = sbr.rel (0) target = $region9
  $region8: #{forward.47} parent=0 // pred_region
    _
  $region9: #{forward.47} parent=0 // pred_fallthru
    _
  // Predicated region
  $region10: #{forward.47} parent=0 // pred_check
    _
  $region11: #{forward.47} parent=0 // pred_check_branch
    %13 = sbr.rel (0) target = $region13
  $region12: #{forward.47} parent=0 // pred_region
    _
  $region13: #{forward.47} parent=0 // pred_fallthru
    _
  %v15 = vld [vmem:[%s1] sm:$0xf]
  %v16 = vld [vmem:[%s1 + $0x4] sm:$0xf]
  %v17 = vld [vmem:[%s1 + $0x8] sm:$0x1]
  %v18 = vld [vmem:[%s0] sm:$0xf]
  %v19 = vld [vmem:[%s0 + $0x4] sm:$0xf]
  %v20 = vld [vmem:[%s0 + $0x8] sm:$0xf]
  %v21 = vld [vmem:[%s0 + $0xc] sm:$0xf]
  %v22 = vld [vmem:[%s0 + $0x10] sm:$0xf]
  %v23 = vld [vmem:[%s0 + $0x14] sm:$0xf]
  %v24 = vld [vmem:[%s0 + $0x18] sm:$0xf]
  %v25 = vld [vmem:[%s0 + $0x1c] sm:$0xf]
  %v26 = vld [vmem:[%s0 + $0x20] sm:$0xf]
  %v27 = vld [vmem:[%s0 + $0x24] sm:$0xf]
  %v28 = vld [vmem:[%s2] sm:$0xff]
  %v29 = vld [vmem:[%s2 + $0x8] sm:$0xff]
  %v30 = vld [vmem:[%s2 + $0x10] sm:$0x3]
  %32 = vset.pattern.permute.xlu0 0
  %33 = vperm.xlu0 %32, %v28
  %v34 = vpop.permute.xlu0 %33
  %37 = vset.pattern.permute.xlu0 0
  %38 = vperm.xlu0 %37, %v29
  %v39 = vpop.permute.xlu0 %38
  %42 = vset.pattern.permute.xlu0 0
  %43 = vperm.xlu0 %42, %v30
  %v44 = vpop.permute.xlu0 %43
  %v49 = vunpack.c.l.b16 %v15
  %v50 = vunpack.c.l.b16 %v16
  %v51 = vunpack.c.l.b16 %v17
  %v52 = vpack.c.b16 %v50, %v49
  %v53 = vpack.c.b16 %v51, %v51
  %v64 = vunpack.c.l.b16 %v18
  %v65 = vunpack.c.l.b16 %v19
  %v66 = vunpack.c.l.b16 %v20
  %v67 = vunpack.c.l.b16 %v21
  %v68 = vunpack.c.l.b16 %v22
  %v69 = vunpack.c.l.b16 %v23
  %v70 = vunpack.c.l.b16 %v24
  %v71 = vunpack.c.l.b16 %v25
  %v72 = vunpack.c.l.b16 %v26
  %v73 = vunpack.c.l.b16 %v27
  %v74 = vpack.c.b16 %v65, %v64
  %v75 = vpack.c.b16 %v67, %v66
  %v76 = vpack.c.b16 %v69, %v68
  %v77 = vpack.c.b16 %v71, %v70
  %v78 = vpack.c.b16 %v73, %v72
  %vm84 = vcmask 654336
  %v86 = vsel %vm84, %v52, 0
  %v89 = vsel %vm84, %v53, 0
  %91 = vmatprep.subr.bf16.mxu0 0
  %92 = vmatpush1.bf16.msra.mxu0 %v74
  %93 = vmatprep.subr.bf16.mxu0 0
  %94 = vmatpush1.bf16.msra.mxu0 %v75
  %95 = vmatprep.subr.bf16.mxu0 0
  %96 = vmatpush1.bf16.msra.mxu0 %v76
  %97 = vmatprep.subr.bf16.mxu0 0
  %98 = vmatpush1.bf16.msra.mxu0 %v77
  %99 = vmatprep.subr.bf16.mxu0 0
  %100 = vmatpush1.bf16.msra.mxu0 %v78
  %101 = vmatprep.subr.bf16.mxu0 0
  %102 = vmatpush1.bf16.msra.mxu0 0
  %103 = vmatprep.subr.bf16.mxu0 0
  %104 = vmatpush1.bf16.msra.mxu0 0
  %105 = vmatprep.subr.bf16.mxu0 0
  %106 = vmatpush1.bf16.msra.mxu0 0
  %107 = vmatprep.subr.bf16.mxu0 0
  %108 = vmatpush1.bf16.msra.mxu0 0
  %109 = vmatprep.subr.bf16.mxu0 0
  %110 = vmatpush1.bf16.msra.mxu0 0
  %111 = vmatprep.subr.bf16.mxu0 0
  %112 = vmatpush1.bf16.msra.mxu0 0
  %113 = vmatprep.subr.bf16.mxu0 0
  %114 = vmatpush1.bf16.msra.mxu0 0
  %115 = vmatprep.subr.bf16.mxu0 0
  %116 = vmatpush1.bf16.msra.mxu0 0
  %117 = vmatprep.subr.bf16.mxu0 0
  %118 = vmatpush1.bf16.msra.mxu0 0
  %119 = vmatprep.subr.bf16.mxu0 0
  %120 = vmatpush1.bf16.msra.mxu0 0
  %121 = vmatprep.subr.bf16.mxu0 0
  %122 = vmatpush1.bf16.msra.mxu0 0
  %123 = vmatprep.mubr.bf16.mxu0 0
  %124 = vmatmul.mubr.bf16.gmra.mrb[0].mxu0 %v86
  %v125 = vpop.f32.mrb[0].mxu0
  %v126 = vadd.f32 %v34, %v125
  %v127 = vpop.f32.mrb[0].mxu0
  %v128 = vpop.f32.mrb[0].mxu0
  %v129 = vadd.f32 %v39, %v128
  %v130 = vpop.f32.mrb[0].mxu0
  %131 = vmatprep.mubr.bf16.mxu0 0
  %132 = vmatmul.mubr.bf16.gmra.mrb[0].mxu0 %v89
  %v133 = vpop.f32.mrb[0].mxu0
  %v134 = vadd.f32 %v44, %v133
  %v135 = vpop.f32.mrb[0].mxu0
  %v136 = vpop.f32.mrb[0].mxu0
  %v137 = vpop.f32.mrb[0].mxu0
  %138 = vdwg.mxu0
  %vm139 = vcmp.ge.f32.partialorder %v126, 0.0
  %vm140 = vcmp.ge.f32.partialorder %v129, 0.0
  %vm141 = vcmp.ge.f32.partialorder %v134, 0.0
  %v142 = vmul.f32 %v126, 0.01
  %v143 = vmul.f32 %v129, 0.01
  %v144 = vmul.f32 %v134, 0.01
  %v145 = vsel %vm139, %v126, %v142
  %v146 = vsel %vm140, %v129, %v143
  %v147 = vsel %vm141, %v134, %v144
  %148 = vst [vmem:[%s3] sm:$0xff] %v145
  %149 = vst [vmem:[%s3 + $0x8] sm:$0xff] %v146
  %150 = vst [vmem:[%s3 + $0x10] sm:$0x3] %v147
  // Predicated region
  $region14: #{forward.47} parent=0 // pred_check
    _
  $region15: #{forward.47} parent=0 // pred_check_branch
    %152 = sbr.rel (0) target = $region17
  $region16: #{forward.47} parent=0 // pred_region
    _
  $region17: #{forward.47} parent=0 // pred_fallthru
    _
  // Predicated region
  $region18: #{forward.47} parent=0 // pred_check
    _
  $region19: #{forward.47} parent=0 // pred_check_branch
    %154 = sbr.rel (0) target = $region21
  $region20: #{forward.47} parent=0 // pred_region
    _
  $region21: #{forward.47} parent=0 // pred_fallthru
    _

// kernel: forward.49
$region0: #{forward.49}
  #allocation0 [shape = 'u32[]', space=smem, size = 0x4, offset = 0x4, fixed_abs, tag = 'smem constant byte address 0x4 - core index']
  #allocation1 [shape = 'u32[144,128]{1,0:T(1,128)}', space=vmem, size = 0x12000, scoped, tag = 'internal scratch']
  %s0 = inlined_call_operand.vmem [shape: bf16[48,128], index: 0, kind: input, shape index: {}]
  %s1 = inlined_call_operand.vmem [shape: bf16[18,48], index: 1, kind: input, shape index: {}]
  %s2 = inlined_call_operand.vmem [shape: f32[18,1], index: 2, kind: input, shape index: {}]
  %s3 = inlined_call_operand.vmem [shape: f32[18,128], index: 3, kind: output, shape index: {}]
  %s4 = sld [smem:[#allocation0]]
  $region22: #{forward.49} parent=0
    _
  %s6 = ssub.s32 1, %s4
  %s7 = scalar_select 0, %s6, %s4
  // Predicated region
  $region2: #{forward.49} parent=0 // pred_check
    _
  $region3: #{forward.49} parent=0 // pred_check_branch
    %9 = sbr.rel (0) target = $region5
  $region4: #{forward.49} parent=0 // pred_region
    _
  $region5: #{forward.49} parent=0 // pred_fallthru
    _
  // Predicated region
  $region6: #{forward.49} parent=0 // pred_check
    _
  $region7: #{forward.49} parent=0 // pred_check_branch
    %11 = sbr.rel (0) target = $region9
  $region8: #{forward.49} parent=0 // pred_region
    _
  $region9: #{forward.49} parent=0 // pred_fallthru
    _
  // Predicated region
  $region10: #{forward.49} parent=0 // pred_check
    _
  $region11: #{forward.49} parent=0 // pred_check_branch
    %13 = sbr.rel (0) target = $region13
  $region12: #{forward.49} parent=0 // pred_region
    _
  $region13: #{forward.49} parent=0 // pred_fallthru
    _
  %v15 = vld [vmem:[%s1] sm:$0xf]
  %v16 = vld [vmem:[%s1 + $0x4] sm:$0xf]
  %v17 = vld [vmem:[%s1 + $0x8] sm:$0x1]
  %v18 = vld [vmem:[%s0] sm:$0xf]
  %v19 = vld [vmem:[%s0 + $0x4] sm:$0xf]
  %v20 = vld [vmem:[%s0 + $0x8] sm:$0xf]
  %v21 = vld [vmem:[%s0 + $0xc] sm:$0xf]
  %v22 = vld [vmem:[%s0 + $0x10] sm:$0xf]
  %v23 = vld [vmem:[%s0 + $0x14] sm:$0xf]
  %v24 = vld [vmem:[%s2] sm:$0xff]
  %v25 = vld [vmem:[%s2 + $0x8] sm:$0xff]
  %v26 = vld [vmem:[%s2 + $0x10] sm:$0x3]
  %28 = vset.pattern.permute.xlu0 0
  %29 = vperm.xlu0 %28, %v24
  %v30 = vpop.permute.xlu0 %29
  %33 = vset.pattern.permute.xlu0 0
  %34 = vperm.xlu0 %33, %v25
  %v35 = vpop.permute.xlu0 %34
  %38 = vset.pattern.permute.xlu0 0
  %39 = vperm.xlu0 %38, %v26
  %v40 = vpop.permute.xlu0 %39
  %v45 = vunpack.c.l.b16 %v15
  %v46 = vunpack.c.l.b16 %v16
  %v47 = vunpack.c.l.b16 %v17
  %v48 = vpack.c.b16 %v46, %v45
  %v49 = vpack.c.b16 %v47, %v47
  %v56 = vunpack.c.l.b16 %v18
  %v57 = vunpack.c.l.b16 %v19
  %v58 = vunpack.c.l.b16 %v20
  %v59 = vunpack.c.l.b16 %v21
  %v60 = vunpack.c.l.b16 %v22
  %v61 = vunpack.c.l.b16 %v23
  %v62 = vpack.c.b16 %v57, %v56
  %v63 = vpack.c.b16 %v59, %v58
  %v64 = vpack.c.b16 %v61, %v60
  %vm68 = vcmask 392192
  %v70 = vsel %vm68, %v48, 0
  %v73 = vsel %vm68, %v49, 0
  %75 = vmatprep.subr.bf16.mxu0 0
  %76 = vmatpush1.bf16.msra.mxu0 %v62
  %77 = vmatprep.subr.bf16.mxu0 0
  %78 = vmatpush1.bf16.msra.mxu0 %v63
  %79 = vmatprep.subr.bf16.mxu0 0
  %80 = vmatpush1.bf16.msra.mxu0 %v64
  %81 = vmatprep.subr.bf16.mxu0 0
  %82 = vmatpush1.bf16.msra.mxu0 0
  %83 = vmatprep.subr.bf16.mxu0 0
  %84 = vmatpush1.bf16.msra.mxu0 0
  %85 = vmatprep.subr.bf16.mxu0 0
  %86 = vmatpush1.bf16.msra.mxu0 0
  %87 = vmatprep.subr.bf16.mxu0 0
  %88 = vmatpush1.bf16.msra.mxu0 0
  %89 = vmatprep.subr.bf16.mxu0 0
  %90 = vmatpush1.bf16.msra.mxu0 0
  %91 = vmatprep.subr.bf16.mxu0 0
  %92 = vmatpush1.bf16.msra.mxu0 0
  %93 = vmatprep.subr.bf16.mxu0 0
  %94 = vmatpush1.bf16.msra.mxu0 0
  %95 = vmatprep.subr.bf16.mxu0 0
  %96 = vmatpush1.bf16.msra.mxu0 0
  %97 = vmatprep.subr.bf16.mxu0 0
  %98 = vmatpush1.bf16.msra.mxu0 0
  %99 = vmatprep.subr.bf16.mxu0 0
  %100 = vmatpush1.bf16.msra.mxu0 0
  %101 = vmatprep.subr.bf16.mxu0 0
  %102 = vmatpush1.bf16.msra.mxu0 0
  %103 = vmatprep.subr.bf16.mxu0 0
  %104 = vmatpush1.bf16.msra.mxu0 0
  %105 = vmatprep.subr.bf16.mxu0 0
  %106 = vmatpush1.bf16.msra.mxu0 0
  %107 = vmatprep.mubr.bf16.mxu0 0
  %108 = vmatmul.mubr.bf16.gmra.mrb[0].mxu0 %v70
  %v109 = vpop.f32.mrb[0].mxu0
  %v110 = vadd.f32 %v30, %v109
  %v111 = vpop.f32.mrb[0].mxu0
  %v112 = vpop.f32.mrb[0].mxu0
  %v113 = vadd.f32 %v35, %v112
  %v114 = vpop.f32.mrb[0].mxu0
  %115 = vmatprep.mubr.bf16.mxu0 0
  %116 = vmatmul.mubr.bf16.gmra.mrb[0].mxu0 %v73
  %v117 = vpop.f32.mrb[0].mxu0
  %v118 = vadd.f32 %v40, %v117
  %v119 = vpop.f32.mrb[0].mxu0
  %v120 = vpop.f32.mrb[0].mxu0
  %v121 = vpop.f32.mrb[0].mxu0
  %122 = vdwg.mxu0
  %vm123 = vcmp.ge.f32.partialorder %v110, 0.0
  %vm124 = vcmp.ge.f32.partialorder %v113, 0.0
  %vm125 = vcmp.ge.f32.partialorder %v118, 0.0
  %v126 = vmul.f32 %v110, 0.01
  %v127 = vmul.f32 %v113, 0.01
  %v128 = vmul.f32 %v118, 0.01
  %v129 = vsel %vm123, %v110, %v126
  %v130 = vsel %vm124, %v113, %v127
  %v131 = vsel %vm125, %v118, %v128
  %132 = vst [vmem:[%s3] sm:$0xff] %v129
  %133 = vst [vmem:[%s3 + $0x8] sm:$0xff] %v130
  %134 = vst [vmem:[%s3 + $0x10] sm:$0x3] %v131
  // Predicated region
  $region14: #{forward.49} parent=0 // pred_check
    _
  $region15: #{forward.49} parent=0 // pred_check_branch
    %136 = sbr.rel (0) target = $region17
  $region16: #{forward.49} parent=0 // pred_region
    _
  $region17: #{forward.49} parent=0 // pred_fallthru
    _
  // Predicated region
  $region18: #{forward.49} parent=0 // pred_check
    _
  $region19: #{forward.49} parent=0 // pred_check_branch
    %138 = sbr.rel (0) target = $region21
  $region20: #{forward.49} parent=0 // pred_region
    _
  $region21: #{forward.49} parent=0 // pred_fallthru
    _

// kernel: forward.50
$region0: #{forward.50}
  #allocation0 [shape = 'u32[]', space=smem, size = 0x4, offset = 0x4, fixed_abs, tag = 'smem constant byte address 0x4 - core index']
  #allocation1 [shape = 'u32[144,128]{1,0:T(1,128)}', space=vmem, size = 0x12000, scoped, tag = 'internal scratch']
  %s0 = inlined_call_operand.vmem [shape: bf16[176,128], index: 0, kind: input, shape index: {}]
  %s1 = inlined_call_operand.vmem [shape: bf16[24,176], index: 1, kind: input, shape index: {}]
  %s2 = inlined_call_operand.vmem [shape: f32[24,1], index: 2, kind: input, shape index: {}]
  %s3 = inlined_call_operand.vmem [shape: f32[24,128], index: 3, kind: output, shape index: {}]
  %s4 = sld [smem:[#allocation0]]
  $region22: #{forward.50} parent=0
    _
  %s6 = ssub.s32 1, %s4
  %s7 = scalar_select 0, %s6, %s4
  // Predicated region
  $region2: #{forward.50} parent=0 // pred_check
    _
  $region3: #{forward.50} parent=0 // pred_check_branch
    %9 = sbr.rel (0) target = $region5
  $region4: #{forward.50} parent=0 // pred_region
    _
  $region5: #{forward.50} parent=0 // pred_fallthru
    _
  // Predicated region
  $region6: #{forward.50} parent=0 // pred_check
    _
  $region7: #{forward.50} parent=0 // pred_check_branch
    %11 = sbr.rel (0) target = $region9
  $region8: #{forward.50} parent=0 // pred_region
    _
  $region9: #{forward.50} parent=0 // pred_fallthru
    _
  // Predicated region
  $region10: #{forward.50} parent=0 // pred_check
    _
  $region11: #{forward.50} parent=0 // pred_check_branch
    %13 = sbr.rel (0) target = $region13
  $region12: #{forward.50} parent=0 // pred_region
    _
  $region13: #{forward.50} parent=0 // pred_fallthru
    _
  %v15 = vld [vmem:[%s1] sm:$0xff]
  %v16 = vld [vmem:[%s1 + $0x8] sm:$0xff]
  %v17 = vld [vmem:[%s1 + $0x10] sm:$0xff]
  %v18 = vld [vmem:[%s0] sm:$0xf]
  %v19 = vld [vmem:[%s0 + $0x4] sm:$0xf]
  %v20 = vld [vmem:[%s0 + $0x8] sm:$0xf]
  %v21 = vld [vmem:[%s0 + $0xc] sm:$0xf]
  %v22 = vld [vmem:[%s0 + $0x10] sm:$0xf]
  %v23 = vld [vmem:[%s0 + $0x14] sm:$0xf]
  %v24 = vld [vmem:[%s0 + $0x18] sm:$0xf]
  %v25 = vld [vmem:[%s0 + $0x1c] sm:$0xf]
  %v26 = vld [vmem:[%s0 + $0x20] sm:$0xf]
  %v27 = vld [vmem:[%s0 + $0x24] sm:$0xf]
  %v28 = vld [vmem:[%s0 + $0x28] sm:$0xf]
  %v29 = vld [vmem:[%s0 + $0x2c] sm:$0xf]
  %v30 = vld [vmem:[%s0 + $0x30] sm:$0xf]
  %v31 = vld [vmem:[%s0 + $0x34] sm:$0xf]
  %v32 = vld [vmem:[%s0 + $0x38] sm:$0xf]
  %v33 = vld [vmem:[%s0 + $0x3c] sm:$0xf]
  %v34 = vld [vmem:[%s0 + $0x40] sm:$0xf]
  %v35 = vld [vmem:[%s0 + $0x44] sm:$0xf]
  %v36 = vld [vmem:[%s0 + $0x48] sm:$0xf]
  %v37 = vld [vmem:[%s0 + $0x4c] sm:$0xf]
  %v38 = vld [vmem:[%s0 + $0x50] sm:$0xf]
  %v39 = vld [vmem:[%s0 + $0x54] sm:$0xf]
  %v40 = vld [vmem:[%s2] sm:$0xff]
  %v41 = vld [vmem:[%s2 + $0x8] sm:$0xff]
  %v42 = vld [vmem:[%s2 + $0x10] sm:$0xff]
  %44 = vset.pattern.permute.xlu0 0
  %45 = vperm.xlu0 %44, %v40
  %v46 = vpop.permute.xlu0 %45
  %49 = vset.pattern.permute.xlu0 0
  %50 = vperm.xlu0 %49, %v41
  %v51 = vpop.permute.xlu0 %50
  %54 = vset.pattern.permute.xlu0 0
  %55 = vperm.xlu0 %54, %v42
  %v56 = vpop.permute.xlu0 %55
  %v61 = vunpack.c.l.b16 %v15
  %v62 = vunpack.c.h.b16 %v15
  %v63 = vunpack.c.l.b16 %v16
  %v64 = vunpack.c.h.b16 %v16
  %v65 = vunpack.c.l.b16 %v17
  %v66 = vunpack.c.h.b16 %v17
  %v67 = vpack.c.b16 %v63, %v61
  %v68 = vpack.c.b16 %v64, %v62
  %v69 = vpack.c.b16 %v65, %v65
  %v70 = vpack.c.b16 %v66, %v66
  %v95 = vunpack.c.l.b16 %v18
  %v96 = vunpack.c.l.b16 %v19
  %v97 = vunpack.c.l.b16 %v20
  %v98 = vunpack.c.l.b16 %v21
  %v99 = vunpack.c.l.b16 %v22
  %v100 = vunpack.c.l.b16 %v23
  %v101 = vunpack.c.l.b16 %v24
  %v102 = vunpack.c.l.b16 %v25
  %v103 = vunpack.c.l.b16 %v26
  %v104 = vunpack.c.l.b16 %v27
  %v105 = vunpack.c.l.b16 %v28
  %v106 = vunpack.c.l.b16 %v29
  %v107 = vunpack.c.l.b16 %v30
  %v108 = vunpack.c.l.b16 %v31
  %v109 = vunpack.c.l.b16 %v32
  %v110 = vunpack.c.l.b16 %v33
  %v111 = vunpack.c.l.b16 %v34
  %v112 = vunpack.c.l.b16 %v35
  %v113 = vunpack.c.l.b16 %v36
  %v114 = vunpack.c.l.b16 %v37
  %v115 = vunpack.c.l.b16 %v38
  %v116 = vunpack.c.l.b16 %v39
  %v117 = vpack.c.b16 %v96, %v95
  %v118 = vpack.c.b16 %v98, %v97
  %v119 = vpack.c.b16 %v100, %v99
  %v120 = vpack.c.b16 %v102, %v101
  %v121 = vpack.c.b16 %v104, %v103
  %v122 = vpack.c.b16 %v106, %v105
  %v123 = vpack.c.b16 %v108, %v107
  %v124 = vpack.c.b16 %v110, %v109
  %v125 = vpack.c.b16 %v112, %v111
  %v126 = vpack.c.b16 %v114, %v113
  %v127 = vpack.c.b16 %v116, %v115
  %vm139 = vcmask 392192
  %v141 = vsel %vm139, %v68, 0
  %v144 = vsel %vm139, %v70, 0
  %146 = vmatprep.subr.bf16.mxu0 0
  %147 = vmatpush1.bf16.msra.mxu0 %v117
  %148 = vmatprep.subr.bf16.mxu0 0
  %149 = vmatpush1.bf16.msra.mxu0 %v118
  %150 = vmatprep.subr.bf16.mxu0 0
  %151 = vmatpush1.bf16.msra.mxu0 %v119
  %152 = vmatprep.subr.bf16.mxu0 0
  %153 = vmatpush1.bf16.msra.mxu0 %v120
  %154 = vmatprep.subr.bf16.mxu0 0
  %155 = vmatpush1.bf16.msra.mxu0 %v121
  %156 = vmatprep.subr.bf16.mxu0 0
  %157 = vmatpush1.bf16.msra.mxu0 %v122
  %158 = vmatprep.subr.bf16.mxu0 0
  %159 = vmatpush1.bf16.msra.mxu0 %v123
  %160 = vmatprep.subr.bf16.mxu0 0
  %161 = vmatpush1.bf16.msra.mxu0 %v124
  %162 = vmatprep.subr.bf16.mxu0 0
  %163 = vmatpush1.bf16.msra.mxu0 %v125
  %164 = vmatprep.subr.bf16.mxu0 0
  %165 = vmatpush1.bf16.msra.mxu0 %v126
  %166 = vmatprep.subr.bf16.mxu0 0
  %167 = vmatpush1.bf16.msra.mxu0 %v127
  %168 = vmatprep.subr.bf16.mxu0 0
  %169 = vmatpush1.bf16.msra.mxu0 0
  %170 = vmatprep.subr.bf16.mxu0 0
  %171 = vmatpush1.bf16.msra.mxu0 0
  %172 = vmatprep.subr.bf16.mxu0 0
  %173 = vmatpush1.bf16.msra.mxu0 0
  %174 = vmatprep.subr.bf16.mxu0 0
  %175 = vmatpush1.bf16.msra.mxu0 0
  %176 = vmatprep.subr.bf16.mxu0 0
  %177 = vmatpush1.bf16.msra.mxu0 0
  %178 = vmatprep.mubr.bf16.mxu0 %v141
  %179 = vmatmul.mubr.bf16.gmra.mrb[0].mxu0 %v67
  %v180 = vpop.f32.mrb[0].mxu0
  %v181 = vadd.f32 %v46, %v180
  %v182 = vpop.f32.mrb[0].mxu0
  %v183 = vpop.f32.mrb[0].mxu0
  %v184 = vadd.f32 %v51, %v183
  %v185 = vpop.f32.mrb[0].mxu0
  %186 = vmatprep.mubr.bf16.mxu0 %v144
  %187 = vmatmul.mubr.bf16.gmra.mrb[0].mxu0 %v69
  %v188 = vpop.f32.mrb[0].mxu0
  %v189 = vadd.f32 %v56, %v188
  %v190 = vpop.f32.mrb[0].mxu0
  %v191 = vpop.f32.mrb[0].mxu0
  %v192 = vpop.f32.mrb[0].mxu0
  %193 = vdwg.mxu0
  %194 = vst [vmem:[%s3] sm:$0xff] %v181
  %195 = vst [vmem:[%s3 + $0x8] sm:$0xff] %v184
  %196 = vst [vmem:[%s3 + $0x10] sm:$0xff] %v189
  // Predicated region
  $region14: #{forward.50} parent=0 // pred_check
    _
  $region15: #{forward.50} parent=0 // pred_check_branch
    %198 = sbr.rel (0) target = $region17
  $region16: #{forward.50} parent=0 // pred_region
    _
  $region17: #{forward.50} parent=0 // pred_fallthru
    _
  // Predicated region
  $region18: #{forward.50} parent=0 // pred_check
    _
  $region19: #{forward.50} parent=0 // pred_check_branch
    %200 = sbr.rel (0) target = $region21
  $region20: #{forward.50} parent=0 // pred_region
    _
  $region21: #{forward.50} parent=0 // pred_fallthru
    _

// kernel: forward.52
$region0: #{forward.52}
  #allocation0 [shape = 'u32[]', space=smem, size = 0x4, offset = 0x4, fixed_abs, tag = 'smem constant byte address 0x4 - core index']
  #allocation1 [shape = 'u32[144,128]{1,0:T(1,128)}', space=vmem, size = 0x12000, scoped, tag = 'internal scratch']
  %s0 = inlined_call_operand.vmem [shape: bf16[112,128], index: 0, kind: input, shape index: {}]
  %s1 = inlined_call_operand.vmem [shape: bf16[8,112], index: 1, kind: input, shape index: {}]
  %s2 = inlined_call_operand.vmem [shape: f32[8,1], index: 2, kind: input, shape index: {}]
  %s3 = inlined_call_operand.vmem [shape: f32[8,8], index: 3, kind: input, shape index: {}]
  %s4 = inlined_call_operand.vmem [shape: f32[8,1], index: 4, kind: input, shape index: {}]
  %s5 = inlined_call_operand.vmem [shape: f32[8,128], index: 5, kind: output, shape index: {}]
  %s6 = sld [smem:[#allocation0]]
  $region30: #{forward.52} parent=0
    _
  %s8 = ssub.s32 1, %s6
  %s9 = scalar_select 0, %s8, %s6
  // Predicated region
  $region2: #{forward.52} parent=0 // pred_check
    _
  $region3: #{forward.52} parent=0 // pred_check_branch
    %11 = sbr.rel (0) target = $region5
  $region4: #{forward.52} parent=0 // pred_region
    _
  $region5: #{forward.52} parent=0 // pred_fallthru
    _
  // Predicated region
  $region6: #{forward.52} parent=0 // pred_check
    _
  $region7: #{forward.52} parent=0 // pred_check_branch
    %13 = sbr.rel (0) target = $region9
  $region8: #{forward.52} parent=0 // pred_region
    _
  $region9: #{forward.52} parent=0 // pred_fallthru
    _
  // Predicated region
  $region10: #{forward.52} parent=0 // pred_check
    _
  $region11: #{forward.52} parent=0 // pred_check_branch
    %15 = sbr.rel (0) target = $region13
  $region12: #{forward.52} parent=0 // pred_region
    _
  $region13: #{forward.52} parent=0 // pred_fallthru
    _
  // Predicated region
  $region14: #{forward.52} parent=0 // pred_check
    _
  $region15: #{forward.52} parent=0 // pred_check_branch
    %17 = sbr.rel (0) target = $region17
  $region16: #{forward.52} parent=0 // pred_region
    _
  $region17: #{forward.52} parent=0 // pred_fallthru
    _
  // Predicated region
  $region18: #{forward.52} parent=0 // pred_check
    _
  $region19: #{forward.52} parent=0 // pred_check_branch
    %19 = sbr.rel (0) target = $region21
  $region20: #{forward.52} parent=0 // pred_region
    _
  $region21: #{forward.52} parent=0 // pred_fallthru
    _
  %v21 = vld [vmem:[%s1] sm:$0xf]
  %v22 = vld [vmem:[%s0] sm:$0xf]
  %v23 = vld [vmem:[%s0 + $0x4] sm:$0xf]
  %v24 = vld [vmem:[%s0 + $0x8] sm:$0xf]
  %v25 = vld [vmem:[%s0 + $0xc] sm:$0xf]
  %v26 = vld [vmem:[%s0 + $0x10] sm:$0xf]
  %v27 = vld [vmem:[%s0 + $0x14] sm:$0xf]
  %v28 = vld [vmem:[%s0 + $0x18] sm:$0xf]
  %v29 = vld [vmem:[%s0 + $0x1c] sm:$0xf]
  %v30 = vld [vmem:[%s0 + $0x20] sm:$0xf]
  %v31 = vld [vmem:[%s0 + $0x24] sm:$0xf]
  %v32 = vld [vmem:[%s0 + $0x28] sm:$0xf]
  %v33 = vld [vmem:[%s0 + $0x2c] sm:$0xf]
  %v34 = vld [vmem:[%s0 + $0x30] sm:$0xf]
  %v35 = vld [vmem:[%s0 + $0x34] sm:$0xf]
  %v36 = vld [vmem:[%s2] sm:$0xff]
  %38 = vset.pattern.permute.xlu0 0
  %39 = vperm.xlu0 %38, %v36
  %v40 = vpop.permute.xlu0 %39
  %v56 = vunpack.c.l.b16 %v22
  %v57 = vunpack.c.l.b16 %v23
  %v58 = vunpack.c.l.b16 %v24
  %v59 = vunpack.c.l.b16 %v25
  %v60 = vunpack.c.l.b16 %v26
  %v61 = vunpack.c.l.b16 %v27
  %v62 = vunpack.c.l.b16 %v28
  %v63 = vunpack.c.l.b16 %v29
  %v64 = vunpack.c.l.b16 %v30
  %v65 = vunpack.c.l.b16 %v31
  %v66 = vunpack.c.l.b16 %v32
  %v67 = vunpack.c.l.b16 %v33
  %v68 = vunpack.c.l.b16 %v34
  %v69 = vunpack.c.l.b16 %v35
  %v70 = vpack.c.b16 %v57, %v56
  %v71 = vpack.c.b16 %v59, %v58
  %v72 = vpack.c.b16 %v61, %v60
  %v73 = vpack.c.b16 %v63, %v62
  %v74 = vpack.c.b16 %v65, %v64
  %v75 = vpack.c.b16 %v67, %v66
  %v76 = vpack.c.b16 %v69, %v68
  %vm84 = vcmask 916480
  %v86 = vsel %vm84, %v21, 0
  %88 = vmatprep.subr.bf16.mxu0 0
  %89 = vmatpush1.bf16.msra.mxu0 %v70
  %90 = vmatprep.subr.bf16.mxu0 0
  %91 = vmatpush1.bf16.msra.mxu0 %v71
  %92 = vmatprep.subr.bf16.mxu0 0
  %93 = vmatpush1.bf16.msra.mxu0 %v72
  %94 = vmatprep.subr.bf16.mxu0 0
  %95 = vmatpush1.bf16.msra.mxu0 %v73
  %96 = vmatprep.subr.bf16.mxu0 0
  %97 = vmatpush1.bf16.msra.mxu0 %v74
  %98 = vmatprep.subr.bf16.mxu0 0
  %99 = vmatpush1.bf16.msra.mxu0 %v75
  %100 = vmatprep.subr.bf16.mxu0 0
  %101 = vmatpush1.bf16.msra.mxu0 %v76
  %102 = vmatprep.subr.bf16.mxu0 0
  %103 = vmatpush1.bf16.msra.mxu0 0
  %104 = vmatprep.subr.bf16.mxu0 0
  %105 = vmatpush1.bf16.msra.mxu0 0
  %106 = vmatprep.subr.bf16.mxu0 0
  %107 = vmatpush1.bf16.msra.mxu0 0
  %108 = vmatprep.subr.bf16.mxu0 0
  %109 = vmatpush1.bf16.msra.mxu0 0
  %110 = vmatprep.subr.bf16.mxu0 0
  %111 = vmatpush1.bf16.msra.mxu0 0
  %112 = vmatprep.subr.bf16.mxu0 0
  %113 = vmatpush1.bf16.msra.mxu0 0
  %114 = vmatprep.subr.bf16.mxu0 0
  %115 = vmatpush1.bf16.msra.mxu0 0
  %116 = vmatprep.subr.bf16.mxu0 0
  %117 = vmatpush1.bf16.msra.mxu0 0
  %118 = vmatprep.subr.bf16.mxu0 0
  %119 = vmatpush1.bf16.msra.mxu0 0
  %120 = vmatprep.mubr.bf16.mxu0 0
  %121 = vmatmul.mubr.bf16.gmra.mrb[0].mxu0 %v86
  %v122 = vpop.f32.mrb[0].mxu0
  %v123 = vadd.f32 %v40, %v122
  %v124 = vpop.f32.mrb[0].mxu0
  %v125 = vpop.f32.mrb[0].mxu0
  %v126 = vpop.f32.mrb[0].mxu0
  %127 = vdwg.mxu0
  %v128 = vld [vmem:[%s3] sm:$0xff]
  %v129 = vmul.f32 %v123, %v123
  %v130 = vld [vmem:[%s4] sm:$0xff]
  %132 = vset.pattern.permute.xlu0 0
  %133 = vperm.xlu0 %132, %v130
  %v134 = vpop.permute.xlu0 %133
  %vm136 = vcmask 64512
  %v138 = vsel %vm136, %v128, 0
  %140 = vmatprep.subr.mxu0 0.0
  %141 = vmatpush1.msra.mxu0 %v129
  %142 = vmatprep.subr.mxu0 0.0
  %143 = vmatpush1.msra.mxu0 0.0
  %144 = vmatprep.subr.mxu0 0.0
  %145 = vmatpush1.msra.mxu0 0.0
  %146 = vmatprep.subr.mxu0 0.0
  %147 = vmatpush1.msra.mxu0 0.0
  %148 = vmatprep.subr.mxu0 0.0
  %149 = vmatpush1.msra.mxu0 0.0
  %150 = vmatprep.subr.mxu0 0.0
  %151 = vmatpush1.msra.mxu0 0.0
  %152 = vmatprep.subr.mxu0 0.0
  %153 = vmatpush1.msra.mxu0 0.0
  %154 = vmatprep.subr.mxu0 0.0
  %155 = vmatpush1.msra.mxu0 0.0
  %156 = vmatprep.subr.mxu0 0.0
  %157 = vmatpush1.msra.mxu0 0.0
  %158 = vmatprep.subr.mxu0 0.0
  %159 = vmatpush1.msra.mxu0 0.0
  %160 = vmatprep.subr.mxu0 0.0
  %161 = vmatpush1.msra.mxu0 0.0
  %162 = vmatprep.subr.mxu0 0.0
  %163 = vmatpush1.msra.mxu0 0.0
  %164 = vmatprep.subr.mxu0 0.0
  %165 = vmatpush1.msra.mxu0 0.0
  %166 = vmatprep.subr.mxu0 0.0
  %167 = vmatpush1.msra.mxu0 0.0
  %168 = vmatprep.subr.mxu0 0.0
  %169 = vmatpush1.msra.mxu0 0.0
  %170 = vmatprep.subr.mxu0 0.0
  %171 = vmatpush1.msra.mxu0 0.0
  %172 = vmatprep.subr.mxu0 0.0
  %173 = vmatpush1.msra.mxu0 0.0
  %174 = vmatprep.subr.mxu0 0.0
  %175 = vmatpush1.msra.mxu0 0.0
  %176 = vmatprep.subr.mxu0 0.0
  %177 = vmatpush1.msra.mxu0 0.0
  %178 = vmatprep.subr.mxu0 0.0
  %179 = vmatpush1.msra.mxu0 0.0
  %180 = vmatprep.subr.mxu0 0.0
  %181 = vmatpush1.msra.mxu0 0.0
  %182 = vmatprep.subr.mxu0 0.0
  %183 = vmatpush1.msra.mxu0 0.0
  %184 = vmatprep.subr.mxu0 0.0
  %185 = vmatpush1.msra.mxu0 0.0
  %186 = vmatprep.subr.mxu0 0.0
  %187 = vmatpush1.msra.mxu0 0.0
  %188 = vmatprep.subr.mxu0 0.0
  %189 = vmatpush1.msra.mxu0 0.0
  %190 = vmatprep.subr.mxu0 0.0
  %191 = vmatpush1.msra.mxu0 0.0
  %192 = vmatprep.subr.mxu0 0.0
  %193 = vmatpush1.msra.mxu0 0.0
  %194 = vmatprep.subr.mxu0 0.0
  %195 = vmatpush1.msra.mxu0 0.0
  %196 = vmatprep.subr.mxu0 0.0
  %197 = vmatpush1.msra.mxu0 0.0
  %198 = vmatprep.subr.mxu0 0.0
  %199 = vmatpush1.msra.mxu0 0.0
  %200 = vmatprep.subr.mxu0 0.0
  %201 = vmatpush1.msra.mxu0 0.0
  %202 = vmatprep.subr.mxu0 0.0
  %203 = vmatpush1.msra.mxu0 0.0
  %204 = vmatprep.mubr.f32.mxu0 0.0
  %205 = vmatmul.mubr.f32.gmra.mrb[0].mxu0 %v138
  %v206 = vpop.f32.mrb[0].mxu0
  %v207 = vadd.f32 %v134, %v206
  %v208 = vpop.f32.mrb[0].mxu0
  %209 = vdwg.mxu0
  %v210 = vrsqrt.pop %v207
  %v211 = vmul.f32 %v207, %v210
  %vm212 = vcmp.eq.f32.partialorder %v207, inf
  %v213 = vsel %vm212, %v207, %v211
  %vm214 = vcmp.eq.f32.partialorder %v207, 0.0
  %v215 = vand.u32 %v207, 2147483648
  %v216 = vsel %vm214, %v215, %v213
  %v217 = vmul.f32 %v123, %v216
  %218 = vst [vmem:[%s5] sm:$0xff] %v217
  // Predicated region
  $region22: #{forward.52} parent=0 // pred_check
    _
  $region23: #{forward.52} parent=0 // pred_check_branch
    %220 = sbr.rel (0) target = $region25
  $region24: #{forward.52} parent=0 // pred_region
    _
  $region25: #{forward.52} parent=0 // pred_fallthru
    _
  // Predicated region
  $region26: #{forward.52} parent=0 // pred_check
    _
  $region27: #{forward.52} parent=0 // pred_check_branch
    %222 = sbr.rel (0) target = $region29
  $region28: #{forward.52} parent=0 // pred_region
    _
  $region29: #{forward.52} parent=0 // pred_fallthru
    _

// kernel: forward.51
$region0: #{forward.51}
  #allocation0 [shape = 'u32[]', space=smem, size = 0x4, offset = 0x4, fixed_abs, tag = 'smem constant byte address 0x4 - core index']
  #allocation1 [shape = 'u32[144,128]{1,0:T(1,128)}', space=vmem, size = 0x12000, scoped, tag = 'internal scratch']
  %s0 = inlined_call_operand.vmem [shape: f32[12,128], index: 0, kind: input, shape index: {}]
  %s1 = inlined_call_operand.vmem [shape: f32[12,128], index: 1, kind: input, shape index: {}]
  %s2 = inlined_call_operand.vmem [shape: f32[12,128], index: 2, kind: input, shape index: {}]
  %s3 = inlined_call_operand.vmem [shape: f32[12,128], index: 3, kind: output, shape index: {0}]
  %s4 = inlined_call_operand.vmem [shape: f32[12,128], index: 4, kind: output, shape index: {1}]
  %5 = xla_tuple %s3, %s4
  %s6 = sld [smem:[#allocation0]]
  $region30: #{forward.51} parent=0
    _
  %s8 = ssub.s32 1, %s6
  %s9 = scalar_select 0, %s8, %s6
  // Predicated region
  $region2: #{forward.51} parent=0 // pred_check
    _
  $region3: #{forward.51} parent=0 // pred_check_branch
    %11 = sbr.rel (0) target = $region5
  $region4: #{forward.51} parent=0 // pred_region
    _
  $region5: #{forward.51} parent=0 // pred_fallthru
    _
  // Predicated region
  $region6: #{forward.51} parent=0 // pred_check
    _
  $region7: #{forward.51} parent=0 // pred_check_branch
    %13 = sbr.rel (0) target = $region9
  $region8: #{forward.51} parent=0 // pred_region
    _
  $region9: #{forward.51} parent=0 // pred_fallthru
    _
  // Predicated region
  $region10: #{forward.51} parent=0 // pred_check
    _
  $region11: #{forward.51} parent=0 // pred_check_branch
    %15 = sbr.rel (0) target = $region13
  $region12: #{forward.51} parent=0 // pred_region
    _
  $region13: #{forward.51} parent=0 // pred_fallthru
    _
  %v16 = vld [vmem:[%s0] sm:$0xff]
  %v17 = vld [vmem:[%s0 + $0x8] sm:$0xf]
  %v18 = vld [vmem:[%s1] sm:$0xff]
  %v19 = vld [vmem:[%s1 + $0x8] sm:$0xf]
  %v20 = vmax.f32 %v18, 0.11
  %v21 = vmax.f32 %v19, 0.11
  %v22 = vld [vmem:[%s2] sm:$0xff]
  %v23 = vld [vmem:[%s2 + $0x8] sm:$0xf]
  %v24 = vsub.f32 %v16, %v22
  %v25 = vsub.f32 %v17, %v23
  %v26 = vround.ne.pseudo %v24
  %v27 = vround.ne.pseudo %v25
  %v28 = vadd.f32 %v26, %v22
  %v29 = vadd.f32 %v27, %v23
  %v30 = vsub.f32 %v28, %v22
  %v31 = vsub.f32 %v29, %v23
  %v32 = vand.u32 2147483647, %v30
  %v33 = vand.u32 2147483647, %v31
  %v34 = vsub.f32 0.5, %v32
  %v35 = vsub.f32 0.5, %v33
  %v36 = vrcp.pop %v20
  %v37 = vmul.f32 %v34, %v36
  %v38 = vrcp.pop %v21
  %v39 = vmul.f32 %v35, %v38
  %v40 = vmul.f32 %v37, 0.70710677
  %v41 = vmul.f32 %v39, 0.70710677
  %v42 = vand.u32 2147483647, %v40
  %v43 = vand.u32 2147483647, %v41
  %v44 = vmul.f32 %v42, 0.3275911
  %v45 = vmul.f32 %v43, 0.3275911
  %v46 = vadd.f32 %v44, 1.0
  %v47 = vadd.f32 %v45, 1.0
  %v48 = vrcp.pop %v46
  %v49 = vmul.f32 1.0, %v48
  %v50 = vrcp.pop %v47
  %v51 = vmul.f32 1.0, %v50
  %v52 = vmul.f32 %v49, 1.0614054
  %v53 = vmul.f32 %v51, 1.0614054
  %v54 = vadd.f32 %v52, -1.4531521
  %v55 = vadd.f32 %v53, -1.4531521
  %v56 = vmul.f32 %v49, %v54
  %v57 = vmul.f32 %v51, %v55
  %v58 = vadd.f32 %v56, 1.4214138
  %v59 = vadd.f32 %v57, 1.4214138
  %v60 = vmul.f32 %v49, %v58
  %v61 = vmul.f32 %v51, %v59
  %v62 = vadd.f32 %v60, -0.28449672
  %v63 = vadd.f32 %v61, -0.28449672
  %v64 = vmul.f32 %v49, %v62
  %v65 = vmul.f32 %v51, %v63
  %v66 = vadd.f32 %v64, 0.2548296
  %v67 = vadd.f32 %v65, 0.2548296
  %v68 = vmul.f32 %v49, %v66
  %v69 = vmul.f32 %v51, %v67
  %v70 = vsub.f32 0.0, %v42
  %v71 = vsub.f32 0.0, %v43
  %v72 = vmul.f32 %v70, %v42
  %v73 = vmul.f32 %v71, %v43
  %v74 = vmul.f32 %v72, 1.442695
  %v75 = vpow.pop %v74
  %v76 = vmul.f32 %v73, 1.442695
  %v77 = vpow.pop %v76
  %v78 = vmul.f32 %v68, %v75
  %v79 = vmul.f32 %v69, %v77
  %v80 = vsub.f32 1.0, %v78
  %v81 = vsub.f32 1.0, %v79
  %vm82 = vcmp.ge.f32.partialorder %v40, 0.0
  %vm83 = vcmp.ge.f32.partialorder %v41, 0.0
  %v84 = vsub.f32 0.0, %v80
  %v85 = vsub.f32 0.0, %v81
  %v86 = vsel %vm82, %v80, %v84
  %v87 = vsel %vm83, %v81, %v85
  %v88 = vadd.f32 %v86, 1.0
  %v89 = vadd.f32 %v87, 1.0
  %v90 = vmul.f32 %v88, 0.5
  %v91 = vmul.f32 %v89, 0.5
  %v92 = vsub.f32 -0.5, %v32
  %v93 = vsub.f32 -0.5, %v33
  %v94 = vmul.f32 %v92, %v36
  %v95 = vmul.f32 %v93, %v38
  %v96 = vmul.f32 %v94, 0.70710677
  %v97 = vmul.f32 %v95, 0.70710677
  %v98 = vand.u32 2147483647, %v96
  %v99 = vand.u32 2147483647, %v97
  %v100 = vmul.f32 %v98, 0.3275911
  %v101 = vmul.f32 %v99, 0.3275911
  %v102 = vadd.f32 %v100, 1.0
  %v103 = vadd.f32 %v101, 1.0
  %v104 = vrcp.pop %v102
  %v105 = vmul.f32 1.0, %v104
  %v106 = vrcp.pop %v103
  %v107 = vmul.f32 1.0, %v106
  %v108 = vmul.f32 %v105, 1.0614054
  %v109 = vmul.f32 %v107, 1.0614054
  %v110 = vadd.f32 %v108, -1.4531521
  %v111 = vadd.f32 %v109, -1.4531521
  %v112 = vmul.f32 %v105, %v110
  %v113 = vmul.f32 %v107, %v111
  %v114 = vadd.f32 %v112, 1.4214138
  %v115 = vadd.f32 %v113, 1.4214138
  %v116 = vmul.f32 %v105, %v114
  %v117 = vmul.f32 %v107, %v115
  %v118 = vadd.f32 %v116, -0.28449672
  %v119 = vadd.f32 %v117, -0.28449672
  %v120 = vmul.f32 %v105, %v118
  %v121 = vmul.f32 %v107, %v119
  %v122 = vadd.f32 %v120, 0.2548296
  %v123 = vadd.f32 %v121, 0.2548296
  %v124 = vmul.f32 %v105, %v122
  %v125 = vmul.f32 %v107, %v123
  %v126 = vsub.f32 0.0, %v98
  %v127 = vsub.f32 0.0, %v99
  %v128 = vmul.f32 %v126, %v98
  %v129 = vmul.f32 %v127, %v99
  %v130 = vmul.f32 %v128, 1.442695
  %v131 = vpow.pop %v130
  %v132 = vmul.f32 %v129, 1.442695
  %v133 = vpow.pop %v132
  %v134 = vmul.f32 %v124, %v131
  %v135 = vmul.f32 %v125, %v133
  %v136 = vsub.f32 1.0, %v134
  %v137 = vsub.f32 1.0, %v135
  %vm138 = vcmp.ge.f32.partialorder %v96, 0.0
  %vm139 = vcmp.ge.f32.partialorder %v97, 0.0
  %v140 = vsub.f32 0.0, %v136
  %v141 = vsub.f32 0.0, %v137
  %v142 = vsel %vm138, %v136, %v140
  %v143 = vsel %vm139, %v137, %v141
  %v144 = vadd.f32 %v142, 1.0
  %v145 = vadd.f32 %v143, 1.0
  %v146 = vmul.f32 %v144, 0.5
  %v147 = vmul.f32 %v145, 0.5
  %v148 = vsub.f32 %v90, %v146
  %v149 = vsub.f32 %v91, %v147
  %v150 = vmax.f32 %v148, 1e-09
  %v151 = vmax.f32 %v149, 1e-09
  %152 = vst [vmem:[%s3] sm:$0xff] %v28
  %153 = vst [vmem:[%s3 + $0x8] sm:$0xf] %v29
  %154 = vst [vmem:[%s4] sm:$0xff] %v150
  %155 = vst [vmem:[%s4 + $0x8] sm:$0xf] %v151
  // Predicated region
  $region14: #{forward.51} parent=0 // pred_check
    _
  $region15: #{forward.51} parent=0 // pred_check_branch
    %157 = sbr.rel (0) target = $region17
  $region16: #{forward.51} parent=0 // pred_region
    _
  $region17: #{forward.51} parent=0 // pred_fallthru
    _
  // Predicated region
  $region18: #{forward.51} parent=0 // pred_check
    _
  $region19: #{forward.51} parent=0 // pred_check_branch
    %159 = sbr.rel (0) target = $region21
  $region20: #{forward.51} parent=0 // pred_region
    _
  $region21: #{forward.51} parent=0 // pred_fallthru
    _
  // Predicated region
  $region22: #{forward.51} parent=0 // pred_check
    _
  $region23: #{forward.51} parent=0 // pred_check_branch
    %161 = sbr.rel (0) target = $region25
  $region24: #{forward.51} parent=0 // pred_region
    _
  $region25: #{forward.51} parent=0 // pred_fallthru
    _
  // Predicated region
  $region26: #{forward.51} parent=0 // pred_check
    _
  $region27: #{forward.51} parent=0 // pred_check_branch
    %163 = sbr.rel (0) target = $region29
  $region28: #{forward.51} parent=0 // pred_region
    _
  $region29: #{forward.51} parent=0 // pred_fallthru
    _

// kernel: forward.53
$region0: #{forward.53}
  #allocation0 [shape = 'u32[]', space=smem, size = 0x4, offset = 0x4, fixed_abs, tag = 'smem constant byte address 0x4 - core index']
  #allocation1 [shape = 'u32[144,128]{1,0:T(1,128)}', space=vmem, size = 0x12000, scoped, tag = 'internal scratch']
  %s0 = inlined_call_operand.vmem [shape: bf16[80,128], index: 0, kind: input, shape index: {}]
  %s1 = inlined_call_operand.vmem [shape: bf16[8,80], index: 1, kind: input, shape index: {}]
  %s2 = inlined_call_operand.vmem [shape: f32[8,1], index: 2, kind: input, shape index: {}]
  %s3 = inlined_call_operand.vmem [shape: f32[8,8], index: 3, kind: input, shape index: {}]
  %s4 = inlined_call_operand.vmem [shape: f32[8,1], index: 4, kind: input, shape index: {}]
  %s5 = inlined_call_operand.vmem [shape: f32[8,128], index: 5, kind: output, shape index: {}]
  %s6 = sld [smem:[#allocation0]]
  $region30: #{forward.53} parent=0
    _
  %s8 = ssub.s32 1, %s6
  %s9 = scalar_select 0, %s8, %s6
  // Predicated region
  $region2: #{forward.53} parent=0 // pred_check
    _
  $region3: #{forward.53} parent=0 // pred_check_branch
    %11 = sbr.rel (0) target = $region5
  $region4: #{forward.53} parent=0 // pred_region
    _
  $region5: #{forward.53} parent=0 // pred_fallthru
    _
  // Predicated region
  $region6: #{forward.53} parent=0 // pred_check
    _
  $region7: #{forward.53} parent=0 // pred_check_branch
    %13 = sbr.rel (0) target = $region9
  $region8: #{forward.53} parent=0 // pred_region
    _
  $region9: #{forward.53} parent=0 // pred_fallthru
    _
  // Predicated region
  $region10: #{forward.53} parent=0 // pred_check
    _
  $region11: #{forward.53} parent=0 // pred_check_branch
    %15 = sbr.rel (0) target = $region13
  $region12: #{forward.53} parent=0 // pred_region
    _
  $region13: #{forward.53} parent=0 // pred_fallthru
    _
  // Predicated region
  $region14: #{forward.53} parent=0 // pred_check
    _
  $region15: #{forward.53} parent=0 // pred_check_branch
    %17 = sbr.rel (0) target = $region17
  $region16: #{forward.53} parent=0 // pred_region
    _
  $region17: #{forward.53} parent=0 // pred_fallthru
    _
  // Predicated region
  $region18: #{forward.53} parent=0 // pred_check
    _
  $region19: #{forward.53} parent=0 // pred_check_branch
    %19 = sbr.rel (0) target = $region21
  $region20: #{forward.53} parent=0 // pred_region
    _
  $region21: #{forward.53} parent=0 // pred_fallthru
    _
  %v21 = vld [vmem:[%s1] sm:$0xf]
  %v22 = vld [vmem:[%s0] sm:$0xf]
  %v23 = vld [vmem:[%s0 + $0x4] sm:$0xf]
  %v24 = vld [vmem:[%s0 + $0x8] sm:$0xf]
  %v25 = vld [vmem:[%s0 + $0xc] sm:$0xf]
  %v26 = vld [vmem:[%s0 + $0x10] sm:$0xf]
  %v27 = vld [vmem:[%s0 + $0x14] sm:$0xf]
  %v28 = vld [vmem:[%s0 + $0x18] sm:$0xf]
  %v29 = vld [vmem:[%s0 + $0x1c] sm:$0xf]
  %v30 = vld [vmem:[%s0 + $0x20] sm:$0xf]
  %v31 = vld [vmem:[%s0 + $0x24] sm:$0xf]
  %v32 = vld [vmem:[%s2] sm:$0xff]
  %34 = vset.pattern.permute.xlu0 0
  %35 = vperm.xlu0 %34, %v32
  %v36 = vpop.permute.xlu0 %35
  %v48 = vunpack.c.l.b16 %v22
  %v49 = vunpack.c.l.b16 %v23
  %v50 = vunpack.c.l.b16 %v24
  %v51 = vunpack.c.l.b16 %v25
  %v52 = vunpack.c.l.b16 %v26
  %v53 = vunpack.c.l.b16 %v27
  %v54 = vunpack.c.l.b16 %v28
  %v55 = vunpack.c.l.b16 %v29
  %v56 = vunpack.c.l.b16 %v30
  %v57 = vunpack.c.l.b16 %v31
  %v58 = vpack.c.b16 %v49, %v48
  %v59 = vpack.c.b16 %v51, %v50
  %v60 = vpack.c.b16 %v53, %v52
  %v61 = vpack.c.b16 %v55, %v54
  %v62 = vpack.c.b16 %v57, %v56
  %vm68 = vcmask 654336
  %v70 = vsel %vm68, %v21, 0
  %72 = vmatprep.subr.bf16.mxu0 0
  %73 = vmatpush1.bf16.msra.mxu0 %v58
  %74 = vmatprep.subr.bf16.mxu0 0
  %75 = vmatpush1.bf16.msra.mxu0 %v59
  %76 = vmatprep.subr.bf16.mxu0 0
  %77 = vmatpush1.bf16.msra.mxu0 %v60
  %78 = vmatprep.subr.bf16.mxu0 0
  %79 = vmatpush1.bf16.msra.mxu0 %v61
  %80 = vmatprep.subr.bf16.mxu0 0
  %81 = vmatpush1.bf16.msra.mxu0 %v62
  %82 = vmatprep.subr.bf16.mxu0 0
  %83 = vmatpush1.bf16.msra.mxu0 0
  %84 = vmatprep.subr.bf16.mxu0 0
  %85 = vmatpush1.bf16.msra.mxu0 0
  %86 = vmatprep.subr.bf16.mxu0 0
  %87 = vmatpush1.bf16.msra.mxu0 0
  %88 = vmatprep.subr.bf16.mxu0 0
  %89 = vmatpush1.bf16.msra.mxu0 0
  %90 = vmatprep.subr.bf16.mxu0 0
  %91 = vmatpush1.bf16.msra.mxu0 0
  %92 = vmatprep.subr.bf16.mxu0 0
  %93 = vmatpush1.bf16.msra.mxu0 0
  %94 = vmatprep.subr.bf16.mxu0 0
  %95 = vmatpush1.bf16.msra.mxu0 0
  %96 = vmatprep.subr.bf16.mxu0 0
  %97 = vmatpush1.bf16.msra.mxu0 0
  %98 = vmatprep.subr.bf16.mxu0 0
  %99 = vmatpush1.bf16.msra.mxu0 0
  %100 = vmatprep.subr.bf16.mxu0 0
  %101 = vmatpush1.bf16.msra.mxu0 0
  %102 = vmatprep.subr.bf16.mxu0 0
  %103 = vmatpush1.bf16.msra.mxu0 0
  %104 = vmatprep.mubr.bf16.mxu0 0
  %105 = vmatmul.mubr.bf16.gmra.mrb[0].mxu0 %v70
  %v106 = vpop.f32.mrb[0].mxu0
  %v107 = vadd.f32 %v36, %v106
  %v108 = vpop.f32.mrb[0].mxu0
  %v109 = vpop.f32.mrb[0].mxu0
  %v110 = vpop.f32.mrb[0].mxu0
  %111 = vdwg.mxu0
  %v112 = vld [vmem:[%s3] sm:$0xff]
  %v113 = vmul.f32 %v107, %v107
  %v114 = vld [vmem:[%s4] sm:$0xff]
  %116 = vset.pattern.permute.xlu0 0
  %117 = vperm.xlu0 %116, %v114
  %v118 = vpop.permute.xlu0 %117
  %vm120 = vcmask 64512
  %v122 = vsel %vm120, %v112, 0
  %124 = vmatprep.subr.mxu0 0.0
  %125 = vmatpush1.msra.mxu0 %v113
  %126 = vmatprep.subr.mxu0 0.0
  %127 = vmatpush1.msra.mxu0 0.0
  %128 = vmatprep.subr.mxu0 0.0
  %129 = vmatpush1.msra.mxu0 0.0
  %130 = vmatprep.subr.mxu0 0.0
  %131 = vmatpush1.msra.mxu0 0.0
  %132 = vmatprep.subr.mxu0 0.0
  %133 = vmatpush1.msra.mxu0 0.0
  %134 = vmatprep.subr.mxu0 0.0
  %135 = vmatpush1.msra.mxu0 0.0
  %136 = vmatprep.subr.mxu0 0.0
  %137 = vmatpush1.msra.mxu0 0.0
  %138 = vmatprep.subr.mxu0 0.0
  %139 = vmatpush1.msra.mxu0 0.0
  %140 = vmatprep.subr.mxu0 0.0
  %141 = vmatpush1.msra.mxu0 0.0
  %142 = vmatprep.subr.mxu0 0.0
  %143 = vmatpush1.msra.mxu0 0.0
  %144 = vmatprep.subr.mxu0 0.0
  %145 = vmatpush1.msra.mxu0 0.0
  %146 = vmatprep.subr.mxu0 0.0
  %147 = vmatpush1.msra.mxu0 0.0
  %148 = vmatprep.subr.mxu0 0.0
  %149 = vmatpush1.msra.mxu0 0.0
  %150 = vmatprep.subr.mxu0 0.0
  %151 = vmatpush1.msra.mxu0 0.0
  %152 = vmatprep.subr.mxu0 0.0
  %153 = vmatpush1.msra.mxu0 0.0
  %154 = vmatprep.subr.mxu0 0.0
  %155 = vmatpush1.msra.mxu0 0.0
  %156 = vmatprep.subr.mxu0 0.0
  %157 = vmatpush1.msra.mxu0 0.0
  %158 = vmatprep.subr.mxu0 0.0
  %159 = vmatpush1.msra.mxu0 0.0
  %160 = vmatprep.subr.mxu0 0.0
  %161 = vmatpush1.msra.mxu0 0.0
  %162 = vmatprep.subr.mxu0 0.0
  %163 = vmatpush1.msra.mxu0 0.0
  %164 = vmatprep.subr.mxu0 0.0
  %165 = vmatpush1.msra.mxu0 0.0
  %166 = vmatprep.subr.mxu0 0.0
  %167 = vmatpush1.msra.mxu0 0.0
  %168 = vmatprep.subr.mxu0 0.0
  %169 = vmatpush1.msra.mxu0 0.0
  %170 = vmatprep.subr.mxu0 0.0
  %171 = vmatpush1.msra.mxu0 0.0
  %172 = vmatprep.subr.mxu0 0.0
  %173 = vmatpush1.msra.mxu0 0.0
  %174 = vmatprep.subr.mxu0 0.0
  %175 = vmatpush1.msra.mxu0 0.0
  %176 = vmatprep.subr.mxu0 0.0
  %177 = vmatpush1.msra.mxu0 0.0
  %178 = vmatprep.subr.mxu0 0.0
  %179 = vmatpush1.msra.mxu0 0.0
  %180 = vmatprep.subr.mxu0 0.0
  %181 = vmatpush1.msra.mxu0 0.0
  %182 = vmatprep.subr.mxu0 0.0
  %183 = vmatpush1.msra.mxu0 0.0
  %184 = vmatprep.subr.mxu0 0.0
  %185 = vmatpush1.msra.mxu0 0.0
  %186 = vmatprep.subr.mxu0 0.0
  %187 = vmatpush1.msra.mxu0 0.0
  %188 = vmatprep.mubr.f32.mxu0 0.0
  %189 = vmatmul.mubr.f32.gmra.mrb[0].mxu0 %v122
  %v190 = vpop.f32.mrb[0].mxu0
  %v191 = vadd.f32 %v118, %v190
  %v192 = vpop.f32.mrb[0].mxu0
  %193 = vdwg.mxu0
  %v194 = vrsqrt.pop %v191
  %v195 = vmul.f32 %v191, %v194
  %vm196 = vcmp.eq.f32.partialorder %v191, inf
  %v197 = vsel %vm196, %v191, %v195
  %vm198 = vcmp.eq.f32.partialorder %v191, 0.0
  %v199 = vand.u32 %v191, 2147483648
  %v200 = vsel %vm198, %v199, %v197
  %v201 = vmul.f32 %v107, %v200
  %202 = vst [vmem:[%s5] sm:$0xff] %v201
  // Predicated region
  $region22: #{forward.53} parent=0 // pred_check
    _
  $region23: #{forward.53} parent=0 // pred_check_branch
    %204 = sbr.rel (0) target = $region25
  $region24: #{forward.53} parent=0 // pred_region
    _
  $region25: #{forward.53} parent=0 // pred_fallthru
    _
  // Predicated region
  $region26: #{forward.53} parent=0 // pred_check
    _
  $region27: #{forward.53} parent=0 // pred_check_branch
    %206 = sbr.rel (0) target = $region29
  $region28: #{forward.53} parent=0 // pred_region
    _
  $region29: #{forward.53} parent=0 // pred_fallthru
    _

// kernel: forward.55
$region0: #{forward.55}
  #allocation0 [shape = 'u32[]', space=smem, size = 0x4, offset = 0x4, fixed_abs, tag = 'smem constant byte address 0x4 - core index']
  #allocation1 [shape = 'u32[144,128]{1,0:T(1,128)}', space=vmem, size = 0x12000, scoped, tag = 'internal scratch']
  %s0 = inlined_call_operand.vmem [shape: bf16[48,128], index: 0, kind: input, shape index: {}]
  %s1 = inlined_call_operand.vmem [shape: bf16[8,48], index: 1, kind: input, shape index: {}]
  %s2 = inlined_call_operand.vmem [shape: f32[8,1], index: 2, kind: input, shape index: {}]
  %s3 = inlined_call_operand.vmem [shape: f32[8,8], index: 3, kind: input, shape index: {}]
  %s4 = inlined_call_operand.vmem [shape: f32[8,1], index: 4, kind: input, shape index: {}]
  %s5 = inlined_call_operand.vmem [shape: f32[8,128], index: 5, kind: output, shape index: {}]
  %s6 = sld [smem:[#allocation0]]
  $region30: #{forward.55} parent=0
    _
  %s8 = ssub.s32 1, %s6
  %s9 = scalar_select 0, %s8, %s6
  // Predicated region
  $region2: #{forward.55} parent=0 // pred_check
    _
  $region3: #{forward.55} parent=0 // pred_check_branch
    %11 = sbr.rel (0) target = $region5
  $region4: #{forward.55} parent=0 // pred_region
    _
  $region5: #{forward.55} parent=0 // pred_fallthru
    _
  // Predicated region
  $region6: #{forward.55} parent=0 // pred_check
    _
  $region7: #{forward.55} parent=0 // pred_check_branch
    %13 = sbr.rel (0) target = $region9
  $region8: #{forward.55} parent=0 // pred_region
    _
  $region9: #{forward.55} parent=0 // pred_fallthru
    _
  // Predicated region
  $region10: #{forward.55} parent=0 // pred_check
    _
  $region11: #{forward.55} parent=0 // pred_check_branch
    %15 = sbr.rel (0) target = $region13
  $region12: #{forward.55} parent=0 // pred_region
    _
  $region13: #{forward.55} parent=0 // pred_fallthru
    _
  // Predicated region
  $region14: #{forward.55} parent=0 // pred_check
    _
  $region15: #{forward.55} parent=0 // pred_check_branch
    %17 = sbr.rel (0) target = $region17
  $region16: #{forward.55} parent=0 // pred_region
    _
  $region17: #{forward.55} parent=0 // pred_fallthru
    _
  // Predicated region
  $region18: #{forward.55} parent=0 // pred_check
    _
  $region19: #{forward.55} parent=0 // pred_check_branch
    %19 = sbr.rel (0) target = $region21
  $region20: #{forward.55} parent=0 // pred_region
    _
  $region21: #{forward.55} parent=0 // pred_fallthru
    _
  %v21 = vld [vmem:[%s1] sm:$0xf]
  %v22 = vld [vmem:[%s0] sm:$0xf]
  %v23 = vld [vmem:[%s0 + $0x4] sm:$0xf]
  %v24 = vld [vmem:[%s0 + $0x8] sm:$0xf]
  %v25 = vld [vmem:[%s0 + $0xc] sm:$0xf]
  %v26 = vld [vmem:[%s0 + $0x10] sm:$0xf]
  %v27 = vld [vmem:[%s0 + $0x14] sm:$0xf]
  %v28 = vld [vmem:[%s2] sm:$0xff]
  %30 = vset.pattern.permute.xlu0 0
  %31 = vperm.xlu0 %30, %v28
  %v32 = vpop.permute.xlu0 %31
  %v40 = vunpack.c.l.b16 %v22
  %v41 = vunpack.c.l.b16 %v23
  %v42 = vunpack.c.l.b16 %v24
  %v43 = vunpack.c.l.b16 %v25
  %v44 = vunpack.c.l.b16 %v26
  %v45 = vunpack.c.l.b16 %v27
  %v46 = vpack.c.b16 %v41, %v40
  %v47 = vpack.c.b16 %v43, %v42
  %v48 = vpack.c.b16 %v45, %v44
  %vm52 = vcmask 392192
  %v54 = vsel %vm52, %v21, 0
  %56 = vmatprep.subr.bf16.mxu0 0
  %57 = vmatpush1.bf16.msra.mxu0 %v46
  %58 = vmatprep.subr.bf16.mxu0 0
  %59 = vmatpush1.bf16.msra.mxu0 %v47
  %60 = vmatprep.subr.bf16.mxu0 0
  %61 = vmatpush1.bf16.msra.mxu0 %v48
  %62 = vmatprep.subr.bf16.mxu0 0
  %63 = vmatpush1.bf16.msra.mxu0 0
  %64 = vmatprep.subr.bf16.mxu0 0
  %65 = vmatpush1.bf16.msra.mxu0 0
  %66 = vmatprep.subr.bf16.mxu0 0
  %67 = vmatpush1.bf16.msra.mxu0 0
  %68 = vmatprep.subr.bf16.mxu0 0
  %69 = vmatpush1.bf16.msra.mxu0 0
  %70 = vmatprep.subr.bf16.mxu0 0
  %71 = vmatpush1.bf16.msra.mxu0 0
  %72 = vmatprep.subr.bf16.mxu0 0
  %73 = vmatpush1.bf16.msra.mxu0 0
  %74 = vmatprep.subr.bf16.mxu0 0
  %75 = vmatpush1.bf16.msra.mxu0 0
  %76 = vmatprep.subr.bf16.mxu0 0
  %77 = vmatpush1.bf16.msra.mxu0 0
  %78 = vmatprep.subr.bf16.mxu0 0
  %79 = vmatpush1.bf16.msra.mxu0 0
  %80 = vmatprep.subr.bf16.mxu0 0
  %81 = vmatpush1.bf16.msra.mxu0 0
  %82 = vmatprep.subr.bf16.mxu0 0
  %83 = vmatpush1.bf16.msra.mxu0 0
  %84 = vmatprep.subr.bf16.mxu0 0
  %85 = vmatpush1.bf16.msra.mxu0 0
  %86 = vmatprep.subr.bf16.mxu0 0
  %87 = vmatpush1.bf16.msra.mxu0 0
  %88 = vmatprep.mubr.bf16.mxu0 0
  %89 = vmatmul.mubr.bf16.gmra.mrb[0].mxu0 %v54
  %v90 = vpop.f32.mrb[0].mxu0
  %v91 = vadd.f32 %v32, %v90
  %v92 = vpop.f32.mrb[0].mxu0
  %v93 = vpop.f32.mrb[0].mxu0
  %v94 = vpop.f32.mrb[0].mxu0
  %95 = vdwg.mxu0
  %v96 = vld [vmem:[%s3] sm:$0xff]
  %v97 = vmul.f32 %v91, %v91
  %v98 = vld [vmem:[%s4] sm:$0xff]
  %100 = vset.pattern.permute.xlu0 0
  %101 = vperm.xlu0 %100, %v98
  %v102 = vpop.permute.xlu0 %101
  %vm104 = vcmask 64512
  %v106 = vsel %vm104, %v96, 0
  %108 = vmatprep.subr.mxu0 0.0
  %109 = vmatpush1.msra.mxu0 %v97
  %110 = vmatprep.subr.mxu0 0.0
  %111 = vmatpush1.msra.mxu0 0.0
  %112 = vmatprep.subr.mxu0 0.0
  %113 = vmatpush1.msra.mxu0 0.0
  %114 = vmatprep.subr.mxu0 0.0
  %115 = vmatpush1.msra.mxu0 0.0
  %116 = vmatprep.subr.mxu0 0.0
  %117 = vmatpush1.msra.mxu0 0.0
  %118 = vmatprep.subr.mxu0 0.0
  %119 = vmatpush1.msra.mxu0 0.0
  %120 = vmatprep.subr.mxu0 0.0
  %121 = vmatpush1.msra.mxu0 0.0
  %122 = vmatprep.subr.mxu0 0.0
  %123 = vmatpush1.msra.mxu0 0.0
  %124 = vmatprep.subr.mxu0 0.0
  %125 = vmatpush1.msra.mxu0 0.0
  %126 = vmatprep.subr.mxu0 0.0
  %127 = vmatpush1.msra.mxu0 0.0
  %128 = vmatprep.subr.mxu0 0.0
  %129 = vmatpush1.msra.mxu0 0.0
  %130 = vmatprep.subr.mxu0 0.0
  %131 = vmatpush1.msra.mxu0 0.0
  %132 = vmatprep.subr.mxu0 0.0
  %133 = vmatpush1.msra.mxu0 0.0
  %134 = vmatprep.subr.mxu0 0.0
  %135 = vmatpush1.msra.mxu0 0.0
  %136 = vmatprep.subr.mxu0 0.0
  %137 = vmatpush1.msra.mxu0 0.0
  %138 = vmatprep.subr.mxu0 0.0
  %139 = vmatpush1.msra.mxu0 0.0
  %140 = vmatprep.subr.mxu0 0.0
  %141 = vmatpush1.msra.mxu0 0.0
  %142 = vmatprep.subr.mxu0 0.0
  %143 = vmatpush1.msra.mxu0 0.0
  %144 = vmatprep.subr.mxu0 0.0
  %145 = vmatpush1.msra.mxu0 0.0
  %146 = vmatprep.subr.mxu0 0.0
  %147 = vmatpush1.msra.mxu0 0.0
  %148 = vmatprep.subr.mxu0 0.0
  %149 = vmatpush1.msra.mxu0 0.0
  %150 = vmatprep.subr.mxu0 0.0
  %151 = vmatpush1.msra.mxu0 0.0
  %152 = vmatprep.subr.mxu0 0.0
  %153 = vmatpush1.msra.mxu0 0.0
  %154 = vmatprep.subr.mxu0 0.0
  %155 = vmatpush1.msra.mxu0 0.0
  %156 = vmatprep.subr.mxu0 0.0
  %157 = vmatpush1.msra.mxu0 0.0
  %158 = vmatprep.subr.mxu0 0.0
  %159 = vmatpush1.msra.mxu0 0.0
  %160 = vmatprep.subr.mxu0 0.0
  %161 = vmatpush1.msra.mxu0 0.0
  %162 = vmatprep.subr.mxu0 0.0
  %163 = vmatpush1.msra.mxu0 0.0
  %164 = vmatprep.subr.mxu0 0.0
  %165 = vmatpush1.msra.mxu0 0.0
  %166 = vmatprep.subr.mxu0 0.0
  %167 = vmatpush1.msra.mxu0 0.0
  %168 = vmatprep.subr.mxu0 0.0
  %169 = vmatpush1.msra.mxu0 0.0
  %170 = vmatprep.subr.mxu0 0.0
  %171 = vmatpush1.msra.mxu0 0.0
  %172 = vmatprep.mubr.f32.mxu0 0.0
  %173 = vmatmul.mubr.f32.gmra.mrb[0].mxu0 %v106
  %v174 = vpop.f32.mrb[0].mxu0
  %v175 = vadd.f32 %v102, %v174
  %v176 = vpop.f32.mrb[0].mxu0
  %177 = vdwg.mxu0
  %v178 = vrsqrt.pop %v175
  %v179 = vmul.f32 %v175, %v178
  %vm180 = vcmp.eq.f32.partialorder %v175, inf
  %v181 = vsel %vm180, %v175, %v179
  %vm182 = vcmp.eq.f32.partialorder %v175, 0.0
  %v183 = vand.u32 %v175, 2147483648
  %v184 = vsel %vm182, %v183, %v181
  %v185 = vmul.f32 %v91, %v184
  %186 = vst [vmem:[%s5] sm:$0xff] %v185
  // Predicated region
  $region22: #{forward.55} parent=0 // pred_check
    _
  $region23: #{forward.55} parent=0 // pred_check_branch
    %188 = sbr.rel (0) target = $region25
  $region24: #{forward.55} parent=0 // pred_region
    _
  $region25: #{forward.55} parent=0 // pred_fallthru
    _
  // Predicated region
  $region26: #{forward.55} parent=0 // pred_check
    _
  $region27: #{forward.55} parent=0 // pred_check_branch
    %190 = sbr.rel (0) target = $region29
  $region28: #{forward.55} parent=0 // pred_region
    _
  $region29: #{forward.55} parent=0 // pred_fallthru
    _

// kernel: forward.59
$region0: #{forward.59}
  #allocation0 [shape = 'u32[]', space=smem, size = 0x4, offset = 0x4, fixed_abs, tag = 'smem constant byte address 0x4 - core index']
  #allocation1 [shape = 'u32[144,128]{1,0:T(1,128)}', space=vmem, size = 0x12000, scoped, tag = 'internal scratch']
  %s0 = inlined_call_operand.vmem [shape: bf16[32,128], index: 0, kind: input, shape index: {}]
  %s1 = inlined_call_operand.vmem [shape: bf16[8,32], index: 1, kind: input, shape index: {}]
  %s2 = inlined_call_operand.vmem [shape: f32[8,1], index: 2, kind: input, shape index: {}]
  %s3 = inlined_call_operand.vmem [shape: f32[8,8], index: 3, kind: input, shape index: {}]
  %s4 = inlined_call_operand.vmem [shape: f32[8,1], index: 4, kind: input, shape index: {}]
  %s5 = inlined_call_operand.vmem [shape: f32[8,128], index: 5, kind: output, shape index: {}]
  %s6 = sld [smem:[#allocation0]]
  $region30: #{forward.59} parent=0
    _
  %s8 = ssub.s32 1, %s6
  %s9 = scalar_select 0, %s8, %s6
  // Predicated region
  $region2: #{forward.59} parent=0 // pred_check
    _
  $region3: #{forward.59} parent=0 // pred_check_branch
    %11 = sbr.rel (0) target = $region5
  $region4: #{forward.59} parent=0 // pred_region
    _
  $region5: #{forward.59} parent=0 // pred_fallthru
    _
  // Predicated region
  $region6: #{forward.59} parent=0 // pred_check
    _
  $region7: #{forward.59} parent=0 // pred_check_branch
    %13 = sbr.rel (0) target = $region9
  $region8: #{forward.59} parent=0 // pred_region
    _
  $region9: #{forward.59} parent=0 // pred_fallthru
    _
  // Predicated region
  $region10: #{forward.59} parent=0 // pred_check
    _
  $region11: #{forward.59} parent=0 // pred_check_branch
    %15 = sbr.rel (0) target = $region13
  $region12: #{forward.59} parent=0 // pred_region
    _
  $region13: #{forward.59} parent=0 // pred_fallthru
    _
  // Predicated region
  $region14: #{forward.59} parent=0 // pred_check
    _
  $region15: #{forward.59} parent=0 // pred_check_branch
    %17 = sbr.rel (0) target = $region17
  $region16: #{forward.59} parent=0 // pred_region
    _
  $region17: #{forward.59} parent=0 // pred_fallthru
    _
  // Predicated region
  $region18: #{forward.59} parent=0 // pred_check
    _
  $region19: #{forward.59} parent=0 // pred_check_branch
    %19 = sbr.rel (0) target = $region21
  $region20: #{forward.59} parent=0 // pred_region
    _
  $region21: #{forward.59} parent=0 // pred_fallthru
    _
  %v21 = vld [vmem:[%s1] sm:$0xf]
  %v22 = vld [vmem:[%s0] sm:$0xf]
  %v23 = vld [vmem:[%s0 + $0x4] sm:$0xf]
  %v24 = vld [vmem:[%s0 + $0x8] sm:$0xf]
  %v25 = vld [vmem:[%s0 + $0xc] sm:$0xf]
  %v26 = vld [vmem:[%s2] sm:$0xff]
  %28 = vset.pattern.permute.xlu0 0
  %29 = vperm.xlu0 %28, %v26
  %v30 = vpop.permute.xlu0 %29
  %v36 = vunpack.c.l.b16 %v22
  %v37 = vunpack.c.l.b16 %v23
  %v38 = vunpack.c.l.b16 %v24
  %v39 = vunpack.c.l.b16 %v25
  %v40 = vpack.c.b16 %v37, %v36
  %v41 = vpack.c.b16 %v39, %v38
  %vm44 = vcmask 261120
  %v46 = vsel %vm44, %v21, 0
  %48 = vmatprep.subr.bf16.mxu0 0
  %49 = vmatpush1.bf16.msra.mxu0 %v40
  %50 = vmatprep.subr.bf16.mxu0 0
  %51 = vmatpush1.bf16.msra.mxu0 %v41
  %52 = vmatprep.subr.bf16.mxu0 0
  %53 = vmatpush1.bf16.msra.mxu0 0
  %54 = vmatprep.subr.bf16.mxu0 0
  %55 = vmatpush1.bf16.msra.mxu0 0
  %56 = vmatprep.subr.bf16.mxu0 0
  %57 = vmatpush1.bf16.msra.mxu0 0
  %58 = vmatprep.subr.bf16.mxu0 0
  %59 = vmatpush1.bf16.msra.mxu0 0
  %60 = vmatprep.subr.bf16.mxu0 0
  %61 = vmatpush1.bf16.msra.mxu0 0
  %62 = vmatprep.subr.bf16.mxu0 0
  %63 = vmatpush1.bf16.msra.mxu0 0
  %64 = vmatprep.subr.bf16.mxu0 0
  %65 = vmatpush1.bf16.msra.mxu0 0
  %66 = vmatprep.subr.bf16.mxu0 0
  %67 = vmatpush1.bf16.msra.mxu0 0
  %68 = vmatprep.subr.bf16.mxu0 0
  %69 = vmatpush1.bf16.msra.mxu0 0
  %70 = vmatprep.subr.bf16.mxu0 0
  %71 = vmatpush1.bf16.msra.mxu0 0
  %72 = vmatprep.subr.bf16.mxu0 0
  %73 = vmatpush1.bf16.msra.mxu0 0
  %74 = vmatprep.subr.bf16.mxu0 0
  %75 = vmatpush1.bf16.msra.mxu0 0
  %76 = vmatprep.subr.bf16.mxu0 0
  %77 = vmatpush1.bf16.msra.mxu0 0
  %78 = vmatprep.subr.bf16.mxu0 0
  %79 = vmatpush1.bf16.msra.mxu0 0
  %80 = vmatprep.mubr.bf16.mxu0 0
  %81 = vmatmul.mubr.bf16.gmra.mrb[0].mxu0 %v46
  %v82 = vpop.f32.mrb[0].mxu0
  %v83 = vadd.f32 %v30, %v82
  %v84 = vpop.f32.mrb[0].mxu0
  %v85 = vpop.f32.mrb[0].mxu0
  %v86 = vpop.f32.mrb[0].mxu0
  %87 = vdwg.mxu0
  %v88 = vld [vmem:[%s3] sm:$0xff]
  %v89 = vmul.f32 %v83, %v83
  %v90 = vld [vmem:[%s4] sm:$0xff]
  %92 = vset.pattern.permute.xlu0 0
  %93 = vperm.xlu0 %92, %v90
  %v94 = vpop.permute.xlu0 %93
  %vm96 = vcmask 64512
  %v98 = vsel %vm96, %v88, 0
  %100 = vmatprep.subr.mxu0 0.0
  %101 = vmatpush1.msra.mxu0 %v89
  %102 = vmatprep.subr.mxu0 0.0
  %103 = vmatpush1.msra.mxu0 0.0
  %104 = vmatprep.subr.mxu0 0.0
  %105 = vmatpush1.msra.mxu0 0.0
  %106 = vmatprep.subr.mxu0 0.0
  %107 = vmatpush1.msra.mxu0 0.0
  %108 = vmatprep.subr.mxu0 0.0
  %109 = vmatpush1.msra.mxu0 0.0
  %110 = vmatprep.subr.mxu0 0.0
  %111 = vmatpush1.msra.mxu0 0.0
  %112 = vmatprep.subr.mxu0 0.0
  %113 = vmatpush1.msra.mxu0 0.0
  %114 = vmatprep.subr.mxu0 0.0
  %115 = vmatpush1.msra.mxu0 0.0
  %116 = vmatprep.subr.mxu0 0.0
  %117 = vmatpush1.msra.mxu0 0.0
  %118 = vmatprep.subr.mxu0 0.0
  %119 = vmatpush1.msra.mxu0 0.0
  %120 = vmatprep.subr.mxu0 0.0
  %121 = vmatpush1.msra.mxu0 0.0
  %122 = vmatprep.subr.mxu0 0.0
  %123 = vmatpush1.msra.mxu0 0.0
  %124 = vmatprep.subr.mxu0 0.0
  %125 = vmatpush1.msra.mxu0 0.0
  %126 = vmatprep.subr.mxu0 0.0
  %127 = vmatpush1.msra.mxu0 0.0
  %128 = vmatprep.subr.mxu0 0.0
  %129 = vmatpush1.msra.mxu0 0.0
  %130 = vmatprep.subr.mxu0 0.0
  %131 = vmatpush1.msra.mxu0 0.0
  %132 = vmatprep.subr.mxu0 0.0
  %133 = vmatpush1.msra.mxu0 0.0
  %134 = vmatprep.subr.mxu0 0.0
  %135 = vmatpush1.msra.mxu0 0.0
  %136 = vmatprep.subr.mxu0 0.0
  %137 = vmatpush1.msra.mxu0 0.0
  %138 = vmatprep.subr.mxu0 0.0
  %139 = vmatpush1.msra.mxu0 0.0
  %140 = vmatprep.subr.mxu0 0.0
  %141 = vmatpush1.msra.mxu0 0.0
  %142 = vmatprep.subr.mxu0 0.0
  %143 = vmatpush1.msra.mxu0 0.0
  %144 = vmatprep.subr.mxu0 0.0
  %145 = vmatpush1.msra.mxu0 0.0
  %146 = vmatprep.subr.mxu0 0.0
  %147 = vmatpush1.msra.mxu0 0.0
  %148 = vmatprep.subr.mxu0 0.0
  %149 = vmatpush1.msra.mxu0 0.0
  %150 = vmatprep.subr.mxu0 0.0
  %151 = vmatpush1.msra.mxu0 0.0
  %152 = vmatprep.subr.mxu0 0.0
  %153 = vmatpush1.msra.mxu0 0.0
  %154 = vmatprep.subr.mxu0 0.0
  %155 = vmatpush1.msra.mxu0 0.0
  %156 = vmatprep.subr.mxu0 0.0
  %157 = vmatpush1.msra.mxu0 0.0
  %158 = vmatprep.subr.mxu0 0.0
  %159 = vmatpush1.msra.mxu0 0.0
  %160 = vmatprep.subr.mxu0 0.0
  %161 = vmatpush1.msra.mxu0 0.0
  %162 = vmatprep.subr.mxu0 0.0
  %163 = vmatpush1.msra.mxu0 0.0
  %164 = vmatprep.mubr.f32.mxu0 0.0
  %165 = vmatmul.mubr.f32.gmra.mrb[0].mxu0 %v98
  %v166 = vpop.f32.mrb[0].mxu0
  %v167 = vadd.f32 %v94, %v166
  %v168 = vpop.f32.mrb[0].mxu0
  %169 = vdwg.mxu0
  %v170 = vrsqrt.pop %v167
  %v171 = vmul.f32 %v167, %v170
  %vm172 = vcmp.eq.f32.partialorder %v167, inf
  %v173 = vsel %vm172, %v167, %v171
  %vm174 = vcmp.eq.f32.partialorder %v167, 0.0
  %v175 = vand.u32 %v167, 2147483648
  %v176 = vsel %vm174, %v175, %v173
  %v177 = vmul.f32 %v83, %v176
  %178 = vst [vmem:[%s5] sm:$0xff] %v177
  // Predicated region
  $region22: #{forward.59} parent=0 // pred_check
    _
  $region23: #{forward.59} parent=0 // pred_check_branch
    %180 = sbr.rel (0) target = $region25
  $region24: #{forward.59} parent=0 // pred_region
    _
  $region25: #{forward.59} parent=0 // pred_fallthru
    _
  // Predicated region
  $region26: #{forward.59} parent=0 // pred_check
    _
  $region27: #{forward.59} parent=0 // pred_check_branch
    %182 = sbr.rel (0) target = $region29
  $region28: #{forward.59} parent=0 // pred_region
    _
  $region29: #{forward.59} parent=0 // pred_fallthru
    _

// kernel: forward.60
$region0: #{forward.60}
  #allocation0 [shape = 'u32[]', space=smem, size = 0x4, offset = 0x4, fixed_abs, tag = 'smem constant byte address 0x4 - core index']
  #allocation1 [shape = 'u32[144,128]{1,0:T(1,128)}', space=vmem, size = 0x12000, scoped, tag = 'internal scratch']
  %s0 = inlined_call_operand.vmem [shape: bf16[80,512], index: 0, kind: input, shape index: {}]
  %s1 = inlined_call_operand.vmem [shape: bf16[8,80], index: 1, kind: input, shape index: {}]
  %s2 = inlined_call_operand.vmem [shape: f32[8,1], index: 2, kind: input, shape index: {}]
  %s3 = inlined_call_operand.vmem [shape: f32[8,8], index: 3, kind: input, shape index: {}]
  %s4 = inlined_call_operand.vmem [shape: f32[8,1], index: 4, kind: input, shape index: {}]
  %s5 = inlined_call_operand.vmem [shape: f32[8,512], index: 5, kind: output, shape index: {}]
  %s6 = sld [smem:[#allocation0]]
  $region30: #{forward.60} parent=0
    _
  %s8 = ssub.s32 1, %s6
  %s9 = scalar_select 0, %s8, %s6
  // Predicated region
  $region2: #{forward.60} parent=0 // pred_check
    _
  $region3: #{forward.60} parent=0 // pred_check_branch
    %11 = sbr.rel (0) target = $region5
  $region4: #{forward.60} parent=0 // pred_region
    _
  $region5: #{forward.60} parent=0 // pred_fallthru
    _
  // Predicated region
  $region6: #{forward.60} parent=0 // pred_check
    _
  $region7: #{forward.60} parent=0 // pred_check_branch
    %13 = sbr.rel (0) target = $region9
  $region8: #{forward.60} parent=0 // pred_region
    _
  $region9: #{forward.60} parent=0 // pred_fallthru
    _
  // Predicated region
  $region10: #{forward.60} parent=0 // pred_check
    _
  $region11: #{forward.60} parent=0 // pred_check_branch
    %15 = sbr.rel (0) target = $region13
  $region12: #{forward.60} parent=0 // pred_region
    _
  $region13: #{forward.60} parent=0 // pred_fallthru
    _
  // Predicated region
  $region14: #{forward.60} parent=0 // pred_check
    _
  $region15: #{forward.60} parent=0 // pred_check_branch
    %17 = sbr.rel (0) target = $region17
  $region16: #{forward.60} parent=0 // pred_region
    _
  $region17: #{forward.60} parent=0 // pred_fallthru
    _
  // Predicated region
  $region18: #{forward.60} parent=0 // pred_check
    _
  $region19: #{forward.60} parent=0 // pred_check_branch
    %19 = sbr.rel (0) target = $region21
  $region20: #{forward.60} parent=0 // pred_region
    _
  $region21: #{forward.60} parent=0 // pred_fallthru
    _
  %v21 = vld [vmem:[%s1] sm:$0xf]
  %v22 = vld [vmem:[%s0] sm:$0xff]
  %v23 = vld [vmem:[%s0 + $0x8] sm:$0xff]
  %v24 = vld [vmem:[%s0 + $0x10] sm:$0xff]
  %v25 = vld [vmem:[%s0 + $0x18] sm:$0xff]
  %v26 = vld [vmem:[%s0 + $0x20] sm:$0xff]
  %v27 = vld [vmem:[%s0 + $0x28] sm:$0xff]
  %v28 = vld [vmem:[%s0 + $0x30] sm:$0xff]
  %v29 = vld [vmem:[%s0 + $0x38] sm:$0xff]
  %v30 = vld [vmem:[%s0 + $0x40] sm:$0xff]
  %v31 = vld [vmem:[%s0 + $0x48] sm:$0xff]
  %v32 = vld [vmem:[%s0 + $0x50] sm:$0xff]
  %v33 = vld [vmem:[%s0 + $0x58] sm:$0xff]
  %v34 = vld [vmem:[%s0 + $0x60] sm:$0xff]
  %v35 = vld [vmem:[%s0 + $0x68] sm:$0xff]
  %v36 = vld [vmem:[%s0 + $0x70] sm:$0xff]
  %v37 = vld [vmem:[%s0 + $0x78] sm:$0xff]
  %v38 = vld [vmem:[%s0 + $0x80] sm:$0xff]
  %v39 = vld [vmem:[%s0 + $0x88] sm:$0xff]
  %v40 = vld [vmem:[%s0 + $0x90] sm:$0xff]
  %v41 = vld [vmem:[%s0 + $0x98] sm:$0xff]
  %v42 = vld [vmem:[%s2] sm:$0xff]
  %44 = vset.pattern.permute.xlu0 0
  %45 = vperm.xlu0 %44, %v42
  %v46 = vpop.permute.xlu0 %45
  %v68 = vunpack.c.l.b16 %v22
  %v69 = vunpack.c.h.b16 %v22
  %v70 = vunpack.c.l.b16 %v23
  %v71 = vunpack.c.h.b16 %v23
  %v72 = vunpack.c.l.b16 %v24
  %v73 = vunpack.c.h.b16 %v24
  %v74 = vunpack.c.l.b16 %v25
  %v75 = vunpack.c.h.b16 %v25
  %v76 = vunpack.c.l.b16 %v26
  %v77 = vunpack.c.h.b16 %v26
  %v78 = vunpack.c.l.b16 %v27
  %v79 = vunpack.c.h.b16 %v27
  %v80 = vunpack.c.l.b16 %v28
  %v81 = vunpack.c.h.b16 %v28
  %v82 = vunpack.c.l.b16 %v29
  %v83 = vunpack.c.h.b16 %v29
  %v84 = vunpack.c.l.b16 %v30
  %v85 = vunpack.c.h.b16 %v30
  %v86 = vunpack.c.l.b16 %v31
  %v87 = vunpack.c.h.b16 %v31
  %v88 = vunpack.c.l.b16 %v32
  %v89 = vunpack.c.h.b16 %v32
  %v90 = vunpack.c.l.b16 %v33
  %v91 = vunpack.c.h.b16 %v33
  %v92 = vunpack.c.l.b16 %v34
  %v93 = vunpack.c.h.b16 %v34
  %v94 = vunpack.c.l.b16 %v35
  %v95 = vunpack.c.h.b16 %v35
  %v96 = vunpack.c.l.b16 %v36
  %v97 = vunpack.c.h.b16 %v36
  %v98 = vunpack.c.l.b16 %v37
  %v99 = vunpack.c.h.b16 %v37
  %v100 = vunpack.c.l.b16 %v38
  %v101 = vunpack.c.h.b16 %v38
  %v102 = vunpack.c.l.b16 %v39
  %v103 = vunpack.c.h.b16 %v39
  %v104 = vunpack.c.l.b16 %v40
  %v105 = vunpack.c.h.b16 %v40
  %v106 = vunpack.c.l.b16 %v41
  %v107 = vunpack.c.h.b16 %v41
  %v108 = vpack.c.b16 %v72, %v68
  %v109 = vpack.c.b16 %v73, %v69
  %v110 = vpack.c.b16 %v74, %v70
  %v111 = vpack.c.b16 %v75, %v71
  %v112 = vpack.c.b16 %v80, %v76
  %v113 = vpack.c.b16 %v81, %v77
  %v114 = vpack.c.b16 %v82, %v78
  %v115 = vpack.c.b16 %v83, %v79
  %v116 = vpack.c.b16 %v88, %v84
  %v117 = vpack.c.b16 %v89, %v85
  %v118 = vpack.c.b16 %v90, %v86
  %v119 = vpack.c.b16 %v91, %v87
  %v120 = vpack.c.b16 %v96, %v92
  %v121 = vpack.c.b16 %v97, %v93
  %v122 = vpack.c.b16 %v98, %v94
  %v123 = vpack.c.b16 %v99, %v95
  %v124 = vpack.c.b16 %v104, %v100
  %v125 = vpack.c.b16 %v105, %v101
  %v126 = vpack.c.b16 %v106, %v102
  %v127 = vpack.c.b16 %v107, %v103
  %vm148 = vcmask 654336
  %v150 = vsel %vm148, %v21, 0
  %152 = vmatprep.subr.bf16.mxu0 %v109
  %153 = vmatpush1.bf16.msra.mxu0 %v108
  %154 = vmatprep.subr.bf16.mxu0 %v113
  %155 = vmatpush1.bf16.msra.mxu0 %v112
  %156 = vmatprep.subr.bf16.mxu0 %v117
  %157 = vmatpush1.bf16.msra.mxu0 %v116
  %158 = vmatprep.subr.bf16.mxu0 %v121
  %159 = vmatpush1.bf16.msra.mxu0 %v120
  %160 = vmatprep.subr.bf16.mxu0 %v125
  %161 = vmatpush1.bf16.msra.mxu0 %v124
  %162 = vmatprep.subr.bf16.mxu0 0
  %163 = vmatpush1.bf16.msra.mxu0 0
  %164 = vmatprep.subr.bf16.mxu0 0
  %165 = vmatpush1.bf16.msra.mxu0 0
  %166 = vmatprep.subr.bf16.mxu0 0
  %167 = vmatpush1.bf16.msra.mxu0 0
  %168 = vmatprep.subr.bf16.mxu0 0
  %169 = vmatpush1.bf16.msra.mxu0 0
  %170 = vmatprep.subr.bf16.mxu0 0
  %171 = vmatpush1.bf16.msra.mxu0 0
  %172 = vmatprep.subr.bf16.mxu0 0
  %173 = vmatpush1.bf16.msra.mxu0 0
  %174 = vmatprep.subr.bf16.mxu0 0
  %175 = vmatpush1.bf16.msra.mxu0 0
  %176 = vmatprep.subr.bf16.mxu0 0
  %177 = vmatpush1.bf16.msra.mxu0 0
  %178 = vmatprep.subr.bf16.mxu0 0
  %179 = vmatpush1.bf16.msra.mxu0 0
  %180 = vmatprep.subr.bf16.mxu0 0
  %181 = vmatpush1.bf16.msra.mxu0 0
  %182 = vmatprep.subr.bf16.mxu0 0
  %183 = vmatpush1.bf16.msra.mxu0 0
  %184 = vmatprep.mubr.bf16.mxu0 0
  %185 = vmatmul.mubr.bf16.gmra.mrb[0].mxu0 %v150
  %v186 = vpop.f32.mrb[0].mxu0
  %v187 = vadd.f32 %v46, %v186
  %v188 = vpop.f32.mrb[0].mxu0
  %v189 = vadd.f32 %v46, %v188
  %v190 = vpop.f32.mrb[0].mxu0
  %v191 = vpop.f32.mrb[0].mxu0
  %192 = vdwg.mxu0
  %193 = vmatprep.subr.bf16.mxu0 %v111
  %194 = vmatpush1.bf16.msra.mxu0 %v110
  %195 = vmatprep.subr.bf16.mxu0 %v115
  %196 = vmatpush1.bf16.msra.mxu0 %v114
  %197 = vmatprep.subr.bf16.mxu0 %v119
  %198 = vmatpush1.bf16.msra.mxu0 %v118
  %199 = vmatprep.subr.bf16.mxu0 %v123
  %200 = vmatpush1.bf16.msra.mxu0 %v122
  %201 = vmatprep.subr.bf16.mxu0 %v127
  %202 = vmatpush1.bf16.msra.mxu0 %v126
  %203 = vmatprep.subr.bf16.mxu0 0
  %204 = vmatpush1.bf16.msra.mxu0 0
  %205 = vmatprep.subr.bf16.mxu0 0
  %206 = vmatpush1.bf16.msra.mxu0 0
  %207 = vmatprep.subr.bf16.mxu0 0
  %208 = vmatpush1.bf16.msra.mxu0 0
  %209 = vmatprep.subr.bf16.mxu0 0
  %210 = vmatpush1.bf16.msra.mxu0 0
  %211 = vmatprep.subr.bf16.mxu0 0
  %212 = vmatpush1.bf16.msra.mxu0 0
  %213 = vmatprep.subr.bf16.mxu0 0
  %214 = vmatpush1.bf16.msra.mxu0 0
  %215 = vmatprep.subr.bf16.mxu0 0
  %216 = vmatpush1.bf16.msra.mxu0 0
  %217 = vmatprep.subr.bf16.mxu0 0
  %218 = vmatpush1.bf16.msra.mxu0 0
  %219 = vmatprep.subr.bf16.mxu0 0
  %220 = vmatpush1.bf16.msra.mxu0 0
  %221 = vmatprep.subr.bf16.mxu0 0
  %222 = vmatpush1.bf16.msra.mxu0 0
  %223 = vmatprep.subr.bf16.mxu0 0
  %224 = vmatpush1.bf16.msra.mxu0 0
  %225 = vmatprep.mubr.bf16.mxu0 0
  %226 = vmatmul.mubr.bf16.gmra.mrb[0].mxu0 %v150
  %v227 = vpop.f32.mrb[0].mxu0
  %v228 = vadd.f32 %v46, %v227
  %v229 = vpop.f32.mrb[0].mxu0
  %v230 = vadd.f32 %v46, %v229
  %v231 = vpop.f32.mrb[0].mxu0
  %v232 = vpop.f32.mrb[0].mxu0
  %233 = vdwg.mxu0
  %v234 = vld [vmem:[%s3] sm:$0xff]
  %v235 = vmul.f32 %v187, %v187
  %v236 = vmul.f32 %v189, %v189
  %v237 = vmul.f32 %v228, %v228
  %v238 = vmul.f32 %v230, %v230
  %v239 = vld [vmem:[%s4] sm:$0xff]
  %241 = vset.pattern.permute.xlu0 0
  %242 = vperm.xlu0 %241, %v239
  %v243 = vpop.permute.xlu0 %242
  %vm245 = vcmask 64512
  %v247 = vsel %vm245, %v234, 0
  %249 = vmatprep.subr.mxu0 %v236
  %250 = vmatpush1.msra.mxu0 %v235
  %251 = vmatprep.subr.mxu0 0.0
  %252 = vmatpush1.msra.mxu0 0.0
  %253 = vmatprep.subr.mxu0 0.0
  %254 = vmatpush1.msra.mxu0 0.0
  %255 = vmatprep.subr.mxu0 0.0
  %256 = vmatpush1.msra.mxu0 0.0
  %257 = vmatprep.subr.mxu0 0.0
  %258 = vmatpush1.msra.mxu0 0.0
  %259 = vmatprep.subr.mxu0 0.0
  %260 = vmatpush1.msra.mxu0 0.0
  %261 = vmatprep.subr.mxu0 0.0
  %262 = vmatpush1.msra.mxu0 0.0
  %263 = vmatprep.subr.mxu0 0.0
  %264 = vmatpush1.msra.mxu0 0.0
  %265 = vmatprep.subr.mxu0 0.0
  %266 = vmatpush1.msra.mxu0 0.0
  %267 = vmatprep.subr.mxu0 0.0
  %268 = vmatpush1.msra.mxu0 0.0
  %269 = vmatprep.subr.mxu0 0.0
  %270 = vmatpush1.msra.mxu0 0.0
  %271 = vmatprep.subr.mxu0 0.0
  %272 = vmatpush1.msra.mxu0 0.0
  %273 = vmatprep.subr.mxu0 0.0
  %274 = vmatpush1.msra.mxu0 0.0
  %275 = vmatprep.subr.mxu0 0.0
  %276 = vmatpush1.msra.mxu0 0.0
  %277 = vmatprep.subr.mxu0 0.0
  %278 = vmatpush1.msra.mxu0 0.0
  %279 = vmatprep.subr.mxu0 0.0
  %280 = vmatpush1.msra.mxu0 0.0
  %281 = vmatprep.subr.mxu0 0.0
  %282 = vmatpush1.msra.mxu0 0.0
  %283 = vmatprep.subr.mxu0 0.0
  %284 = vmatpush1.msra.mxu0 0.0
  %285 = vmatprep.subr.mxu0 0.0
  %286 = vmatpush1.msra.mxu0 0.0
  %287 = vmatprep.subr.mxu0 0.0
  %288 = vmatpush1.msra.mxu0 0.0
  %289 = vmatprep.subr.mxu0 0.0
  %290 = vmatpush1.msra.mxu0 0.0
  %291 = vmatprep.subr.mxu0 0.0
  %292 = vmatpush1.msra.mxu0 0.0
  %293 = vmatprep.subr.mxu0 0.0
  %294 = vmatpush1.msra.mxu0 0.0
  %295 = vmatprep.subr.mxu0 0.0
  %296 = vmatpush1.msra.mxu0 0.0
  %297 = vmatprep.subr.mxu0 0.0
  %298 = vmatpush1.msra.mxu0 0.0
  %299 = vmatprep.subr.mxu0 0.0
  %300 = vmatpush1.msra.mxu0 0.0
  %301 = vmatprep.subr.mxu0 0.0
  %302 = vmatpush1.msra.mxu0 0.0
  %303 = vmatprep.subr.mxu0 0.0
  %304 = vmatpush1.msra.mxu0 0.0
  %305 = vmatprep.subr.mxu0 0.0
  %306 = vmatpush1.msra.mxu0 0.0
  %307 = vmatprep.subr.mxu0 0.0
  %308 = vmatpush1.msra.mxu0 0.0
  %309 = vmatprep.subr.mxu0 0.0
  %310 = vmatpush1.msra.mxu0 0.0
  %311 = vmatprep.subr.mxu0 0.0
  %312 = vmatpush1.msra.mxu0 0.0
  %313 = vmatprep.mubr.f32.mxu0 0.0
  %314 = vmatmul.mubr.f32.gmra.mrb[0].mxu0 %v247
  %v315 = vpop.f32.mrb[0].mxu0
  %v316 = vadd.f32 %v243, %v315
  %v317 = vpop.f32.mrb[0].mxu0
  %v318 = vadd.f32 %v243, %v317
  %319 = vdwg.mxu0
  %320 = vmatprep.subr.mxu0 %v238
  %321 = vmatpush1.msra.mxu0 %v237
  %322 = vmatprep.subr.mxu0 0.0
  %323 = vmatpush1.msra.mxu0 0.0
  %324 = vmatprep.subr.mxu0 0.0
  %325 = vmatpush1.msra.mxu0 0.0
  %326 = vmatprep.subr.mxu0 0.0
  %327 = vmatpush1.msra.mxu0 0.0
  %328 = vmatprep.subr.mxu0 0.0
  %329 = vmatpush1.msra.mxu0 0.0
  %330 = vmatprep.subr.mxu0 0.0
  %331 = vmatpush1.msra.mxu0 0.0
  %332 = vmatprep.subr.mxu0 0.0
  %333 = vmatpush1.msra.mxu0 0.0
  %334 = vmatprep.subr.mxu0 0.0
  %335 = vmatpush1.msra.mxu0 0.0
  %336 = vmatprep.subr.mxu0 0.0
  %337 = vmatpush1.msra.mxu0 0.0
  %338 = vmatprep.subr.mxu0 0.0
  %339 = vmatpush1.msra.mxu0 0.0
  %340 = vmatprep.subr.mxu0 0.0
  %341 = vmatpush1.msra.mxu0 0.0
  %342 = vmatprep.subr.mxu0 0.0
  %343 = vmatpush1.msra.mxu0 0.0
  %344 = vmatprep.subr.mxu0 0.0
  %345 = vmatpush1.msra.mxu0 0.0
  %346 = vmatprep.subr.mxu0 0.0
  %347 = vmatpush1.msra.mxu0 0.0
  %348 = vmatprep.subr.mxu0 0.0
  %349 = vmatpush1.msra.mxu0 0.0
  %350 = vmatprep.subr.mxu0 0.0
  %351 = vmatpush1.msra.mxu0 0.0
  %352 = vmatprep.subr.mxu0 0.0
  %353 = vmatpush1.msra.mxu0 0.0
  %354 = vmatprep.subr.mxu0 0.0
  %355 = vmatpush1.msra.mxu0 0.0
  %356 = vmatprep.subr.mxu0 0.0
  %357 = vmatpush1.msra.mxu0 0.0
  %358 = vmatprep.subr.mxu0 0.0
  %359 = vmatpush1.msra.mxu0 0.0
  %360 = vmatprep.subr.mxu0 0.0
  %361 = vmatpush1.msra.mxu0 0.0
  %362 = vmatprep.subr.mxu0 0.0
  %363 = vmatpush1.msra.mxu0 0.0
  %364 = vmatprep.subr.mxu0 0.0
  %365 = vmatpush1.msra.mxu0 0.0
  %366 = vmatprep.subr.mxu0 0.0
  %367 = vmatpush1.msra.mxu0 0.0
  %368 = vmatprep.subr.mxu0 0.0
  %369 = vmatpush1.msra.mxu0 0.0
  %370 = vmatprep.subr.mxu0 0.0
  %371 = vmatpush1.msra.mxu0 0.0
  %372 = vmatprep.subr.mxu0 0.0
  %373 = vmatpush1.msra.mxu0 0.0
  %374 = vmatprep.subr.mxu0 0.0
  %375 = vmatpush1.msra.mxu0 0.0
  %376 = vmatprep.subr.mxu0 0.0
  %377 = vmatpush1.msra.mxu0 0.0
  %378 = vmatprep.subr.mxu0 0.0
  %379 = vmatpush1.msra.mxu0 0.0
  %380 = vmatprep.subr.mxu0 0.0
  %381 = vmatpush1.msra.mxu0 0.0
  %382 = vmatprep.subr.mxu0 0.0
  %383 = vmatpush1.msra.mxu0 0.0
  %384 = vmatprep.mubr.f32.mxu0 0.0
  %385 = vmatmul.mubr.f32.gmra.mrb[0].mxu0 %v247
  %v386 = vpop.f32.mrb[0].mxu0
  %v387 = vadd.f32 %v243, %v386
  %v388 = vpop.f32.mrb[0].mxu0
  %v389 = vadd.f32 %v243, %v388
  %390 = vdwg.mxu0
  %v391 = vrsqrt.pop %v316
  %v392 = vmul.f32 %v316, %v391
  %vm393 = vcmp.eq.f32.partialorder %v316, inf
  %v394 = vsel %vm393, %v316, %v392
  %vm395 = vcmp.eq.f32.partialorder %v316, 0.0
  %v396 = vand.u32 %v316, 2147483648
  %v397 = vsel %vm395, %v396, %v394
  %v398 = vrsqrt.pop %v318
  %v399 = vmul.f32 %v318, %v398
  %vm400 = vcmp.eq.f32.partialorder %v318, inf
  %v401 = vsel %vm400, %v318, %v399
  %vm402 = vcmp.eq.f32.partialorder %v318, 0.0
  %v403 = vand.u32 %v318, 2147483648
  %v404 = vsel %vm402, %v403, %v401
  %v405 = vrsqrt.pop %v387
  %v406 = vmul.f32 %v387, %v405
  %vm407 = vcmp.eq.f32.partialorder %v387, inf
  %v408 = vsel %vm407, %v387, %v406
  %vm409 = vcmp.eq.f32.partialorder %v387, 0.0
  %v410 = vand.u32 %v387, 2147483648
  %v411 = vsel %vm409, %v410, %v408
  %v412 = vrsqrt.pop %v389
  %v413 = vmul.f32 %v389, %v412
  %vm414 = vcmp.eq.f32.partialorder %v389, inf
  %v415 = vsel %vm414, %v389, %v413
  %vm416 = vcmp.eq.f32.partialorder %v389, 0.0
  %v417 = vand.u32 %v389, 2147483648
  %v418 = vsel %vm416, %v417, %v415
  %v419 = vmul.f32 %v187, %v397
  %v420 = vmul.f32 %v189, %v404
  %v421 = vmul.f32 %v228, %v411
  %v422 = vmul.f32 %v230, %v418
  %423 = vst [vmem:[%s5] sm:$0xff] %v419
  %424 = vst [vmem:[%s5 + $0x8] sm:$0xff] %v420
  %425 = vst [vmem:[%s5 + $0x10] sm:$0xff] %v421
  %426 = vst [vmem:[%s5 + $0x18] sm:$0xff] %v422
  // Predicated region
  $region22: #{forward.60} parent=0 // pred_check
    _
  $region23: #{forward.60} parent=0 // pred_check_branch
    %428 = sbr.rel (0) target = $region25
  $region24: #{forward.60} parent=0 // pred_region
    _
  $region25: #{forward.60} parent=0 // pred_fallthru
    _
  // Predicated region
  $region26: #{forward.60} parent=0 // pred_check
    _
  $region27: #{forward.60} parent=0 // pred_check_branch
    %430 = sbr.rel (0) target = $region29
  $region28: #{forward.60} parent=0 // pred_region
    _
  $region29: #{forward.60} parent=0 // pred_fallthru
    _

// kernel: forward.61
$region0: #{forward.61}
  #allocation0 [shape = 'u32[]', space=smem, size = 0x4, offset = 0x4, fixed_abs, tag = 'smem constant byte address 0x4 - core index']
  #allocation1 [shape = 'u32[144,128]{1,0:T(1,128)}', space=vmem, size = 0x12000, scoped, tag = 'internal scratch']
  %s0 = inlined_call_operand.vmem [shape: bf16[48,512], index: 0, kind: input, shape index: {}]
  %s1 = inlined_call_operand.vmem [shape: bf16[8,48], index: 1, kind: input, shape index: {}]
  %s2 = inlined_call_operand.vmem [shape: f32[8,1], index: 2, kind: input, shape index: {}]
  %s3 = inlined_call_operand.vmem [shape: f32[8,8], index: 3, kind: input, shape index: {}]
  %s4 = inlined_call_operand.vmem [shape: f32[8,1], index: 4, kind: input, shape index: {}]
  %s5 = inlined_call_operand.vmem [shape: f32[8,512], index: 5, kind: output, shape index: {}]
  %s6 = sld [smem:[#allocation0]]
  $region30: #{forward.61} parent=0
    _
  %s8 = ssub.s32 1, %s6
  %s9 = scalar_select 0, %s8, %s6
  // Predicated region
  $region2: #{forward.61} parent=0 // pred_check
    _
  $region3: #{forward.61} parent=0 // pred_check_branch
    %11 = sbr.rel (0) target = $region5
  $region4: #{forward.61} parent=0 // pred_region
    _
  $region5: #{forward.61} parent=0 // pred_fallthru
    _
  // Predicated region
  $region6: #{forward.61} parent=0 // pred_check
    _
  $region7: #{forward.61} parent=0 // pred_check_branch
    %13 = sbr.rel (0) target = $region9
  $region8: #{forward.61} parent=0 // pred_region
    _
  $region9: #{forward.61} parent=0 // pred_fallthru
    _
  // Predicated region
  $region10: #{forward.61} parent=0 // pred_check
    _
  $region11: #{forward.61} parent=0 // pred_check_branch
    %15 = sbr.rel (0) target = $region13
  $region12: #{forward.61} parent=0 // pred_region
    _
  $region13: #{forward.61} parent=0 // pred_fallthru
    _
  // Predicated region
  $region14: #{forward.61} parent=0 // pred_check
    _
  $region15: #{forward.61} parent=0 // pred_check_branch
    %17 = sbr.rel (0) target = $region17
  $region16: #{forward.61} parent=0 // pred_region
    _
  $region17: #{forward.61} parent=0 // pred_fallthru
    _
  // Predicated region
  $region18: #{forward.61} parent=0 // pred_check
    _
  $region19: #{forward.61} parent=0 // pred_check_branch
    %19 = sbr.rel (0) target = $region21
  $region20: #{forward.61} parent=0 // pred_region
    _
  $region21: #{forward.61} parent=0 // pred_fallthru
    _
  %v21 = vld [vmem:[%s1] sm:$0xf]
  %v22 = vld [vmem:[%s0] sm:$0xff]
  %v23 = vld [vmem:[%s0 + $0x8] sm:$0xff]
  %v24 = vld [vmem:[%s0 + $0x10] sm:$0xff]
  %v25 = vld [vmem:[%s0 + $0x18] sm:$0xff]
  %v26 = vld [vmem:[%s0 + $0x20] sm:$0xff]
  %v27 = vld [vmem:[%s0 + $0x28] sm:$0xff]
  %v28 = vld [vmem:[%s0 + $0x30] sm:$0xff]
  %v29 = vld [vmem:[%s0 + $0x38] sm:$0xff]
  %v30 = vld [vmem:[%s0 + $0x40] sm:$0xff]
  %v31 = vld [vmem:[%s0 + $0x48] sm:$0xff]
  %v32 = vld [vmem:[%s0 + $0x50] sm:$0xff]
  %v33 = vld [vmem:[%s0 + $0x58] sm:$0xff]
  %v34 = vld [vmem:[%s2] sm:$0xff]
  %36 = vset.pattern.permute.xlu0 0
  %37 = vperm.xlu0 %36, %v34
  %v38 = vpop.permute.xlu0 %37
  %v52 = vunpack.c.l.b16 %v22
  %v53 = vunpack.c.h.b16 %v22
  %v54 = vunpack.c.l.b16 %v23
  %v55 = vunpack.c.h.b16 %v23
  %v56 = vunpack.c.l.b16 %v24
  %v57 = vunpack.c.h.b16 %v24
  %v58 = vunpack.c.l.b16 %v25
  %v59 = vunpack.c.h.b16 %v25
  %v60 = vunpack.c.l.b16 %v26
  %v61 = vunpack.c.h.b16 %v26
  %v62 = vunpack.c.l.b16 %v27
  %v63 = vunpack.c.h.b16 %v27
  %v64 = vunpack.c.l.b16 %v28
  %v65 = vunpack.c.h.b16 %v28
  %v66 = vunpack.c.l.b16 %v29
  %v67 = vunpack.c.h.b16 %v29
  %v68 = vunpack.c.l.b16 %v30
  %v69 = vunpack.c.h.b16 %v30
  %v70 = vunpack.c.l.b16 %v31
  %v71 = vunpack.c.h.b16 %v31
  %v72 = vunpack.c.l.b16 %v32
  %v73 = vunpack.c.h.b16 %v32
  %v74 = vunpack.c.l.b16 %v33
  %v75 = vunpack.c.h.b16 %v33
  %v76 = vpack.c.b16 %v56, %v52
  %v77 = vpack.c.b16 %v57, %v53
  %v78 = vpack.c.b16 %v58, %v54
  %v79 = vpack.c.b16 %v59, %v55
  %v80 = vpack.c.b16 %v64, %v60
  %v81 = vpack.c.b16 %v65, %v61
  %v82 = vpack.c.b16 %v66, %v62
  %v83 = vpack.c.b16 %v67, %v63
  %v84 = vpack.c.b16 %v72, %v68
  %v85 = vpack.c.b16 %v73, %v69
  %v86 = vpack.c.b16 %v74, %v70
  %v87 = vpack.c.b16 %v75, %v71
  %vm100 = vcmask 392192
  %v102 = vsel %vm100, %v21, 0
  %104 = vmatprep.subr.bf16.mxu0 %v77
  %105 = vmatpush1.bf16.msra.mxu0 %v76
  %106 = vmatprep.subr.bf16.mxu0 %v81
  %107 = vmatpush1.bf16.msra.mxu0 %v80
  %108 = vmatprep.subr.bf16.mxu0 %v85
  %109 = vmatpush1.bf16.msra.mxu0 %v84
  %110 = vmatprep.subr.bf16.mxu0 0
  %111 = vmatpush1.bf16.msra.mxu0 0
  %112 = vmatprep.subr.bf16.mxu0 0
  %113 = vmatpush1.bf16.msra.mxu0 0
  %114 = vmatprep.subr.bf16.mxu0 0
  %115 = vmatpush1.bf16.msra.mxu0 0
  %116 = vmatprep.subr.bf16.mxu0 0
  %117 = vmatpush1.bf16.msra.mxu0 0
  %118 = vmatprep.subr.bf16.mxu0 0
  %119 = vmatpush1.bf16.msra.mxu0 0
  %120 = vmatprep.subr.bf16.mxu0 0
  %121 = vmatpush1.bf16.msra.mxu0 0
  %122 = vmatprep.subr.bf16.mxu0 0
  %123 = vmatpush1.bf16.msra.mxu0 0
  %124 = vmatprep.subr.bf16.mxu0 0
  %125 = vmatpush1.bf16.msra.mxu0 0
  %126 = vmatprep.subr.bf16.mxu0 0
  %127 = vmatpush1.bf16.msra.mxu0 0
  %128 = vmatprep.subr.bf16.mxu0 0
  %129 = vmatpush1.bf16.msra.mxu0 0
  %130 = vmatprep.subr.bf16.mxu0 0
  %131 = vmatpush1.bf16.msra.mxu0 0
  %132 = vmatprep.subr.bf16.mxu0 0
  %133 = vmatpush1.bf16.msra.mxu0 0
  %134 = vmatprep.subr.bf16.mxu0 0
  %135 = vmatpush1.bf16.msra.mxu0 0
  %136 = vmatprep.mubr.bf16.mxu0 0
  %137 = vmatmul.mubr.bf16.gmra.mrb[0].mxu0 %v102
  %v138 = vpop.f32.mrb[0].mxu0
  %v139 = vadd.f32 %v38, %v138
  %v140 = vpop.f32.mrb[0].mxu0
  %v141 = vadd.f32 %v38, %v140
  %v142 = vpop.f32.mrb[0].mxu0
  %v143 = vpop.f32.mrb[0].mxu0
  %144 = vdwg.mxu0
  %145 = vmatprep.subr.bf16.mxu0 %v79
  %146 = vmatpush1.bf16.msra.mxu0 %v78
  %147 = vmatprep.subr.bf16.mxu0 %v83
  %148 = vmatpush1.bf16.msra.mxu0 %v82
  %149 = vmatprep.subr.bf16.mxu0 %v87
  %150 = vmatpush1.bf16.msra.mxu0 %v86
  %151 = vmatprep.subr.bf16.mxu0 0
  %152 = vmatpush1.bf16.msra.mxu0 0
  %153 = vmatprep.subr.bf16.mxu0 0
  %154 = vmatpush1.bf16.msra.mxu0 0
  %155 = vmatprep.subr.bf16.mxu0 0
  %156 = vmatpush1.bf16.msra.mxu0 0
  %157 = vmatprep.subr.bf16.mxu0 0
  %158 = vmatpush1.bf16.msra.mxu0 0
  %159 = vmatprep.subr.bf16.mxu0 0
  %160 = vmatpush1.bf16.msra.mxu0 0
  %161 = vmatprep.subr.bf16.mxu0 0
  %162 = vmatpush1.bf16.msra.mxu0 0
  %163 = vmatprep.subr.bf16.mxu0 0
  %164 = vmatpush1.bf16.msra.mxu0 0
  %165 = vmatprep.subr.bf16.mxu0 0
  %166 = vmatpush1.bf16.msra.mxu0 0
  %167 = vmatprep.subr.bf16.mxu0 0
  %168 = vmatpush1.bf16.msra.mxu0 0
  %169 = vmatprep.subr.bf16.mxu0 0
  %170 = vmatpush1.bf16.msra.mxu0 0
  %171 = vmatprep.subr.bf16.mxu0 0
  %172 = vmatpush1.bf16.msra.mxu0 0
  %173 = vmatprep.subr.bf16.mxu0 0
  %174 = vmatpush1.bf16.msra.mxu0 0
  %175 = vmatprep.subr.bf16.mxu0 0
  %176 = vmatpush1.bf16.msra.mxu0 0
  %177 = vmatprep.mubr.bf16.mxu0 0
  %178 = vmatmul.mubr.bf16.gmra.mrb[0].mxu0 %v102
  %v179 = vpop.f32.mrb[0].mxu0
  %v180 = vadd.f32 %v38, %v179
  %v181 = vpop.f32.mrb[0].mxu0
  %v182 = vadd.f32 %v38, %v181
  %v183 = vpop.f32.mrb[0].mxu0
  %v184 = vpop.f32.mrb[0].mxu0
  %185 = vdwg.mxu0
  %v186 = vld [vmem:[%s3] sm:$0xff]
  %v187 = vmul.f32 %v139, %v139
  %v188 = vmul.f32 %v141, %v141
  %v189 = vmul.f32 %v180, %v180
  %v190 = vmul.f32 %v182, %v182
  %v191 = vld [vmem:[%s4] sm:$0xff]
  %193 = vset.pattern.permute.xlu0 0
  %194 = vperm.xlu0 %193, %v191
  %v195 = vpop.permute.xlu0 %194
  %vm197 = vcmask 64512
  %v199 = vsel %vm197, %v186, 0
  %201 = vmatprep.subr.mxu0 %v188
  %202 = vmatpush1.msra.mxu0 %v187
  %203 = vmatprep.subr.mxu0 0.0
  %204 = vmatpush1.msra.mxu0 0.0
  %205 = vmatprep.subr.mxu0 0.0
  %206 = vmatpush1.msra.mxu0 0.0
  %207 = vmatprep.subr.mxu0 0.0
  %208 = vmatpush1.msra.mxu0 0.0
  %209 = vmatprep.subr.mxu0 0.0
  %210 = vmatpush1.msra.mxu0 0.0
  %211 = vmatprep.subr.mxu0 0.0
  %212 = vmatpush1.msra.mxu0 0.0
  %213 = vmatprep.subr.mxu0 0.0
  %214 = vmatpush1.msra.mxu0 0.0
  %215 = vmatprep.subr.mxu0 0.0
  %216 = vmatpush1.msra.mxu0 0.0
  %217 = vmatprep.subr.mxu0 0.0
  %218 = vmatpush1.msra.mxu0 0.0
  %219 = vmatprep.subr.mxu0 0.0
  %220 = vmatpush1.msra.mxu0 0.0
  %221 = vmatprep.subr.mxu0 0.0
  %222 = vmatpush1.msra.mxu0 0.0
  %223 = vmatprep.subr.mxu0 0.0
  %224 = vmatpush1.msra.mxu0 0.0
  %225 = vmatprep.subr.mxu0 0.0
  %226 = vmatpush1.msra.mxu0 0.0
  %227 = vmatprep.subr.mxu0 0.0
  %228 = vmatpush1.msra.mxu0 0.0
  %229 = vmatprep.subr.mxu0 0.0
  %230 = vmatpush1.msra.mxu0 0.0
  %231 = vmatprep.subr.mxu0 0.0
  %232 = vmatpush1.msra.mxu0 0.0
  %233 = vmatprep.subr.mxu0 0.0
  %234 = vmatpush1.msra.mxu0 0.0
  %235 = vmatprep.subr.mxu0 0.0
  %236 = vmatpush1.msra.mxu0 0.0
  %237 = vmatprep.subr.mxu0 0.0
  %238 = vmatpush1.msra.mxu0 0.0
  %239 = vmatprep.subr.mxu0 0.0
  %240 = vmatpush1.msra.mxu0 0.0
  %241 = vmatprep.subr.mxu0 0.0
  %242 = vmatpush1.msra.mxu0 0.0
  %243 = vmatprep.subr.mxu0 0.0
  %244 = vmatpush1.msra.mxu0 0.0
  %245 = vmatprep.subr.mxu0 0.0
  %246 = vmatpush1.msra.mxu0 0.0
  %247 = vmatprep.subr.mxu0 0.0
  %248 = vmatpush1.msra.mxu0 0.0
  %249 = vmatprep.subr.mxu0 0.0
  %250 = vmatpush1.msra.mxu0 0.0
  %251 = vmatprep.subr.mxu0 0.0
  %252 = vmatpush1.msra.mxu0 0.0
  %253 = vmatprep.subr.mxu0 0.0
  %254 = vmatpush1.msra.mxu0 0.0
  %255 = vmatprep.subr.mxu0 0.0
  %256 = vmatpush1.msra.mxu0 0.0
  %257 = vmatprep.subr.mxu0 0.0
  %258 = vmatpush1.msra.mxu0 0.0
  %259 = vmatprep.subr.mxu0 0.0
  %260 = vmatpush1.msra.mxu0 0.0
  %261 = vmatprep.subr.mxu0 0.0
  %262 = vmatpush1.msra.mxu0 0.0
  %263 = vmatprep.subr.mxu0 0.0
  %264 = vmatpush1.msra.mxu0 0.0
  %265 = vmatprep.mubr.f32.mxu0 0.0
  %266 = vmatmul.mubr.f32.gmra.mrb[0].mxu0 %v199
  %v267 = vpop.f32.mrb[0].mxu0
  %v268 = vadd.f32 %v195, %v267
  %v269 = vpop.f32.mrb[0].mxu0
  %v270 = vadd.f32 %v195, %v269
  %271 = vdwg.mxu0
  %272 = vmatprep.subr.mxu0 %v190
  %273 = vmatpush1.msra.mxu0 %v189
  %274 = vmatprep.subr.mxu0 0.0
  %275 = vmatpush1.msra.mxu0 0.0
  %276 = vmatprep.subr.mxu0 0.0
  %277 = vmatpush1.msra.mxu0 0.0
  %278 = vmatprep.subr.mxu0 0.0
  %279 = vmatpush1.msra.mxu0 0.0
  %280 = vmatprep.subr.mxu0 0.0
  %281 = vmatpush1.msra.mxu0 0.0
  %282 = vmatprep.subr.mxu0 0.0
  %283 = vmatpush1.msra.mxu0 0.0
  %284 = vmatprep.subr.mxu0 0.0
  %285 = vmatpush1.msra.mxu0 0.0
  %286 = vmatprep.subr.mxu0 0.0
  %287 = vmatpush1.msra.mxu0 0.0
  %288 = vmatprep.subr.mxu0 0.0
  %289 = vmatpush1.msra.mxu0 0.0
  %290 = vmatprep.subr.mxu0 0.0
  %291 = vmatpush1.msra.mxu0 0.0
  %292 = vmatprep.subr.mxu0 0.0
  %293 = vmatpush1.msra.mxu0 0.0
  %294 = vmatprep.subr.mxu0 0.0
  %295 = vmatpush1.msra.mxu0 0.0
  %296 = vmatprep.subr.mxu0 0.0
  %297 = vmatpush1.msra.mxu0 0.0
  %298 = vmatprep.subr.mxu0 0.0
  %299 = vmatpush1.msra.mxu0 0.0
  %300 = vmatprep.subr.mxu0 0.0
  %301 = vmatpush1.msra.mxu0 0.0
  %302 = vmatprep.subr.mxu0 0.0
  %303 = vmatpush1.msra.mxu0 0.0
  %304 = vmatprep.subr.mxu0 0.0
  %305 = vmatpush1.msra.mxu0 0.0
  %306 = vmatprep.subr.mxu0 0.0
  %307 = vmatpush1.msra.mxu0 0.0
  %308 = vmatprep.subr.mxu0 0.0
  %309 = vmatpush1.msra.mxu0 0.0
  %310 = vmatprep.subr.mxu0 0.0
  %311 = vmatpush1.msra.mxu0 0.0
  %312 = vmatprep.subr.mxu0 0.0
  %313 = vmatpush1.msra.mxu0 0.0
  %314 = vmatprep.subr.mxu0 0.0
  %315 = vmatpush1.msra.mxu0 0.0
  %316 = vmatprep.subr.mxu0 0.0
  %317 = vmatpush1.msra.mxu0 0.0
  %318 = vmatprep.subr.mxu0 0.0
  %319 = vmatpush1.msra.mxu0 0.0
  %320 = vmatprep.subr.mxu0 0.0
  %321 = vmatpush1.msra.mxu0 0.0
  %322 = vmatprep.subr.mxu0 0.0
  %323 = vmatpush1.msra.mxu0 0.0
  %324 = vmatprep.subr.mxu0 0.0
  %325 = vmatpush1.msra.mxu0 0.0
  %326 = vmatprep.subr.mxu0 0.0
  %327 = vmatpush1.msra.mxu0 0.0
  %328 = vmatprep.subr.mxu0 0.0
  %329 = vmatpush1.msra.mxu0 0.0
  %330 = vmatprep.subr.mxu0 0.0
  %331 = vmatpush1.msra.mxu0 0.0
  %332 = vmatprep.subr.mxu0 0.0
  %333 = vmatpush1.msra.mxu0 0.0
  %334 = vmatprep.subr.mxu0 0.0
  %335 = vmatpush1.msra.mxu0 0.0
  %336 = vmatprep.mubr.f32.mxu0 0.0
  %337 = vmatmul.mubr.f32.gmra.mrb[0].mxu0 %v199
  %v338 = vpop.f32.mrb[0].mxu0
  %v339 = vadd.f32 %v195, %v338
  %v340 = vpop.f32.mrb[0].mxu0
  %v341 = vadd.f32 %v195, %v340
  %342 = vdwg.mxu0
  %v343 = vrsqrt.pop %v268
  %v344 = vmul.f32 %v268, %v343
  %vm345 = vcmp.eq.f32.partialorder %v268, inf
  %v346 = vsel %vm345, %v268, %v344
  %vm347 = vcmp.eq.f32.partialorder %v268, 0.0
  %v348 = vand.u32 %v268, 2147483648
  %v349 = vsel %vm347, %v348, %v346
  %v350 = vrsqrt.pop %v270
  %v351 = vmul.f32 %v270, %v350
  %vm352 = vcmp.eq.f32.partialorder %v270, inf
  %v353 = vsel %vm352, %v270, %v351
  %vm354 = vcmp.eq.f32.partialorder %v270, 0.0
  %v355 = vand.u32 %v270, 2147483648
  %v356 = vsel %vm354, %v355, %v353
  %v357 = vrsqrt.pop %v339
  %v358 = vmul.f32 %v339, %v357
  %vm359 = vcmp.eq.f32.partialorder %v339, inf
  %v360 = vsel %vm359, %v339, %v358
  %vm361 = vcmp.eq.f32.partialorder %v339, 0.0
  %v362 = vand.u32 %v339, 2147483648
  %v363 = vsel %vm361, %v362, %v360
  %v364 = vrsqrt.pop %v341
  %v365 = vmul.f32 %v341, %v364
  %vm366 = vcmp.eq.f32.partialorder %v341, inf
  %v367 = vsel %vm366, %v341, %v365
  %vm368 = vcmp.eq.f32.partialorder %v341, 0.0
  %v369 = vand.u32 %v341, 2147483648
  %v370 = vsel %vm368, %v369, %v367
  %v371 = vmul.f32 %v139, %v349
  %v372 = vmul.f32 %v141, %v356
  %v373 = vmul.f32 %v180, %v363
  %v374 = vmul.f32 %v182, %v370
  %375 = vst [vmem:[%s5] sm:$0xff] %v371
  %376 = vst [vmem:[%s5 + $0x8] sm:$0xff] %v372
  %377 = vst [vmem:[%s5 + $0x10] sm:$0xff] %v373
  %378 = vst [vmem:[%s5 + $0x18] sm:$0xff] %v374
  // Predicated region
  $region22: #{forward.61} parent=0 // pred_check
    _
  $region23: #{forward.61} parent=0 // pred_check_branch
    %380 = sbr.rel (0) target = $region25
  $region24: #{forward.61} parent=0 // pred_region
    _
  $region25: #{forward.61} parent=0 // pred_fallthru
    _
  // Predicated region
  $region26: #{forward.61} parent=0 // pred_check
    _
  $region27: #{forward.61} parent=0 // pred_check_branch
    %382 = sbr.rel (0) target = $region29
  $region28: #{forward.61} parent=0 // pred_region
    _
  $region29: #{forward.61} parent=0 // pred_fallthru
    _

// kernel: forward.63
$region0: #{forward.63}
  #allocation0 [shape = 'u32[]', space=smem, size = 0x4, offset = 0x4, fixed_abs, tag = 'smem constant byte address 0x4 - core index']
  #allocation1 [shape = 'u32[144,128]{1,0:T(1,128)}', space=vmem, size = 0x12000, scoped, tag = 'internal scratch']
  %s0 = inlined_call_operand.vmem [shape: bf16[32,512], index: 0, kind: input, shape index: {}]
  %s1 = inlined_call_operand.vmem [shape: bf16[8,32], index: 1, kind: input, shape index: {}]
  %s2 = inlined_call_operand.vmem [shape: f32[8,1], index: 2, kind: input, shape index: {}]
  %s3 = inlined_call_operand.vmem [shape: f32[8,8], index: 3, kind: input, shape index: {}]
  %s4 = inlined_call_operand.vmem [shape: f32[8,1], index: 4, kind: input, shape index: {}]
  %s5 = inlined_call_operand.vmem [shape: f32[8,512], index: 5, kind: output, shape index: {}]
  %s6 = sld [smem:[#allocation0]]
  $region30: #{forward.63} parent=0
    _
  %s8 = ssub.s32 1, %s6
  %s9 = scalar_select 0, %s8, %s6
  // Predicated region
  $region2: #{forward.63} parent=0 // pred_check
    _
  $region3: #{forward.63} parent=0 // pred_check_branch
    %11 = sbr.rel (0) target = $region5
  $region4: #{forward.63} parent=0 // pred_region
    _
  $region5: #{forward.63} parent=0 // pred_fallthru
    _
  // Predicated region
  $region6: #{forward.63} parent=0 // pred_check
    _
  $region7: #{forward.63} parent=0 // pred_check_branch
    %13 = sbr.rel (0) target = $region9
  $region8: #{forward.63} parent=0 // pred_region
    _
  $region9: #{forward.63} parent=0 // pred_fallthru
    _
  // Predicated region
  $region10: #{forward.63} parent=0 // pred_check
    _
  $region11: #{forward.63} parent=0 // pred_check_branch
    %15 = sbr.rel (0) target = $region13
  $region12: #{forward.63} parent=0 // pred_region
    _
  $region13: #{forward.63} parent=0 // pred_fallthru
    _
  // Predicated region
  $region14: #{forward.63} parent=0 // pred_check
    _
  $region15: #{forward.63} parent=0 // pred_check_branch
    %17 = sbr.rel (0) target = $region17
  $region16: #{forward.63} parent=0 // pred_region
    _
  $region17: #{forward.63} parent=0 // pred_fallthru
    _
  // Predicated region
  $region18: #{forward.63} parent=0 // pred_check
    _
  $region19: #{forward.63} parent=0 // pred_check_branch
    %19 = sbr.rel (0) target = $region21
  $region20: #{forward.63} parent=0 // pred_region
    _
  $region21: #{forward.63} parent=0 // pred_fallthru
    _
  %v21 = vld [vmem:[%s1] sm:$0xf]
  %v22 = vld [vmem:[%s0] sm:$0xff]
  %v23 = vld [vmem:[%s0 + $0x8] sm:$0xff]
  %v24 = vld [vmem:[%s0 + $0x10] sm:$0xff]
  %v25 = vld [vmem:[%s0 + $0x18] sm:$0xff]
  %v26 = vld [vmem:[%s0 + $0x20] sm:$0xff]
  %v27 = vld [vmem:[%s0 + $0x28] sm:$0xff]
  %v28 = vld [vmem:[%s0 + $0x30] sm:$0xff]
  %v29 = vld [vmem:[%s0 + $0x38] sm:$0xff]
  %v30 = vld [vmem:[%s2] sm:$0xff]
  %32 = vset.pattern.permute.xlu0 0
  %33 = vperm.xlu0 %32, %v30
  %v34 = vpop.permute.xlu0 %33
  %v44 = vunpack.c.l.b16 %v22
  %v45 = vunpack.c.h.b16 %v22
  %v46 = vunpack.c.l.b16 %v23
  %v47 = vunpack.c.h.b16 %v23
  %v48 = vunpack.c.l.b16 %v24
  %v49 = vunpack.c.h.b16 %v24
  %v50 = vunpack.c.l.b16 %v25
  %v51 = vunpack.c.h.b16 %v25
  %v52 = vunpack.c.l.b16 %v26
  %v53 = vunpack.c.h.b16 %v26
  %v54 = vunpack.c.l.b16 %v27
  %v55 = vunpack.c.h.b16 %v27
  %v56 = vunpack.c.l.b16 %v28
  %v57 = vunpack.c.h.b16 %v28
  %v58 = vunpack.c.l.b16 %v29
  %v59 = vunpack.c.h.b16 %v29
  %v60 = vpack.c.b16 %v48, %v44
  %v61 = vpack.c.b16 %v49, %v45
  %v62 = vpack.c.b16 %v50, %v46
  %v63 = vpack.c.b16 %v51, %v47
  %v64 = vpack.c.b16 %v56, %v52
  %v65 = vpack.c.b16 %v57, %v53
  %v66 = vpack.c.b16 %v58, %v54
  %v67 = vpack.c.b16 %v59, %v55
  %vm76 = vcmask 261120
  %v78 = vsel %vm76, %v21, 0
  %80 = vmatprep.subr.bf16.mxu0 %v61
  %81 = vmatpush1.bf16.msra.mxu0 %v60
  %82 = vmatprep.subr.bf16.mxu0 %v65
  %83 = vmatpush1.bf16.msra.mxu0 %v64
  %84 = vmatprep.subr.bf16.mxu0 0
  %85 = vmatpush1.bf16.msra.mxu0 0
  %86 = vmatprep.subr.bf16.mxu0 0
  %87 = vmatpush1.bf16.msra.mxu0 0
  %88 = vmatprep.subr.bf16.mxu0 0
  %89 = vmatpush1.bf16.msra.mxu0 0
  %90 = vmatprep.subr.bf16.mxu0 0
  %91 = vmatpush1.bf16.msra.mxu0 0
  %92 = vmatprep.subr.bf16.mxu0 0
  %93 = vmatpush1.bf16.msra.mxu0 0
  %94 = vmatprep.subr.bf16.mxu0 0
  %95 = vmatpush1.bf16.msra.mxu0 0
  %96 = vmatprep.subr.bf16.mxu0 0
  %97 = vmatpush1.bf16.msra.mxu0 0
  %98 = vmatprep.subr.bf16.mxu0 0
  %99 = vmatpush1.bf16.msra.mxu0 0
  %100 = vmatprep.subr.bf16.mxu0 0
  %101 = vmatpush1.bf16.msra.mxu0 0
  %102 = vmatprep.subr.bf16.mxu0 0
  %103 = vmatpush1.bf16.msra.mxu0 0
  %104 = vmatprep.subr.bf16.mxu0 0
  %105 = vmatpush1.bf16.msra.mxu0 0
  %106 = vmatprep.subr.bf16.mxu0 0
  %107 = vmatpush1.bf16.msra.mxu0 0
  %108 = vmatprep.subr.bf16.mxu0 0
  %109 = vmatpush1.bf16.msra.mxu0 0
  %110 = vmatprep.subr.bf16.mxu0 0
  %111 = vmatpush1.bf16.msra.mxu0 0
  %112 = vmatprep.mubr.bf16.mxu0 0
  %113 = vmatmul.mubr.bf16.gmra.mrb[0].mxu0 %v78
  %v114 = vpop.f32.mrb[0].mxu0
  %v115 = vadd.f32 %v34, %v114
  %v116 = vpop.f32.mrb[0].mxu0
  %v117 = vadd.f32 %v34, %v116
  %v118 = vpop.f32.mrb[0].mxu0
  %v119 = vpop.f32.mrb[0].mxu0
  %120 = vdwg.mxu0
  %121 = vmatprep.subr.bf16.mxu0 %v63
  %122 = vmatpush1.bf16.msra.mxu0 %v62
  %123 = vmatprep.subr.bf16.mxu0 %v67
  %124 = vmatpush1.bf16.msra.mxu0 %v66
  %125 = vmatprep.subr.bf16.mxu0 0
  %126 = vmatpush1.bf16.msra.mxu0 0
  %127 = vmatprep.subr.bf16.mxu0 0
  %128 = vmatpush1.bf16.msra.mxu0 0
  %129 = vmatprep.subr.bf16.mxu0 0
  %130 = vmatpush1.bf16.msra.mxu0 0
  %131 = vmatprep.subr.bf16.mxu0 0
  %132 = vmatpush1.bf16.msra.mxu0 0
  %133 = vmatprep.subr.bf16.mxu0 0
  %134 = vmatpush1.bf16.msra.mxu0 0
  %135 = vmatprep.subr.bf16.mxu0 0
  %136 = vmatpush1.bf16.msra.mxu0 0
  %137 = vmatprep.subr.bf16.mxu0 0
  %138 = vmatpush1.bf16.msra.mxu0 0
  %139 = vmatprep.subr.bf16.mxu0 0
  %140 = vmatpush1.bf16.msra.mxu0 0
  %141 = vmatprep.subr.bf16.mxu0 0
  %142 = vmatpush1.bf16.msra.mxu0 0
  %143 = vmatprep.subr.bf16.mxu0 0
  %144 = vmatpush1.bf16.msra.mxu0 0
  %145 = vmatprep.subr.bf16.mxu0 0
  %146 = vmatpush1.bf16.msra.mxu0 0
  %147 = vmatprep.subr.bf16.mxu0 0
  %148 = vmatpush1.bf16.msra.mxu0 0
  %149 = vmatprep.subr.bf16.mxu0 0
  %150 = vmatpush1.bf16.msra.mxu0 0
  %151 = vmatprep.subr.bf16.mxu0 0
  %152 = vmatpush1.bf16.msra.mxu0 0
  %153 = vmatprep.mubr.bf16.mxu0 0
  %154 = vmatmul.mubr.bf16.gmra.mrb[0].mxu0 %v78
  %v155 = vpop.f32.mrb[0].mxu0
  %v156 = vadd.f32 %v34, %v155
  %v157 = vpop.f32.mrb[0].mxu0
  %v158 = vadd.f32 %v34, %v157
  %v159 = vpop.f32.mrb[0].mxu0
  %v160 = vpop.f32.mrb[0].mxu0
  %161 = vdwg.mxu0
  %v162 = vld [vmem:[%s3] sm:$0xff]
  %v163 = vmul.f32 %v115, %v115
  %v164 = vmul.f32 %v117, %v117
  %v165 = vmul.f32 %v156, %v156
  %v166 = vmul.f32 %v158, %v158
  %v167 = vld [vmem:[%s4] sm:$0xff]
  %169 = vset.pattern.permute.xlu0 0
  %170 = vperm.xlu0 %169, %v167
  %v171 = vpop.permute.xlu0 %170
  %vm173 = vcmask 64512
  %v175 = vsel %vm173, %v162, 0
  %177 = vmatprep.subr.mxu0 %v164
  %178 = vmatpush1.msra.mxu0 %v163
  %179 = vmatprep.subr.mxu0 0.0
  %180 = vmatpush1.msra.mxu0 0.0
  %181 = vmatprep.subr.mxu0 0.0
  %182 = vmatpush1.msra.mxu0 0.0
  %183 = vmatprep.subr.mxu0 0.0
  %184 = vmatpush1.msra.mxu0 0.0
  %185 = vmatprep.subr.mxu0 0.0
  %186 = vmatpush1.msra.mxu0 0.0
  %187 = vmatprep.subr.mxu0 0.0
  %188 = vmatpush1.msra.mxu0 0.0
  %189 = vmatprep.subr.mxu0 0.0
  %190 = vmatpush1.msra.mxu0 0.0
  %191 = vmatprep.subr.mxu0 0.0
  %192 = vmatpush1.msra.mxu0 0.0
  %193 = vmatprep.subr.mxu0 0.0
  %194 = vmatpush1.msra.mxu0 0.0
  %195 = vmatprep.subr.mxu0 0.0
  %196 = vmatpush1.msra.mxu0 0.0
  %197 = vmatprep.subr.mxu0 0.0
  %198 = vmatpush1.msra.mxu0 0.0
  %199 = vmatprep.subr.mxu0 0.0
  %200 = vmatpush1.msra.mxu0 0.0
  %201 = vmatprep.subr.mxu0 0.0
  %202 = vmatpush1.msra.mxu0 0.0
  %203 = vmatprep.subr.mxu0 0.0
  %204 = vmatpush1.msra.mxu0 0.0
  %205 = vmatprep.subr.mxu0 0.0
  %206 = vmatpush1.msra.mxu0 0.0
  %207 = vmatprep.subr.mxu0 0.0
  %208 = vmatpush1.msra.mxu0 0.0
  %209 = vmatprep.subr.mxu0 0.0
  %210 = vmatpush1.msra.mxu0 0.0
  %211 = vmatprep.subr.mxu0 0.0
  %212 = vmatpush1.msra.mxu0 0.0
  %213 = vmatprep.subr.mxu0 0.0
  %214 = vmatpush1.msra.mxu0 0.0
  %215 = vmatprep.subr.mxu0 0.0
  %216 = vmatpush1.msra.mxu0 0.0
  %217 = vmatprep.subr.mxu0 0.0
  %218 = vmatpush1.msra.mxu0 0.0
  %219 = vmatprep.subr.mxu0 0.0
  %220 = vmatpush1.msra.mxu0 0.0
  %221 = vmatprep.subr.mxu0 0.0
  %222 = vmatpush1.msra.mxu0 0.0
  %223 = vmatprep.subr.mxu0 0.0
  %224 = vmatpush1.msra.mxu0 0.0
  %225 = vmatprep.subr.mxu0 0.0
  %226 = vmatpush1.msra.mxu0 0.0
  %227 = vmatprep.subr.mxu0 0.0
  %228 = vmatpush1.msra.mxu0 0.0
  %229 = vmatprep.subr.mxu0 0.0
  %230 = vmatpush1.msra.mxu0 0.0
  %231 = vmatprep.subr.mxu0 0.0
  %232 = vmatpush1.msra.mxu0 0.0
  %233 = vmatprep.subr.mxu0 0.0
  %234 = vmatpush1.msra.mxu0 0.0
  %235 = vmatprep.subr.mxu0 0.0
  %236 = vmatpush1.msra.mxu0 0.0
  %237 = vmatprep.subr.mxu0 0.0
  %238 = vmatpush1.msra.mxu0 0.0
  %239 = vmatprep.subr.mxu0 0.0
  %240 = vmatpush1.msra.mxu0 0.0
  %241 = vmatprep.mubr.f32.mxu0 0.0
  %242 = vmatmul.mubr.f32.gmra.mrb[0].mxu0 %v175
  %v243 = vpop.f32.mrb[0].mxu0
  %v244 = vadd.f32 %v171, %v243
  %v245 = vpop.f32.mrb[0].mxu0
  %v246 = vadd.f32 %v171, %v245
  %247 = vdwg.mxu0
  %248 = vmatprep.subr.mxu0 %v166
  %249 = vmatpush1.msra.mxu0 %v165
  %250 = vmatprep.subr.mxu0 0.0
  %251 = vmatpush1.msra.mxu0 0.0
  %252 = vmatprep.subr.mxu0 0.0
  %253 = vmatpush1.msra.mxu0 0.0
  %254 = vmatprep.subr.mxu0 0.0
  %255 = vmatpush1.msra.mxu0 0.0
  %256 = vmatprep.subr.mxu0 0.0
  %257 = vmatpush1.msra.mxu0 0.0
  %258 = vmatprep.subr.mxu0 0.0
  %259 = vmatpush1.msra.mxu0 0.0
  %260 = vmatprep.subr.mxu0 0.0
  %261 = vmatpush1.msra.mxu0 0.0
  %262 = vmatprep.subr.mxu0 0.0
  %263 = vmatpush1.msra.mxu0 0.0
  %264 = vmatprep.subr.mxu0 0.0
  %265 = vmatpush1.msra.mxu0 0.0
  %266 = vmatprep.subr.mxu0 0.0
  %267 = vmatpush1.msra.mxu0 0.0
  %268 = vmatprep.subr.mxu0 0.0
  %269 = vmatpush1.msra.mxu0 0.0
  %270 = vmatprep.subr.mxu0 0.0
  %271 = vmatpush1.msra.mxu0 0.0
  %272 = vmatprep.subr.mxu0 0.0
  %273 = vmatpush1.msra.mxu0 0.0
  %274 = vmatprep.subr.mxu0 0.0
  %275 = vmatpush1.msra.mxu0 0.0
  %276 = vmatprep.subr.mxu0 0.0
  %277 = vmatpush1.msra.mxu0 0.0
  %278 = vmatprep.subr.mxu0 0.0
  %279 = vmatpush1.msra.mxu0 0.0
  %280 = vmatprep.subr.mxu0 0.0
  %281 = vmatpush1.msra.mxu0 0.0
  %282 = vmatprep.subr.mxu0 0.0
  %283 = vmatpush1.msra.mxu0 0.0
  %284 = vmatprep.subr.mxu0 0.0
  %285 = vmatpush1.msra.mxu0 0.0
  %286 = vmatprep.subr.mxu0 0.0
  %287 = vmatpush1.msra.mxu0 0.0
  %288 = vmatprep.subr.mxu0 0.0
  %289 = vmatpush1.msra.mxu0 0.0
  %290 = vmatprep.subr.mxu0 0.0
  %291 = vmatpush1.msra.mxu0 0.0
  %292 = vmatprep.subr.mxu0 0.0
  %293 = vmatpush1.msra.mxu0 0.0
  %294 = vmatprep.subr.mxu0 0.0
  %295 = vmatpush1.msra.mxu0 0.0
  %296 = vmatprep.subr.mxu0 0.0
  %297 = vmatpush1.msra.mxu0 0.0
  %298 = vmatprep.subr.mxu0 0.0
  %299 = vmatpush1.msra.mxu0 0.0
  %300 = vmatprep.subr.mxu0 0.0
  %301 = vmatpush1.msra.mxu0 0.0
  %302 = vmatprep.subr.mxu0 0.0
  %303 = vmatpush1.msra.mxu0 0.0
  %304 = vmatprep.subr.mxu0 0.0
  %305 = vmatpush1.msra.mxu0 0.0
  %306 = vmatprep.subr.mxu0 0.0
  %307 = vmatpush1.msra.mxu0 0.0
  %308 = vmatprep.subr.mxu0 0.0
  %309 = vmatpush1.msra.mxu0 0.0
  %310 = vmatprep.subr.mxu0 0.0
  %311 = vmatpush1.msra.mxu0 0.0
  %312 = vmatprep.mubr.f32.mxu0 0.0
  %313 = vmatmul.mubr.f32.gmra.mrb[0].mxu0 %v175
  %v314 = vpop.f32.mrb[0].mxu0
  %v315 = vadd.f32 %v171, %v314
  %v316 = vpop.f32.mrb[0].mxu0
  %v317 = vadd.f32 %v171, %v316
  %318 = vdwg.mxu0
  %v319 = vrsqrt.pop %v244
  %v320 = vmul.f32 %v244, %v319
  %vm321 = vcmp.eq.f32.partialorder %v244, inf
  %v322 = vsel %vm321, %v244, %v320
  %vm323 = vcmp.eq.f32.partialorder %v244, 0.0
  %v324 = vand.u32 %v244, 2147483648
  %v325 = vsel %vm323, %v324, %v322
  %v326 = vrsqrt.pop %v246
  %v327 = vmul.f32 %v246, %v326
  %vm328 = vcmp.eq.f32.partialorder %v246, inf
  %v329 = vsel %vm328, %v246, %v327
  %vm330 = vcmp.eq.f32.partialorder %v246, 0.0
  %v331 = vand.u32 %v246, 2147483648
  %v332 = vsel %vm330, %v331, %v329
  %v333 = vrsqrt.pop %v315
  %v334 = vmul.f32 %v315, %v333
  %vm335 = vcmp.eq.f32.partialorder %v315, inf
  %v336 = vsel %vm335, %v315, %v334
  %vm337 = vcmp.eq.f32.partialorder %v315, 0.0
  %v338 = vand.u32 %v315, 2147483648
  %v339 = vsel %vm337, %v338, %v336
  %v340 = vrsqrt.pop %v317
  %v341 = vmul.f32 %v317, %v340
  %vm342 = vcmp.eq.f32.partialorder %v317, inf
  %v343 = vsel %vm342, %v317, %v341
  %vm344 = vcmp.eq.f32.partialorder %v317, 0.0
  %v345 = vand.u32 %v317, 2147483648
  %v346 = vsel %vm344, %v345, %v343
  %v347 = vmul.f32 %v115, %v325
  %v348 = vmul.f32 %v117, %v332
  %v349 = vmul.f32 %v156, %v339
  %v350 = vmul.f32 %v158, %v346
  %351 = vst [vmem:[%s5] sm:$0xff] %v347
  %352 = vst [vmem:[%s5 + $0x8] sm:$0xff] %v348
  %353 = vst [vmem:[%s5 + $0x10] sm:$0xff] %v349
  %354 = vst [vmem:[%s5 + $0x18] sm:$0xff] %v350
  // Predicated region
  $region22: #{forward.63} parent=0 // pred_check
    _
  $region23: #{forward.63} parent=0 // pred_check_branch
    %356 = sbr.rel (0) target = $region25
  $region24: #{forward.63} parent=0 // pred_region
    _
  $region25: #{forward.63} parent=0 // pred_fallthru
    _
  // Predicated region
  $region26: #{forward.63} parent=0 // pred_check
    _
  $region27: #{forward.63} parent=0 // pred_check_branch
    %358 = sbr.rel (0) target = $region29
  $region28: #{forward.63} parent=0 // pred_region
    _
  $region29: #{forward.63} parent=0 // pred_fallthru
    _

// kernel: forward.64
$region0: #{forward.64}
  #allocation0 [shape = 'u32[]', space=smem, size = 0x4, offset = 0x4, fixed_abs, tag = 'smem constant byte address 0x4 - core index']
  #allocation1 [shape = 'u32[144,128]{1,0:T(1,128)}', space=vmem, size = 0x12000, scoped, tag = 'internal scratch']
  %s0 = inlined_call_operand.vmem [shape: bf16[80,2048], index: 0, kind: input, shape index: {}]
  %s1 = inlined_call_operand.vmem [shape: bf16[3,80], index: 1, kind: input, shape index: {}]
  %s2 = inlined_call_operand.vmem [shape: f32[3,1], index: 2, kind: input, shape index: {}]
  %s3 = inlined_call_operand.vmem [shape: f32[3,2048], index: 3, kind: output, shape index: {}]
  %s4 = sld [smem:[#allocation0]]
  $region68: #{forward.64} parent=0
    _
  %s6 = ssub.s32 1, %s4
  %s7 = scalar_select 0, %s6, %s4
  $region1: #{forward.64} parent=0
    #allocation2 [shape = 'u8[327680]{0}', space=vmem, size = 0x50000, scoped, tag = 'input window, operand 0']
    loop: start=0, step=1, limit=4
    $region2: #{forward.64} parent=1 // loop_pre_header
      _
    $region3: #{forward.64} parent=1 // loop_header
      %s9 = sphi 0, %s13
      %p10 = scmp.ge.s32.totalorder %s9, 4
      %s19 = sphi 0, %s21
      %s22 = sphi 0, %s19
      %s23 = sphi 0, %s22
      %s39 = sphi 0, %s23
      %s43 = sphi 0, %s43
      %s45 = sphi 0, %s43
      %s46 = sphi 0, %s45
      %s60 = sphi 0, %s46
      %s64 = sphi 0, %s64
      %s66 = sphi 0, %s64
      %s67 = sphi 0, %s66
      %s81 = sphi 0, %s67
      %s87 = sphi 0, %s89
      %s90 = sphi 0, %s87
      %s91 = sphi 0, %s90
      %s107 = sphi 0, %s91
    $region4: #{forward.64} parent=1 // loop_header_branch
      %12 = sbr.rel (%p10) target = $region8
    $region5: #{forward.64} parent=1 // loop_body
      %s14 = ssub.s32 %s9, 1
      %s15 = ssub.s32 %s9, 2
      %s16 = sadd.s32 %s9, 1
      %s17 = ssub.s32 %s9, %s16
      %p18 = scmp.eq.s32.totalorder %s17, 0
      %s20 = sadd.s32 %s19, 1
      %s21 = scalar_select %p18, %s19, %s20
      %p24 = pneg %p18
      %p25 = scmp.eq.s32.totalorder %s9, 1
      %p26 = por %p24, %p25
      %p27 = scmp.ne.s32.totalorder %s19, %s22
      %p28 = scmp.eq.s32.totalorder %s9, 0
      %p29 = por %p27, %p28
      %p30 = scmp.ne.s32.totalorder %s19, %s22
      %p31 = scmp.eq.s32.totalorder %s14, 1
      %p32 = por %p30, %p31
      %p33 = scmp.ne.s32.totalorder %s22, %s23
      %p34 = scmp.eq.s32.totalorder %s14, 0
      %p35 = por %p33, %p34
      %p36 = scmp.ne.s32.totalorder %s22, %s23
      %p37 = scmp.eq.s32.totalorder %s15, 1
      %p38 = por %p36, %p37
      %p40 = scmp.ne.s32.totalorder %s23, %s39
      %p41 = scmp.eq.s32.totalorder %s15, 0
      %p42 = por %p40, %p41
      %s44 = sadd.s32 %s43, 1
      %p47 = scmp.eq.s32.totalorder %s9, 1
      %p48 = scmp.ne.s32.totalorder %s43, %s45
      %p49 = scmp.eq.s32.totalorder %s9, 0
      %p50 = por %p48, %p49
      %p51 = scmp.ne.s32.totalorder %s43, %s45
      %p52 = scmp.eq.s32.totalorder %s14, 1
      %p53 = por %p51, %p52
      %p54 = scmp.ne.s32.totalorder %s45, %s46
      %p55 = scmp.eq.s32.totalorder %s14, 0
      %p56 = por %p54, %p55
      %p57 = scmp.ne.s32.totalorder %s45, %s46
      %p58 = scmp.eq.s32.totalorder %s15, 1
      %p59 = por %p57, %p58
      %p61 = scmp.ne.s32.totalorder %s46, %s60
      %p62 = scmp.eq.s32.totalorder %s15, 0
      %p63 = por %p61, %p62
      %s65 = sadd.s32 %s64, 1
      %p68 = scmp.eq.s32.totalorder %s9, 1
      %p69 = scmp.ne.s32.totalorder %s64, %s66
      %p70 = scmp.eq.s32.totalorder %s9, 0
      %p71 = por %p69, %p70
      %p72 = scmp.ne.s32.totalorder %s64, %s66
      %p73 = scmp.eq.s32.totalorder %s14, 1
      %p74 = por %p72, %p73
      %p75 = scmp.ne.s32.totalorder %s66, %s67
      %p76 = scmp.eq.s32.totalorder %s14, 0
      %p77 = por %p75, %p76
      %p78 = scmp.ne.s32.totalorder %s66, %s67
      %p79 = scmp.eq.s32.totalorder %s15, 1
      %p80 = por %p78, %p79
      %p82 = scmp.ne.s32.totalorder %s67, %s81
      %p83 = scmp.eq.s32.totalorder %s15, 0
      %p84 = por %p82, %p83
      %s85 = ssub.s32 %s9, %s16
      %p86 = scmp.eq.s32.totalorder %s85, 0
      %s88 = sadd.s32 %s87, 1
      %s89 = scalar_select %p86, %s87, %s88
      %p92 = pneg %p86
      %p93 = scmp.eq.s32.totalorder %s9, 1
      %p94 = por %p92, %p93
      %p95 = scmp.ne.s32.totalorder %s87, %s90
      %p96 = scmp.eq.s32.totalorder %s9, 0
      %p97 = por %p95, %p96
      %p98 = scmp.ne.s32.totalorder %s87, %s90
      %p99 = scmp.eq.s32.totalorder %s14, 1
      %p100 = por %p98, %p99
      %p101 = scmp.ne.s32.totalorder %s90, %s91
      %p102 = scmp.eq.s32.totalorder %s14, 0
      %p103 = por %p101, %p102
      %p104 = scmp.ne.s32.totalorder %s90, %s91
      %p105 = scmp.eq.s32.totalorder %s15, 1
      %p106 = por %p104, %p105
      %p108 = scmp.ne.s32.totalorder %s91, %s107
      %p109 = scmp.eq.s32.totalorder %s15, 0
      %p110 = por %p108, %p109
      %p111 = scmp.le.s32.totalorder 1, %s9
      %p112 = scmp.lt.s32.totalorder %s9, 3
      %p113 = pnand %p111, %p112
      %p114 = pneg %p113
      // Predicated region
      $region9: #{forward.64} parent=5 // pred_check
        _
      $region10: #{forward.64} parent=5 // pred_check_branch
        %116 = sbr.rel (%p113) target = $region12
      $region11: #{forward.64} parent=5 // pred_region
        %s117 = ssub.s32 %s9, 1
        // Predicated region
        $region13: #{forward.64} parent=11 // pred_check
          %p118 = pneg %p56
        $region14: #{forward.64} parent=11 // pred_check_branch
          %120 = sbr.rel (%p118) target = $region16
        $region15: #{forward.64} parent=11 // pred_region
          _
        $region16: #{forward.64} parent=11 // pred_fallthru
          _
        // Predicated region
        $region17: #{forward.64} parent=11 // pred_check
          %p121 = pneg %p77
        $region18: #{forward.64} parent=11 // pred_check_branch
          %123 = sbr.rel (%p121) target = $region20
        $region19: #{forward.64} parent=11 // pred_region
          _
        $region20: #{forward.64} parent=11 // pred_fallthru
          _
      $region12: #{forward.64} parent=5 // pred_fallthru
        _
      %p124 = scmp.lt.s32.totalorder %s9, 2
      // Predicated region
      $region21: #{forward.64} parent=5 // pred_check
        %p125 = pneg %p124
      $region22: #{forward.64} parent=5 // pred_check_branch
        %127 = sbr.rel (%p125) target = $region24
      $region23: #{forward.64} parent=5 // pred_region
        // Predicated region
        $region25: #{forward.64} parent=23 // pred_check
          %p128 = pneg %p29
        $region26: #{forward.64} parent=23 // pred_check_branch
          %130 = sbr.rel (%p128) target = $region28
        $region27: #{forward.64} parent=23 // pred_region
          %s131 = sand.u32 %s19, 1
          %s132 = sand.u32 %s19, 1
          %s133 = smul.addr %s132, 320
          %s134 = scalar_lea.vmem [#allocation2], %s133
          %s135 = smul.u32 8, %s9
          %s136 = smul.addr %s135, 4
          %s137 = scalar_lea.vmem %s0, %s136
          // Predicated region
          $region29: #{forward.64} parent=27 // pred_check
            _
          $region30: #{forward.64} parent=27 // pred_check_branch
            %139 = sbr.rel (0) target = $region32
          $region31: #{forward.64} parent=27 // pred_region
            // Predicated region
            $region33: #{forward.64} parent=31 // pred_check
              _
            $region34: #{forward.64} parent=31 // pred_check_branch
              %141 = sbr.rel (0) target = $region36
            $region35: #{forward.64} parent=31 // pred_region
              loop: start=0, step=1, limit=1
              $region37: #{forward.64} parent=35 // loop_pre_header
                _
              $region38: #{forward.64} parent=35 // loop_header
                %s143 = sphi 0, %s147
                %p144 = scmp.ge.s32.totalorder %s143, 1
                %s148 = sphi %s137, %s137
                %s149 = sphi %s134, %s134
              $region39: #{forward.64} parent=35 // loop_header_branch
                %146 = sbr.rel (%p144) target = $region43
              $region40: #{forward.64} parent=35 // loop_body
                %v150 = vld [vmem:[%s148] sm:$0xff]
                %151 = vst [vmem:[%s149] sm:$0xff] %v150
                %v152 = vld [vmem:[%s148 + $0x8] sm:$0xff]
                %153 = vst [vmem:[%s149 + $0x8] sm:$0xff] %v152
                %v154 = vld [vmem:[%s148 + $0x10] sm:$0xff]
                %155 = vst [vmem:[%s149 + $0x10] sm:$0xff] %v154
                %v156 = vld [vmem:[%s148 + $0x18] sm:$0xff]
                %157 = vst [vmem:[%s149 + $0x18] sm:$0xff] %v156
                %v158 = vld [vmem:[%s148 + $0x40] sm:$0xff]
                %159 = vst [vmem:[%s149 + $0x20] sm:$0xff] %v158
                %v160 = vld [vmem:[%s148 + $0x48] sm:$0xff]
                %161 = vst [vmem:[%s149 + $0x28] sm:$0xff] %v160
                %v162 = vld [vmem:[%s148 + $0x50] sm:$0xff]
                %163 = vst [vmem:[%s149 + $0x30] sm:$0xff] %v162
                %v164 = vld [vmem:[%s148 + $0x58] sm:$0xff]
                %165 = vst [vmem:[%s149 + $0x38] sm:$0xff] %v164
                %v166 = vld [vmem:[%s148 + $0x80] sm:$0xff]
                %167 = vst [vmem:[%s149 + $0x40] sm:$0xff] %v166
                %v168 = vld [vmem:[%s148 + $0x88] sm:$0xff]
                %169 = vst [vmem:[%s149 + $0x48] sm:$0xff] %v168
                %v170 = vld [vmem:[%s148 + $0x90] sm:$0xff]
                %171 = vst [vmem:[%s149 + $0x50] sm:$0xff] %v170
                %v172 = vld [vmem:[%s148 + $0x98] sm:$0xff]
                %173 = vst [vmem:[%s149 + $0x58] sm:$0xff] %v172
                %v174 = vld [vmem:[%s148 + $0xc0] sm:$0xff]
                %175 = vst [vmem:[%s149 + $0x60] sm:$0xff] %v174
                %v176 = vld [vmem:[%s148 + $0xc8] sm:$0xff]
                %177 = vst [vmem:[%s149 + $0x68] sm:$0xff] %v176
                %v178 = vld [vmem:[%s148 + $0xd0] sm:$0xff]
                %179 = vst [vmem:[%s149 + $0x70] sm:$0xff] %v178
                %v180 = vld [vmem:[%s148 + $0xd8] sm:$0xff]
                %181 = vst [vmem:[%s149 + $0x78] sm:$0xff] %v180
                %v182 = vld [vmem:[%s148 + $0x100] sm:$0xff]
                %183 = vst [vmem:[%s149 + $0x80] sm:$0xff] %v182
                %v184 = vld [vmem:[%s148 + $0x108] sm:$0xff]
                %185 = vst [vmem:[%s149 + $0x88] sm:$0xff] %v184
                %v186 = vld [vmem:[%s148 + $0x110] sm:$0xff]
                %187 = vst [vmem:[%s149 + $0x90] sm:$0xff] %v186
                %v188 = vld [vmem:[%s148 + $0x118] sm:$0xff]
                %189 = vst [vmem:[%s149 + $0x98] sm:$0xff] %v188
                %v190 = vld [vmem:[%s148 + $0x140] sm:$0xff]
                %191 = vst [vmem:[%s149 + $0xa0] sm:$0xff] %v190
                %v192 = vld [vmem:[%s148 + $0x148] sm:$0xff]
                %193 = vst [vmem:[%s149 + $0xa8] sm:$0xff] %v192
                %v194 = vld [vmem:[%s148 + $0x150] sm:$0xff]
                %195 = vst [vmem:[%s149 + $0xb0] sm:$0xff] %v194
                %v196 = vld [vmem:[%s148 + $0x158] sm:$0xff]
                %197 = vst [vmem:[%s149 + $0xb8] sm:$0xff] %v196
                %v198 = vld [vmem:[%s148 + $0x180] sm:$0xff]
                %199 = vst [vmem:[%s149 + $0xc0] sm:$0xff] %v198
                %v200 = vld [vmem:[%s148 + $0x188] sm:$0xff]
                %201 = vst [vmem:[%s149 + $0xc8] sm:$0xff] %v200
                %v202 = vld [vmem:[%s148 + $0x190] sm:$0xff]
                %203 = vst [vmem:[%s149 + $0xd0] sm:$0xff] %v202
                %v204 = vld [vmem:[%s148 + $0x198] sm:$0xff]
                %205 = vst [vmem:[%s149 + $0xd8] sm:$0xff] %v204
                %v206 = vld [vmem:[%s148 + $0x1c0] sm:$0xff]
                %207 = vst [vmem:[%s149 + $0xe0] sm:$0xff] %v206
                %v208 = vld [vmem:[%s148 + $0x1c8] sm:$0xff]
                %209 = vst [vmem:[%s149 + $0xe8] sm:$0xff] %v208
                %v210 = vld [vmem:[%s148 + $0x1d0] sm:$0xff]
                %211 = vst [vmem:[%s149 + $0xf0] sm:$0xff] %v210
                %v212 = vld [vmem:[%s148 + $0x1d8] sm:$0xff]
                %213 = vst [vmem:[%s149 + $0xf8] sm:$0xff] %v212
                %v214 = vld [vmem:[%s148 + $0x200] sm:$0xff]
                %215 = vst [vmem:[%s149 + $0x100] sm:$0xff] %v214
                %v216 = vld [vmem:[%s148 + $0x208] sm:$0xff]
                %217 = vst [vmem:[%s149 + $0x108] sm:$0xff] %v216
                %v218 = vld [vmem:[%s148 + $0x210] sm:$0xff]
                %219 = vst [vmem:[%s149 + $0x110] sm:$0xff] %v218
                %v220 = vld [vmem:[%s148 + $0x218] sm:$0xff]
                %221 = vst [vmem:[%s149 + $0x118] sm:$0xff] %v220
                %v222 = vld [vmem:[%s148 + $0x240] sm:$0xff]
                %223 = vst [vmem:[%s149 + $0x120] sm:$0xff] %v222
                %v224 = vld [vmem:[%s148 + $0x248] sm:$0xff]
                %225 = vst [vmem:[%s149 + $0x128] sm:$0xff] %v224
                %v226 = vld [vmem:[%s148 + $0x250] sm:$0xff]
                %227 = vst [vmem:[%s149 + $0x130] sm:$0xff] %v226
                %v228 = vld [vmem:[%s148 + $0x258] sm:$0xff]
                %229 = vst [vmem:[%s149 + $0x138] sm:$0xff] %v228
              $region41: #{forward.64} parent=35 // loop_footer
                %s147 = sadd.s32 1, %s143
              $region42: #{forward.64} parent=35 // loop_footer_branch
                %142 = sbr.rel target = $region38
              $region43: #{forward.64} parent=35 // loop_exit
                _
            $region36: #{forward.64} parent=31 // pred_fallthru
              _
            // Predicated region
            $region44: #{forward.64} parent=31 // pred_check
              _
            $region45: #{forward.64} parent=31 // pred_check_branch
              %231 = sbr.rel target = $region47
            $region46: #{forward.64} parent=31 // pred_region
              _
            $region47: #{forward.64} parent=31 // pred_fallthru
              _
          $region32: #{forward.64} parent=27 // pred_fallthru
            _
          %232 = vnop
        $region28: #{forward.64} parent=23 // pred_fallthru
          _
      $region24: #{forward.64} parent=5 // pred_fallthru
        _
      %p233 = scmp.le.s32.totalorder 1, %s9
      %p234 = scmp.lt.s32.totalorder %s9, 3
      %p235 = pnand %p233, %p234
      %p236 = pneg %p235
      // Predicated region
      $region48: #{forward.64} parent=5 // pred_check
        _
      $region49: #{forward.64} parent=5 // pred_check_branch
        %238 = sbr.rel (%p235) target = $region51
      $region50: #{forward.64} parent=5 // pred_region
        %s239 = ssub.s32 %s9, 1
        %s240 = sand.u32 %s22, 1
        %s241 = sand.u32 %s22, 1
        %s242 = smul.addr %s241, 320
        %s243 = scalar_lea.vmem [#allocation2], %s242
        // Predicated region
        $region52: #{forward.64} parent=50 // pred_check
          %p244 = pneg %p35
        $region53: #{forward.64} parent=50 // pred_check_branch
          %246 = sbr.rel (%p244) target = $region55
        $region54: #{forward.64} parent=50 // pred_region
          _
        $region55: #{forward.64} parent=50 // pred_fallthru
          _
        %s247 = sand.u32 %s22, 1
        %s248 = sand.u32 %s22, 1
        %s249 = smul.addr %s248, 320
        %s250 = scalar_lea.vmem [#allocation2], %s249
        %p251 = pneg %p35
        %p252 = pneg %p32
        %p253 = pneg %p56
        %p254 = pneg %p53
        %p255 = pneg %p77
        %p256 = pneg %p74
        %p257 = pneg %p103
        %p258 = pneg %p100
        %s259 = smul.u32 8, %s14
        %p260 = scmp.lt.s32.totalorder %s259, 15
        %s261 = scalar_select %p260, %s259, 15
        %s262 = smul.addr %s261, 4
        %s263 = scalar_lea.vmem %s3, %s262
        %s264 = smul.u32 8, %s14
        %s265 = smul.u32 8, %s14
        %p266 = scmp.lt.s32.totalorder %s265, 15
        %s267 = scalar_select %p266, %s265, 15
        %s268 = smul.addr %s267, 4
        %s269 = scalar_lea.vmem %s3, %s268
        %s270 = smul.u32 8, %s14
        %v272 = vld [vmem:[%s1] sm:$0x3]
        %v273 = vld [vmem:[%s243] sm:$0xff]
        %v274 = vld [vmem:[%s243 + $0x8] sm:$0xff]
        %v275 = vld [vmem:[%s243 + $0x10] sm:$0xff]
        %v276 = vld [vmem:[%s243 + $0x18] sm:$0xff]
        %v277 = vld [vmem:[%s243 + $0x20] sm:$0xff]
        %v278 = vld [vmem:[%s243 + $0x28] sm:$0xff]
        %v279 = vld [vmem:[%s243 + $0x30] sm:$0xff]
        %v280 = vld [vmem:[%s243 + $0x38] sm:$0xff]
        %v281 = vld [vmem:[%s243 + $0x40] sm:$0xff]
        %v282 = vld [vmem:[%s243 + $0x48] sm:$0xff]
        %v283 = vld [vmem:[%s243 + $0x50] sm:$0xff]
        %v284 = vld [vmem:[%s243 + $0x58] sm:$0xff]
        %v285 = vld [vmem:[%s243 + $0x60] sm:$0xff]
        %v286 = vld [vmem:[%s243 + $0x68] sm:$0xff]
        %v287 = vld [vmem:[%s243 + $0x70] sm:$0xff]
        %v288 = vld [vmem:[%s243 + $0x78] sm:$0xff]
        %v289 = vld [vmem:[%s243 + $0x80] sm:$0xff]
        %v290 = vld [vmem:[%s243 + $0x88] sm:$0xff]
        %v291 = vld [vmem:[%s243 + $0x90] sm:$0xff]
        %v292 = vld [vmem:[%s243 + $0x98] sm:$0xff]
        %v293 = vld [vmem:[%s243 + $0xa0] sm:$0xff]
        %v294 = vld [vmem:[%s243 + $0xa8] sm:$0xff]
        %v295 = vld [vmem:[%s243 + $0xb0] sm:$0xff]
        %v296 = vld [vmem:[%s243 + $0xb8] sm:$0xff]
        %v297 = vld [vmem:[%s243 + $0xc0] sm:$0xff]
        %v298 = vld [vmem:[%s243 + $0xc8] sm:$0xff]
        %v299 = vld [vmem:[%s243 + $0xd0] sm:$0xff]
        %v300 = vld [vmem:[%s243 + $0xd8] sm:$0xff]
        %v301 = vld [vmem:[%s243 + $0xe0] sm:$0xff]
        %v302 = vld [vmem:[%s243 + $0xe8] sm:$0xff]
        %v303 = vld [vmem:[%s243 + $0xf0] sm:$0xff]
        %v304 = vld [vmem:[%s243 + $0xf8] sm:$0xff]
        %v305 = vld [vmem:[%s243 + $0x100] sm:$0xff]
        %v306 = vld [vmem:[%s243 + $0x108] sm:$0xff]
        %v307 = vld [vmem:[%s243 + $0x110] sm:$0xff]
        %v308 = vld [vmem:[%s243 + $0x118] sm:$0xff]
        %v309 = vld [vmem:[%s243 + $0x120] sm:$0xff]
        %v310 = vld [vmem:[%s243 + $0x128] sm:$0xff]
        %v311 = vld [vmem:[%s243 + $0x130] sm:$0xff]
        %v312 = vld [vmem:[%s243 + $0x138] sm:$0xff]
        %v313 = vld [vmem:[%s2] sm:$0x7]
        %315 = vset.pattern.permute.xlu0 0
        %316 = vperm.xlu0 %315, %v313
        %v317 = vpop.permute.xlu0 %316
        %v359 = vunpack.c.l.b16 %v273
        %v360 = vunpack.c.h.b16 %v273
        %v361 = vunpack.c.l.b16 %v274
        %v362 = vunpack.c.h.b16 %v274
        %v363 = vunpack.c.l.b16 %v275
        %v364 = vunpack.c.h.b16 %v275
        %v365 = vunpack.c.l.b16 %v276
        %v366 = vunpack.c.h.b16 %v276
        %v367 = vunpack.c.l.b16 %v277
        %v368 = vunpack.c.h.b16 %v277
        %v369 = vunpack.c.l.b16 %v278
        %v370 = vunpack.c.h.b16 %v278
        %v371 = vunpack.c.l.b16 %v279
        %v372 = vunpack.c.h.b16 %v279
        %v373 = vunpack.c.l.b16 %v280
        %v374 = vunpack.c.h.b16 %v280
        %v375 = vunpack.c.l.b16 %v281
        %v376 = vunpack.c.h.b16 %v281
        %v377 = vunpack.c.l.b16 %v282
        %v378 = vunpack.c.h.b16 %v282
        %v379 = vunpack.c.l.b16 %v283
        %v380 = vunpack.c.h.b16 %v283
        %v381 = vunpack.c.l.b16 %v284
        %v382 = vunpack.c.h.b16 %v284
        %v383 = vunpack.c.l.b16 %v285
        %v384 = vunpack.c.h.b16 %v285
        %v385 = vunpack.c.l.b16 %v286
        %v386 = vunpack.c.h.b16 %v286
        %v387 = vunpack.c.l.b16 %v287
        %v388 = vunpack.c.h.b16 %v287
        %v389 = vunpack.c.l.b16 %v288
        %v390 = vunpack.c.h.b16 %v288
        %v391 = vunpack.c.l.b16 %v289
        %v392 = vunpack.c.h.b16 %v289
        %v393 = vunpack.c.l.b16 %v290
        %v394 = vunpack.c.h.b16 %v290
        %v395 = vunpack.c.l.b16 %v291
        %v396 = vunpack.c.h.b16 %v291
        %v397 = vunpack.c.l.b16 %v292
        %v398 = vunpack.c.h.b16 %v292
        %v399 = vunpack.c.l.b16 %v293
        %v400 = vunpack.c.h.b16 %v293
        %v401 = vunpack.c.l.b16 %v294
        %v402 = vunpack.c.h.b16 %v294
        %v403 = vunpack.c.l.b16 %v295
        %v404 = vunpack.c.h.b16 %v295
        %v405 = vunpack.c.l.b16 %v296
        %v406 = vunpack.c.h.b16 %v296
        %v407 = vunpack.c.l.b16 %v297
        %v408 = vunpack.c.h.b16 %v297
        %v409 = vunpack.c.l.b16 %v298
        %v410 = vunpack.c.h.b16 %v298
        %v411 = vunpack.c.l.b16 %v299
        %v412 = vunpack.c.h.b16 %v299
        %v413 = vunpack.c.l.b16 %v300
        %v414 = vunpack.c.h.b16 %v300
        %v415 = vunpack.c.l.b16 %v301
        %v416 = vunpack.c.h.b16 %v301
        %v417 = vunpack.c.l.b16 %v302
        %v418 = vunpack.c.h.b16 %v302
        %v419 = vunpack.c.l.b16 %v303
        %v420 = vunpack.c.h.b16 %v303
        %v421 = vunpack.c.l.b16 %v304
        %v422 = vunpack.c.h.b16 %v304
        %v423 = vunpack.c.l.b16 %v305
        %v424 = vunpack.c.h.b16 %v305
        %v425 = vunpack.c.l.b16 %v306
        %v426 = vunpack.c.h.b16 %v306
        %v427 = vunpack.c.l.b16 %v307
        %v428 = vunpack.c.h.b16 %v307
        %v429 = vunpack.c.l.b16 %v308
        %v430 = vunpack.c.h.b16 %v308
        %v431 = vunpack.c.l.b16 %v309
        %v432 = vunpack.c.h.b16 %v309
        %v433 = vunpack.c.l.b16 %v310
        %v434 = vunpack.c.h.b16 %v310
        %v435 = vunpack.c.l.b16 %v311
        %v436 = vunpack.c.h.b16 %v311
        %v437 = vunpack.c.l.b16 %v312
        %v438 = vunpack.c.h.b16 %v312
        %v439 = vpack.c.b16 %v367, %v359
        %v440 = vpack.c.b16 %v368, %v360
        %v441 = vpack.c.b16 %v369, %v361
        %v442 = vpack.c.b16 %v370, %v362
        %v443 = vpack.c.b16 %v371, %v363
        %v444 = vpack.c.b16 %v372, %v364
        %v445 = vpack.c.b16 %v373, %v365
        %v446 = vpack.c.b16 %v374, %v366
        %v447 = vpack.c.b16 %v383, %v375
        %v448 = vpack.c.b16 %v384, %v376
        %v449 = vpack.c.b16 %v385, %v377
        %v450 = vpack.c.b16 %v386, %v378
        %v451 = vpack.c.b16 %v387, %v379
        %v452 = vpack.c.b16 %v388, %v380
        %v453 = vpack.c.b16 %v389, %v381
        %v454 = vpack.c.b16 %v390, %v382
        %v455 = vpack.c.b16 %v399, %v391
        %v456 = vpack.c.b16 %v400, %v392
        %v457 = vpack.c.b16 %v401, %v393
        %v458 = vpack.c.b16 %v402, %v394
        %v459 = vpack.c.b16 %v403, %v395
        %v460 = vpack.c.b16 %v404, %v396
        %v461 = vpack.c.b16 %v405, %v397
        %v462 = vpack.c.b16 %v406, %v398
        %v463 = vpack.c.b16 %v415, %v407
        %v464 = vpack.c.b16 %v416, %v408
        %v465 = vpack.c.b16 %v417, %v409
        %v466 = vpack.c.b16 %v418, %v410
        %v467 = vpack.c.b16 %v419, %v411
        %v468 = vpack.c.b16 %v420, %v412
        %v469 = vpack.c.b16 %v421, %v413
        %v470 = vpack.c.b16 %v422, %v414
        %v471 = vpack.c.b16 %v431, %v423
        %v472 = vpack.c.b16 %v432, %v424
        %v473 = vpack.c.b16 %v433, %v425
        %v474 = vpack.c.b16 %v434, %v426
        %v475 = vpack.c.b16 %v435, %v427
        %v476 = vpack.c.b16 %v436, %v428
        %v477 = vpack.c.b16 %v437, %v429
        %v478 = vpack.c.b16 %v438, %v430
        %vm519 = vcmask 654336
        %v521 = vsel %vm519, %v272, 0
        %523 = vmatprep.subr.bf16.mxu0 %v440
        %524 = vmatpush1.bf16.msra.mxu0 %v439
        %525 = vmatprep.subr.bf16.mxu0 %v448
        %526 = vmatpush1.bf16.msra.mxu0 %v447
        %527 = vmatprep.subr.bf16.mxu0 %v456
        %528 = vmatpush1.bf16.msra.mxu0 %v455
        %529 = vmatprep.subr.bf16.mxu0 %v464
        %530 = vmatpush1.bf16.msra.mxu0 %v463
        %531 = vmatprep.subr.bf16.mxu0 %v472
        %532 = vmatpush1.bf16.msra.mxu0 %v471
        %533 = vmatprep.subr.bf16.mxu0 0
        %534 = vmatpush1.bf16.msra.mxu0 0
        %535 = vmatprep.subr.bf16.mxu0 0
        %536 = vmatpush1.bf16.msra.mxu0 0
        %537 = vmatprep.subr.bf16.mxu0 0
        %538 = vmatpush1.bf16.msra.mxu0 0
        %539 = vmatprep.subr.bf16.mxu0 0
        %540 = vmatpush1.bf16.msra.mxu0 0
        %541 = vmatprep.subr.bf16.mxu0 0
        %542 = vmatpush1.bf16.msra.mxu0 0
        %543 = vmatprep.subr.bf16.mxu0 0
        %544 = vmatpush1.bf16.msra.mxu0 0
        %545 = vmatprep.subr.bf16.mxu0 0
        %546 = vmatpush1.bf16.msra.mxu0 0
        %547 = vmatprep.subr.bf16.mxu0 0
        %548 = vmatpush1.bf16.msra.mxu0 0
        %549 = vmatprep.subr.bf16.mxu0 0
        %550 = vmatpush1.bf16.msra.mxu0 0
        %551 = vmatprep.subr.bf16.mxu0 0
        %552 = vmatpush1.bf16.msra.mxu0 0
        %553 = vmatprep.subr.bf16.mxu0 0
        %554 = vmatpush1.bf16.msra.mxu0 0
        %555 = vmatprep.mubr.bf16.mxu0 0
        %556 = vmatmul.mubr.bf16.gmra.mrb[0].mxu0 %v521
        %v557 = vpop.f32.mrb[0].mxu0
        %v558 = vadd.f32 %v317, %v557
        %v559 = vpop.f32.mrb[0].mxu0
        %v560 = vadd.f32 %v317, %v559
        %v561 = vpop.f32.mrb[0].mxu0
        %v562 = vpop.f32.mrb[0].mxu0
        %563 = vdwg.mxu0
        %564 = vmatprep.subr.bf16.mxu0 %v442
        %565 = vmatpush1.bf16.msra.mxu0 %v441
        %566 = vmatprep.subr.bf16.mxu0 %v450
        %567 = vmatpush1.bf16.msra.mxu0 %v449
        %568 = vmatprep.subr.bf16.mxu0 %v458
        %569 = vmatpush1.bf16.msra.mxu0 %v457
        %570 = vmatprep.subr.bf16.mxu0 %v466
        %571 = vmatpush1.bf16.msra.mxu0 %v465
        %572 = vmatprep.subr.bf16.mxu0 %v474
        %573 = vmatpush1.bf16.msra.mxu0 %v473
        %574 = vmatprep.subr.bf16.mxu0 0
        %575 = vmatpush1.bf16.msra.mxu0 0
        %576 = vmatprep.subr.bf16.mxu0 0
        %577 = vmatpush1.bf16.msra.mxu0 0
        %578 = vmatprep.subr.bf16.mxu0 0
        %579 = vmatpush1.bf16.msra.mxu0 0
        %580 = vmatprep.subr.bf16.mxu0 0
        %581 = vmatpush1.bf16.msra.mxu0 0
        %582 = vmatprep.subr.bf16.mxu0 0
        %583 = vmatpush1.bf16.msra.mxu0 0
        %584 = vmatprep.subr.bf16.mxu0 0
        %585 = vmatpush1.bf16.msra.mxu0 0
        %586 = vmatprep.subr.bf16.mxu0 0
        %587 = vmatpush1.bf16.msra.mxu0 0
        %588 = vmatprep.subr.bf16.mxu0 0
        %589 = vmatpush1.bf16.msra.mxu0 0
        %590 = vmatprep.subr.bf16.mxu0 0
        %591 = vmatpush1.bf16.msra.mxu0 0
        %592 = vmatprep.subr.bf16.mxu0 0
        %593 = vmatpush1.bf16.msra.mxu0 0
        %594 = vmatprep.subr.bf16.mxu0 0
        %595 = vmatpush1.bf16.msra.mxu0 0
        %596 = vmatprep.mubr.bf16.mxu0 0
        %597 = vmatmul.mubr.bf16.gmra.mrb[0].mxu0 %v521
        %v598 = vpop.f32.mrb[0].mxu0
        %v599 = vadd.f32 %v317, %v598
        %v600 = vpop.f32.mrb[0].mxu0
        %v601 = vadd.f32 %v317, %v600
        %v602 = vpop.f32.mrb[0].mxu0
        %v603 = vpop.f32.mrb[0].mxu0
        %604 = vdwg.mxu0
        %605 = vmatprep.subr.bf16.mxu0 %v444
        %606 = vmatpush1.bf16.msra.mxu0 %v443
        %607 = vmatprep.subr.bf16.mxu0 %v452
        %608 = vmatpush1.bf16.msra.mxu0 %v451
        %609 = vmatprep.subr.bf16.mxu0 %v460
        %610 = vmatpush1.bf16.msra.mxu0 %v459
        %611 = vmatprep.subr.bf16.mxu0 %v468
        %612 = vmatpush1.bf16.msra.mxu0 %v467
        %613 = vmatprep.subr.bf16.mxu0 %v476
        %614 = vmatpush1.bf16.msra.mxu0 %v475
        %615 = vmatprep.subr.bf16.mxu0 0
        %616 = vmatpush1.bf16.msra.mxu0 0
        %617 = vmatprep.subr.bf16.mxu0 0
        %618 = vmatpush1.bf16.msra.mxu0 0
        %619 = vmatprep.subr.bf16.mxu0 0
        %620 = vmatpush1.bf16.msra.mxu0 0
        %621 = vmatprep.subr.bf16.mxu0 0
        %622 = vmatpush1.bf16.msra.mxu0 0
        %623 = vmatprep.subr.bf16.mxu0 0
        %624 = vmatpush1.bf16.msra.mxu0 0
        %625 = vmatprep.subr.bf16.mxu0 0
        %626 = vmatpush1.bf16.msra.mxu0 0
        %627 = vmatprep.subr.bf16.mxu0 0
        %628 = vmatpush1.bf16.msra.mxu0 0
        %629 = vmatprep.subr.bf16.mxu0 0
        %630 = vmatpush1.bf16.msra.mxu0 0
        %631 = vmatprep.subr.bf16.mxu0 0
        %632 = vmatpush1.bf16.msra.mxu0 0
        %633 = vmatprep.subr.bf16.mxu0 0
        %634 = vmatpush1.bf16.msra.mxu0 0
        %635 = vmatprep.subr.bf16.mxu0 0
        %636 = vmatpush1.bf16.msra.mxu0 0
        %637 = vmatprep.mubr.bf16.mxu0 0
        %638 = vmatmul.mubr.bf16.gmra.mrb[0].mxu0 %v521
        %v639 = vpop.f32.mrb[0].mxu0
        %v640 = vadd.f32 %v317, %v639
        %v641 = vpop.f32.mrb[0].mxu0
        %v642 = vadd.f32 %v317, %v641
        %v643 = vpop.f32.mrb[0].mxu0
        %v644 = vpop.f32.mrb[0].mxu0
        %645 = vdwg.mxu0
        %646 = vmatprep.subr.bf16.mxu0 %v446
        %647 = vmatpush1.bf16.msra.mxu0 %v445
        %648 = vmatprep.subr.bf16.mxu0 %v454
        %649 = vmatpush1.bf16.msra.mxu0 %v453
        %650 = vmatprep.subr.bf16.mxu0 %v462
        %651 = vmatpush1.bf16.msra.mxu0 %v461
        %652 = vmatprep.subr.bf16.mxu0 %v470
        %653 = vmatpush1.bf16.msra.mxu0 %v469
        %654 = vmatprep.subr.bf16.mxu0 %v478
        %655 = vmatpush1.bf16.msra.mxu0 %v477
        %656 = vmatprep.subr.bf16.mxu0 0
        %657 = vmatpush1.bf16.msra.mxu0 0
        %658 = vmatprep.subr.bf16.mxu0 0
        %659 = vmatpush1.bf16.msra.mxu0 0
        %660 = vmatprep.subr.bf16.mxu0 0
        %661 = vmatpush1.bf16.msra.mxu0 0
        %662 = vmatprep.subr.bf16.mxu0 0
        %663 = vmatpush1.bf16.msra.mxu0 0
        %664 = vmatprep.subr.bf16.mxu0 0
        %665 = vmatpush1.bf16.msra.mxu0 0
        %666 = vmatprep.subr.bf16.mxu0 0
        %667 = vmatpush1.bf16.msra.mxu0 0
        %668 = vmatprep.subr.bf16.mxu0 0
        %669 = vmatpush1.bf16.msra.mxu0 0
        %670 = vmatprep.subr.bf16.mxu0 0
        %671 = vmatpush1.bf16.msra.mxu0 0
        %672 = vmatprep.subr.bf16.mxu0 0
        %673 = vmatpush1.bf16.msra.mxu0 0
        %674 = vmatprep.subr.bf16.mxu0 0
        %675 = vmatpush1.bf16.msra.mxu0 0
        %676 = vmatprep.subr.bf16.mxu0 0
        %677 = vmatpush1.bf16.msra.mxu0 0
        %678 = vmatprep.mubr.bf16.mxu0 0
        %679 = vmatmul.mubr.bf16.gmra.mrb[0].mxu0 %v521
        %v680 = vpop.f32.mrb[0].mxu0
        %v681 = vadd.f32 %v317, %v680
        %v682 = vpop.f32.mrb[0].mxu0
        %v683 = vadd.f32 %v317, %v682
        %v684 = vpop.f32.mrb[0].mxu0
        %v685 = vpop.f32.mrb[0].mxu0
        %686 = vdwg.mxu0
        %v695 = vcombine.low %v558, %v560
        %v696 = vcombine.low %v599, %v601
        %v697 = vcombine.low %v640, %v642
        %v698 = vcombine.low %v681, %v683
        %703 = vst [vmem:[%s269] sm:$0x77] %v695
        %704 = vst [vmem:[%s269 + $0x8] sm:$0x77] %v696
        %705 = vst [vmem:[%s269 + $0x10] sm:$0x77] %v697
        %706 = vst [vmem:[%s269 + $0x18] sm:$0x77] %v698
        %s707 = smul.u32 8, %s14
        %p708 = scmp.lt.s32.totalorder %s707, 15
        %s709 = scalar_select %p708, %s707, 15
        %s710 = smul.addr %s709, 4
        %s711 = scalar_lea.vmem %s3, %s710
        // Predicated region
        $region56: #{forward.64} parent=50 // pred_check
          %p712 = pneg %p100
        $region57: #{forward.64} parent=50 // pred_check_branch
          %714 = sbr.rel (%p712) target = $region59
        $region58: #{forward.64} parent=50 // pred_region
          %s715 = smul.u32 8, %s14
        $region59: #{forward.64} parent=50 // pred_fallthru
          _
      $region51: #{forward.64} parent=5 // pred_fallthru
        _
      %p716 = scmp.le.s32.totalorder 2, %s9
      // Predicated region
      $region60: #{forward.64} parent=5 // pred_check
        %p717 = pneg %p716
      $region61: #{forward.64} parent=5 // pred_check_branch
        %719 = sbr.rel (%p717) target = $region63
      $region62: #{forward.64} parent=5 // pred_region
        %s720 = ssub.s32 %s9, 2
        // Predicated region
        $region64: #{forward.64} parent=62 // pred_check
          %p721 = pneg %p106
        $region65: #{forward.64} parent=62 // pred_check_branch
          %723 = sbr.rel (%p721) target = $region67
        $region66: #{forward.64} parent=62 // pred_region
          %s724 = smul.u32 8, %s15
          %p725 = scmp.lt.s32.totalorder %s724, 15
          %s726 = scalar_select %p725, %s724, 15
          %s727 = smul.addr %s726, 4
          %s728 = scalar_lea.vmem %s3, %s727
        $region67: #{forward.64} parent=62 // pred_fallthru
          _
      $region63: #{forward.64} parent=5 // pred_fallthru
        _
    $region6: #{forward.64} parent=1 // loop_footer
      %s13 = sadd.s32 1, %s9
    $region7: #{forward.64} parent=1 // loop_footer_branch
      %8 = sbr.rel target = $region3
    $region8: #{forward.64} parent=1 // loop_exit
      _

// kernel: forward.65
$region0: #{forward.65}
  #allocation0 [shape = 'u32[]', space=smem, size = 0x4, offset = 0x4, fixed_abs, tag = 'smem constant byte address 0x4 - core index']
  #allocation1 [shape = 'u32[144,128]{1,0:T(1,128)}', space=vmem, size = 0x12000, scoped, tag = 'internal scratch']
  %s0 = inlined_call_operand.vmem [shape: bf16[48,2048], index: 0, kind: input, shape index: {}]
  %s1 = inlined_call_operand.vmem [shape: bf16[3,48], index: 1, kind: input, shape index: {}]
  %s2 = inlined_call_operand.vmem [shape: f32[3,1], index: 2, kind: input, shape index: {}]
  %s3 = inlined_call_operand.vmem [shape: f32[3,2048], index: 3, kind: output, shape index: {}]
  %s4 = sld [smem:[#allocation0]]
  $region68: #{forward.65} parent=0
    _
  %s6 = ssub.s32 1, %s4
  %s7 = scalar_select 0, %s6, %s4
  $region1: #{forward.65} parent=0
    #allocation2 [shape = 'u8[196608]{0}', space=vmem, size = 0x30000, scoped, tag = 'input window, operand 0']
    loop: start=0, step=1, limit=4
    $region2: #{forward.65} parent=1 // loop_pre_header
      _
    $region3: #{forward.65} parent=1 // loop_header
      %s9 = sphi 0, %s13
      %p10 = scmp.ge.s32.totalorder %s9, 4
      %s19 = sphi 0, %s21
      %s22 = sphi 0, %s19
      %s23 = sphi 0, %s22
      %s39 = sphi 0, %s23
      %s43 = sphi 0, %s43
      %s45 = sphi 0, %s43
      %s46 = sphi 0, %s45
      %s60 = sphi 0, %s46
      %s64 = sphi 0, %s64
      %s66 = sphi 0, %s64
      %s67 = sphi 0, %s66
      %s81 = sphi 0, %s67
      %s87 = sphi 0, %s89
      %s90 = sphi 0, %s87
      %s91 = sphi 0, %s90
      %s107 = sphi 0, %s91
    $region4: #{forward.65} parent=1 // loop_header_branch
      %12 = sbr.rel (%p10) target = $region8
    $region5: #{forward.65} parent=1 // loop_body
      %s14 = ssub.s32 %s9, 1
      %s15 = ssub.s32 %s9, 2
      %s16 = sadd.s32 %s9, 1
      %s17 = ssub.s32 %s9, %s16
      %p18 = scmp.eq.s32.totalorder %s17, 0
      %s20 = sadd.s32 %s19, 1
      %s21 = scalar_select %p18, %s19, %s20
      %p24 = pneg %p18
      %p25 = scmp.eq.s32.totalorder %s9, 1
      %p26 = por %p24, %p25
      %p27 = scmp.ne.s32.totalorder %s19, %s22
      %p28 = scmp.eq.s32.totalorder %s9, 0
      %p29 = por %p27, %p28
      %p30 = scmp.ne.s32.totalorder %s19, %s22
      %p31 = scmp.eq.s32.totalorder %s14, 1
      %p32 = por %p30, %p31
      %p33 = scmp.ne.s32.totalorder %s22, %s23
      %p34 = scmp.eq.s32.totalorder %s14, 0
      %p35 = por %p33, %p34
      %p36 = scmp.ne.s32.totalorder %s22, %s23
      %p37 = scmp.eq.s32.totalorder %s15, 1
      %p38 = por %p36, %p37
      %p40 = scmp.ne.s32.totalorder %s23, %s39
      %p41 = scmp.eq.s32.totalorder %s15, 0
      %p42 = por %p40, %p41
      %s44 = sadd.s32 %s43, 1
      %p47 = scmp.eq.s32.totalorder %s9, 1
      %p48 = scmp.ne.s32.totalorder %s43, %s45
      %p49 = scmp.eq.s32.totalorder %s9, 0
      %p50 = por %p48, %p49
      %p51 = scmp.ne.s32.totalorder %s43, %s45
      %p52 = scmp.eq.s32.totalorder %s14, 1
      %p53 = por %p51, %p52
      %p54 = scmp.ne.s32.totalorder %s45, %s46
      %p55 = scmp.eq.s32.totalorder %s14, 0
      %p56 = por %p54, %p55
      %p57 = scmp.ne.s32.totalorder %s45, %s46
      %p58 = scmp.eq.s32.totalorder %s15, 1
      %p59 = por %p57, %p58
      %p61 = scmp.ne.s32.totalorder %s46, %s60
      %p62 = scmp.eq.s32.totalorder %s15, 0
      %p63 = por %p61, %p62
      %s65 = sadd.s32 %s64, 1
      %p68 = scmp.eq.s32.totalorder %s9, 1
      %p69 = scmp.ne.s32.totalorder %s64, %s66
      %p70 = scmp.eq.s32.totalorder %s9, 0
      %p71 = por %p69, %p70
      %p72 = scmp.ne.s32.totalorder %s64, %s66
      %p73 = scmp.eq.s32.totalorder %s14, 1
      %p74 = por %p72, %p73
      %p75 = scmp.ne.s32.totalorder %s66, %s67
      %p76 = scmp.eq.s32.totalorder %s14, 0
      %p77 = por %p75, %p76
      %p78 = scmp.ne.s32.totalorder %s66, %s67
      %p79 = scmp.eq.s32.totalorder %s15, 1
      %p80 = por %p78, %p79
      %p82 = scmp.ne.s32.totalorder %s67, %s81
      %p83 = scmp.eq.s32.totalorder %s15, 0
      %p84 = por %p82, %p83
      %s85 = ssub.s32 %s9, %s16
      %p86 = scmp.eq.s32.totalorder %s85, 0
      %s88 = sadd.s32 %s87, 1
      %s89 = scalar_select %p86, %s87, %s88
      %p92 = pneg %p86
      %p93 = scmp.eq.s32.totalorder %s9, 1
      %p94 = por %p92, %p93
      %p95 = scmp.ne.s32.totalorder %s87, %s90
      %p96 = scmp.eq.s32.totalorder %s9, 0
      %p97 = por %p95, %p96
      %p98 = scmp.ne.s32.totalorder %s87, %s90
      %p99 = scmp.eq.s32.totalorder %s14, 1
      %p100 = por %p98, %p99
      %p101 = scmp.ne.s32.totalorder %s90, %s91
      %p102 = scmp.eq.s32.totalorder %s14, 0
      %p103 = por %p101, %p102
      %p104 = scmp.ne.s32.totalorder %s90, %s91
      %p105 = scmp.eq.s32.totalorder %s15, 1
      %p106 = por %p104, %p105
      %p108 = scmp.ne.s32.totalorder %s91, %s107
      %p109 = scmp.eq.s32.totalorder %s15, 0
      %p110 = por %p108, %p109
      %p111 = scmp.le.s32.totalorder 1, %s9
      %p112 = scmp.lt.s32.totalorder %s9, 3
      %p113 = pnand %p111, %p112
      %p114 = pneg %p113
      // Predicated region
      $region9: #{forward.65} parent=5 // pred_check
        _
      $region10: #{forward.65} parent=5 // pred_check_branch
        %116 = sbr.rel (%p113) target = $region12
      $region11: #{forward.65} parent=5 // pred_region
        %s117 = ssub.s32 %s9, 1
        // Predicated region
        $region13: #{forward.65} parent=11 // pred_check
          %p118 = pneg %p56
        $region14: #{forward.65} parent=11 // pred_check_branch
          %120 = sbr.rel (%p118) target = $region16
        $region15: #{forward.65} parent=11 // pred_region
          _
        $region16: #{forward.65} parent=11 // pred_fallthru
          _
        // Predicated region
        $region17: #{forward.65} parent=11 // pred_check
          %p121 = pneg %p77
        $region18: #{forward.65} parent=11 // pred_check_branch
          %123 = sbr.rel (%p121) target = $region20
        $region19: #{forward.65} parent=11 // pred_region
          _
        $region20: #{forward.65} parent=11 // pred_fallthru
          _
      $region12: #{forward.65} parent=5 // pred_fallthru
        _
      %p124 = scmp.lt.s32.totalorder %s9, 2
      // Predicated region
      $region21: #{forward.65} parent=5 // pred_check
        %p125 = pneg %p124
      $region22: #{forward.65} parent=5 // pred_check_branch
        %127 = sbr.rel (%p125) target = $region24
      $region23: #{forward.65} parent=5 // pred_region
        // Predicated region
        $region25: #{forward.65} parent=23 // pred_check
          %p128 = pneg %p29
        $region26: #{forward.65} parent=23 // pred_check_branch
          %130 = sbr.rel (%p128) target = $region28
        $region27: #{forward.65} parent=23 // pred_region
          %s131 = sand.u32 %s19, 1
          %s132 = sand.u32 %s19, 1
          %s133 = smul.addr %s132, 192
          %s134 = scalar_lea.vmem [#allocation2], %s133
          %s135 = smul.u32 8, %s9
          %s136 = smul.addr %s135, 4
          %s137 = scalar_lea.vmem %s0, %s136
          // Predicated region
          $region29: #{forward.65} parent=27 // pred_check
            _
          $region30: #{forward.65} parent=27 // pred_check_branch
            %139 = sbr.rel (0) target = $region32
          $region31: #{forward.65} parent=27 // pred_region
            // Predicated region
            $region33: #{forward.65} parent=31 // pred_check
              _
            $region34: #{forward.65} parent=31 // pred_check_branch
              %141 = sbr.rel (0) target = $region36
            $region35: #{forward.65} parent=31 // pred_region
              loop: start=0, step=1, limit=1
              $region37: #{forward.65} parent=35 // loop_pre_header
                _
              $region38: #{forward.65} parent=35 // loop_header
                %s143 = sphi 0, %s147
                %p144 = scmp.ge.s32.totalorder %s143, 1
                %s148 = sphi %s137, %s137
                %s149 = sphi %s134, %s134
              $region39: #{forward.65} parent=35 // loop_header_branch
                %146 = sbr.rel (%p144) target = $region43
              $region40: #{forward.65} parent=35 // loop_body
                %v150 = vld [vmem:[%s148] sm:$0xff]
                %151 = vst [vmem:[%s149] sm:$0xff] %v150
                %v152 = vld [vmem:[%s148 + $0x8] sm:$0xff]
                %153 = vst [vmem:[%s149 + $0x8] sm:$0xff] %v152
                %v154 = vld [vmem:[%s148 + $0x10] sm:$0xff]
                %155 = vst [vmem:[%s149 + $0x10] sm:$0xff] %v154
                %v156 = vld [vmem:[%s148 + $0x18] sm:$0xff]
                %157 = vst [vmem:[%s149 + $0x18] sm:$0xff] %v156
                %v158 = vld [vmem:[%s148 + $0x40] sm:$0xff]
                %159 = vst [vmem:[%s149 + $0x20] sm:$0xff] %v158
                %v160 = vld [vmem:[%s148 + $0x48] sm:$0xff]
                %161 = vst [vmem:[%s149 + $0x28] sm:$0xff] %v160
                %v162 = vld [vmem:[%s148 + $0x50] sm:$0xff]
                %163 = vst [vmem:[%s149 + $0x30] sm:$0xff] %v162
                %v164 = vld [vmem:[%s148 + $0x58] sm:$0xff]
                %165 = vst [vmem:[%s149 + $0x38] sm:$0xff] %v164
                %v166 = vld [vmem:[%s148 + $0x80] sm:$0xff]
                %167 = vst [vmem:[%s149 + $0x40] sm:$0xff] %v166
                %v168 = vld [vmem:[%s148 + $0x88] sm:$0xff]
                %169 = vst [vmem:[%s149 + $0x48] sm:$0xff] %v168
                %v170 = vld [vmem:[%s148 + $0x90] sm:$0xff]
                %171 = vst [vmem:[%s149 + $0x50] sm:$0xff] %v170
                %v172 = vld [vmem:[%s148 + $0x98] sm:$0xff]
                %173 = vst [vmem:[%s149 + $0x58] sm:$0xff] %v172
                %v174 = vld [vmem:[%s148 + $0xc0] sm:$0xff]
                %175 = vst [vmem:[%s149 + $0x60] sm:$0xff] %v174
                %v176 = vld [vmem:[%s148 + $0xc8] sm:$0xff]
                %177 = vst [vmem:[%s149 + $0x68] sm:$0xff] %v176
                %v178 = vld [vmem:[%s148 + $0xd0] sm:$0xff]
                %179 = vst [vmem:[%s149 + $0x70] sm:$0xff] %v178
                %v180 = vld [vmem:[%s148 + $0xd8] sm:$0xff]
                %181 = vst [vmem:[%s149 + $0x78] sm:$0xff] %v180
                %v182 = vld [vmem:[%s148 + $0x100] sm:$0xff]
                %183 = vst [vmem:[%s149 + $0x80] sm:$0xff] %v182
                %v184 = vld [vmem:[%s148 + $0x108] sm:$0xff]
                %185 = vst [vmem:[%s149 + $0x88] sm:$0xff] %v184
                %v186 = vld [vmem:[%s148 + $0x110] sm:$0xff]
                %187 = vst [vmem:[%s149 + $0x90] sm:$0xff] %v186
                %v188 = vld [vmem:[%s148 + $0x118] sm:$0xff]
                %189 = vst [vmem:[%s149 + $0x98] sm:$0xff] %v188
                %v190 = vld [vmem:[%s148 + $0x140] sm:$0xff]
                %191 = vst [vmem:[%s149 + $0xa0] sm:$0xff] %v190
                %v192 = vld [vmem:[%s148 + $0x148] sm:$0xff]
                %193 = vst [vmem:[%s149 + $0xa8] sm:$0xff] %v192
                %v194 = vld [vmem:[%s148 + $0x150] sm:$0xff]
                %195 = vst [vmem:[%s149 + $0xb0] sm:$0xff] %v194
                %v196 = vld [vmem:[%s148 + $0x158] sm:$0xff]
                %197 = vst [vmem:[%s149 + $0xb8] sm:$0xff] %v196
              $region41: #{forward.65} parent=35 // loop_footer
                %s147 = sadd.s32 1, %s143
              $region42: #{forward.65} parent=35 // loop_footer_branch
                %142 = sbr.rel target = $region38
              $region43: #{forward.65} parent=35 // loop_exit
                _
            $region36: #{forward.65} parent=31 // pred_fallthru
              _
            // Predicated region
            $region44: #{forward.65} parent=31 // pred_check
              _
            $region45: #{forward.65} parent=31 // pred_check_branch
              %199 = sbr.rel target = $region47
            $region46: #{forward.65} parent=31 // pred_region
              _
            $region47: #{forward.65} parent=31 // pred_fallthru
              _
          $region32: #{forward.65} parent=27 // pred_fallthru
            _
          %200 = vnop
        $region28: #{forward.65} parent=23 // pred_fallthru
          _
      $region24: #{forward.65} parent=5 // pred_fallthru
        _
      %p201 = scmp.le.s32.totalorder 1, %s9
      %p202 = scmp.lt.s32.totalorder %s9, 3
      %p203 = pnand %p201, %p202
      %p204 = pneg %p203
      // Predicated region
      $region48: #{forward.65} parent=5 // pred_check
        _
      $region49: #{forward.65} parent=5 // pred_check_branch
        %206 = sbr.rel (%p203) target = $region51
      $region50: #{forward.65} parent=5 // pred_region
        %s207 = ssub.s32 %s9, 1
        %s208 = sand.u32 %s22, 1
        %s209 = sand.u32 %s22, 1
        %s210 = smul.addr %s209, 192
        %s211 = scalar_lea.vmem [#allocation2], %s210
        // Predicated region
        $region52: #{forward.65} parent=50 // pred_check
          %p212 = pneg %p35
        $region53: #{forward.65} parent=50 // pred_check_branch
          %214 = sbr.rel (%p212) target = $region55
        $region54: #{forward.65} parent=50 // pred_region
          _
        $region55: #{forward.65} parent=50 // pred_fallthru
          _
        %s215 = sand.u32 %s22, 1
        %s216 = sand.u32 %s22, 1
        %s217 = smul.addr %s216, 192
        %s218 = scalar_lea.vmem [#allocation2], %s217
        %p219 = pneg %p35
        %p220 = pneg %p32
        %p221 = pneg %p56
        %p222 = pneg %p53
        %p223 = pneg %p77
        %p224 = pneg %p74
        %p225 = pneg %p103
        %p226 = pneg %p100
        %s227 = smul.u32 8, %s14
        %p228 = scmp.lt.s32.totalorder %s227, 15
        %s229 = scalar_select %p228, %s227, 15
        %s230 = smul.addr %s229, 4
        %s231 = scalar_lea.vmem %s3, %s230
        %s232 = smul.u32 8, %s14
        %s233 = smul.u32 8, %s14
        %p234 = scmp.lt.s32.totalorder %s233, 15
        %s235 = scalar_select %p234, %s233, 15
        %s236 = smul.addr %s235, 4
        %s237 = scalar_lea.vmem %s3, %s236
        %s238 = smul.u32 8, %s14
        %v240 = vld [vmem:[%s1] sm:$0x3]
        %v241 = vld [vmem:[%s211] sm:$0xff]
        %v242 = vld [vmem:[%s211 + $0x8] sm:$0xff]
        %v243 = vld [vmem:[%s211 + $0x10] sm:$0xff]
        %v244 = vld [vmem:[%s211 + $0x18] sm:$0xff]
        %v245 = vld [vmem:[%s211 + $0x20] sm:$0xff]
        %v246 = vld [vmem:[%s211 + $0x28] sm:$0xff]
        %v247 = vld [vmem:[%s211 + $0x30] sm:$0xff]
        %v248 = vld [vmem:[%s211 + $0x38] sm:$0xff]
        %v249 = vld [vmem:[%s211 + $0x40] sm:$0xff]
        %v250 = vld [vmem:[%s211 + $0x48] sm:$0xff]
        %v251 = vld [vmem:[%s211 + $0x50] sm:$0xff]
        %v252 = vld [vmem:[%s211 + $0x58] sm:$0xff]
        %v253 = vld [vmem:[%s211 + $0x60] sm:$0xff]
        %v254 = vld [vmem:[%s211 + $0x68] sm:$0xff]
        %v255 = vld [vmem:[%s211 + $0x70] sm:$0xff]
        %v256 = vld [vmem:[%s211 + $0x78] sm:$0xff]
        %v257 = vld [vmem:[%s211 + $0x80] sm:$0xff]
        %v258 = vld [vmem:[%s211 + $0x88] sm:$0xff]
        %v259 = vld [vmem:[%s211 + $0x90] sm:$0xff]
        %v260 = vld [vmem:[%s211 + $0x98] sm:$0xff]
        %v261 = vld [vmem:[%s211 + $0xa0] sm:$0xff]
        %v262 = vld [vmem:[%s211 + $0xa8] sm:$0xff]
        %v263 = vld [vmem:[%s211 + $0xb0] sm:$0xff]
        %v264 = vld [vmem:[%s211 + $0xb8] sm:$0xff]
        %v265 = vld [vmem:[%s2] sm:$0x7]
        %267 = vset.pattern.permute.xlu0 0
        %268 = vperm.xlu0 %267, %v265
        %v269 = vpop.permute.xlu0 %268
        %v295 = vunpack.c.l.b16 %v241
        %v296 = vunpack.c.h.b16 %v241
        %v297 = vunpack.c.l.b16 %v242
        %v298 = vunpack.c.h.b16 %v242
        %v299 = vunpack.c.l.b16 %v243
        %v300 = vunpack.c.h.b16 %v243
        %v301 = vunpack.c.l.b16 %v244
        %v302 = vunpack.c.h.b16 %v244
        %v303 = vunpack.c.l.b16 %v245
        %v304 = vunpack.c.h.b16 %v245
        %v305 = vunpack.c.l.b16 %v246
        %v306 = vunpack.c.h.b16 %v246
        %v307 = vunpack.c.l.b16 %v247
        %v308 = vunpack.c.h.b16 %v247
        %v309 = vunpack.c.l.b16 %v248
        %v310 = vunpack.c.h.b16 %v248
        %v311 = vunpack.c.l.b16 %v249
        %v312 = vunpack.c.h.b16 %v249
        %v313 = vunpack.c.l.b16 %v250
        %v314 = vunpack.c.h.b16 %v250
        %v315 = vunpack.c.l.b16 %v251
        %v316 = vunpack.c.h.b16 %v251
        %v317 = vunpack.c.l.b16 %v252
        %v318 = vunpack.c.h.b16 %v252
        %v319 = vunpack.c.l.b16 %v253
        %v320 = vunpack.c.h.b16 %v253
        %v321 = vunpack.c.l.b16 %v254
        %v322 = vunpack.c.h.b16 %v254
        %v323 = vunpack.c.l.b16 %v255
        %v324 = vunpack.c.h.b16 %v255
        %v325 = vunpack.c.l.b16 %v256
        %v326 = vunpack.c.h.b16 %v256
        %v327 = vunpack.c.l.b16 %v257
        %v328 = vunpack.c.h.b16 %v257
        %v329 = vunpack.c.l.b16 %v258
        %v330 = vunpack.c.h.b16 %v258
        %v331 = vunpack.c.l.b16 %v259
        %v332 = vunpack.c.h.b16 %v259
        %v333 = vunpack.c.l.b16 %v260
        %v334 = vunpack.c.h.b16 %v260
        %v335 = vunpack.c.l.b16 %v261
        %v336 = vunpack.c.h.b16 %v261
        %v337 = vunpack.c.l.b16 %v262
        %v338 = vunpack.c.h.b16 %v262
        %v339 = vunpack.c.l.b16 %v263
        %v340 = vunpack.c.h.b16 %v263
        %v341 = vunpack.c.l.b16 %v264
        %v342 = vunpack.c.h.b16 %v264
        %v343 = vpack.c.b16 %v303, %v295
        %v344 = vpack.c.b16 %v304, %v296
        %v345 = vpack.c.b16 %v305, %v297
        %v346 = vpack.c.b16 %v306, %v298
        %v347 = vpack.c.b16 %v307, %v299
        %v348 = vpack.c.b16 %v308, %v300
        %v349 = vpack.c.b16 %v309, %v301
        %v350 = vpack.c.b16 %v310, %v302
        %v351 = vpack.c.b16 %v319, %v311
        %v352 = vpack.c.b16 %v320, %v312
        %v353 = vpack.c.b16 %v321, %v313
        %v354 = vpack.c.b16 %v322, %v314
        %v355 = vpack.c.b16 %v323, %v315
        %v356 = vpack.c.b16 %v324, %v316
        %v357 = vpack.c.b16 %v325, %v317
        %v358 = vpack.c.b16 %v326, %v318
        %v359 = vpack.c.b16 %v335, %v327
        %v360 = vpack.c.b16 %v336, %v328
        %v361 = vpack.c.b16 %v337, %v329
        %v362 = vpack.c.b16 %v338, %v330
        %v363 = vpack.c.b16 %v339, %v331
        %v364 = vpack.c.b16 %v340, %v332
        %v365 = vpack.c.b16 %v341, %v333
        %v366 = vpack.c.b16 %v342, %v334
        %vm391 = vcmask 392192
        %v393 = vsel %vm391, %v240, 0
        %395 = vmatprep.subr.bf16.mxu0 %v344
        %396 = vmatpush1.bf16.msra.mxu0 %v343
        %397 = vmatprep.subr.bf16.mxu0 %v352
        %398 = vmatpush1.bf16.msra.mxu0 %v351
        %399 = vmatprep.subr.bf16.mxu0 %v360
        %400 = vmatpush1.bf16.msra.mxu0 %v359
        %401 = vmatprep.subr.bf16.mxu0 0
        %402 = vmatpush1.bf16.msra.mxu0 0
        %403 = vmatprep.subr.bf16.mxu0 0
        %404 = vmatpush1.bf16.msra.mxu0 0
        %405 = vmatprep.subr.bf16.mxu0 0
        %406 = vmatpush1.bf16.msra.mxu0 0
        %407 = vmatprep.subr.bf16.mxu0 0
        %408 = vmatpush1.bf16.msra.mxu0 0
        %409 = vmatprep.subr.bf16.mxu0 0
        %410 = vmatpush1.bf16.msra.mxu0 0
        %411 = vmatprep.subr.bf16.mxu0 0
        %412 = vmatpush1.bf16.msra.mxu0 0
        %413 = vmatprep.subr.bf16.mxu0 0
        %414 = vmatpush1.bf16.msra.mxu0 0
        %415 = vmatprep.subr.bf16.mxu0 0
        %416 = vmatpush1.bf16.msra.mxu0 0
        %417 = vmatprep.subr.bf16.mxu0 0
        %418 = vmatpush1.bf16.msra.mxu0 0
        %419 = vmatprep.subr.bf16.mxu0 0
        %420 = vmatpush1.bf16.msra.mxu0 0
        %421 = vmatprep.subr.bf16.mxu0 0
        %422 = vmatpush1.bf16.msra.mxu0 0
        %423 = vmatprep.subr.bf16.mxu0 0
        %424 = vmatpush1.bf16.msra.mxu0 0
        %425 = vmatprep.subr.bf16.mxu0 0
        %426 = vmatpush1.bf16.msra.mxu0 0
        %427 = vmatprep.mubr.bf16.mxu0 0
        %428 = vmatmul.mubr.bf16.gmra.mrb[0].mxu0 %v393
        %v429 = vpop.f32.mrb[0].mxu0
        %v430 = vadd.f32 %v269, %v429
        %v431 = vpop.f32.mrb[0].mxu0
        %v432 = vadd.f32 %v269, %v431
        %v433 = vpop.f32.mrb[0].mxu0
        %v434 = vpop.f32.mrb[0].mxu0
        %435 = vdwg.mxu0
        %436 = vmatprep.subr.bf16.mxu0 %v346
        %437 = vmatpush1.bf16.msra.mxu0 %v345
        %438 = vmatprep.subr.bf16.mxu0 %v354
        %439 = vmatpush1.bf16.msra.mxu0 %v353
        %440 = vmatprep.subr.bf16.mxu0 %v362
        %441 = vmatpush1.bf16.msra.mxu0 %v361
        %442 = vmatprep.subr.bf16.mxu0 0
        %443 = vmatpush1.bf16.msra.mxu0 0
        %444 = vmatprep.subr.bf16.mxu0 0
        %445 = vmatpush1.bf16.msra.mxu0 0
        %446 = vmatprep.subr.bf16.mxu0 0
        %447 = vmatpush1.bf16.msra.mxu0 0
        %448 = vmatprep.subr.bf16.mxu0 0
        %449 = vmatpush1.bf16.msra.mxu0 0
        %450 = vmatprep.subr.bf16.mxu0 0
        %451 = vmatpush1.bf16.msra.mxu0 0
        %452 = vmatprep.subr.bf16.mxu0 0
        %453 = vmatpush1.bf16.msra.mxu0 0
        %454 = vmatprep.subr.bf16.mxu0 0
        %455 = vmatpush1.bf16.msra.mxu0 0
        %456 = vmatprep.subr.bf16.mxu0 0
        %457 = vmatpush1.bf16.msra.mxu0 0
        %458 = vmatprep.subr.bf16.mxu0 0
        %459 = vmatpush1.bf16.msra.mxu0 0
        %460 = vmatprep.subr.bf16.mxu0 0
        %461 = vmatpush1.bf16.msra.mxu0 0
        %462 = vmatprep.subr.bf16.mxu0 0
        %463 = vmatpush1.bf16.msra.mxu0 0
        %464 = vmatprep.subr.bf16.mxu0 0
        %465 = vmatpush1.bf16.msra.mxu0 0
        %466 = vmatprep.subr.bf16.mxu0 0
        %467 = vmatpush1.bf16.msra.mxu0 0
        %468 = vmatprep.mubr.bf16.mxu0 0
        %469 = vmatmul.mubr.bf16.gmra.mrb[0].mxu0 %v393
        %v470 = vpop.f32.mrb[0].mxu0
        %v471 = vadd.f32 %v269, %v470
        %v472 = vpop.f32.mrb[0].mxu0
        %v473 = vadd.f32 %v269, %v472
        %v474 = vpop.f32.mrb[0].mxu0
        %v475 = vpop.f32.mrb[0].mxu0
        %476 = vdwg.mxu0
        %477 = vmatprep.subr.bf16.mxu0 %v348
        %478 = vmatpush1.bf16.msra.mxu0 %v347
        %479 = vmatprep.subr.bf16.mxu0 %v356
        %480 = vmatpush1.bf16.msra.mxu0 %v355
        %481 = vmatprep.subr.bf16.mxu0 %v364
        %482 = vmatpush1.bf16.msra.mxu0 %v363
        %483 = vmatprep.subr.bf16.mxu0 0
        %484 = vmatpush1.bf16.msra.mxu0 0
        %485 = vmatprep.subr.bf16.mxu0 0
        %486 = vmatpush1.bf16.msra.mxu0 0
        %487 = vmatprep.subr.bf16.mxu0 0
        %488 = vmatpush1.bf16.msra.mxu0 0
        %489 = vmatprep.subr.bf16.mxu0 0
        %490 = vmatpush1.bf16.msra.mxu0 0
        %491 = vmatprep.subr.bf16.mxu0 0
        %492 = vmatpush1.bf16.msra.mxu0 0
        %493 = vmatprep.subr.bf16.mxu0 0
        %494 = vmatpush1.bf16.msra.mxu0 0
        %495 = vmatprep.subr.bf16.mxu0 0
        %496 = vmatpush1.bf16.msra.mxu0 0
        %497 = vmatprep.subr.bf16.mxu0 0
        %498 = vmatpush1.bf16.msra.mxu0 0
        %499 = vmatprep.subr.bf16.mxu0 0
        %500 = vmatpush1.bf16.msra.mxu0 0
        %501 = vmatprep.subr.bf16.mxu0 0
        %502 = vmatpush1.bf16.msra.mxu0 0
        %503 = vmatprep.subr.bf16.mxu0 0
        %504 = vmatpush1.bf16.msra.mxu0 0
        %505 = vmatprep.subr.bf16.mxu0 0
        %506 = vmatpush1.bf16.msra.mxu0 0
        %507 = vmatprep.subr.bf16.mxu0 0
        %508 = vmatpush1.bf16.msra.mxu0 0
        %509 = vmatprep.mubr.bf16.mxu0 0
        %510 = vmatmul.mubr.bf16.gmra.mrb[0].mxu0 %v393
        %v511 = vpop.f32.mrb[0].mxu0
        %v512 = vadd.f32 %v269, %v511
        %v513 = vpop.f32.mrb[0].mxu0
        %v514 = vadd.f32 %v269, %v513
        %v515 = vpop.f32.mrb[0].mxu0
        %v516 = vpop.f32.mrb[0].mxu0
        %517 = vdwg.mxu0
        %518 = vmatprep.subr.bf16.mxu0 %v350
        %519 = vmatpush1.bf16.msra.mxu0 %v349
        %520 = vmatprep.subr.bf16.mxu0 %v358
        %521 = vmatpush1.bf16.msra.mxu0 %v357
        %522 = vmatprep.subr.bf16.mxu0 %v366
        %523 = vmatpush1.bf16.msra.mxu0 %v365
        %524 = vmatprep.subr.bf16.mxu0 0
        %525 = vmatpush1.bf16.msra.mxu0 0
        %526 = vmatprep.subr.bf16.mxu0 0
        %527 = vmatpush1.bf16.msra.mxu0 0
        %528 = vmatprep.subr.bf16.mxu0 0
        %529 = vmatpush1.bf16.msra.mxu0 0
        %530 = vmatprep.subr.bf16.mxu0 0
        %531 = vmatpush1.bf16.msra.mxu0 0
        %532 = vmatprep.subr.bf16.mxu0 0
        %533 = vmatpush1.bf16.msra.mxu0 0
        %534 = vmatprep.subr.bf16.mxu0 0
        %535 = vmatpush1.bf16.msra.mxu0 0
        %536 = vmatprep.subr.bf16.mxu0 0
        %537 = vmatpush1.bf16.msra.mxu0 0
        %538 = vmatprep.subr.bf16.mxu0 0
        %539 = vmatpush1.bf16.msra.mxu0 0
        %540 = vmatprep.subr.bf16.mxu0 0
        %541 = vmatpush1.bf16.msra.mxu0 0
        %542 = vmatprep.subr.bf16.mxu0 0
        %543 = vmatpush1.bf16.msra.mxu0 0
        %544 = vmatprep.subr.bf16.mxu0 0
        %545 = vmatpush1.bf16.msra.mxu0 0
        %546 = vmatprep.subr.bf16.mxu0 0
        %547 = vmatpush1.bf16.msra.mxu0 0
        %548 = vmatprep.subr.bf16.mxu0 0
        %549 = vmatpush1.bf16.msra.mxu0 0
        %550 = vmatprep.mubr.bf16.mxu0 0
        %551 = vmatmul.mubr.bf16.gmra.mrb[0].mxu0 %v393
        %v552 = vpop.f32.mrb[0].mxu0
        %v553 = vadd.f32 %v269, %v552
        %v554 = vpop.f32.mrb[0].mxu0
        %v555 = vadd.f32 %v269, %v554
        %v556 = vpop.f32.mrb[0].mxu0
        %v557 = vpop.f32.mrb[0].mxu0
        %558 = vdwg.mxu0
        %v567 = vcombine.low %v430, %v432
        %v568 = vcombine.low %v471, %v473
        %v569 = vcombine.low %v512, %v514
        %v570 = vcombine.low %v553, %v555
        %575 = vst [vmem:[%s237] sm:$0x77] %v567
        %576 = vst [vmem:[%s237 + $0x8] sm:$0x77] %v568
        %577 = vst [vmem:[%s237 + $0x10] sm:$0x77] %v569
        %578 = vst [vmem:[%s237 + $0x18] sm:$0x77] %v570
        %s579 = smul.u32 8, %s14
        %p580 = scmp.lt.s32.totalorder %s579, 15
        %s581 = scalar_select %p580, %s579, 15
        %s582 = smul.addr %s581, 4
        %s583 = scalar_lea.vmem %s3, %s582
        // Predicated region
        $region56: #{forward.65} parent=50 // pred_check
          %p584 = pneg %p100
        $region57: #{forward.65} parent=50 // pred_check_branch
          %586 = sbr.rel (%p584) target = $region59
        $region58: #{forward.65} parent=50 // pred_region
          %s587 = smul.u32 8, %s14
        $region59: #{forward.65} parent=50 // pred_fallthru
          _
      $region51: #{forward.65} parent=5 // pred_fallthru
        _
      %p588 = scmp.le.s32.totalorder 2, %s9
      // Predicated region
      $region60: #{forward.65} parent=5 // pred_check
        %p589 = pneg %p588
      $region61: #{forward.65} parent=5 // pred_check_branch
        %591 = sbr.rel (%p589) target = $region63
      $region62: #{forward.65} parent=5 // pred_region
        %s592 = ssub.s32 %s9, 2
        // Predicated region
        $region64: #{forward.65} parent=62 // pred_check
          %p593 = pneg %p106
        $region65: #{forward.65} parent=62 // pred_check_branch
          %595 = sbr.rel (%p593) target = $region67
        $region66: #{forward.65} parent=62 // pred_region
          %s596 = smul.u32 8, %s15
          %p597 = scmp.lt.s32.totalorder %s596, 15
          %s598 = scalar_select %p597, %s596, 15
          %s599 = smul.addr %s598, 4
          %s600 = scalar_lea.vmem %s3, %s599
        $region67: #{forward.65} parent=62 // pred_fallthru
          _
      $region63: #{forward.65} parent=5 // pred_fallthru
        _
    $region6: #{forward.65} parent=1 // loop_footer
      %s13 = sadd.s32 1, %s9
    $region7: #{forward.65} parent=1 // loop_footer_branch
      %8 = sbr.rel target = $region3
    $region8: #{forward.65} parent=1 // loop_exit
      _

// kernel: forward.67
$region0: #{forward.67}
  #allocation0 [shape = 'u32[]', space=smem, size = 0x4, offset = 0x4, fixed_abs, tag = 'smem constant byte address 0x4 - core index']
  #allocation1 [shape = 'u32[144,128]{1,0:T(1,128)}', space=vmem, size = 0x12000, scoped, tag = 'internal scratch']
  %s0 = inlined_call_operand.vmem [shape: bf16[32,2048], index: 0, kind: input, shape index: {}]
  %s1 = inlined_call_operand.vmem [shape: bf16[3,32], index: 1, kind: input, shape index: {}]
  %s2 = inlined_call_operand.vmem [shape: f32[3,1], index: 2, kind: input, shape index: {}]
  %s3 = inlined_call_operand.vmem [shape: f32[3,2048], index: 3, kind: output, shape index: {}]
  %s4 = sld [smem:[#allocation0]]
  $region68: #{forward.67} parent=0
    _
  %s6 = ssub.s32 1, %s4
  %s7 = scalar_select 0, %s6, %s4
  $region1: #{forward.67} parent=0
    #allocation2 [shape = 'u8[131072]{0}', space=vmem, size = 0x20000, scoped, tag = 'input window, operand 0']
    loop: start=0, step=1, limit=4
    $region2: #{forward.67} parent=1 // loop_pre_header
      _
    $region3: #{forward.67} parent=1 // loop_header
      %s9 = sphi 0, %s13
      %p10 = scmp.ge.s32.totalorder %s9, 4
      %s19 = sphi 0, %s21
      %s22 = sphi 0, %s19
      %s23 = sphi 0, %s22
      %s39 = sphi 0, %s23
      %s43 = sphi 0, %s43
      %s45 = sphi 0, %s43
      %s46 = sphi 0, %s45
      %s60 = sphi 0, %s46
      %s64 = sphi 0, %s64
      %s66 = sphi 0, %s64
      %s67 = sphi 0, %s66
      %s81 = sphi 0, %s67
      %s87 = sphi 0, %s89
      %s90 = sphi 0, %s87
      %s91 = sphi 0, %s90
      %s107 = sphi 0, %s91
    $region4: #{forward.67} parent=1 // loop_header_branch
      %12 = sbr.rel (%p10) target = $region8
    $region5: #{forward.67} parent=1 // loop_body
      %s14 = ssub.s32 %s9, 1
      %s15 = ssub.s32 %s9, 2
      %s16 = sadd.s32 %s9, 1
      %s17 = ssub.s32 %s9, %s16
      %p18 = scmp.eq.s32.totalorder %s17, 0
      %s20 = sadd.s32 %s19, 1
      %s21 = scalar_select %p18, %s19, %s20
      %p24 = pneg %p18
      %p25 = scmp.eq.s32.totalorder %s9, 1
      %p26 = por %p24, %p25
      %p27 = scmp.ne.s32.totalorder %s19, %s22
      %p28 = scmp.eq.s32.totalorder %s9, 0
      %p29 = por %p27, %p28
      %p30 = scmp.ne.s32.totalorder %s19, %s22
      %p31 = scmp.eq.s32.totalorder %s14, 1
      %p32 = por %p30, %p31
      %p33 = scmp.ne.s32.totalorder %s22, %s23
      %p34 = scmp.eq.s32.totalorder %s14, 0
      %p35 = por %p33, %p34
      %p36 = scmp.ne.s32.totalorder %s22, %s23
      %p37 = scmp.eq.s32.totalorder %s15, 1
      %p38 = por %p36, %p37
      %p40 = scmp.ne.s32.totalorder %s23, %s39
      %p41 = scmp.eq.s32.totalorder %s15, 0
      %p42 = por %p40, %p41
      %s44 = sadd.s32 %s43, 1
      %p47 = scmp.eq.s32.totalorder %s9, 1
      %p48 = scmp.ne.s32.totalorder %s43, %s45
      %p49 = scmp.eq.s32.totalorder %s9, 0
      %p50 = por %p48, %p49
      %p51 = scmp.ne.s32.totalorder %s43, %s45
      %p52 = scmp.eq.s32.totalorder %s14, 1
      %p53 = por %p51, %p52
      %p54 = scmp.ne.s32.totalorder %s45, %s46
      %p55 = scmp.eq.s32.totalorder %s14, 0
      %p56 = por %p54, %p55
      %p57 = scmp.ne.s32.totalorder %s45, %s46
      %p58 = scmp.eq.s32.totalorder %s15, 1
      %p59 = por %p57, %p58
      %p61 = scmp.ne.s32.totalorder %s46, %s60
      %p62 = scmp.eq.s32.totalorder %s15, 0
      %p63 = por %p61, %p62
      %s65 = sadd.s32 %s64, 1
      %p68 = scmp.eq.s32.totalorder %s9, 1
      %p69 = scmp.ne.s32.totalorder %s64, %s66
      %p70 = scmp.eq.s32.totalorder %s9, 0
      %p71 = por %p69, %p70
      %p72 = scmp.ne.s32.totalorder %s64, %s66
      %p73 = scmp.eq.s32.totalorder %s14, 1
      %p74 = por %p72, %p73
      %p75 = scmp.ne.s32.totalorder %s66, %s67
      %p76 = scmp.eq.s32.totalorder %s14, 0
      %p77 = por %p75, %p76
      %p78 = scmp.ne.s32.totalorder %s66, %s67
      %p79 = scmp.eq.s32.totalorder %s15, 1
      %p80 = por %p78, %p79
      %p82 = scmp.ne.s32.totalorder %s67, %s81
      %p83 = scmp.eq.s32.totalorder %s15, 0
      %p84 = por %p82, %p83
      %s85 = ssub.s32 %s9, %s16
      %p86 = scmp.eq.s32.totalorder %s85, 0
      %s88 = sadd.s32 %s87, 1
      %s89 = scalar_select %p86, %s87, %s88
      %p92 = pneg %p86
      %p93 = scmp.eq.s32.totalorder %s9, 1
      %p94 = por %p92, %p93
      %p95 = scmp.ne.s32.totalorder %s87, %s90
      %p96 = scmp.eq.s32.totalorder %s9, 0
      %p97 = por %p95, %p96
      %p98 = scmp.ne.s32.totalorder %s87, %s90
      %p99 = scmp.eq.s32.totalorder %s14, 1
      %p100 = por %p98, %p99
      %p101 = scmp.ne.s32.totalorder %s90, %s91
      %p102 = scmp.eq.s32.totalorder %s14, 0
      %p103 = por %p101, %p102
      %p104 = scmp.ne.s32.totalorder %s90, %s91
      %p105 = scmp.eq.s32.totalorder %s15, 1
      %p106 = por %p104, %p105
      %p108 = scmp.ne.s32.totalorder %s91, %s107
      %p109 = scmp.eq.s32.totalorder %s15, 0
      %p110 = por %p108, %p109
      %p111 = scmp.le.s32.totalorder 1, %s9
      %p112 = scmp.lt.s32.totalorder %s9, 3
      %p113 = pnand %p111, %p112
      %p114 = pneg %p113
      // Predicated region
      $region9: #{forward.67} parent=5 // pred_check
        _
      $region10: #{forward.67} parent=5 // pred_check_branch
        %116 = sbr.rel (%p113) target = $region12
      $region11: #{forward.67} parent=5 // pred_region
        %s117 = ssub.s32 %s9, 1
        // Predicated region
        $region13: #{forward.67} parent=11 // pred_check
          %p118 = pneg %p56
        $region14: #{forward.67} parent=11 // pred_check_branch
          %120 = sbr.rel (%p118) target = $region16
        $region15: #{forward.67} parent=11 // pred_region
          _
        $region16: #{forward.67} parent=11 // pred_fallthru
          _
        // Predicated region
        $region17: #{forward.67} parent=11 // pred_check
          %p121 = pneg %p77
        $region18: #{forward.67} parent=11 // pred_check_branch
          %123 = sbr.rel (%p121) target = $region20
        $region19: #{forward.67} parent=11 // pred_region
          _
        $region20: #{forward.67} parent=11 // pred_fallthru
          _
      $region12: #{forward.67} parent=5 // pred_fallthru
        _
      %p124 = scmp.lt.s32.totalorder %s9, 2
      // Predicated region
      $region21: #{forward.67} parent=5 // pred_check
        %p125 = pneg %p124
      $region22: #{forward.67} parent=5 // pred_check_branch
        %127 = sbr.rel (%p125) target = $region24
      $region23: #{forward.67} parent=5 // pred_region
        // Predicated region
        $region25: #{forward.67} parent=23 // pred_check
          %p128 = pneg %p29
        $region26: #{forward.67} parent=23 // pred_check_branch
          %130 = sbr.rel (%p128) target = $region28
        $region27: #{forward.67} parent=23 // pred_region
          %s131 = sand.u32 %s19, 1
          %s132 = sand.u32 %s19, 1
          %s133 = smul.addr %s132, 128
          %s134 = scalar_lea.vmem [#allocation2], %s133
          %s135 = smul.u32 8, %s9
          %s136 = smul.addr %s135, 4
          %s137 = scalar_lea.vmem %s0, %s136
          // Predicated region
          $region29: #{forward.67} parent=27 // pred_check
            _
          $region30: #{forward.67} parent=27 // pred_check_branch
            %139 = sbr.rel (0) target = $region32
          $region31: #{forward.67} parent=27 // pred_region
            // Predicated region
            $region33: #{forward.67} parent=31 // pred_check
              _
            $region34: #{forward.67} parent=31 // pred_check_branch
              %141 = sbr.rel (0) target = $region36
            $region35: #{forward.67} parent=31 // pred_region
              loop: start=0, step=1, limit=1
              $region37: #{forward.67} parent=35 // loop_pre_header
                _
              $region38: #{forward.67} parent=35 // loop_header
                %s143 = sphi 0, %s147
                %p144 = scmp.ge.s32.totalorder %s143, 1
                %s148 = sphi %s137, %s137
                %s149 = sphi %s134, %s134
              $region39: #{forward.67} parent=35 // loop_header_branch
                %146 = sbr.rel (%p144) target = $region43
              $region40: #{forward.67} parent=35 // loop_body
                %v150 = vld [vmem:[%s148] sm:$0xff]
                %151 = vst [vmem:[%s149] sm:$0xff] %v150
                %v152 = vld [vmem:[%s148 + $0x8] sm:$0xff]
                %153 = vst [vmem:[%s149 + $0x8] sm:$0xff] %v152
                %v154 = vld [vmem:[%s148 + $0x10] sm:$0xff]
                %155 = vst [vmem:[%s149 + $0x10] sm:$0xff] %v154
                %v156 = vld [vmem:[%s148 + $0x18] sm:$0xff]
                %157 = vst [vmem:[%s149 + $0x18] sm:$0xff] %v156
                %v158 = vld [vmem:[%s148 + $0x40] sm:$0xff]
                %159 = vst [vmem:[%s149 + $0x20] sm:$0xff] %v158
                %v160 = vld [vmem:[%s148 + $0x48] sm:$0xff]
                %161 = vst [vmem:[%s149 + $0x28] sm:$0xff] %v160
                %v162 = vld [vmem:[%s148 + $0x50] sm:$0xff]
                %163 = vst [vmem:[%s149 + $0x30] sm:$0xff] %v162
                %v164 = vld [vmem:[%s148 + $0x58] sm:$0xff]
                %165 = vst [vmem:[%s149 + $0x38] sm:$0xff] %v164
                %v166 = vld [vmem:[%s148 + $0x80] sm:$0xff]
                %167 = vst [vmem:[%s149 + $0x40] sm:$0xff] %v166
                %v168 = vld [vmem:[%s148 + $0x88] sm:$0xff]
                %169 = vst [vmem:[%s149 + $0x48] sm:$0xff] %v168
                %v170 = vld [vmem:[%s148 + $0x90] sm:$0xff]
                %171 = vst [vmem:[%s149 + $0x50] sm:$0xff] %v170
                %v172 = vld [vmem:[%s148 + $0x98] sm:$0xff]
                %173 = vst [vmem:[%s149 + $0x58] sm:$0xff] %v172
                %v174 = vld [vmem:[%s148 + $0xc0] sm:$0xff]
                %175 = vst [vmem:[%s149 + $0x60] sm:$0xff] %v174
                %v176 = vld [vmem:[%s148 + $0xc8] sm:$0xff]
                %177 = vst [vmem:[%s149 + $0x68] sm:$0xff] %v176
                %v178 = vld [vmem:[%s148 + $0xd0] sm:$0xff]
                %179 = vst [vmem:[%s149 + $0x70] sm:$0xff] %v178
                %v180 = vld [vmem:[%s148 + $0xd8] sm:$0xff]
                %181 = vst [vmem:[%s149 + $0x78] sm:$0xff] %v180
              $region41: #{forward.67} parent=35 // loop_footer
                %s147 = sadd.s32 1, %s143
              $region42: #{forward.67} parent=35 // loop_footer_branch
                %142 = sbr.rel target = $region38
              $region43: #{forward.67} parent=35 // loop_exit
                _
            $region36: #{forward.67} parent=31 // pred_fallthru
              _
            // Predicated region
            $region44: #{forward.67} parent=31 // pred_check
              _
            $region45: #{forward.67} parent=31 // pred_check_branch
              %183 = sbr.rel target = $region47
            $region46: #{forward.67} parent=31 // pred_region
              _
            $region47: #{forward.67} parent=31 // pred_fallthru
              _
          $region32: #{forward.67} parent=27 // pred_fallthru
            _
          %184 = vnop
        $region28: #{forward.67} parent=23 // pred_fallthru
          _
      $region24: #{forward.67} parent=5 // pred_fallthru
        _
      %p185 = scmp.le.s32.totalorder 1, %s9
      %p186 = scmp.lt.s32.totalorder %s9, 3
      %p187 = pnand %p185, %p186
      %p188 = pneg %p187
      // Predicated region
      $region48: #{forward.67} parent=5 // pred_check
        _
      $region49: #{forward.67} parent=5 // pred_check_branch
        %190 = sbr.rel (%p187) target = $region51
      $region50: #{forward.67} parent=5 // pred_region
        %s191 = ssub.s32 %s9, 1
        %s192 = sand.u32 %s22, 1
        %s193 = sand.u32 %s22, 1
        %s194 = smul.addr %s193, 128
        %s195 = scalar_lea.vmem [#allocation2], %s194
        // Predicated region
        $region52: #{forward.67} parent=50 // pred_check
          %p196 = pneg %p35
        $region53: #{forward.67} parent=50 // pred_check_branch
          %198 = sbr.rel (%p196) target = $region55
        $region54: #{forward.67} parent=50 // pred_region
          _
        $region55: #{forward.67} parent=50 // pred_fallthru
          _
        %s199 = sand.u32 %s22, 1
        %s200 = sand.u32 %s22, 1
        %s201 = smul.addr %s200, 128
        %s202 = scalar_lea.vmem [#allocation2], %s201
        %p203 = pneg %p35
        %p204 = pneg %p32
        %p205 = pneg %p56
        %p206 = pneg %p53
        %p207 = pneg %p77
        %p208 = pneg %p74
        %p209 = pneg %p103
        %p210 = pneg %p100
        %s211 = smul.u32 8, %s14
        %p212 = scmp.lt.s32.totalorder %s211, 15
        %s213 = scalar_select %p212, %s211, 15
        %s214 = smul.addr %s213, 4
        %s215 = scalar_lea.vmem %s3, %s214
        %s216 = smul.u32 8, %s14
        %s217 = smul.u32 8, %s14
        %p218 = scmp.lt.s32.totalorder %s217, 15
        %s219 = scalar_select %p218, %s217, 15
        %s220 = smul.addr %s219, 4
        %s221 = scalar_lea.vmem %s3, %s220
        %s222 = smul.u32 8, %s14
        %v224 = vld [vmem:[%s1] sm:$0x3]
        %v225 = vld [vmem:[%s195] sm:$0xff]
        %v226 = vld [vmem:[%s195 + $0x8] sm:$0xff]
        %v227 = vld [vmem:[%s195 + $0x10] sm:$0xff]
        %v228 = vld [vmem:[%s195 + $0x18] sm:$0xff]
        %v229 = vld [vmem:[%s195 + $0x20] sm:$0xff]
        %v230 = vld [vmem:[%s195 + $0x28] sm:$0xff]
        %v231 = vld [vmem:[%s195 + $0x30] sm:$0xff]
        %v232 = vld [vmem:[%s195 + $0x38] sm:$0xff]
        %v233 = vld [vmem:[%s195 + $0x40] sm:$0xff]
        %v234 = vld [vmem:[%s195 + $0x48] sm:$0xff]
        %v235 = vld [vmem:[%s195 + $0x50] sm:$0xff]
        %v236 = vld [vmem:[%s195 + $0x58] sm:$0xff]
        %v237 = vld [vmem:[%s195 + $0x60] sm:$0xff]
        %v238 = vld [vmem:[%s195 + $0x68] sm:$0xff]
        %v239 = vld [vmem:[%s195 + $0x70] sm:$0xff]
        %v240 = vld [vmem:[%s195 + $0x78] sm:$0xff]
        %v241 = vld [vmem:[%s2] sm:$0x7]
        %243 = vset.pattern.permute.xlu0 0
        %244 = vperm.xlu0 %243, %v241
        %v245 = vpop.permute.xlu0 %244
        %v263 = vunpack.c.l.b16 %v225
        %v264 = vunpack.c.h.b16 %v225
        %v265 = vunpack.c.l.b16 %v226
        %v266 = vunpack.c.h.b16 %v226
        %v267 = vunpack.c.l.b16 %v227
        %v268 = vunpack.c.h.b16 %v227
        %v269 = vunpack.c.l.b16 %v228
        %v270 = vunpack.c.h.b16 %v228
        %v271 = vunpack.c.l.b16 %v229
        %v272 = vunpack.c.h.b16 %v229
        %v273 = vunpack.c.l.b16 %v230
        %v274 = vunpack.c.h.b16 %v230
        %v275 = vunpack.c.l.b16 %v231
        %v276 = vunpack.c.h.b16 %v231
        %v277 = vunpack.c.l.b16 %v232
        %v278 = vunpack.c.h.b16 %v232
        %v279 = vunpack.c.l.b16 %v233
        %v280 = vunpack.c.h.b16 %v233
        %v281 = vunpack.c.l.b16 %v234
        %v282 = vunpack.c.h.b16 %v234
        %v283 = vunpack.c.l.b16 %v235
        %v284 = vunpack.c.h.b16 %v235
        %v285 = vunpack.c.l.b16 %v236
        %v286 = vunpack.c.h.b16 %v236
        %v287 = vunpack.c.l.b16 %v237
        %v288 = vunpack.c.h.b16 %v237
        %v289 = vunpack.c.l.b16 %v238
        %v290 = vunpack.c.h.b16 %v238
        %v291 = vunpack.c.l.b16 %v239
        %v292 = vunpack.c.h.b16 %v239
        %v293 = vunpack.c.l.b16 %v240
        %v294 = vunpack.c.h.b16 %v240
        %v295 = vpack.c.b16 %v271, %v263
        %v296 = vpack.c.b16 %v272, %v264
        %v297 = vpack.c.b16 %v273, %v265
        %v298 = vpack.c.b16 %v274, %v266
        %v299 = vpack.c.b16 %v275, %v267
        %v300 = vpack.c.b16 %v276, %v268
        %v301 = vpack.c.b16 %v277, %v269
        %v302 = vpack.c.b16 %v278, %v270
        %v303 = vpack.c.b16 %v287, %v279
        %v304 = vpack.c.b16 %v288, %v280
        %v305 = vpack.c.b16 %v289, %v281
        %v306 = vpack.c.b16 %v290, %v282
        %v307 = vpack.c.b16 %v291, %v283
        %v308 = vpack.c.b16 %v292, %v284
        %v309 = vpack.c.b16 %v293, %v285
        %v310 = vpack.c.b16 %v294, %v286
        %vm327 = vcmask 261120
        %v329 = vsel %vm327, %v224, 0
        %331 = vmatprep.subr.bf16.mxu0 %v296
        %332 = vmatpush1.bf16.msra.mxu0 %v295
        %333 = vmatprep.subr.bf16.mxu0 %v304
        %334 = vmatpush1.bf16.msra.mxu0 %v303
        %335 = vmatprep.subr.bf16.mxu0 0
        %336 = vmatpush1.bf16.msra.mxu0 0
        %337 = vmatprep.subr.bf16.mxu0 0
        %338 = vmatpush1.bf16.msra.mxu0 0
        %339 = vmatprep.subr.bf16.mxu0 0
        %340 = vmatpush1.bf16.msra.mxu0 0
        %341 = vmatprep.subr.bf16.mxu0 0
        %342 = vmatpush1.bf16.msra.mxu0 0
        %343 = vmatprep.subr.bf16.mxu0 0
        %344 = vmatpush1.bf16.msra.mxu0 0
        %345 = vmatprep.subr.bf16.mxu0 0
        %346 = vmatpush1.bf16.msra.mxu0 0
        %347 = vmatprep.subr.bf16.mxu0 0
        %348 = vmatpush1.bf16.msra.mxu0 0
        %349 = vmatprep.subr.bf16.mxu0 0
        %350 = vmatpush1.bf16.msra.mxu0 0
        %351 = vmatprep.subr.bf16.mxu0 0
        %352 = vmatpush1.bf16.msra.mxu0 0
        %353 = vmatprep.subr.bf16.mxu0 0
        %354 = vmatpush1.bf16.msra.mxu0 0
        %355 = vmatprep.subr.bf16.mxu0 0
        %356 = vmatpush1.bf16.msra.mxu0 0
        %357 = vmatprep.subr.bf16.mxu0 0
        %358 = vmatpush1.bf16.msra.mxu0 0
        %359 = vmatprep.subr.bf16.mxu0 0
        %360 = vmatpush1.bf16.msra.mxu0 0
        %361 = vmatprep.subr.bf16.mxu0 0
        %362 = vmatpush1.bf16.msra.mxu0 0
        %363 = vmatprep.mubr.bf16.mxu0 0
        %364 = vmatmul.mubr.bf16.gmra.mrb[0].mxu0 %v329
        %v365 = vpop.f32.mrb[0].mxu0
        %v366 = vadd.f32 %v245, %v365
        %v367 = vpop.f32.mrb[0].mxu0
        %v368 = vadd.f32 %v245, %v367
        %v369 = vpop.f32.mrb[0].mxu0
        %v370 = vpop.f32.mrb[0].mxu0
        %371 = vdwg.mxu0
        %372 = vmatprep.subr.bf16.mxu0 %v298
        %373 = vmatpush1.bf16.msra.mxu0 %v297
        %374 = vmatprep.subr.bf16.mxu0 %v306
        %375 = vmatpush1.bf16.msra.mxu0 %v305
        %376 = vmatprep.subr.bf16.mxu0 0
        %377 = vmatpush1.bf16.msra.mxu0 0
        %378 = vmatprep.subr.bf16.mxu0 0
        %379 = vmatpush1.bf16.msra.mxu0 0
        %380 = vmatprep.subr.bf16.mxu0 0
        %381 = vmatpush1.bf16.msra.mxu0 0
        %382 = vmatprep.subr.bf16.mxu0 0
        %383 = vmatpush1.bf16.msra.mxu0 0
        %384 = vmatprep.subr.bf16.mxu0 0
        %385 = vmatpush1.bf16.msra.mxu0 0
        %386 = vmatprep.subr.bf16.mxu0 0
        %387 = vmatpush1.bf16.msra.mxu0 0
        %388 = vmatprep.subr.bf16.mxu0 0
        %389 = vmatpush1.bf16.msra.mxu0 0
        %390 = vmatprep.subr.bf16.mxu0 0
        %391 = vmatpush1.bf16.msra.mxu0 0
        %392 = vmatprep.subr.bf16.mxu0 0
        %393 = vmatpush1.bf16.msra.mxu0 0
        %394 = vmatprep.subr.bf16.mxu0 0
        %395 = vmatpush1.bf16.msra.mxu0 0
        %396 = vmatprep.subr.bf16.mxu0 0
        %397 = vmatpush1.bf16.msra.mxu0 0
        %398 = vmatprep.subr.bf16.mxu0 0
        %399 = vmatpush1.bf16.msra.mxu0 0
        %400 = vmatprep.subr.bf16.mxu0 0
        %401 = vmatpush1.bf16.msra.mxu0 0
        %402 = vmatprep.subr.bf16.mxu0 0
        %403 = vmatpush1.bf16.msra.mxu0 0
        %404 = vmatprep.mubr.bf16.mxu0 0
        %405 = vmatmul.mubr.bf16.gmra.mrb[0].mxu0 %v329
        %v406 = vpop.f32.mrb[0].mxu0
        %v407 = vadd.f32 %v245, %v406
        %v408 = vpop.f32.mrb[0].mxu0
        %v409 = vadd.f32 %v245, %v408
        %v410 = vpop.f32.mrb[0].mxu0
        %v411 = vpop.f32.mrb[0].mxu0
        %412 = vdwg.mxu0
        %413 = vmatprep.subr.bf16.mxu0 %v300
        %414 = vmatpush1.bf16.msra.mxu0 %v299
        %415 = vmatprep.subr.bf16.mxu0 %v308
        %416 = vmatpush1.bf16.msra.mxu0 %v307
        %417 = vmatprep.subr.bf16.mxu0 0
        %418 = vmatpush1.bf16.msra.mxu0 0
        %419 = vmatprep.subr.bf16.mxu0 0
        %420 = vmatpush1.bf16.msra.mxu0 0
        %421 = vmatprep.subr.bf16.mxu0 0
        %422 = vmatpush1.bf16.msra.mxu0 0
        %423 = vmatprep.subr.bf16.mxu0 0
        %424 = vmatpush1.bf16.msra.mxu0 0
        %425 = vmatprep.subr.bf16.mxu0 0
        %426 = vmatpush1.bf16.msra.mxu0 0
        %427 = vmatprep.subr.bf16.mxu0 0
        %428 = vmatpush1.bf16.msra.mxu0 0
        %429 = vmatprep.subr.bf16.mxu0 0
        %430 = vmatpush1.bf16.msra.mxu0 0
        %431 = vmatprep.subr.bf16.mxu0 0
        %432 = vmatpush1.bf16.msra.mxu0 0
        %433 = vmatprep.subr.bf16.mxu0 0
        %434 = vmatpush1.bf16.msra.mxu0 0
        %435 = vmatprep.subr.bf16.mxu0 0
        %436 = vmatpush1.bf16.msra.mxu0 0
        %437 = vmatprep.subr.bf16.mxu0 0
        %438 = vmatpush1.bf16.msra.mxu0 0
        %439 = vmatprep.subr.bf16.mxu0 0
        %440 = vmatpush1.bf16.msra.mxu0 0
        %441 = vmatprep.subr.bf16.mxu0 0
        %442 = vmatpush1.bf16.msra.mxu0 0
        %443 = vmatprep.subr.bf16.mxu0 0
        %444 = vmatpush1.bf16.msra.mxu0 0
        %445 = vmatprep.mubr.bf16.mxu0 0
        %446 = vmatmul.mubr.bf16.gmra.mrb[0].mxu0 %v329
        %v447 = vpop.f32.mrb[0].mxu0
        %v448 = vadd.f32 %v245, %v447
        %v449 = vpop.f32.mrb[0].mxu0
        %v450 = vadd.f32 %v245, %v449
        %v451 = vpop.f32.mrb[0].mxu0
        %v452 = vpop.f32.mrb[0].mxu0
        %453 = vdwg.mxu0
        %454 = vmatprep.subr.bf16.mxu0 %v302
        %455 = vmatpush1.bf16.msra.mxu0 %v301
        %456 = vmatprep.subr.bf16.mxu0 %v310
        %457 = vmatpush1.bf16.msra.mxu0 %v309
        %458 = vmatprep.subr.bf16.mxu0 0
        %459 = vmatpush1.bf16.msra.mxu0 0
        %460 = vmatprep.subr.bf16.mxu0 0
        %461 = vmatpush1.bf16.msra.mxu0 0
        %462 = vmatprep.subr.bf16.mxu0 0
        %463 = vmatpush1.bf16.msra.mxu0 0
        %464 = vmatprep.subr.bf16.mxu0 0
        %465 = vmatpush1.bf16.msra.mxu0 0
        %466 = vmatprep.subr.bf16.mxu0 0
        %467 = vmatpush1.bf16.msra.mxu0 0
        %468 = vmatprep.subr.bf16.mxu0 0
        %469 = vmatpush1.bf16.msra.mxu0 0
        %470 = vmatprep.subr.bf16.mxu0 0
        %471 = vmatpush1.bf16.msra.mxu0 0
        %472 = vmatprep.subr.bf16.mxu0 0
        %473 = vmatpush1.bf16.msra.mxu0 0
        %474 = vmatprep.subr.bf16.mxu0 0
        %475 = vmatpush1.bf16.msra.mxu0 0
        %476 = vmatprep.subr.bf16.mxu0 0
        %477 = vmatpush1.bf16.msra.mxu0 0
        %478 = vmatprep.subr.bf16.mxu0 0
        %479 = vmatpush1.bf16.msra.mxu0 0
        %480 = vmatprep.subr.bf16.mxu0 0
        %481 = vmatpush1.bf16.msra.mxu0 0
        %482 = vmatprep.subr.bf16.mxu0 0
        %483 = vmatpush1.bf16.msra.mxu0 0
        %484 = vmatprep.subr.bf16.mxu0 0
        %485 = vmatpush1.bf16.msra.mxu0 0
        %486 = vmatprep.mubr.bf16.mxu0 0
        %487 = vmatmul.mubr.bf16.gmra.mrb[0].mxu0 %v329
        %v488 = vpop.f32.mrb[0].mxu0
        %v489 = vadd.f32 %v245, %v488
        %v490 = vpop.f32.mrb[0].mxu0
        %v491 = vadd.f32 %v245, %v490
        %v492 = vpop.f32.mrb[0].mxu0
        %v493 = vpop.f32.mrb[0].mxu0
        %494 = vdwg.mxu0
        %v503 = vcombine.low %v366, %v368
        %v504 = vcombine.low %v407, %v409
        %v505 = vcombine.low %v448, %v450
        %v506 = vcombine.low %v489, %v491
        %511 = vst [vmem:[%s221] sm:$0x77] %v503
        %512 = vst [vmem:[%s221 + $0x8] sm:$0x77] %v504
        %513 = vst [vmem:[%s221 + $0x10] sm:$0x77] %v505
        %514 = vst [vmem:[%s221 + $0x18] sm:$0x77] %v506
        %s515 = smul.u32 8, %s14
        %p516 = scmp.lt.s32.totalorder %s515, 15
        %s517 = scalar_select %p516, %s515, 15
        %s518 = smul.addr %s517, 4
        %s519 = scalar_lea.vmem %s3, %s518
        // Predicated region
        $region56: #{forward.67} parent=50 // pred_check
          %p520 = pneg %p100
        $region57: #{forward.67} parent=50 // pred_check_branch
          %522 = sbr.rel (%p520) target = $region59
        $region58: #{forward.67} parent=50 // pred_region
          %s523 = smul.u32 8, %s14
        $region59: #{forward.67} parent=50 // pred_fallthru
          _
      $region51: #{forward.67} parent=5 // pred_fallthru
        _
      %p524 = scmp.le.s32.totalorder 2, %s9
      // Predicated region
      $region60: #{forward.67} parent=5 // pred_check
        %p525 = pneg %p524
      $region61: #{forward.67} parent=5 // pred_check_branch
        %527 = sbr.rel (%p525) target = $region63
      $region62: #{forward.67} parent=5 // pred_region
        %s528 = ssub.s32 %s9, 2
        // Predicated region
        $region64: #{forward.67} parent=62 // pred_check
          %p529 = pneg %p106
        $region65: #{forward.67} parent=62 // pred_check_branch
          %531 = sbr.rel (%p529) target = $region67
        $region66: #{forward.67} parent=62 // pred_region
          %s532 = smul.u32 8, %s15
          %p533 = scmp.lt.s32.totalorder %s532, 15
          %s534 = scalar_select %p533, %s532, 15
          %s535 = smul.addr %s534, 4
          %s536 = scalar_lea.vmem %s3, %s535
        $region67: #{forward.67} parent=62 // pred_fallthru
          _
      $region63: #{forward.67} parent=5 // pred_fallthru
        _
    $region6: #{forward.67} parent=1 // loop_footer
      %s13 = sadd.s32 1, %s9
    $region7: #{forward.67} parent=1 // loop_footer_branch
      %8 = sbr.rel target = $region3
    $region8: #{forward.67} parent=1 // loop_exit
      _

</llo_original>
